<compile_context>
chip_gen: v6e
topology: v6e:2x2x1
jax: 0.10.0
libtpu: 0.0.40
codegen_flags: <defaults>
</compile_context>

<pallas_src>
import functools

import jax
import jax.numpy as jnp
from jax.experimental import pallas as pl
from jax.experimental.pallas import tpu as pltpu


def _leaky_relu(x, alpha=0.2):
    # max(x, alpha*x) == leaky_relu for 0 < alpha < 1 (2 VPU ops instead of 3).
    return jnp.maximum(x, alpha * x)


# ---------------------------------------------------------------------------
# Generic Debias_v2 (GAT-style) layer kernel: one TILE of query rows per grid
# step against all N_pad key rows.  Heads ("groups") are batched along lanes.
# ---------------------------------------------------------------------------
def _debias_layer_kernel(n_groups, out_logsoftmax,
                         xk_ref, xq_ref, adj_ref, pe_ref, low_ref,
                         w_ref, gb_ref, addrev_ref, alr_ref,
                         out_ref, stats_ref):
    f_out = w_ref.shape[1]
    g_dim = f_out // n_groups

    # Projections: key-side h recomputed from the resident features each tile,
    # query-side h from the tiled block (bf16 MXU operands, f32 accumulation).
    h_keys = jnp.dot(xk_ref[...], w_ref[...], preferred_element_type=jnp.float32)
    h_q = jnp.dot(xq_ref[...], w_ref[...], preferred_element_type=jnp.float32)

    # FiLM: gamma/beta for all groups in one matmul. relu(k) is folded into the
    # weights, the bias into the trailing ones-column of pe (done wrapper-side).
    gb = jnp.dot(pe_ref[...], gb_ref[...], preferred_element_type=jnp.float32)
    gamma = _leaky_relu(gb[:, :f_out])
    beta = _leaky_relu(gb[:, f_out:])

    # Attention logit pieces for all groups: f_l (TILE, G), f_r (G, N_pad).
    alr = alr_ref[...]
    f_l = jax.lax.dot_general(h_q, alr[:n_groups, :], (((1,), (1,)), ((), ())),
                              preferred_element_type=jnp.float32)
    f_r = jax.lax.dot_general(alr[n_groups:, :], h_keys, (((1,), (1,)), ((), ())),
                              preferred_element_type=jnp.float32)

    # Edge mask: one int8 -> f32 convert per tile, reused by all groups, applied
    # as a post-exp multiply (no -inf select).
    mask_f = adj_ref[...].astype(jnp.float32)

    agg_parts = []
    for g in range(n_groups):
        e = _leaky_relu(f_l[:, g:g + 1] + f_r[g:g + 1, :])            # (TILE, N_pad)
        e = e - jnp.max(e, axis=1, keepdims=True)
        p = jnp.exp(e) * mask_f
        denom = jnp.maximum(jnp.sum(p, axis=1, keepdims=True), 1e-30)  # isolated-row guard
        inv = pl.reciprocal(denom, approx=True)                        # EUP, deferred norm
        agg_parts.append(
            jnp.dot(p, h_keys[:, g * g_dim:(g + 1) * g_dim],
                    preferred_element_type=jnp.float32) * inv)
    agg = agg_parts[0] if n_groups == 1 else jnp.concatenate(agg_parts, axis=1)

    # Debias contexts (block-diagonal add/rev weights packed along lanes).
    mod = gamma * agg + beta
    br = jnp.dot(mod, addrev_ref[...], preferred_element_type=jnp.float32)
    b_add = br[:, :f_out]
    b_rev = br[:, f_out:]
    out = agg - b_rev + low_ref[...] * (b_add + b_rev)

    if out_logsoftmax:
        z = out - jnp.max(out, axis=1, keepdims=True)
        out = z - jnp.log(jnp.sum(jnp.exp(z), axis=1, keepdims=True))
    out_ref[...] = out.astype(out_ref.dtype)

    # Per-row regularizer contributions; wrapper sums only the real (unpadded) rows.
    bias_rows = jnp.sum(b_add * b_add + b_rev * b_rev, axis=1, keepdims=True)
    film_rows = jnp.sum(gamma * gamma + beta * beta, axis=1, keepdims=True)
    stats_ref[...] = jnp.concatenate([bias_rows, film_rows], axis=1)


def _debias_layer(x_feat, adj_i8, pe_aug, low, w_bf, gb_w, addrev, alr,
                  *, n_groups, out_logsoftmax, out_dtype, tile):
    """Row-tiled pallas_call for one Debias layer (all heads fused)."""
    n_pad, fin = x_feat.shape
    f_out = w_bf.shape[1]
    pe_dim = pe_aug.shape[1]
    num_tiles = n_pad // tile
    x_bytes = x_feat.dtype.itemsize

    in_specs = [
        pl.BlockSpec((n_pad, fin), lambda i: (0, 0)),      # key features (VMEM-resident)
        pl.BlockSpec((tile, fin), lambda i: (i, 0)),        # query features (tiled)
        pl.BlockSpec((tile, n_pad), lambda i: (i, 0)),      # adjacency rows (int8)
        pl.BlockSpec((tile, pe_dim), lambda i: (i, 0)),     # [pe | 1]
        pl.BlockSpec((tile, 1), lambda i: (i, 0)),          # low-degree flag
        pl.BlockSpec(w_bf.shape, lambda i: (0, 0)),         # packed projection weights
        pl.BlockSpec(gb_w.shape, lambda i: (0, 0)),         # packed FiLM weights + bias row
        pl.BlockSpec(addrev.shape, lambda i: (0, 0)),       # packed add/rev (block-diag)
        pl.BlockSpec(alr.shape, lambda i: (0, 0)),          # packed a_l / a_r rows
    ]
    out_specs = (
        pl.BlockSpec((tile, f_out), lambda i: (i, 0)),
        pl.BlockSpec((tile, 2), lambda i: (i, 0)),
    )
    out_shape = (
        jax.ShapeDtypeStruct((n_pad, f_out), out_dtype),
        jax.ShapeDtypeStruct((n_pad, 2), jnp.float32),
    )

    # VMEM budget: resident keys + double-buffered adj row blocks + f32 (TILE, N)
    # intermediates + small per-tile buffers.  Generous; capped for v7x (64 MiB phys).
    budget = (n_pad * fin * x_bytes
              + 2 * tile * n_pad
              + 10 * tile * n_pad * 4
              + 2 * n_pad * (f_out + 2 * n_groups) * 4
              + 16 * tile * max(f_out, 128) * 4
              + (4 << 20))
    vmem_limit = int(min(max(budget, 32 << 20), 60 << 20))

    cost = pl.CostEstimate(
        flops=int(2 * (num_tiles + 1) * n_pad * fin * f_out
                  + 2 * n_pad * n_pad * f_out
                  + 2 * num_tiles * n_pad * f_out * 2 * n_groups
                  + 4 * n_pad * f_out * f_out
                  + 8 * n_groups * n_pad * n_pad),
        transcendentals=int(n_groups * n_pad * n_pad + 3 * n_pad),
        bytes_accessed=int(n_pad * n_pad
                           + (num_tiles + 1) * n_pad * fin * x_bytes
                           + n_pad * (pe_dim + 3) * 4
                           + n_pad * f_out * jnp.dtype(out_dtype).itemsize),
    )

    return pl.pallas_call(
        functools.partial(_debias_layer_kernel, n_groups, out_logsoftmax),
        grid=(num_tiles,),
        in_specs=in_specs,
        out_specs=out_specs,
        out_shape=out_shape,
        compiler_params=pltpu.CompilerParams(
            dimension_semantics=("parallel",),      # v7x: 2 TensorCores split row tiles
            vmem_limit_bytes=vmem_limit),
        cost_estimate=cost,
    )(x_feat, x_feat, adj_i8, pe_aug, low, w_bf, gb_w, addrev, alr)


# ---------------------------------------------------------------------------
# Parameters / packing / glue (plain JAX)
# ---------------------------------------------------------------------------
def _xavier(key, shape):
    fan_in, fan_out = shape[0], shape[1]
    lim = (6.0 / (fan_in + fan_out)) ** 0.5
    return jax.random.uniform(key, shape, jnp.float32, -lim, lim)


def init_debias_params(key, fin, fout, dim_d):
    ks = jax.random.split(key, 9)
    return {
        "W": _xavier(ks[0], (fin, fout)),
        "W_gamma": _xavier(ks[1], (dim_d, fout)),
        "W_beta": _xavier(ks[2], (dim_d, fout)),
        "b_gamma": _xavier(ks[3], (1, fout)),
        "b_beta": _xavier(ks[4], (1, fout)),
        # nn.Linear(out, out, bias=False) computes x @ W.T -> store transposed.
        "W_add_T": _xavier(ks[5], (fout, fout)).T,
        "W_rev_T": _xavier(ks[6], (fout, fout)).T,
        "a_l": _xavier(ks[7], (fout, 1)),
        "a_r_row": _xavier(ks[8], (fout, 1)).T,        # (1, fout)
        "k": jnp.ones((1, 1), jnp.float32),            # learnable degree-encoding scale
    }


def sinusoidal_pe(max_degree, dim_d):
    pos = jnp.arange(max_degree + 1, dtype=jnp.float32)[:, None]
    i = jnp.arange(dim_d, dtype=jnp.float32)[None, :]
    angle = pos / jnp.power(10000.0, (2.0 * jnp.floor(i / 2.0)) / dim_d)
    return jnp.where((i % 2) == 0, jnp.sin(angle), jnp.cos(angle)).astype(jnp.float32)


def _block_diag(mats):
    rows = sum(m.shape[0] for m in mats)
    cols = sum(m.shape[1] for m in mats)
    out = jnp.zeros((rows, cols), mats[0].dtype)
    r = c = 0
    for m in mats:
        out = out.at[r:r + m.shape[0], c:c + m.shape[1]].set(m)
        r += m.shape[0]
        c += m.shape[1]
    return out


def pack_dfair_params(head_params, out_params, pe_table):
    """Consolidate the per-head / output-layer weights into a handful of
    lane-packed arrays (one DMA each) consumed by the fused kernels."""
    cat = lambda name: jnp.concatenate([hp[name] for hp in head_params], axis=1)
    op = out_params
    return {
        "pe_table": pe_table,
        # ---- hidden layer: heads batched along lanes ----
        "W1": cat("W").astype(jnp.bfloat16),                               # (F, H*nhid)
        "GB1": jnp.concatenate([cat("W_gamma"), cat("W_beta")], axis=1),   # (d, 2*H*nhid)
        "GB1_b": jnp.concatenate([cat("b_gamma"), cat("b_beta")], axis=1),
        "ADDREV1": jnp.concatenate(
            [_block_diag([hp["W_add_T"] for hp in head_params]),
             _block_diag([hp["W_rev_T"] for hp in head_params])], axis=1),
        "ALR1": jnp.concatenate(
            [_block_diag([hp["a_l"].T for hp in head_params]),
             _block_diag([hp["a_r_row"] for hp in head_params])], axis=0),
        "k1": jnp.stack([hp["k"][0, 0] for hp in head_params]),
        # ---- output layer ----
        "W2": op["W"].astype(jnp.bfloat16),
        "GB2": jnp.concatenate([op["W_gamma"], op["W_beta"]], axis=1),
        "GB2_b": jnp.concatenate([op["b_gamma"], op["b_beta"]], axis=1),
        "ADDREV2": jnp.concatenate([op["W_add_T"], op["W_rev_T"]], axis=1),
        "ALR2": jnp.concatenate([op["a_l"].T, op["a_r_row"]], axis=0),
        "k2": op["k"][0, 0],
    }


def dfair_gat_forward(params, x, adj, d, idx=None, edge=None, *, tile=128):
    """DFair_GAT.forward (eval mode): two fused, row-tiled Pallas kernels."""
    del idx, edge  # TODO(synk): unused (dense-adj path, all-node constraints).
    assert tile % 32 == 0
    n = x.shape[0]
    nheads = params["ALR1"].shape[0] // 2
    nhid = params["W1"].shape[1] // nheads

    # Node-level inputs (F.dropout(training=False) is the identity).
    pe = params["pe_table"][d]                                      # (N, dim_d) gather
    pe_aug = jnp.concatenate([pe, jnp.ones((n, 1), jnp.float32)], axis=1)
    d_f = d.astype(jnp.float32)
    low = (d_f <= jnp.mean(d_f)).astype(jnp.float32)[:, None]       # low-degree flag
    adj_i8 = (adj > 0).astype(jnp.int8)                             # 0/1 edge mask
    x_bf = x.astype(jnp.bfloat16)

    # Pad the node dimension to a multiple of the row tile; padded rows are
    # isolated self-loops with zero features so they never affect real rows.
    n_pad = ((n + tile - 1) // tile) * tile
    extra = n_pad - n
    if extra:
        x_bf = jnp.pad(x_bf, ((0, extra), (0, 0)))
        pe_aug = jnp.pad(pe_aug, ((0, extra), (0, 0)))
        low = jnp.pad(low, ((0, extra), (0, 0)))
        adj_i8 = jnp.pad(adj_i8, ((0, extra), (0, extra)))
        rng = jnp.arange(n, n_pad)
        adj_i8 = adj_i8.at[rng, rng].set(jnp.int8(1))

    # Fold relu(k) into the gamma/beta weight columns, and the FiLM bias in as
    # the last weight row (pe carries a trailing ones-column).
    s1 = jnp.repeat(jnp.maximum(params["k1"], 0.0), nhid)
    s1 = jnp.concatenate([s1, s1])                                   # gamma & beta halves
    gb1_w = jnp.concatenate([params["GB1"] * s1[None, :], params["GB1_b"]], axis=0)
    k2 = jnp.maximum(params["k2"], 0.0)
    gb2_w = jnp.concatenate([params["GB2"] * k2, params["GB2_b"]], axis=0)

    # Layer 1: the 3 attention heads fused; concat emitted directly in bf16.
    xcat, stats1 = _debias_layer(
        x_bf, adj_i8, pe_aug, low,
        params["W1"], gb1_w, params["ADDREV1"], params["ALR1"],
        n_groups=nheads, out_logsoftmax=False, out_dtype=jnp.bfloat16, tile=tile)

    # Layer 2: output Debias layer on the concatenation + fused log_softmax.
    logp_pad, stats2 = _debias_layer(
        xcat, adj_i8, pe_aug, low,
        params["W2"], gb2_w, params["ADDREV2"], params["ALR2"],
        n_groups=1, out_logsoftmax=True, out_dtype=jnp.float32, tile=tile)

    logp = logp_pad[:n]
    b1 = jnp.sum(stats1[:n, 0]) / (n * nheads)
    film1 = jnp.sum(stats1[:n, 1]) / (n * nheads)
    b2 = jnp.sum(stats2[:n, 0]) / n
    film2 = jnp.sum(stats2[:n, 1]) / n
    return logp, b1 + b2, film1 + film2


if __name__ == "__main__":
    N, NFEAT, NHID, NHEADS, NCLASS = 256, 32, 16, 3, 8
    DIM_D, MAX_DEG = 8, 32
    TILE = 128   # -> grid of 2 row tiles (parallel across v7x TensorCores)

    key = jax.random.PRNGKey(0)
    k_feat, k_adj, k_p = jax.random.split(key, 3)

    x = jax.random.normal(k_feat, (N, NFEAT), jnp.float32)
    adj_rand = (jax.random.uniform(k_adj, (N, N)) < 0.05).astype(jnp.float32)
    adj = jnp.maximum(adj_rand, adj_rand.T)
    adj = jnp.maximum(adj, jnp.eye(N, dtype=jnp.float32))            # self-loops
    d = jnp.clip(jnp.sum(adj, axis=1).astype(jnp.int32), 0, MAX_DEG)
    idx = jnp.arange(N, dtype=jnp.int32)
    edge = None

    pkeys = jax.random.split(k_p, NHEADS + 1)
    head_params = [init_debias_params(pkeys[i], NFEAT, NHID, DIM_D)
                   for i in range(NHEADS)]
    out_params = init_debias_params(pkeys[NHEADS], NHID * NHEADS, NCLASS, DIM_D)
    params = pack_dfair_params(head_params, out_params,
                               sinusoidal_pe(MAX_DEG, DIM_D))

    fwd = jax.jit(functools.partial(dfair_gat_forward, tile=TILE))
    logp, b_loss, film_loss = fwd(params, x, adj, d, idx, edge)
    jax.block_until_ready((logp, b_loss, film_loss))

    assert logp.shape == (N, NCLASS)
    assert b_loss.shape == () and film_loss.shape == ()
    assert bool(jnp.all(jnp.isfinite(logp)))
    assert bool(jnp.isfinite(b_loss)) and bool(jnp.isfinite(film_loss))
    # rows of log_softmax must sum (in prob space) to ~1
    assert bool(jnp.allclose(jnp.sum(jnp.exp(logp), axis=1), 1.0, atol=1e-3))
    print("KERNEL_OK")
</pallas_src>

<mosaic_0001>
module attributes {stable_mosaic.version = 11 : i64} {
  func.func @_debias_layer_kernel(%arg0: i32, %arg1: memref<256x32xbf16, #tpu.memory_space<vmem>>, %arg2: memref<128x32xbf16, #tpu.memory_space<vmem>>, %arg3: memref<128x256xi8, #tpu.memory_space<vmem>>, %arg4: memref<128x9xf32, #tpu.memory_space<vmem>>, %arg5: memref<128x1xf32, #tpu.memory_space<vmem>>, %arg6: memref<32x48xbf16, #tpu.memory_space<vmem>>, %arg7: memref<9x96xf32, #tpu.memory_space<vmem>>, %arg8: memref<48x96xf32, #tpu.memory_space<vmem>>, %arg9: memref<6x48xf32, #tpu.memory_space<vmem>>, %arg10: memref<128x48xbf16, #tpu.memory_space<vmem>>, %arg11: memref<128x2xf32, #tpu.memory_space<vmem>>) attributes {dimension_semantics = [#tpu.dimension_semantics<parallel>], iteration_bounds = array<i64: 2>, scalar_prefetch = 0 : i64, scratch_operands = 0 : i64, tpu.core_type = #tpu.core_type<tc>, window_params = [{pipeline_mode = #tpu.pipeline_mode<synchronous>, transform_indices = @transform_0, window_bounds = array<i64: 256, 32>}, {transform_indices = @transform_1, window_bounds = array<i64: 128, 32>}, {transform_indices = @transform_2, window_bounds = array<i64: 128, 256>}, {transform_indices = @transform_3, window_bounds = array<i64: 128, 9>}, {transform_indices = @transform_4, window_bounds = array<i64: 128, 1>}, {pipeline_mode = #tpu.pipeline_mode<synchronous>, transform_indices = @transform_5, window_bounds = array<i64: 32, 48>}, {pipeline_mode = #tpu.pipeline_mode<synchronous>, transform_indices = @transform_6, window_bounds = array<i64: 9, 96>}, {pipeline_mode = #tpu.pipeline_mode<synchronous>, transform_indices = @transform_7, window_bounds = array<i64: 48, 96>}, {pipeline_mode = #tpu.pipeline_mode<synchronous>, transform_indices = @transform_8, window_bounds = array<i64: 6, 48>}, {transform_indices = @transform_9, window_bounds = array<i64: 128, 48>}, {transform_indices = @transform_10, window_bounds = array<i64: 128, 2>}]} {
    %c0 = arith.constant 0 : index
    %c0_0 = arith.constant 0 : index
    %0 = vector.load %arg1[%c0, %c0_0] : memref<256x32xbf16, #tpu.memory_space<vmem>>, vector<256x32xbf16>
    %c0_1 = arith.constant 0 : index
    %c0_2 = arith.constant 0 : index
    %1 = vector.load %arg6[%c0_1, %c0_2] : memref<32x48xbf16, #tpu.memory_space<vmem>>, vector<32x48xbf16>
    %cst = arith.constant dense<0.000000e+00> : vector<256x48xf32>
    %2 = tpu.matmul %0, %1, %cst {dimension_numbers = #tpu.dot_dimension_numbers<[1], [0], [0], [1], [0, 0, 1, 1], [], []>} : vector<256x32xbf16>, vector<32x48xbf16>, vector<256x48xf32> -> vector<256x48xf32>
    %c0_3 = arith.constant 0 : index
    %c0_4 = arith.constant 0 : index
    %3 = vector.load %arg2[%c0_3, %c0_4] : memref<128x32xbf16, #tpu.memory_space<vmem>>, vector<128x32xbf16>
    %c0_5 = arith.constant 0 : index
    %c0_6 = arith.constant 0 : index
    %4 = vector.load %arg6[%c0_5, %c0_6] : memref<32x48xbf16, #tpu.memory_space<vmem>>, vector<32x48xbf16>
    %cst_7 = arith.constant dense<0.000000e+00> : vector<128x48xf32>
    %5 = tpu.matmul %3, %4, %cst_7 {dimension_numbers = #tpu.dot_dimension_numbers<[1], [0], [0], [1], [0, 0, 1, 1], [], []>} : vector<128x32xbf16>, vector<32x48xbf16>, vector<128x48xf32> -> vector<128x48xf32>
    %c0_8 = arith.constant 0 : index
    %c0_9 = arith.constant 0 : index
    %6 = vector.load %arg4[%c0_8, %c0_9] : memref<128x9xf32, #tpu.memory_space<vmem>>, vector<128x9xf32>
    %c0_10 = arith.constant 0 : index
    %c0_11 = arith.constant 0 : index
    %7 = vector.load %arg7[%c0_10, %c0_11] : memref<9x96xf32, #tpu.memory_space<vmem>>, vector<9x96xf32>
    %cst_12 = arith.constant dense<0.000000e+00> : vector<128x96xf32>
    %8 = tpu.matmul %6, %7, %cst_12 {dimension_numbers = #tpu.dot_dimension_numbers<[1], [0], [0], [1], [0, 0, 1, 1], [], []>} : vector<128x9xf32>, vector<9x96xf32>, vector<128x96xf32> -> vector<128x96xf32>
    %9 = vector.extract_strided_slice %8 {offsets = [0, 0], sizes = [128, 48], strides = [1, 1]} : vector<128x96xf32> to vector<128x48xf32>
    %cst_13 = arith.constant 2.000000e-01 : f32
    %10 = vector.broadcast %cst_13 : f32 to vector<128x48xf32>
    %11 = arith.mulf %10, %9 : vector<128x48xf32>
    %12 = arith.maximumf %9, %11 : vector<128x48xf32>
    %13 = vector.extract_strided_slice %8 {offsets = [0, 48], sizes = [128, 48], strides = [1, 1]} : vector<128x96xf32> to vector<128x48xf32>
    %cst_14 = arith.constant 2.000000e-01 : f32
    %14 = vector.broadcast %cst_14 : f32 to vector<128x48xf32>
    %15 = arith.mulf %14, %13 : vector<128x48xf32>
    %16 = arith.maximumf %13, %15 : vector<128x48xf32>
    %c0_15 = arith.constant 0 : index
    %c0_16 = arith.constant 0 : index
    %17 = vector.load %arg9[%c0_15, %c0_16] : memref<6x48xf32, #tpu.memory_space<vmem>>, vector<6x48xf32>
    %18 = vector.extract_strided_slice %17 {offsets = [0, 0], sizes = [3, 48], strides = [1, 1]} : vector<6x48xf32> to vector<3x48xf32>
    %cst_17 = arith.constant dense<0.000000e+00> : vector<128x3xf32>
    %19 = tpu.matmul %5, %18, %cst_17 {dimension_numbers = #tpu.dot_dimension_numbers<[1], [1], [0], [0], [0, 0, 1, 0], [], []>} : vector<128x48xf32>, vector<3x48xf32>, vector<128x3xf32> -> vector<128x3xf32>
    %20 = vector.extract_strided_slice %17 {offsets = [3, 0], sizes = [3, 48], strides = [1, 1]} : vector<6x48xf32> to vector<3x48xf32>
    %cst_18 = arith.constant dense<0.000000e+00> : vector<3x256xf32>
    %21 = tpu.matmul %20, %2, %cst_18 {dimension_numbers = #tpu.dot_dimension_numbers<[1], [1], [0], [0], [0, 0, 1, 0], [], []>} : vector<3x48xf32>, vector<256x48xf32>, vector<3x256xf32> -> vector<3x256xf32>
    %c0_19 = arith.constant 0 : index
    %c0_20 = arith.constant 0 : index
    %22 = vector.load %arg3[%c0_19, %c0_20] : memref<128x256xi8, #tpu.memory_space<vmem>>, vector<128x256xi8>
    %23 = arith.sitofp %22 : vector<128x256xi8> to vector<128x256xf32>
    %24 = vector.extract_strided_slice %19 {offsets = [0, 0], sizes = [128, 1], strides = [1, 1]} : vector<128x3xf32> to vector<128x1xf32>
    %25 = vector.extract_strided_slice %21 {offsets = [0, 0], sizes = [1, 256], strides = [1, 1]} : vector<3x256xf32> to vector<1x256xf32>
    %26 = vector.broadcast %24 : vector<128x1xf32> to vector<128x256xf32>
    %27 = vector.broadcast %25 : vector<1x256xf32> to vector<128x256xf32>
    %28 = arith.addf %26, %27 : vector<128x256xf32>
    %cst_21 = arith.constant 2.000000e-01 : f32
    %29 = vector.broadcast %cst_21 : f32 to vector<128x256xf32>
    %30 = arith.mulf %29, %28 : vector<128x256xf32>
    %31 = arith.maximumf %28, %30 : vector<128x256xf32>
    %cst_22 = arith.constant dense<0xFF800000> : vector<128xf32>
    %32 = vector.multi_reduction <maximumf>, %31, %cst_22 [1] : vector<128x256xf32> to vector<128xf32>
    %33 = vector.shape_cast %32 : vector<128xf32> to vector<128x1xf32>
    %34 = vector.broadcast %33 : vector<128x1xf32> to vector<128x256xf32>
    %35 = arith.subf %31, %34 : vector<128x256xf32>
    %36 = math.exp %35 : vector<128x256xf32>
    %37 = arith.mulf %36, %23 : vector<128x256xf32>
    %cst_23 = arith.constant dense<0.000000e+00> : vector<128xf32>
    %38 = vector.multi_reduction <add>, %37, %cst_23 [1] : vector<128x256xf32> to vector<128xf32>
    %39 = vector.shape_cast %38 : vector<128xf32> to vector<128x1xf32>
    %cst_24 = arith.constant 1.000000e-30 : f32
    %40 = vector.broadcast %cst_24 : f32 to vector<128x1xf32>
    %41 = arith.maximumf %39, %40 : vector<128x1xf32>
    %42 = tpu.reciprocal %41 {approx = true} : vector<128x1xf32> -> vector<128x1xf32>
    %43 = vector.extract_strided_slice %2 {offsets = [0, 0], sizes = [256, 16], strides = [1, 1]} : vector<256x48xf32> to vector<256x16xf32>
    %cst_25 = arith.constant dense<0.000000e+00> : vector<128x16xf32>
    %44 = tpu.matmul %37, %43, %cst_25 {dimension_numbers = #tpu.dot_dimension_numbers<[1], [0], [0], [1], [0, 0, 1, 1], [], []>} : vector<128x256xf32>, vector<256x16xf32>, vector<128x16xf32> -> vector<128x16xf32>
    %45 = vector.broadcast %42 : vector<128x1xf32> to vector<128x16xf32>
    %46 = arith.mulf %44, %45 : vector<128x16xf32>
    %47 = vector.extract_strided_slice %19 {offsets = [0, 1], sizes = [128, 1], strides = [1, 1]} : vector<128x3xf32> to vector<128x1xf32>
    %48 = vector.extract_strided_slice %21 {offsets = [1, 0], sizes = [1, 256], strides = [1, 1]} : vector<3x256xf32> to vector<1x256xf32>
    %49 = vector.broadcast %47 : vector<128x1xf32> to vector<128x256xf32>
    %50 = vector.broadcast %48 : vector<1x256xf32> to vector<128x256xf32>
    %51 = arith.addf %49, %50 : vector<128x256xf32>
    %cst_26 = arith.constant 2.000000e-01 : f32
    %52 = vector.broadcast %cst_26 : f32 to vector<128x256xf32>
    %53 = arith.mulf %52, %51 : vector<128x256xf32>
    %54 = arith.maximumf %51, %53 : vector<128x256xf32>
    %cst_27 = arith.constant dense<0xFF800000> : vector<128xf32>
    %55 = vector.multi_reduction <maximumf>, %54, %cst_27 [1] : vector<128x256xf32> to vector<128xf32>
    %56 = vector.shape_cast %55 : vector<128xf32> to vector<128x1xf32>
    %57 = vector.broadcast %56 : vector<128x1xf32> to vector<128x256xf32>
    %58 = arith.subf %54, %57 : vector<128x256xf32>
    %59 = math.exp %58 : vector<128x256xf32>
    %60 = arith.mulf %59, %23 : vector<128x256xf32>
    %cst_28 = arith.constant dense<0.000000e+00> : vector<128xf32>
    %61 = vector.multi_reduction <add>, %60, %cst_28 [1] : vector<128x256xf32> to vector<128xf32>
    %62 = vector.shape_cast %61 : vector<128xf32> to vector<128x1xf32>
    %cst_29 = arith.constant 1.000000e-30 : f32
    %63 = vector.broadcast %cst_29 : f32 to vector<128x1xf32>
    %64 = arith.maximumf %62, %63 : vector<128x1xf32>
    %65 = tpu.reciprocal %64 {approx = true} : vector<128x1xf32> -> vector<128x1xf32>
    %66 = vector.extract_strided_slice %2 {offsets = [0, 16], sizes = [256, 16], strides = [1, 1]} : vector<256x48xf32> to vector<256x16xf32>
    %cst_30 = arith.constant dense<0.000000e+00> : vector<128x16xf32>
    %67 = tpu.matmul %60, %66, %cst_30 {dimension_numbers = #tpu.dot_dimension_numbers<[1], [0], [0], [1], [0, 0, 1, 1], [], []>} : vector<128x256xf32>, vector<256x16xf32>, vector<128x16xf32> -> vector<128x16xf32>
    %68 = vector.broadcast %65 : vector<128x1xf32> to vector<128x16xf32>
    %69 = arith.mulf %67, %68 : vector<128x16xf32>
    %70 = vector.extract_strided_slice %19 {offsets = [0, 2], sizes = [128, 1], strides = [1, 1]} : vector<128x3xf32> to vector<128x1xf32>
    %71 = vector.extract_strided_slice %21 {offsets = [2, 0], sizes = [1, 256], strides = [1, 1]} : vector<3x256xf32> to vector<1x256xf32>
    %72 = vector.broadcast %70 : vector<128x1xf32> to vector<128x256xf32>
    %73 = vector.broadcast %71 : vector<1x256xf32> to vector<128x256xf32>
    %74 = arith.addf %72, %73 : vector<128x256xf32>
    %cst_31 = arith.constant 2.000000e-01 : f32
    %75 = vector.broadcast %cst_31 : f32 to vector<128x256xf32>
    %76 = arith.mulf %75, %74 : vector<128x256xf32>
    %77 = arith.maximumf %74, %76 : vector<128x256xf32>
    %cst_32 = arith.constant dense<0xFF800000> : vector<128xf32>
    %78 = vector.multi_reduction <maximumf>, %77, %cst_32 [1] : vector<128x256xf32> to vector<128xf32>
    %79 = vector.shape_cast %78 : vector<128xf32> to vector<128x1xf32>
    %80 = vector.broadcast %79 : vector<128x1xf32> to vector<128x256xf32>
    %81 = arith.subf %77, %80 : vector<128x256xf32>
    %82 = math.exp %81 : vector<128x256xf32>
    %83 = arith.mulf %82, %23 : vector<128x256xf32>
    %cst_33 = arith.constant dense<0.000000e+00> : vector<128xf32>
    %84 = vector.multi_reduction <add>, %83, %cst_33 [1] : vector<128x256xf32> to vector<128xf32>
    %85 = vector.shape_cast %84 : vector<128xf32> to vector<128x1xf32>
    %cst_34 = arith.constant 1.000000e-30 : f32
    %86 = vector.broadcast %cst_34 : f32 to vector<128x1xf32>
    %87 = arith.maximumf %85, %86 : vector<128x1xf32>
    %88 = tpu.reciprocal %87 {approx = true} : vector<128x1xf32> -> vector<128x1xf32>
    %89 = vector.extract_strided_slice %2 {offsets = [0, 32], sizes = [256, 16], strides = [1, 1]} : vector<256x48xf32> to vector<256x16xf32>
    %cst_35 = arith.constant dense<0.000000e+00> : vector<128x16xf32>
    %90 = tpu.matmul %83, %89, %cst_35 {dimension_numbers = #tpu.dot_dimension_numbers<[1], [0], [0], [1], [0, 0, 1, 1], [], []>} : vector<128x256xf32>, vector<256x16xf32>, vector<128x16xf32> -> vector<128x16xf32>
    %91 = vector.broadcast %88 : vector<128x1xf32> to vector<128x16xf32>
    %92 = arith.mulf %90, %91 : vector<128x16xf32>
    %93 = tpu.concatenate %46, %69, %92 in 1 : vector<128x16xf32>, vector<128x16xf32>, vector<128x16xf32> -> vector<128x48xf32>
    %94 = arith.mulf %12, %93 : vector<128x48xf32>
    %95 = arith.addf %94, %16 : vector<128x48xf32>
    %c0_36 = arith.constant 0 : index
    %c0_37 = arith.constant 0 : index
    %96 = vector.load %arg8[%c0_36, %c0_37] : memref<48x96xf32, #tpu.memory_space<vmem>>, vector<48x96xf32>
    %cst_38 = arith.constant dense<0.000000e+00> : vector<128x96xf32>
    %97 = tpu.matmul %95, %96, %cst_38 {dimension_numbers = #tpu.dot_dimension_numbers<[1], [0], [0], [1], [0, 0, 1, 1], [], []>} : vector<128x48xf32>, vector<48x96xf32>, vector<128x96xf32> -> vector<128x96xf32>
    %98 = vector.extract_strided_slice %97 {offsets = [0, 0], sizes = [128, 48], strides = [1, 1]} : vector<128x96xf32> to vector<128x48xf32>
    %99 = vector.extract_strided_slice %97 {offsets = [0, 48], sizes = [128, 48], strides = [1, 1]} : vector<128x96xf32> to vector<128x48xf32>
    %100 = arith.subf %93, %99 : vector<128x48xf32>
    %c0_39 = arith.constant 0 : index
    %c0_40 = arith.constant 0 : index
    %101 = vector.load %arg5[%c0_39, %c0_40] : memref<128x1xf32, #tpu.memory_space<vmem>>, vector<128x1xf32>
    %102 = arith.addf %98, %99 : vector<128x48xf32>
    %103 = vector.broadcast %101 : vector<128x1xf32> to vector<128x48xf32>
    %104 = arith.mulf %103, %102 : vector<128x48xf32>
    %105 = arith.addf %100, %104 : vector<128x48xf32>
    %106 = arith.truncf %105 : vector<128x48xf32> to vector<128x48xbf16>
    %c0_41 = arith.constant 0 : index
    %c0_42 = arith.constant 0 : index
    %107 = vector.load %arg10[%c0_41, %c0_42] : memref<128x48xbf16, #tpu.memory_space<vmem>>, vector<128x48xbf16>
    tpu.vector_store %arg10[%c0_41, %c0_42], %106 {strides = array<i32>} : memref<128x48xbf16, #tpu.memory_space<vmem>>, vector<128x48xbf16>,
    %108 = arith.mulf %98, %98 : vector<128x48xf32>
    %109 = arith.mulf %99, %99 : vector<128x48xf32>
    %110 = arith.addf %108, %109 : vector<128x48xf32>
    %cst_43 = arith.constant dense<0.000000e+00> : vector<128xf32>
    %111 = vector.multi_reduction <add>, %110, %cst_43 [1] : vector<128x48xf32> to vector<128xf32>
    %112 = vector.shape_cast %111 : vector<128xf32> to vector<128x1xf32>
    %113 = arith.mulf %12, %12 : vector<128x48xf32>
    %114 = arith.mulf %16, %16 : vector<128x48xf32>
    %115 = arith.addf %113, %114 : vector<128x48xf32>
    %cst_44 = arith.constant dense<0.000000e+00> : vector<128xf32>
    %116 = vector.multi_reduction <add>, %115, %cst_44 [1] : vector<128x48xf32> to vector<128xf32>
    %117 = vector.shape_cast %116 : vector<128xf32> to vector<128x1xf32>
    %118 = tpu.concatenate %112, %117 in 1 : vector<128x1xf32>, vector<128x1xf32> -> vector<128x2xf32>
    %c0_45 = arith.constant 0 : index
    %c0_46 = arith.constant 0 : index
    %119 = vector.load %arg11[%c0_45, %c0_46] : memref<128x2xf32, #tpu.memory_space<vmem>>, vector<128x2xf32>
    tpu.vector_store %arg11[%c0_45, %c0_46], %118 {strides = array<i32>} : memref<128x2xf32, #tpu.memory_space<vmem>>, vector<128x2xf32>,
    return
  }
  func.func @transform_0(%arg0: i32) -> (i32, i32) {
    %c0_i32 = arith.constant 0 : i32
    %c0_i32_0 = arith.constant 0 : i32
    %c0_i32_1 = arith.constant 0 : i32
    return %c0_i32, %c0_i32_0 : i32, i32
  }
  func.func @transform_1(%arg0: i32) -> (i32, i32) {
    %c0_i32 = arith.constant 0 : i32
    %c0_i32_0 = arith.constant 0 : i32
    return %arg0, %c0_i32 : i32, i32
  }
  func.func @transform_2(%arg0: i32) -> (i32, i32) {
    %c0_i32 = arith.constant 0 : i32
    %c0_i32_0 = arith.constant 0 : i32
    return %arg0, %c0_i32 : i32, i32
  }
  func.func @transform_3(%arg0: i32) -> (i32, i32) {
    %c0_i32 = arith.constant 0 : i32
    %c0_i32_0 = arith.constant 0 : i32
    return %arg0, %c0_i32 : i32, i32
  }
  func.func @transform_4(%arg0: i32) -> (i32, i32) {
    %c0_i32 = arith.constant 0 : i32
    %c0_i32_0 = arith.constant 0 : i32
    return %arg0, %c0_i32 : i32, i32
  }
  func.func @transform_5(%arg0: i32) -> (i32, i32) {
    %c0_i32 = arith.constant 0 : i32
    %c0_i32_0 = arith.constant 0 : i32
    %c0_i32_1 = arith.constant 0 : i32
    return %c0_i32, %c0_i32_0 : i32, i32
  }
  func.func @transform_6(%arg0: i32) -> (i32, i32) {
    %c0_i32 = arith.constant 0 : i32
    %c0_i32_0 = arith.constant 0 : i32
    %c0_i32_1 = arith.constant 0 : i32
    return %c0_i32, %c0_i32_0 : i32, i32
  }
  func.func @transform_7(%arg0: i32) -> (i32, i32) {
    %c0_i32 = arith.constant 0 : i32
    %c0_i32_0 = arith.constant 0 : i32
    %c0_i32_1 = arith.constant 0 : i32
    return %c0_i32, %c0_i32_0 : i32, i32
  }
  func.func @transform_8(%arg0: i32) -> (i32, i32) {
    %c0_i32 = arith.constant 0 : i32
    %c0_i32_0 = arith.constant 0 : i32
    %c0_i32_1 = arith.constant 0 : i32
    return %c0_i32, %c0_i32_0 : i32, i32
  }
  func.func @transform_9(%arg0: i32) -> (i32, i32) {
    %c0_i32 = arith.constant 0 : i32
    %c0_i32_0 = arith.constant 0 : i32
    return %arg0, %c0_i32 : i32, i32
  }
  func.func @transform_10(%arg0: i32) -> (i32, i32) {
    %c0_i32 = arith.constant 0 : i32
    %c0_i32_0 = arith.constant 0 : i32
    return %arg0, %c0_i32 : i32, i32
  }
}

module attributes {stable_mosaic.version = 11 : i64} {
  func.func @_debias_layer_kernel(%arg0: i32, %arg1: memref<256x48xbf16, #tpu.memory_space<vmem>>, %arg2: memref<128x48xbf16, #tpu.memory_space<vmem>>, %arg3: memref<128x256xi8, #tpu.memory_space<vmem>>, %arg4: memref<128x9xf32, #tpu.memory_space<vmem>>, %arg5: memref<128x1xf32, #tpu.memory_space<vmem>>, %arg6: memref<48x8xbf16, #tpu.memory_space<vmem>>, %arg7: memref<9x16xf32, #tpu.memory_space<vmem>>, %arg8: memref<8x16xf32, #tpu.memory_space<vmem>>, %arg9: memref<2x8xf32, #tpu.memory_space<vmem>>, %arg10: memref<128x8xf32, #tpu.memory_space<vmem>>, %arg11: memref<128x2xf32, #tpu.memory_space<vmem>>) attributes {dimension_semantics = [#tpu.dimension_semantics<parallel>], iteration_bounds = array<i64: 2>, scalar_prefetch = 0 : i64, scratch_operands = 0 : i64, tpu.core_type = #tpu.core_type<tc>, window_params = [{pipeline_mode = #tpu.pipeline_mode<synchronous>, transform_indices = @transform_0, window_bounds = array<i64: 256, 48>}, {transform_indices = @transform_1, window_bounds = array<i64: 128, 48>}, {transform_indices = @transform_2, window_bounds = array<i64: 128, 256>}, {transform_indices = @transform_3, window_bounds = array<i64: 128, 9>}, {transform_indices = @transform_4, window_bounds = array<i64: 128, 1>}, {pipeline_mode = #tpu.pipeline_mode<synchronous>, transform_indices = @transform_5, window_bounds = array<i64: 48, 8>}, {pipeline_mode = #tpu.pipeline_mode<synchronous>, transform_indices = @transform_6, window_bounds = array<i64: 9, 16>}, {pipeline_mode = #tpu.pipeline_mode<synchronous>, transform_indices = @transform_7, window_bounds = array<i64: 8, 16>}, {pipeline_mode = #tpu.pipeline_mode<synchronous>, transform_indices = @transform_8, window_bounds = array<i64: 2, 8>}, {transform_indices = @transform_9, window_bounds = array<i64: 128, 8>}, {transform_indices = @transform_10, window_bounds = array<i64: 128, 2>}]} {
    %c0 = arith.constant 0 : index
    %c0_0 = arith.constant 0 : index
    %0 = vector.load %arg1[%c0, %c0_0] : memref<256x48xbf16, #tpu.memory_space<vmem>>, vector<256x48xbf16>
    %c0_1 = arith.constant 0 : index
    %c0_2 = arith.constant 0 : index
    %1 = vector.load %arg6[%c0_1, %c0_2] : memref<48x8xbf16, #tpu.memory_space<vmem>>, vector<48x8xbf16>
    %cst = arith.constant dense<0.000000e+00> : vector<256x8xf32>
    %2 = tpu.matmul %0, %1, %cst {dimension_numbers = #tpu.dot_dimension_numbers<[1], [0], [0], [1], [0, 0, 1, 1], [], []>} : vector<256x48xbf16>, vector<48x8xbf16>, vector<256x8xf32> -> vector<256x8xf32>
    %c0_3 = arith.constant 0 : index
    %c0_4 = arith.constant 0 : index
    %3 = vector.load %arg2[%c0_3, %c0_4] : memref<128x48xbf16, #tpu.memory_space<vmem>>, vector<128x48xbf16>
    %c0_5 = arith.constant 0 : index
    %c0_6 = arith.constant 0 : index
    %4 = vector.load %arg6[%c0_5, %c0_6] : memref<48x8xbf16, #tpu.memory_space<vmem>>, vector<48x8xbf16>
    %cst_7 = arith.constant dense<0.000000e+00> : vector<128x8xf32>
    %5 = tpu.matmul %3, %4, %cst_7 {dimension_numbers = #tpu.dot_dimension_numbers<[1], [0], [0], [1], [0, 0, 1, 1], [], []>} : vector<128x48xbf16>, vector<48x8xbf16>, vector<128x8xf32> -> vector<128x8xf32>
    %c0_8 = arith.constant 0 : index
    %c0_9 = arith.constant 0 : index
    %6 = vector.load %arg4[%c0_8, %c0_9] : memref<128x9xf32, #tpu.memory_space<vmem>>, vector<128x9xf32>
    %c0_10 = arith.constant 0 : index
    %c0_11 = arith.constant 0 : index
    %7 = vector.load %arg7[%c0_10, %c0_11] : memref<9x16xf32, #tpu.memory_space<vmem>>, vector<9x16xf32>
    %cst_12 = arith.constant dense<0.000000e+00> : vector<128x16xf32>
    %8 = tpu.matmul %6, %7, %cst_12 {dimension_numbers = #tpu.dot_dimension_numbers<[1], [0], [0], [1], [0, 0, 1, 1], [], []>} : vector<128x9xf32>, vector<9x16xf32>, vector<128x16xf32> -> vector<128x16xf32>
    %9 = vector.extract_strided_slice %8 {offsets = [0, 0], sizes = [128, 8], strides = [1, 1]} : vector<128x16xf32> to vector<128x8xf32>
    %cst_13 = arith.constant 2.000000e-01 : f32
    %10 = vector.broadcast %cst_13 : f32 to vector<128x8xf32>
    %11 = arith.mulf %10, %9 : vector<128x8xf32>
    %12 = arith.maximumf %9, %11 : vector<128x8xf32>
    %13 = vector.extract_strided_slice %8 {offsets = [0, 8], sizes = [128, 8], strides = [1, 1]} : vector<128x16xf32> to vector<128x8xf32>
    %cst_14 = arith.constant 2.000000e-01 : f32
    %14 = vector.broadcast %cst_14 : f32 to vector<128x8xf32>
    %15 = arith.mulf %14, %13 : vector<128x8xf32>
    %16 = arith.maximumf %13, %15 : vector<128x8xf32>
    %c0_15 = arith.constant 0 : index
    %c0_16 = arith.constant 0 : index
    %17 = vector.load %arg9[%c0_15, %c0_16] : memref<2x8xf32, #tpu.memory_space<vmem>>, vector<2x8xf32>
    %18 = vector.extract_strided_slice %17 {offsets = [0, 0], sizes = [1, 8], strides = [1, 1]} : vector<2x8xf32> to vector<1x8xf32>
    %cst_17 = arith.constant dense<0.000000e+00> : vector<128x1xf32>
    %19 = tpu.matmul %5, %18, %cst_17 {dimension_numbers = #tpu.dot_dimension_numbers<[1], [1], [0], [0], [0, 0, 1, 0], [], []>} : vector<128x8xf32>, vector<1x8xf32>, vector<128x1xf32> -> vector<128x1xf32>
    %20 = vector.extract_strided_slice %17 {offsets = [1, 0], sizes = [1, 8], strides = [1, 1]} : vector<2x8xf32> to vector<1x8xf32>
    %cst_18 = arith.constant dense<0.000000e+00> : vector<1x256xf32>
    %21 = tpu.matmul %20, %2, %cst_18 {dimension_numbers = #tpu.dot_dimension_numbers<[1], [1], [0], [0], [0, 0, 1, 0], [], []>} : vector<1x8xf32>, vector<256x8xf32>, vector<1x256xf32> -> vector<1x256xf32>
    %c0_19 = arith.constant 0 : index
    %c0_20 = arith.constant 0 : index
    %22 = vector.load %arg3[%c0_19, %c0_20] : memref<128x256xi8, #tpu.memory_space<vmem>>, vector<128x256xi8>
    %23 = arith.sitofp %22 : vector<128x256xi8> to vector<128x256xf32>
    %24 = vector.broadcast %19 : vector<128x1xf32> to vector<128x256xf32>
    %25 = vector.broadcast %21 : vector<1x256xf32> to vector<128x256xf32>
    %26 = arith.addf %24, %25 : vector<128x256xf32>
    %cst_21 = arith.constant 2.000000e-01 : f32
    %27 = vector.broadcast %cst_21 : f32 to vector<128x256xf32>
    %28 = arith.mulf %27, %26 : vector<128x256xf32>
    %29 = arith.maximumf %26, %28 : vector<128x256xf32>
    %cst_22 = arith.constant dense<0xFF800000> : vector<128xf32>
    %30 = vector.multi_reduction <maximumf>, %29, %cst_22 [1] : vector<128x256xf32> to vector<128xf32>
    %31 = vector.shape_cast %30 : vector<128xf32> to vector<128x1xf32>
    %32 = vector.broadcast %31 : vector<128x1xf32> to vector<128x256xf32>
    %33 = arith.subf %29, %32 : vector<128x256xf32>
    %34 = math.exp %33 : vector<128x256xf32>
    %35 = arith.mulf %34, %23 : vector<128x256xf32>
    %cst_23 = arith.constant dense<0.000000e+00> : vector<128xf32>
    %36 = vector.multi_reduction <add>, %35, %cst_23 [1] : vector<128x256xf32> to vector<128xf32>
    %37 = vector.shape_cast %36 : vector<128xf32> to vector<128x1xf32>
    %cst_24 = arith.constant 1.000000e-30 : f32
    %38 = vector.broadcast %cst_24 : f32 to vector<128x1xf32>
    %39 = arith.maximumf %37, %38 : vector<128x1xf32>
    %40 = tpu.reciprocal %39 {approx = true} : vector<128x1xf32> -> vector<128x1xf32>
    %cst_25 = arith.constant dense<0.000000e+00> : vector<128x8xf32>
    %41 = tpu.matmul %35, %2, %cst_25 {dimension_numbers = #tpu.dot_dimension_numbers<[1], [0], [0], [1], [0, 0, 1, 1], [], []>} : vector<128x256xf32>, vector<256x8xf32>, vector<128x8xf32> -> vector<128x8xf32>
    %42 = vector.broadcast %40 : vector<128x1xf32> to vector<128x8xf32>
    %43 = arith.mulf %41, %42 : vector<128x8xf32>
    %44 = arith.mulf %12, %43 : vector<128x8xf32>
    %45 = arith.addf %44, %16 : vector<128x8xf32>
    %c0_26 = arith.constant 0 : index
    %c0_27 = arith.constant 0 : index
    %46 = vector.load %arg8[%c0_26, %c0_27] : memref<8x16xf32, #tpu.memory_space<vmem>>, vector<8x16xf32>
    %cst_28 = arith.constant dense<0.000000e+00> : vector<128x16xf32>
    %47 = tpu.matmul %45, %46, %cst_28 {dimension_numbers = #tpu.dot_dimension_numbers<[1], [0], [0], [1], [0, 0, 1, 1], [], []>} : vector<128x8xf32>, vector<8x16xf32>, vector<128x16xf32> -> vector<128x16xf32>
    %48 = vector.extract_strided_slice %47 {offsets = [0, 0], sizes = [128, 8], strides = [1, 1]} : vector<128x16xf32> to vector<128x8xf32>
    %49 = vector.extract_strided_slice %47 {offsets = [0, 8], sizes = [128, 8], strides = [1, 1]} : vector<128x16xf32> to vector<128x8xf32>
    %50 = arith.subf %43, %49 : vector<128x8xf32>
    %c0_29 = arith.constant 0 : index
    %c0_30 = arith.constant 0 : index
    %51 = vector.load %arg5[%c0_29, %c0_30] : memref<128x1xf32, #tpu.memory_space<vmem>>, vector<128x1xf32>
    %52 = arith.addf %48, %49 : vector<128x8xf32>
    %53 = vector.broadcast %51 : vector<128x1xf32> to vector<128x8xf32>
    %54 = arith.mulf %53, %52 : vector<128x8xf32>
    %55 = arith.addf %50, %54 : vector<128x8xf32>
    %cst_31 = arith.constant dense<0xFF800000> : vector<128xf32>
    %56 = vector.multi_reduction <maximumf>, %55, %cst_31 [1] : vector<128x8xf32> to vector<128xf32>
    %57 = vector.shape_cast %56 : vector<128xf32> to vector<128x1xf32>
    %58 = vector.broadcast %57 : vector<128x1xf32> to vector<128x8xf32>
    %59 = arith.subf %55, %58 : vector<128x8xf32>
    %60 = math.exp %59 : vector<128x8xf32>
    %cst_32 = arith.constant dense<0.000000e+00> : vector<128xf32>
    %61 = vector.multi_reduction <add>, %60, %cst_32 [1] : vector<128x8xf32> to vector<128xf32>
    %62 = vector.shape_cast %61 : vector<128xf32> to vector<128x1xf32>
    %63 = math.log %62 : vector<128x1xf32>
    %64 = vector.broadcast %63 : vector<128x1xf32> to vector<128x8xf32>
    %65 = arith.subf %59, %64 : vector<128x8xf32>
    %c0_33 = arith.constant 0 : index
    %c0_34 = arith.constant 0 : index
    %66 = vector.load %arg10[%c0_33, %c0_34] : memref<128x8xf32, #tpu.memory_space<vmem>>, vector<128x8xf32>
    tpu.vector_store %arg10[%c0_33, %c0_34], %65 {strides = array<i32>} : memref<128x8xf32, #tpu.memory_space<vmem>>, vector<128x8xf32>,
    %67 = arith.mulf %48, %48 : vector<128x8xf32>
    %68 = arith.mulf %49, %49 : vector<128x8xf32>
    %69 = arith.addf %67, %68 : vector<128x8xf32>
    %cst_35 = arith.constant dense<0.000000e+00> : vector<128xf32>
    %70 = vector.multi_reduction <add>, %69, %cst_35 [1] : vector<128x8xf32> to vector<128xf32>
    %71 = vector.shape_cast %70 : vector<128xf32> to vector<128x1xf32>
    %72 = arith.mulf %12, %12 : vector<128x8xf32>
    %73 = arith.mulf %16, %16 : vector<128x8xf32>
    %74 = arith.addf %72, %73 : vector<128x8xf32>
    %cst_36 = arith.constant dense<0.000000e+00> : vector<128xf32>
    %75 = vector.multi_reduction <add>, %74, %cst_36 [1] : vector<128x8xf32> to vector<128xf32>
    %76 = vector.shape_cast %75 : vector<128xf32> to vector<128x1xf32>
    %77 = tpu.concatenate %71, %76 in 1 : vector<128x1xf32>, vector<128x1xf32> -> vector<128x2xf32>
    %c0_37 = arith.constant 0 : index
    %c0_38 = arith.constant 0 : index
    %78 = vector.load %arg11[%c0_37, %c0_38] : memref<128x2xf32, #tpu.memory_space<vmem>>, vector<128x2xf32>
    tpu.vector_store %arg11[%c0_37, %c0_38], %77 {strides = array<i32>} : memref<128x2xf32, #tpu.memory_space<vmem>>, vector<128x2xf32>,
    return
  }
  func.func @transform_0(%arg0: i32) -> (i32, i32) {
    %c0_i32 = arith.constant 0 : i32
    %c0_i32_0 = arith.constant 0 : i32
    %c0_i32_1 = arith.constant 0 : i32
    return %c0_i32, %c0_i32_0 : i32, i32
  }
  func.func @transform_1(%arg0: i32) -> (i32, i32) {
    %c0_i32 = arith.constant 0 : i32
    %c0_i32_0 = arith.constant 0 : i32
    return %arg0, %c0_i32 : i32, i32
  }
  func.func @transform_2(%arg0: i32) -> (i32, i32) {
    %c0_i32 = arith.constant 0 : i32
    %c0_i32_0 = arith.constant 0 : i32
    return %arg0, %c0_i32 : i32, i32
  }
  func.func @transform_3(%arg0: i32) -> (i32, i32) {
    %c0_i32 = arith.constant 0 : i32
    %c0_i32_0 = arith.constant 0 : i32
    return %arg0, %c0_i32 : i32, i32
  }
  func.func @transform_4(%arg0: i32) -> (i32, i32) {
    %c0_i32 = arith.constant 0 : i32
    %c0_i32_0 = arith.constant 0 : i32
    return %arg0, %c0_i32 : i32, i32
  }
  func.func @transform_5(%arg0: i32) -> (i32, i32) {
    %c0_i32 = arith.constant 0 : i32
    %c0_i32_0 = arith.constant 0 : i32
    %c0_i32_1 = arith.constant 0 : i32
    return %c0_i32, %c0_i32_0 : i32, i32
  }
  func.func @transform_6(%arg0: i32) -> (i32, i32) {
    %c0_i32 = arith.constant 0 : i32
    %c0_i32_0 = arith.constant 0 : i32
    %c0_i32_1 = arith.constant 0 : i32
    return %c0_i32, %c0_i32_0 : i32, i32
  }
  func.func @transform_7(%arg0: i32) -> (i32, i32) {
    %c0_i32 = arith.constant 0 : i32
    %c0_i32_0 = arith.constant 0 : i32
    %c0_i32_1 = arith.constant 0 : i32
    return %c0_i32, %c0_i32_0 : i32, i32
  }
  func.func @transform_8(%arg0: i32) -> (i32, i32) {
    %c0_i32 = arith.constant 0 : i32
    %c0_i32_0 = arith.constant 0 : i32
    %c0_i32_1 = arith.constant 0 : i32
    return %c0_i32, %c0_i32_0 : i32, i32
  }
  func.func @transform_9(%arg0: i32) -> (i32, i32) {
    %c0_i32 = arith.constant 0 : i32
    %c0_i32_0 = arith.constant 0 : i32
    return %arg0, %c0_i32 : i32, i32
  }
  func.func @transform_10(%arg0: i32) -> (i32, i32) {
    %c0_i32 = arith.constant 0 : i32
    %c0_i32_0 = arith.constant 0 : i32
    return %arg0, %c0_i32 : i32, i32
  }
}

</mosaic_0001>

<llo_original>
// kernel: dfair_gat_forward.3
$region0: #{dfair_gat_forward.3}
  #allocation0 [shape = 'u32[]', space=smem, size = 0x4, offset = 0x4, fixed_abs, tag = 'smem constant byte address 0x4 - core index']
  #allocation1 [shape = 'u32[144,128]{1,0:T(1,128)}', space=vmem, size = 0x12000, scoped, tag = 'internal scratch']
  %s0 = inlined_call_operand.vmem [shape: bf16[256,48], index: 0, kind: input, shape index: {}, may-alias: {0,1}]
  %s1 = inlined_call_operand.vmem [shape: bf16[256,48], index: 1, kind: input, shape index: {}, may-alias: {0,1}]
  %s2 = inlined_call_operand.vmem [shape: s8[256,256], index: 2, kind: input, shape index: {}]
  %s3 = inlined_call_operand.vmem [shape: f32[256,9], index: 3, kind: input, shape index: {}]
  %s4 = inlined_call_operand.vmem [shape: f32[256,1], index: 4, kind: input, shape index: {}]
  %s5 = inlined_call_operand.vmem [shape: bf16[48,8], index: 5, kind: input, shape index: {}]
  %s6 = inlined_call_operand.vmem [shape: f32[9,16], index: 6, kind: input, shape index: {}]
  %s7 = inlined_call_operand.vmem [shape: f32[8,16], index: 7, kind: input, shape index: {}]
  %s8 = inlined_call_operand.vmem [shape: f32[2,8], index: 8, kind: input, shape index: {}]
  %s9 = inlined_call_operand.vmem [shape: f32[256,8], index: 9, kind: output, shape index: {0}]
  %s10 = inlined_call_operand.vmem [shape: f32[256,2], index: 10, kind: output, shape index: {1}]
  %11 = xla_tuple %s9, %s10
  %s12 = sld [smem:[#allocation0]]
  $region77: #{dfair_gat_forward.3} parent=0
    _
  %s14 = ssub.s32 1, %s12
  %s15 = scalar_select 0, %s14, %s12
  loop: start=0, step=1, limit=4
  $region2: #{dfair_gat_forward.3} parent=0 // loop_pre_header
    _
  $region3: #{dfair_gat_forward.3} parent=0 // loop_header
    %s17 = sphi 0, %s21
    %p18 = scmp.ge.s32.totalorder %s17, 4
    %s25 = sphi 0, %s25
    %s27 = sphi 0, %s25
    %s28 = sphi 0, %s27
    %s42 = sphi 0, %s28
    %s48 = sphi 0, %s50
    %s51 = sphi 0, %s48
    %s52 = sphi 0, %s51
    %s68 = sphi 0, %s52
    %s74 = sphi 0, %s76
    %s77 = sphi 0, %s74
    %s78 = sphi 0, %s77
    %s94 = sphi 0, %s78
    %s100 = sphi 0, %s102
    %s103 = sphi 0, %s100
    %s104 = sphi 0, %s103
    %s120 = sphi 0, %s104
    %s126 = sphi 0, %s128
    %s129 = sphi 0, %s126
    %s130 = sphi 0, %s129
    %s146 = sphi 0, %s130
    %s150 = sphi 0, %s150
    %s152 = sphi 0, %s150
    %s153 = sphi 0, %s152
    %s167 = sphi 0, %s153
    %s171 = sphi 0, %s171
    %s173 = sphi 0, %s171
    %s174 = sphi 0, %s173
    %s188 = sphi 0, %s174
    %s192 = sphi 0, %s192
    %s194 = sphi 0, %s192
    %s195 = sphi 0, %s194
    %s209 = sphi 0, %s195
    %s213 = sphi 0, %s213
    %s215 = sphi 0, %s213
    %s216 = sphi 0, %s215
    %s230 = sphi 0, %s216
    %s236 = sphi 0, %s238
    %s239 = sphi 0, %s236
    %s240 = sphi 0, %s239
    %s256 = sphi 0, %s240
    %s262 = sphi 0, %s264
    %s265 = sphi 0, %s262
    %s266 = sphi 0, %s265
    %s282 = sphi 0, %s266
  $region4: #{dfair_gat_forward.3} parent=0 // loop_header_branch
    %20 = sbr.rel (%p18) target = $region8
  $region5: #{dfair_gat_forward.3} parent=0 // loop_body
    %s22 = ssub.s32 %s17, 1
    %s23 = ssub.s32 %s17, 2
    %s24 = sadd.s32 %s17, 1
    %s26 = sadd.s32 %s25, 1
    %p29 = scmp.eq.s32.totalorder %s17, 1
    %p30 = scmp.ne.s32.totalorder %s25, %s27
    %p31 = scmp.eq.s32.totalorder %s17, 0
    %p32 = por %p30, %p31
    %p33 = scmp.ne.s32.totalorder %s25, %s27
    %p34 = scmp.eq.s32.totalorder %s22, 1
    %p35 = por %p33, %p34
    %p36 = scmp.ne.s32.totalorder %s27, %s28
    %p37 = scmp.eq.s32.totalorder %s22, 0
    %p38 = por %p36, %p37
    %p39 = scmp.ne.s32.totalorder %s27, %s28
    %p40 = scmp.eq.s32.totalorder %s23, 1
    %p41 = por %p39, %p40
    %p43 = scmp.ne.s32.totalorder %s28, %s42
    %p44 = scmp.eq.s32.totalorder %s23, 0
    %p45 = por %p43, %p44
    %s46 = ssub.s32 %s17, %s24
    %p47 = scmp.eq.s32.totalorder %s46, 0
    %s49 = sadd.s32 %s48, 1
    %s50 = scalar_select %p47, %s48, %s49
    %p53 = pneg %p47
    %p54 = scmp.eq.s32.totalorder %s17, 1
    %p55 = por %p53, %p54
    %p56 = scmp.ne.s32.totalorder %s48, %s51
    %p57 = scmp.eq.s32.totalorder %s17, 0
    %p58 = por %p56, %p57
    %p59 = scmp.ne.s32.totalorder %s48, %s51
    %p60 = scmp.eq.s32.totalorder %s22, 1
    %p61 = por %p59, %p60
    %p62 = scmp.ne.s32.totalorder %s51, %s52
    %p63 = scmp.eq.s32.totalorder %s22, 0
    %p64 = por %p62, %p63
    %p65 = scmp.ne.s32.totalorder %s51, %s52
    %p66 = scmp.eq.s32.totalorder %s23, 1
    %p67 = por %p65, %p66
    %p69 = scmp.ne.s32.totalorder %s52, %s68
    %p70 = scmp.eq.s32.totalorder %s23, 0
    %p71 = por %p69, %p70
    %s72 = ssub.s32 %s17, %s24
    %p73 = scmp.eq.s32.totalorder %s72, 0
    %s75 = sadd.s32 %s74, 1
    %s76 = scalar_select %p73, %s74, %s75
    %p79 = pneg %p73
    %p80 = scmp.eq.s32.totalorder %s17, 1
    %p81 = por %p79, %p80
    %p82 = scmp.ne.s32.totalorder %s74, %s77
    %p83 = scmp.eq.s32.totalorder %s17, 0
    %p84 = por %p82, %p83
    %p85 = scmp.ne.s32.totalorder %s74, %s77
    %p86 = scmp.eq.s32.totalorder %s22, 1
    %p87 = por %p85, %p86
    %p88 = scmp.ne.s32.totalorder %s77, %s78
    %p89 = scmp.eq.s32.totalorder %s22, 0
    %p90 = por %p88, %p89
    %p91 = scmp.ne.s32.totalorder %s77, %s78
    %p92 = scmp.eq.s32.totalorder %s23, 1
    %p93 = por %p91, %p92
    %p95 = scmp.ne.s32.totalorder %s78, %s94
    %p96 = scmp.eq.s32.totalorder %s23, 0
    %p97 = por %p95, %p96
    %s98 = ssub.s32 %s17, %s24
    %p99 = scmp.eq.s32.totalorder %s98, 0
    %s101 = sadd.s32 %s100, 1
    %s102 = scalar_select %p99, %s100, %s101
    %p105 = pneg %p99
    %p106 = scmp.eq.s32.totalorder %s17, 1
    %p107 = por %p105, %p106
    %p108 = scmp.ne.s32.totalorder %s100, %s103
    %p109 = scmp.eq.s32.totalorder %s17, 0
    %p110 = por %p108, %p109
    %p111 = scmp.ne.s32.totalorder %s100, %s103
    %p112 = scmp.eq.s32.totalorder %s22, 1
    %p113 = por %p111, %p112
    %p114 = scmp.ne.s32.totalorder %s103, %s104
    %p115 = scmp.eq.s32.totalorder %s22, 0
    %p116 = por %p114, %p115
    %p117 = scmp.ne.s32.totalorder %s103, %s104
    %p118 = scmp.eq.s32.totalorder %s23, 1
    %p119 = por %p117, %p118
    %p121 = scmp.ne.s32.totalorder %s104, %s120
    %p122 = scmp.eq.s32.totalorder %s23, 0
    %p123 = por %p121, %p122
    %s124 = ssub.s32 %s17, %s24
    %p125 = scmp.eq.s32.totalorder %s124, 0
    %s127 = sadd.s32 %s126, 1
    %s128 = scalar_select %p125, %s126, %s127
    %p131 = pneg %p125
    %p132 = scmp.eq.s32.totalorder %s17, 1
    %p133 = por %p131, %p132
    %p134 = scmp.ne.s32.totalorder %s126, %s129
    %p135 = scmp.eq.s32.totalorder %s17, 0
    %p136 = por %p134, %p135
    %p137 = scmp.ne.s32.totalorder %s126, %s129
    %p138 = scmp.eq.s32.totalorder %s22, 1
    %p139 = por %p137, %p138
    %p140 = scmp.ne.s32.totalorder %s129, %s130
    %p141 = scmp.eq.s32.totalorder %s22, 0
    %p142 = por %p140, %p141
    %p143 = scmp.ne.s32.totalorder %s129, %s130
    %p144 = scmp.eq.s32.totalorder %s23, 1
    %p145 = por %p143, %p144
    %p147 = scmp.ne.s32.totalorder %s130, %s146
    %p148 = scmp.eq.s32.totalorder %s23, 0
    %p149 = por %p147, %p148
    %s151 = sadd.s32 %s150, 1
    %p154 = scmp.eq.s32.totalorder %s17, 1
    %p155 = scmp.ne.s32.totalorder %s150, %s152
    %p156 = scmp.eq.s32.totalorder %s17, 0
    %p157 = por %p155, %p156
    %p158 = scmp.ne.s32.totalorder %s150, %s152
    %p159 = scmp.eq.s32.totalorder %s22, 1
    %p160 = por %p158, %p159
    %p161 = scmp.ne.s32.totalorder %s152, %s153
    %p162 = scmp.eq.s32.totalorder %s22, 0
    %p163 = por %p161, %p162
    %p164 = scmp.ne.s32.totalorder %s152, %s153
    %p165 = scmp.eq.s32.totalorder %s23, 1
    %p166 = por %p164, %p165
    %p168 = scmp.ne.s32.totalorder %s153, %s167
    %p169 = scmp.eq.s32.totalorder %s23, 0
    %p170 = por %p168, %p169
    %s172 = sadd.s32 %s171, 1
    %p175 = scmp.eq.s32.totalorder %s17, 1
    %p176 = scmp.ne.s32.totalorder %s171, %s173
    %p177 = scmp.eq.s32.totalorder %s17, 0
    %p178 = por %p176, %p177
    %p179 = scmp.ne.s32.totalorder %s171, %s173
    %p180 = scmp.eq.s32.totalorder %s22, 1
    %p181 = por %p179, %p180
    %p182 = scmp.ne.s32.totalorder %s173, %s174
    %p183 = scmp.eq.s32.totalorder %s22, 0
    %p184 = por %p182, %p183
    %p185 = scmp.ne.s32.totalorder %s173, %s174
    %p186 = scmp.eq.s32.totalorder %s23, 1
    %p187 = por %p185, %p186
    %p189 = scmp.ne.s32.totalorder %s174, %s188
    %p190 = scmp.eq.s32.totalorder %s23, 0
    %p191 = por %p189, %p190
    %s193 = sadd.s32 %s192, 1
    %p196 = scmp.eq.s32.totalorder %s17, 1
    %p197 = scmp.ne.s32.totalorder %s192, %s194
    %p198 = scmp.eq.s32.totalorder %s17, 0
    %p199 = por %p197, %p198
    %p200 = scmp.ne.s32.totalorder %s192, %s194
    %p201 = scmp.eq.s32.totalorder %s22, 1
    %p202 = por %p200, %p201
    %p203 = scmp.ne.s32.totalorder %s194, %s195
    %p204 = scmp.eq.s32.totalorder %s22, 0
    %p205 = por %p203, %p204
    %p206 = scmp.ne.s32.totalorder %s194, %s195
    %p207 = scmp.eq.s32.totalorder %s23, 1
    %p208 = por %p206, %p207
    %p210 = scmp.ne.s32.totalorder %s195, %s209
    %p211 = scmp.eq.s32.totalorder %s23, 0
    %p212 = por %p210, %p211
    %s214 = sadd.s32 %s213, 1
    %p217 = scmp.eq.s32.totalorder %s17, 1
    %p218 = scmp.ne.s32.totalorder %s213, %s215
    %p219 = scmp.eq.s32.totalorder %s17, 0
    %p220 = por %p218, %p219
    %p221 = scmp.ne.s32.totalorder %s213, %s215
    %p222 = scmp.eq.s32.totalorder %s22, 1
    %p223 = por %p221, %p222
    %p224 = scmp.ne.s32.totalorder %s215, %s216
    %p225 = scmp.eq.s32.totalorder %s22, 0
    %p226 = por %p224, %p225
    %p227 = scmp.ne.s32.totalorder %s215, %s216
    %p228 = scmp.eq.s32.totalorder %s23, 1
    %p229 = por %p227, %p228
    %p231 = scmp.ne.s32.totalorder %s216, %s230
    %p232 = scmp.eq.s32.totalorder %s23, 0
    %p233 = por %p231, %p232
    %s234 = ssub.s32 %s17, %s24
    %p235 = scmp.eq.s32.totalorder %s234, 0
    %s237 = sadd.s32 %s236, 1
    %s238 = scalar_select %p235, %s236, %s237
    %p241 = pneg %p235
    %p242 = scmp.eq.s32.totalorder %s17, 1
    %p243 = por %p241, %p242
    %p244 = scmp.ne.s32.totalorder %s236, %s239
    %p245 = scmp.eq.s32.totalorder %s17, 0
    %p246 = por %p244, %p245
    %p247 = scmp.ne.s32.totalorder %s236, %s239
    %p248 = scmp.eq.s32.totalorder %s22, 1
    %p249 = por %p247, %p248
    %p250 = scmp.ne.s32.totalorder %s239, %s240
    %p251 = scmp.eq.s32.totalorder %s22, 0
    %p252 = por %p250, %p251
    %p253 = scmp.ne.s32.totalorder %s239, %s240
    %p254 = scmp.eq.s32.totalorder %s23, 1
    %p255 = por %p253, %p254
    %p257 = scmp.ne.s32.totalorder %s240, %s256
    %p258 = scmp.eq.s32.totalorder %s23, 0
    %p259 = por %p257, %p258
    %s260 = ssub.s32 %s17, %s24
    %p261 = scmp.eq.s32.totalorder %s260, 0
    %s263 = sadd.s32 %s262, 1
    %s264 = scalar_select %p261, %s262, %s263
    %p267 = pneg %p261
    %p268 = scmp.eq.s32.totalorder %s17, 1
    %p269 = por %p267, %p268
    %p270 = scmp.ne.s32.totalorder %s262, %s265
    %p271 = scmp.eq.s32.totalorder %s17, 0
    %p272 = por %p270, %p271
    %p273 = scmp.ne.s32.totalorder %s262, %s265
    %p274 = scmp.eq.s32.totalorder %s22, 1
    %p275 = por %p273, %p274
    %p276 = scmp.ne.s32.totalorder %s265, %s266
    %p277 = scmp.eq.s32.totalorder %s22, 0
    %p278 = por %p276, %p277
    %p279 = scmp.ne.s32.totalorder %s265, %s266
    %p280 = scmp.eq.s32.totalorder %s23, 1
    %p281 = por %p279, %p280
    %p283 = scmp.ne.s32.totalorder %s266, %s282
    %p284 = scmp.eq.s32.totalorder %s23, 0
    %p285 = por %p283, %p284
    %p286 = scmp.le.s32.totalorder 1, %s17
    %p287 = scmp.lt.s32.totalorder %s17, 3
    %p288 = pnand %p286, %p287
    %p289 = pneg %p288
    // Predicated region
    $region9: #{dfair_gat_forward.3} parent=5 // pred_check
      _
    $region10: #{dfair_gat_forward.3} parent=5 // pred_check_branch
      %291 = sbr.rel (%p288) target = $region12
    $region11: #{dfair_gat_forward.3} parent=5 // pred_region
      %s292 = ssub.s32 %s17, 1
      // Predicated region
      $region13: #{dfair_gat_forward.3} parent=11 // pred_check
        %p293 = pneg %p38
      $region14: #{dfair_gat_forward.3} parent=11 // pred_check_branch
        %295 = sbr.rel (%p293) target = $region16
      $region15: #{dfair_gat_forward.3} parent=11 // pred_region
        _
      $region16: #{dfair_gat_forward.3} parent=11 // pred_fallthru
        _
      // Predicated region
      $region17: #{dfair_gat_forward.3} parent=11 // pred_check
        %p296 = pneg %p163
      $region18: #{dfair_gat_forward.3} parent=11 // pred_check_branch
        %298 = sbr.rel (%p296) target = $region20
      $region19: #{dfair_gat_forward.3} parent=11 // pred_region
        _
      $region20: #{dfair_gat_forward.3} parent=11 // pred_fallthru
        _
      // Predicated region
      $region21: #{dfair_gat_forward.3} parent=11 // pred_check
        %p299 = pneg %p184
      $region22: #{dfair_gat_forward.3} parent=11 // pred_check_branch
        %301 = sbr.rel (%p299) target = $region24
      $region23: #{dfair_gat_forward.3} parent=11 // pred_region
        _
      $region24: #{dfair_gat_forward.3} parent=11 // pred_fallthru
        _
      // Predicated region
      $region25: #{dfair_gat_forward.3} parent=11 // pred_check
        %p302 = pneg %p205
      $region26: #{dfair_gat_forward.3} parent=11 // pred_check_branch
        %304 = sbr.rel (%p302) target = $region28
      $region27: #{dfair_gat_forward.3} parent=11 // pred_region
        _
      $region28: #{dfair_gat_forward.3} parent=11 // pred_fallthru
        _
      // Predicated region
      $region29: #{dfair_gat_forward.3} parent=11 // pred_check
        %p305 = pneg %p226
      $region30: #{dfair_gat_forward.3} parent=11 // pred_check_branch
        %307 = sbr.rel (%p305) target = $region32
      $region31: #{dfair_gat_forward.3} parent=11 // pred_region
        _
      $region32: #{dfair_gat_forward.3} parent=11 // pred_fallthru
        _
    $region12: #{dfair_gat_forward.3} parent=5 // pred_fallthru
      _
    %p308 = scmp.lt.s32.totalorder %s17, 2
    // Predicated region
    $region33: #{dfair_gat_forward.3} parent=5 // pred_check
      %p309 = pneg %p308
    $region34: #{dfair_gat_forward.3} parent=5 // pred_check_branch
      %311 = sbr.rel (%p309) target = $region36
    $region35: #{dfair_gat_forward.3} parent=5 // pred_region
      // Predicated region
      $region37: #{dfair_gat_forward.3} parent=35 // pred_check
        %p312 = pneg %p58
      $region38: #{dfair_gat_forward.3} parent=35 // pred_check_branch
        %314 = sbr.rel (%p312) target = $region40
      $region39: #{dfair_gat_forward.3} parent=35 // pred_region
        %s315 = smul.u32 16, %s17
        %p316 = scmp.lt.s32.totalorder %s315, 31
        %s317 = scalar_select %p316, %s315, 31
        %s318 = smul.addr %s317, 4
        %s319 = scalar_lea.vmem %s1, %s318
        %s320 = smul.u32 16, %s17
      $region40: #{dfair_gat_forward.3} parent=35 // pred_fallthru
        _
      // Predicated region
      $region41: #{dfair_gat_forward.3} parent=35 // pred_check
        %p321 = pneg %p84
      $region42: #{dfair_gat_forward.3} parent=35 // pred_check_branch
        %323 = sbr.rel (%p321) target = $region44
      $region43: #{dfair_gat_forward.3} parent=35 // pred_region
        %s324 = smul.u32 4, %s17
        %p325 = scmp.lt.s32.totalorder %s324, 7
        %s326 = scalar_select %p325, %s324, 7
        %s327 = smul.addr %s326, 2
        %s328 = smul.addr %s327, 8
        %s329 = scalar_lea.vmem %s2, %s328
        %s330 = smul.u32 4, %s17
      $region44: #{dfair_gat_forward.3} parent=35 // pred_fallthru
        _
      // Predicated region
      $region45: #{dfair_gat_forward.3} parent=35 // pred_check
        %p331 = pneg %p110
      $region46: #{dfair_gat_forward.3} parent=35 // pred_check_branch
        %333 = sbr.rel (%p331) target = $region48
      $region47: #{dfair_gat_forward.3} parent=35 // pred_region
        %s334 = smul.u32 16, %s17
        %p335 = scmp.lt.s32.totalorder %s334, 31
        %s336 = scalar_select %p335, %s334, 31
        %s337 = smul.addr %s336, 8
        %s338 = scalar_lea.vmem %s3, %s337
        %s339 = smul.u32 16, %s17
      $region48: #{dfair_gat_forward.3} parent=35 // pred_fallthru
        _
      // Predicated region
      $region49: #{dfair_gat_forward.3} parent=35 // pred_check
        %p340 = pneg %p136
      $region50: #{dfair_gat_forward.3} parent=35 // pred_check_branch
        %342 = sbr.rel (%p340) target = $region52
      $region51: #{dfair_gat_forward.3} parent=35 // pred_region
        %s343 = smul.u32 16, %s17
        %p344 = scmp.lt.s32.totalorder %s343, 31
        %s345 = scalar_select %p344, %s343, 31
        %s346 = smul.addr %s345, 8
        %s347 = scalar_lea.vmem %s4, %s346
        %s348 = smul.u32 16, %s17
      $region52: #{dfair_gat_forward.3} parent=35 // pred_fallthru
        _
    $region36: #{dfair_gat_forward.3} parent=5 // pred_fallthru
      _
    %p349 = scmp.le.s32.totalorder 1, %s17
    %p350 = scmp.lt.s32.totalorder %s17, 3
    %p351 = pnand %p349, %p350
    %p352 = pneg %p351
    // Predicated region
    $region53: #{dfair_gat_forward.3} parent=5 // pred_check
      _
    $region54: #{dfair_gat_forward.3} parent=5 // pred_check_branch
      %354 = sbr.rel (%p351) target = $region56
    $region55: #{dfair_gat_forward.3} parent=5 // pred_region
      %s355 = ssub.s32 %s17, 1
      %p356 = pneg %p38
      %p357 = pneg %p35
      %s358 = smul.u32 16, %s22
      %p359 = scmp.lt.s32.totalorder %s358, 31
      %s360 = scalar_select %p359, %s358, 31
      %s361 = smul.addr %s360, 4
      %s362 = scalar_lea.vmem %s1, %s361
      %p363 = pneg %p64
      %p364 = pneg %p61
      %s365 = smul.u32 4, %s22
      %p366 = scmp.lt.s32.totalorder %s365, 7
      %s367 = scalar_select %p366, %s365, 7
      %s368 = smul.addr %s367, 2
      %s369 = smul.addr %s368, 8
      %s370 = scalar_lea.vmem %s2, %s369
      %p371 = pneg %p90
      %p372 = pneg %p87
      %s373 = smul.u32 16, %s22
      %p374 = scmp.lt.s32.totalorder %s373, 31
      %s375 = scalar_select %p374, %s373, 31
      %s376 = smul.addr %s375, 8
      %s377 = scalar_lea.vmem %s3, %s376
      %p378 = pneg %p116
      %p379 = pneg %p113
      %s380 = smul.u32 16, %s22
      %p381 = scmp.lt.s32.totalorder %s380, 31
      %s382 = scalar_select %p381, %s380, 31
      %s383 = smul.addr %s382, 8
      %s384 = scalar_lea.vmem %s4, %s383
      %p385 = pneg %p142
      %p386 = pneg %p139
      %p387 = pneg %p163
      %p388 = pneg %p160
      %p389 = pneg %p184
      %p390 = pneg %p181
      %p391 = pneg %p205
      %p392 = pneg %p202
      %p393 = pneg %p226
      %p394 = pneg %p223
      %p395 = pneg %p252
      %p396 = pneg %p249
      %s397 = smul.u32 16, %s22
      %p398 = scmp.lt.s32.totalorder %s397, 31
      %s399 = scalar_select %p398, %s397, 31
      %s400 = smul.addr %s399, 8
      %s401 = scalar_lea.vmem %s9, %s400
      %p402 = pneg %p278
      %p403 = pneg %p275
      %s404 = smul.u32 16, %s22
      %p405 = scmp.lt.s32.totalorder %s404, 31
      %s406 = scalar_select %p405, %s404, 31
      %s407 = smul.addr %s406, 8
      %s408 = scalar_lea.vmem %s10, %s407
      %s409 = smul.u32 16, %s22
      %p410 = scmp.lt.s32.totalorder %s409, 31
      %s411 = scalar_select %p410, %s409, 31
      %s412 = smul.addr %s411, 4
      %s413 = scalar_lea.vmem %s1, %s412
      %s414 = smul.u32 16, %s22
      %s415 = smul.u32 4, %s22
      %p416 = scmp.lt.s32.totalorder %s415, 7
      %s417 = scalar_select %p416, %s415, 7
      %s418 = smul.addr %s417, 2
      %s419 = smul.addr %s418, 8
      %s420 = scalar_lea.vmem %s2, %s419
      %s421 = smul.u32 4, %s22
      %s422 = smul.u32 16, %s22
      %p423 = scmp.lt.s32.totalorder %s422, 31
      %s424 = scalar_select %p423, %s422, 31
      %s425 = smul.addr %s424, 8
      %s426 = scalar_lea.vmem %s3, %s425
      %s427 = smul.u32 16, %s22
      %s428 = smul.u32 16, %s22
      %p429 = scmp.lt.s32.totalorder %s428, 31
      %s430 = scalar_select %p429, %s428, 31
      %s431 = smul.addr %s430, 8
      %s432 = scalar_lea.vmem %s4, %s431
      %s433 = smul.u32 16, %s22
      %s434 = smul.u32 16, %s22
      %p435 = scmp.lt.s32.totalorder %s434, 31
      %s436 = scalar_select %p435, %s434, 31
      %s437 = smul.addr %s436, 8
      %s438 = scalar_lea.vmem %s9, %s437
      %s439 = smul.u32 16, %s22
      %s440 = smul.u32 16, %s22
      %p441 = scmp.lt.s32.totalorder %s440, 31
      %s442 = scalar_select %p441, %s440, 31
      %s443 = smul.addr %s442, 8
      %s444 = scalar_lea.vmem %s10, %s443
      %s445 = smul.u32 16, %s22
      %v447 = vld [vmem:[%s0] sm:$0xf]
      %v448 = vld [vmem:[%s0 + $0x4] sm:$0xf]
      %v449 = vld [vmem:[%s0 + $0x8] sm:$0xf]
      %v450 = vld [vmem:[%s0 + $0xc] sm:$0xf]
      %v451 = vld [vmem:[%s0 + $0x10] sm:$0xf]
      %v452 = vld [vmem:[%s0 + $0x14] sm:$0xf]
      %v453 = vld [vmem:[%s0 + $0x18] sm:$0xf]
      %v454 = vld [vmem:[%s0 + $0x1c] sm:$0xf]
      %v455 = vld [vmem:[%s0 + $0x20] sm:$0xf]
      %v456 = vld [vmem:[%s0 + $0x24] sm:$0xf]
      %v457 = vld [vmem:[%s0 + $0x28] sm:$0xf]
      %v458 = vld [vmem:[%s0 + $0x2c] sm:$0xf]
      %v459 = vld [vmem:[%s0 + $0x30] sm:$0xf]
      %v460 = vld [vmem:[%s0 + $0x34] sm:$0xf]
      %v461 = vld [vmem:[%s0 + $0x38] sm:$0xf]
      %v462 = vld [vmem:[%s0 + $0x3c] sm:$0xf]
      %v463 = vld [vmem:[%s0 + $0x40] sm:$0xf]
      %v464 = vld [vmem:[%s0 + $0x44] sm:$0xf]
      %v465 = vld [vmem:[%s0 + $0x48] sm:$0xf]
      %v466 = vld [vmem:[%s0 + $0x4c] sm:$0xf]
      %v467 = vld [vmem:[%s0 + $0x50] sm:$0xf]
      %v468 = vld [vmem:[%s0 + $0x54] sm:$0xf]
      %v469 = vld [vmem:[%s0 + $0x58] sm:$0xf]
      %v470 = vld [vmem:[%s0 + $0x5c] sm:$0xf]
      %v471 = vld [vmem:[%s0 + $0x60] sm:$0xf]
      %v472 = vld [vmem:[%s0 + $0x64] sm:$0xf]
      %v473 = vld [vmem:[%s0 + $0x68] sm:$0xf]
      %v474 = vld [vmem:[%s0 + $0x6c] sm:$0xf]
      %v475 = vld [vmem:[%s0 + $0x70] sm:$0xf]
      %v476 = vld [vmem:[%s0 + $0x74] sm:$0xf]
      %v477 = vld [vmem:[%s0 + $0x78] sm:$0xf]
      %v478 = vld [vmem:[%s0 + $0x7c] sm:$0xf]
      %v479 = vld [vmem:[%s5] sm:$0xf]
      %v480 = vld [vmem:[%s5 + $0x4] sm:$0xf]
      %v481 = vld [vmem:[%s5 + $0x8] sm:$0xf]
      %v482 = vld [vmem:[%s5 + $0xc] sm:$0xf]
      %v483 = vld [vmem:[%s5 + $0x10] sm:$0xf]
      %v484 = vld [vmem:[%s5 + $0x14] sm:$0xf]
      %v517 = vunpack.c.l.b16 %v447
      %v518 = vunpack.c.l.b16 %v448
      %v519 = vunpack.c.l.b16 %v449
      %v520 = vunpack.c.l.b16 %v450
      %v521 = vunpack.c.l.b16 %v451
      %v522 = vunpack.c.l.b16 %v452
      %v523 = vunpack.c.l.b16 %v453
      %v524 = vunpack.c.l.b16 %v454
      %v525 = vunpack.c.l.b16 %v455
      %v526 = vunpack.c.l.b16 %v456
      %v527 = vunpack.c.l.b16 %v457
      %v528 = vunpack.c.l.b16 %v458
      %v529 = vunpack.c.l.b16 %v459
      %v530 = vunpack.c.l.b16 %v460
      %v531 = vunpack.c.l.b16 %v461
      %v532 = vunpack.c.l.b16 %v462
      %v533 = vunpack.c.l.b16 %v463
      %v534 = vunpack.c.l.b16 %v464
      %v535 = vunpack.c.l.b16 %v465
      %v536 = vunpack.c.l.b16 %v466
      %v537 = vunpack.c.l.b16 %v467
      %v538 = vunpack.c.l.b16 %v468
      %v539 = vunpack.c.l.b16 %v469
      %v540 = vunpack.c.l.b16 %v470
      %v541 = vunpack.c.l.b16 %v471
      %v542 = vunpack.c.l.b16 %v472
      %v543 = vunpack.c.l.b16 %v473
      %v544 = vunpack.c.l.b16 %v474
      %v545 = vunpack.c.l.b16 %v475
      %v546 = vunpack.c.l.b16 %v476
      %v547 = vunpack.c.l.b16 %v477
      %v548 = vunpack.c.l.b16 %v478
      %v549 = vpack.c.b16 %v518, %v517
      %v550 = vpack.c.b16 %v520, %v519
      %v551 = vpack.c.b16 %v522, %v521
      %v552 = vpack.c.b16 %v524, %v523
      %v553 = vpack.c.b16 %v526, %v525
      %v554 = vpack.c.b16 %v528, %v527
      %v555 = vpack.c.b16 %v530, %v529
      %v556 = vpack.c.b16 %v532, %v531
      %v557 = vpack.c.b16 %v534, %v533
      %v558 = vpack.c.b16 %v536, %v535
      %v559 = vpack.c.b16 %v538, %v537
      %v560 = vpack.c.b16 %v540, %v539
      %v561 = vpack.c.b16 %v542, %v541
      %v562 = vpack.c.b16 %v544, %v543
      %v563 = vpack.c.b16 %v546, %v545
      %v564 = vpack.c.b16 %v548, %v547
      %v571 = vunpack.c.l.b16 %v479
      %v572 = vunpack.c.l.b16 %v480
      %v573 = vunpack.c.l.b16 %v481
      %v574 = vunpack.c.l.b16 %v482
      %v575 = vunpack.c.l.b16 %v483
      %v576 = vunpack.c.l.b16 %v484
      %v577 = vpack.c.b16 %v572, %v571
      %v578 = vpack.c.b16 %v574, %v573
      %v579 = vpack.c.b16 %v576, %v575
      %vm583 = vcmask 392192
      %v585 = vsel %vm583, %v549, 0
      %v588 = vsel %vm583, %v550, 0
      %v591 = vsel %vm583, %v551, 0
      %v594 = vsel %vm583, %v552, 0
      %v597 = vsel %vm583, %v553, 0
      %v600 = vsel %vm583, %v554, 0
      %v603 = vsel %vm583, %v555, 0
      %v606 = vsel %vm583, %v556, 0
      %v609 = vsel %vm583, %v557, 0
      %v612 = vsel %vm583, %v558, 0
      %v615 = vsel %vm583, %v559, 0
      %v618 = vsel %vm583, %v560, 0
      %v621 = vsel %vm583, %v561, 0
      %v624 = vsel %vm583, %v562, 0
      %v627 = vsel %vm583, %v563, 0
      %v630 = vsel %vm583, %v564, 0
      %632 = vmatprep.subr.bf16.mxu0 0
      %633 = vmatpush1.bf16.msra.mxu0 0
      %634 = vmatprep.subr.bf16.mxu0 0
      %635 = vmatpush1.bf16.msra.mxu0 0
      %636 = vmatprep.subr.bf16.mxu0 0
      %637 = vmatpush1.bf16.msra.mxu0 0
      %638 = vmatprep.subr.bf16.mxu0 0
      %639 = vmatpush1.bf16.msra.mxu0 0
      %640 = vmatprep.subr.bf16.mxu0 0
      %641 = vmatpush1.bf16.msra.mxu0 0
      %642 = vmatprep.subr.bf16.mxu0 0
      %643 = vmatpush1.bf16.msra.mxu0 %v579
      %644 = vmatprep.subr.bf16.mxu0 0
      %645 = vmatpush1.bf16.msra.mxu0 %v578
      %646 = vmatprep.subr.bf16.mxu0 0
      %647 = vmatpush1.bf16.msra.mxu0 %v577
      %648 = vmatprep.subr.bf16.mxu0 0
      %649 = vmatpush2.bf16.msra.mxu0 0
      %650 = vmatprep.subr.bf16.mxu0 0
      %651 = vmatpush2.bf16.msra.mxu0 0
      %652 = vmatprep.subr.bf16.mxu0 0
      %653 = vmatpush2.bf16.msra.mxu0 0
      %654 = vmatprep.subr.bf16.mxu0 0
      %655 = vmatpush2.bf16.msra.mxu0 0
      %656 = vmatprep.subr.bf16.mxu0 0
      %657 = vmatpush2.bf16.msra.mxu0 0
      %658 = vmatprep.subr.bf16.mxu0 0
      %659 = vmatpush2.bf16.msra.mxu0 0
      %660 = vmatprep.subr.bf16.mxu0 0
      %661 = vmatpush2.bf16.msra.mxu0 0
      %662 = vmatprep.subr.bf16.mxu0 0
      %663 = vmatpush2.bf16.msra.mxu0 0
      %664 = vmatprep.mubr.bf16.mxu0 0
      %665 = vmatmul.mubr.bf16.gmra.mxu0 %v585
      %v666 = vpop.f32.mrf.mxu0
      %v667 = vadd.f32 0.0, %v666
      %v668 = vpop.f32.mrf.mxu0
      %v669 = vpop.f32.mrf.mxu0
      %v670 = vadd.f32 0.0, %v669
      %v671 = vpop.f32.mrf.mxu0
      %672 = vmatprep.mubr.bf16.mxu0 0
      %673 = vmatmul.mubr.bf16.gmra.mxu0 %v588
      %v674 = vpop.f32.mrf.mxu0
      %v675 = vadd.f32 0.0, %v674
      %v676 = vpop.f32.mrf.mxu0
      %v677 = vpop.f32.mrf.mxu0
      %v678 = vadd.f32 0.0, %v677
      %v679 = vpop.f32.mrf.mxu0
      %680 = vmatprep.mubr.bf16.mxu0 0
      %681 = vmatmul.mubr.bf16.gmra.mxu0 %v591
      %v682 = vpop.f32.mrf.mxu0
      %v683 = vadd.f32 0.0, %v682
      %v684 = vpop.f32.mrf.mxu0
      %v685 = vpop.f32.mrf.mxu0
      %v686 = vadd.f32 0.0, %v685
      %v687 = vpop.f32.mrf.mxu0
      %688 = vmatprep.mubr.bf16.mxu0 0
      %689 = vmatmul.mubr.bf16.gmra.mxu0 %v594
      %v690 = vpop.f32.mrf.mxu0
      %v691 = vadd.f32 0.0, %v690
      %v692 = vpop.f32.mrf.mxu0
      %v693 = vpop.f32.mrf.mxu0
      %v694 = vadd.f32 0.0, %v693
      %v695 = vpop.f32.mrf.mxu0
      %696 = vmatprep.mubr.bf16.mxu0 0
      %697 = vmatmul.mubr.bf16.gmra.mxu0 %v597
      %v698 = vpop.f32.mrf.mxu0
      %v699 = vadd.f32 0.0, %v698
      %v700 = vpop.f32.mrf.mxu0
      %v701 = vpop.f32.mrf.mxu0
      %v702 = vadd.f32 0.0, %v701
      %v703 = vpop.f32.mrf.mxu0
      %704 = vmatprep.mubr.bf16.mxu0 0
      %705 = vmatmul.mubr.bf16.gmra.mxu0 %v600
      %v706 = vpop.f32.mrf.mxu0
      %v707 = vadd.f32 0.0, %v706
      %v708 = vpop.f32.mrf.mxu0
      %v709 = vpop.f32.mrf.mxu0
      %v710 = vadd.f32 0.0, %v709
      %v711 = vpop.f32.mrf.mxu0
      %712 = vmatprep.mubr.bf16.mxu0 0
      %713 = vmatmul.mubr.bf16.gmra.mxu0 %v603
      %v714 = vpop.f32.mrf.mxu0
      %v715 = vadd.f32 0.0, %v714
      %v716 = vpop.f32.mrf.mxu0
      %v717 = vpop.f32.mrf.mxu0
      %v718 = vadd.f32 0.0, %v717
      %v719 = vpop.f32.mrf.mxu0
      %720 = vmatprep.mubr.bf16.mxu0 0
      %721 = vmatmul.mubr.bf16.gmra.mxu0 %v606
      %v722 = vpop.f32.mrf.mxu0
      %v723 = vadd.f32 0.0, %v722
      %v724 = vpop.f32.mrf.mxu0
      %v725 = vpop.f32.mrf.mxu0
      %v726 = vadd.f32 0.0, %v725
      %v727 = vpop.f32.mrf.mxu0
      %728 = vmatprep.mubr.bf16.mxu0 0
      %729 = vmatmul.mubr.bf16.gmra.mxu0 %v609
      %v730 = vpop.f32.mrf.mxu0
      %v731 = vadd.f32 0.0, %v730
      %v732 = vpop.f32.mrf.mxu0
      %v733 = vpop.f32.mrf.mxu0
      %v734 = vadd.f32 0.0, %v733
      %v735 = vpop.f32.mrf.mxu0
      %736 = vmatprep.mubr.bf16.mxu0 0
      %737 = vmatmul.mubr.bf16.gmra.mxu0 %v612
      %v738 = vpop.f32.mrf.mxu0
      %v739 = vadd.f32 0.0, %v738
      %v740 = vpop.f32.mrf.mxu0
      %v741 = vpop.f32.mrf.mxu0
      %v742 = vadd.f32 0.0, %v741
      %v743 = vpop.f32.mrf.mxu0
      %744 = vmatprep.mubr.bf16.mxu0 0
      %745 = vmatmul.mubr.bf16.gmra.mxu0 %v615
      %v746 = vpop.f32.mrf.mxu0
      %v747 = vadd.f32 0.0, %v746
      %v748 = vpop.f32.mrf.mxu0
      %v749 = vpop.f32.mrf.mxu0
      %v750 = vadd.f32 0.0, %v749
      %v751 = vpop.f32.mrf.mxu0
      %752 = vmatprep.mubr.bf16.mxu0 0
      %753 = vmatmul.mubr.bf16.gmra.mxu0 %v618
      %v754 = vpop.f32.mrf.mxu0
      %v755 = vadd.f32 0.0, %v754
      %v756 = vpop.f32.mrf.mxu0
      %v757 = vpop.f32.mrf.mxu0
      %v758 = vadd.f32 0.0, %v757
      %v759 = vpop.f32.mrf.mxu0
      %760 = vmatprep.mubr.bf16.mxu0 0
      %761 = vmatmul.mubr.bf16.gmra.mxu0 %v621
      %v762 = vpop.f32.mrf.mxu0
      %v763 = vadd.f32 0.0, %v762
      %v764 = vpop.f32.mrf.mxu0
      %v765 = vpop.f32.mrf.mxu0
      %v766 = vadd.f32 0.0, %v765
      %v767 = vpop.f32.mrf.mxu0
      %768 = vmatprep.mubr.bf16.mxu0 0
      %769 = vmatmul.mubr.bf16.gmra.mxu0 %v624
      %v770 = vpop.f32.mrf.mxu0
      %v771 = vadd.f32 0.0, %v770
      %v772 = vpop.f32.mrf.mxu0
      %v773 = vpop.f32.mrf.mxu0
      %v774 = vadd.f32 0.0, %v773
      %v775 = vpop.f32.mrf.mxu0
      %776 = vmatprep.mubr.bf16.mxu0 0
      %777 = vmatmul.mubr.bf16.gmra.mxu0 %v627
      %v778 = vpop.f32.mrf.mxu0
      %v779 = vadd.f32 0.0, %v778
      %v780 = vpop.f32.mrf.mxu0
      %v781 = vpop.f32.mrf.mxu0
      %v782 = vadd.f32 0.0, %v781
      %v783 = vpop.f32.mrf.mxu0
      %784 = vmatprep.mubr.bf16.mxu0 0
      %785 = vmatmul.mubr.bf16.gmra.mxu0 %v630
      %v786 = vpop.f32.mrf.mxu0
      %v787 = vadd.f32 0.0, %v786
      %v788 = vpop.f32.mrf.mxu0
      %v789 = vpop.f32.mrf.mxu0
      %v790 = vadd.f32 0.0, %v789
      %v791 = vpop.f32.mrf.mxu0
      %792 = vdwg.mxu0
      %v793 = vld [vmem:[%s413] sm:$0xf]
      %v794 = vld [vmem:[%s413 + $0x4] sm:$0xf]
      %v795 = vld [vmem:[%s413 + $0x8] sm:$0xf]
      %v796 = vld [vmem:[%s413 + $0xc] sm:$0xf]
      %v797 = vld [vmem:[%s413 + $0x10] sm:$0xf]
      %v798 = vld [vmem:[%s413 + $0x14] sm:$0xf]
      %v799 = vld [vmem:[%s413 + $0x18] sm:$0xf]
      %v800 = vld [vmem:[%s413 + $0x1c] sm:$0xf]
      %v801 = vld [vmem:[%s413 + $0x20] sm:$0xf]
      %v802 = vld [vmem:[%s413 + $0x24] sm:$0xf]
      %v803 = vld [vmem:[%s413 + $0x28] sm:$0xf]
      %v804 = vld [vmem:[%s413 + $0x2c] sm:$0xf]
      %v805 = vld [vmem:[%s413 + $0x30] sm:$0xf]
      %v806 = vld [vmem:[%s413 + $0x34] sm:$0xf]
      %v807 = vld [vmem:[%s413 + $0x38] sm:$0xf]
      %v808 = vld [vmem:[%s413 + $0x3c] sm:$0xf]
      %v825 = vunpack.c.l.b16 %v793
      %v826 = vunpack.c.l.b16 %v794
      %v827 = vunpack.c.l.b16 %v795
      %v828 = vunpack.c.l.b16 %v796
      %v829 = vunpack.c.l.b16 %v797
      %v830 = vunpack.c.l.b16 %v798
      %v831 = vunpack.c.l.b16 %v799
      %v832 = vunpack.c.l.b16 %v800
      %v833 = vunpack.c.l.b16 %v801
      %v834 = vunpack.c.l.b16 %v802
      %v835 = vunpack.c.l.b16 %v803
      %v836 = vunpack.c.l.b16 %v804
      %v837 = vunpack.c.l.b16 %v805
      %v838 = vunpack.c.l.b16 %v806
      %v839 = vunpack.c.l.b16 %v807
      %v840 = vunpack.c.l.b16 %v808
      %v841 = vpack.c.b16 %v826, %v825
      %v842 = vpack.c.b16 %v828, %v827
      %v843 = vpack.c.b16 %v830, %v829
      %v844 = vpack.c.b16 %v832, %v831
      %v845 = vpack.c.b16 %v834, %v833
      %v846 = vpack.c.b16 %v836, %v835
      %v847 = vpack.c.b16 %v838, %v837
      %v848 = vpack.c.b16 %v840, %v839
      %v850 = vsel %vm583, %v841, 0
      %v853 = vsel %vm583, %v842, 0
      %v856 = vsel %vm583, %v843, 0
      %v859 = vsel %vm583, %v844, 0
      %v862 = vsel %vm583, %v845, 0
      %v865 = vsel %vm583, %v846, 0
      %v868 = vsel %vm583, %v847, 0
      %v871 = vsel %vm583, %v848, 0
      %873 = vmatprep.subr.bf16.mxu0 0
      %874 = vmatpush1.bf16.msra.mxu0 0
      %875 = vmatprep.subr.bf16.mxu0 0
      %876 = vmatpush1.bf16.msra.mxu0 0
      %877 = vmatprep.subr.bf16.mxu0 0
      %878 = vmatpush1.bf16.msra.mxu0 0
      %879 = vmatprep.subr.bf16.mxu0 0
      %880 = vmatpush1.bf16.msra.mxu0 0
      %881 = vmatprep.subr.bf16.mxu0 0
      %882 = vmatpush1.bf16.msra.mxu0 0
      %883 = vmatprep.subr.bf16.mxu0 0
      %884 = vmatpush1.bf16.msra.mxu0 %v579
      %885 = vmatprep.subr.bf16.mxu0 0
      %886 = vmatpush1.bf16.msra.mxu0 %v578
      %887 = vmatprep.subr.bf16.mxu0 0
      %888 = vmatpush1.bf16.msra.mxu0 %v577
      %889 = vmatprep.subr.bf16.mxu0 0
      %890 = vmatpush2.bf16.msra.mxu0 0
      %891 = vmatprep.subr.bf16.mxu0 0
      %892 = vmatpush2.bf16.msra.mxu0 0
      %893 = vmatprep.subr.bf16.mxu0 0
      %894 = vmatpush2.bf16.msra.mxu0 0
      %895 = vmatprep.subr.bf16.mxu0 0
      %896 = vmatpush2.bf16.msra.mxu0 0
      %897 = vmatprep.subr.bf16.mxu0 0
      %898 = vmatpush2.bf16.msra.mxu0 0
      %899 = vmatprep.subr.bf16.mxu0 0
      %900 = vmatpush2.bf16.msra.mxu0 0
      %901 = vmatprep.subr.bf16.mxu0 0
      %902 = vmatpush2.bf16.msra.mxu0 0
      %903 = vmatprep.subr.bf16.mxu0 0
      %904 = vmatpush2.bf16.msra.mxu0 0
      %905 = vmatprep.mubr.bf16.mxu0 0
      %906 = vmatmul.mubr.bf16.gmra.mxu0 %v850
      %v907 = vpop.f32.mrf.mxu0
      %v908 = vadd.f32 0.0, %v907
      %v909 = vpop.f32.mrf.mxu0
      %v910 = vpop.f32.mrf.mxu0
      %v911 = vadd.f32 0.0, %v910
      %v912 = vpop.f32.mrf.mxu0
      %913 = vmatprep.mubr.bf16.mxu0 0
      %914 = vmatmul.mubr.bf16.gmra.mxu0 %v853
      %v915 = vpop.f32.mrf.mxu0
      %v916 = vadd.f32 0.0, %v915
      %v917 = vpop.f32.mrf.mxu0
      %v918 = vpop.f32.mrf.mxu0
      %v919 = vadd.f32 0.0, %v918
      %v920 = vpop.f32.mrf.mxu0
      %921 = vmatprep.mubr.bf16.mxu0 0
      %922 = vmatmul.mubr.bf16.gmra.mxu0 %v856
      %v923 = vpop.f32.mrf.mxu0
      %v924 = vadd.f32 0.0, %v923
      %v925 = vpop.f32.mrf.mxu0
      %v926 = vpop.f32.mrf.mxu0
      %v927 = vadd.f32 0.0, %v926
      %v928 = vpop.f32.mrf.mxu0
      %929 = vmatprep.mubr.bf16.mxu0 0
      %930 = vmatmul.mubr.bf16.gmra.mxu0 %v859
      %v931 = vpop.f32.mrf.mxu0
      %v932 = vadd.f32 0.0, %v931
      %v933 = vpop.f32.mrf.mxu0
      %v934 = vpop.f32.mrf.mxu0
      %v935 = vadd.f32 0.0, %v934
      %v936 = vpop.f32.mrf.mxu0
      %937 = vmatprep.mubr.bf16.mxu0 0
      %938 = vmatmul.mubr.bf16.gmra.mxu0 %v862
      %v939 = vpop.f32.mrf.mxu0
      %v940 = vadd.f32 0.0, %v939
      %v941 = vpop.f32.mrf.mxu0
      %v942 = vpop.f32.mrf.mxu0
      %v943 = vadd.f32 0.0, %v942
      %v944 = vpop.f32.mrf.mxu0
      %945 = vmatprep.mubr.bf16.mxu0 0
      %946 = vmatmul.mubr.bf16.gmra.mxu0 %v865
      %v947 = vpop.f32.mrf.mxu0
      %v948 = vadd.f32 0.0, %v947
      %v949 = vpop.f32.mrf.mxu0
      %v950 = vpop.f32.mrf.mxu0
      %v951 = vadd.f32 0.0, %v950
      %v952 = vpop.f32.mrf.mxu0
      %953 = vmatprep.mubr.bf16.mxu0 0
      %954 = vmatmul.mubr.bf16.gmra.mxu0 %v868
      %v955 = vpop.f32.mrf.mxu0
      %v956 = vadd.f32 0.0, %v955
      %v957 = vpop.f32.mrf.mxu0
      %v958 = vpop.f32.mrf.mxu0
      %v959 = vadd.f32 0.0, %v958
      %v960 = vpop.f32.mrf.mxu0
      %961 = vmatprep.mubr.bf16.mxu0 0
      %962 = vmatmul.mubr.bf16.gmra.mxu0 %v871
      %v963 = vpop.f32.mrf.mxu0
      %v964 = vadd.f32 0.0, %v963
      %v965 = vpop.f32.mrf.mxu0
      %v966 = vpop.f32.mrf.mxu0
      %v967 = vadd.f32 0.0, %v966
      %v968 = vpop.f32.mrf.mxu0
      %969 = vdwg.mxu0
      %v970 = vld [vmem:[%s426] sm:$0xff]
      %v971 = vld [vmem:[%s426 + $0x8] sm:$0xff]
      %v972 = vld [vmem:[%s426 + $0x10] sm:$0xff]
      %v973 = vld [vmem:[%s426 + $0x18] sm:$0xff]
      %v974 = vld [vmem:[%s426 + $0x20] sm:$0xff]
      %v975 = vld [vmem:[%s426 + $0x28] sm:$0xff]
      %v976 = vld [vmem:[%s426 + $0x30] sm:$0xff]
      %v977 = vld [vmem:[%s426 + $0x38] sm:$0xff]
      %v978 = vld [vmem:[%s426 + $0x40] sm:$0xff]
      %v979 = vld [vmem:[%s426 + $0x48] sm:$0xff]
      %v980 = vld [vmem:[%s426 + $0x50] sm:$0xff]
      %v981 = vld [vmem:[%s426 + $0x58] sm:$0xff]
      %v982 = vld [vmem:[%s426 + $0x60] sm:$0xff]
      %v983 = vld [vmem:[%s426 + $0x68] sm:$0xff]
      %v984 = vld [vmem:[%s426 + $0x70] sm:$0xff]
      %v985 = vld [vmem:[%s426 + $0x78] sm:$0xff]
      %v986 = vld [vmem:[%s6] sm:$0xff]
      %v987 = vld [vmem:[%s6 + $0x8] sm:$0x1]
      %vm988 = vcmask 72704
      %v990 = vsel %vm988, %v970, 0
      %v993 = vsel %vm988, %v971, 0
      %v996 = vsel %vm988, %v972, 0
      %v999 = vsel %vm988, %v973, 0
      %v1002 = vsel %vm988, %v974, 0
      %v1005 = vsel %vm988, %v975, 0
      %v1008 = vsel %vm988, %v976, 0
      %v1011 = vsel %vm988, %v977, 0
      %v1014 = vsel %vm988, %v978, 0
      %v1017 = vsel %vm988, %v979, 0
      %v1020 = vsel %vm988, %v980, 0
      %v1023 = vsel %vm988, %v981, 0
      %v1026 = vsel %vm988, %v982, 0
      %v1029 = vsel %vm988, %v983, 0
      %v1032 = vsel %vm988, %v984, 0
      %v1035 = vsel %vm988, %v985, 0
      %vm1037 = vcmask 1040384
      %v1039 = vsel %vm1037, %v987, 0
      %1041 = vmatprep.subr.mxu0 0.0
      %1042 = vmatpush1.msra.mxu0 0.0
      %1043 = vmatprep.subr.mxu0 0.0
      %1044 = vmatpush1.msra.mxu0 0.0
      %1045 = vmatprep.subr.mxu0 0.0
      %1046 = vmatpush1.msra.mxu0 0.0
      %1047 = vmatprep.subr.mxu0 0.0
      %1048 = vmatpush1.msra.mxu0 0.0
      %1049 = vmatprep.subr.mxu0 0.0
      %1050 = vmatpush1.msra.mxu0 0.0
      %1051 = vmatprep.subr.mxu0 0.0
      %1052 = vmatpush1.msra.mxu0 0.0
      %1053 = vmatprep.subr.mxu0 0.0
      %1054 = vmatpush1.msra.mxu0 0.0
      %1055 = vmatprep.subr.mxu0 0.0
      %1056 = vmatpush1.msra.mxu0 0.0
      %1057 = vmatprep.subr.mxu0 0.0
      %1058 = vmatpush1.msra.mxu0 0.0
      %1059 = vmatprep.subr.mxu0 0.0
      %1060 = vmatpush1.msra.mxu0 0.0
      %1061 = vmatprep.subr.mxu0 0.0
      %1062 = vmatpush1.msra.mxu0 0.0
      %1063 = vmatprep.subr.mxu0 0.0
      %1064 = vmatpush1.msra.mxu0 0.0
      %1065 = vmatprep.subr.mxu0 0.0
      %1066 = vmatpush1.msra.mxu0 0.0
      %1067 = vmatprep.subr.mxu0 0.0
      %1068 = vmatpush1.msra.mxu0 0.0
      %1069 = vmatprep.subr.mxu0 0.0
      %1070 = vmatpush1.msra.mxu0 %v1039
      %1071 = vmatprep.subr.mxu0 0.0
      %1072 = vmatpush1.msra.mxu0 %v986
      %1073 = vmatprep.subr.mxu0 0.0
      %1074 = vmatpush2.msra.mxu0 0.0
      %1075 = vmatprep.subr.mxu0 0.0
      %1076 = vmatpush2.msra.mxu0 0.0
      %1077 = vmatprep.subr.mxu0 0.0
      %1078 = vmatpush2.msra.mxu0 0.0
      %1079 = vmatprep.subr.mxu0 0.0
      %1080 = vmatpush2.msra.mxu0 0.0
      %1081 = vmatprep.subr.mxu0 0.0
      %1082 = vmatpush2.msra.mxu0 0.0
      %1083 = vmatprep.subr.mxu0 0.0
      %1084 = vmatpush2.msra.mxu0 0.0
      %1085 = vmatprep.subr.mxu0 0.0
      %1086 = vmatpush2.msra.mxu0 0.0
      %1087 = vmatprep.subr.mxu0 0.0
      %1088 = vmatpush2.msra.mxu0 0.0
      %1089 = vmatprep.subr.mxu0 0.0
      %1090 = vmatpush2.msra.mxu0 0.0
      %1091 = vmatprep.subr.mxu0 0.0
      %1092 = vmatpush2.msra.mxu0 0.0
      %1093 = vmatprep.subr.mxu0 0.0
      %1094 = vmatpush2.msra.mxu0 0.0
      %1095 = vmatprep.subr.mxu0 0.0
      %1096 = vmatpush2.msra.mxu0 0.0
      %1097 = vmatprep.subr.mxu0 0.0
      %1098 = vmatpush2.msra.mxu0 0.0
      %1099 = vmatprep.subr.mxu0 0.0
      %1100 = vmatpush2.msra.mxu0 0.0
      %1101 = vmatprep.subr.mxu0 0.0
      %1102 = vmatpush2.msra.mxu0 0.0
      %1103 = vmatprep.subr.mxu0 0.0
      %1104 = vmatpush2.msra.mxu0 0.0
      %1105 = vmatprep.mubr.f32.mxu0 0.0
      %1106 = vmatmul.mubr.f32.gmra.mxu0 %v990
      %v1107 = vpop.f32.mrf.mxu0
      %v1108 = vadd.f32 0.0, %v1107
      %v1109 = vpop.f32.mrf.mxu0
      %1110 = vmatprep.mubr.f32.mxu0 0.0
      %1111 = vmatmul.mubr.f32.gmra.mxu0 %v993
      %v1112 = vpop.f32.mrf.mxu0
      %v1113 = vadd.f32 0.0, %v1112
      %v1114 = vpop.f32.mrf.mxu0
      %1115 = vmatprep.mubr.f32.mxu0 0.0
      %1116 = vmatmul.mubr.f32.gmra.mxu0 %v996
      %v1117 = vpop.f32.mrf.mxu0
      %v1118 = vadd.f32 0.0, %v1117
      %v1119 = vpop.f32.mrf.mxu0
      %1120 = vmatprep.mubr.f32.mxu0 0.0
      %1121 = vmatmul.mubr.f32.gmra.mxu0 %v999
      %v1122 = vpop.f32.mrf.mxu0
      %v1123 = vadd.f32 0.0, %v1122
      %v1124 = vpop.f32.mrf.mxu0
      %1125 = vmatprep.mubr.f32.mxu0 0.0
      %1126 = vmatmul.mubr.f32.gmra.mxu0 %v1002
      %v1127 = vpop.f32.mrf.mxu0
      %v1128 = vadd.f32 0.0, %v1127
      %v1129 = vpop.f32.mrf.mxu0
      %1130 = vmatprep.mubr.f32.mxu0 0.0
      %1131 = vmatmul.mubr.f32.gmra.mxu0 %v1005
      %v1132 = vpop.f32.mrf.mxu0
      %v1133 = vadd.f32 0.0, %v1132
      %v1134 = vpop.f32.mrf.mxu0
      %1135 = vmatprep.mubr.f32.mxu0 0.0
      %1136 = vmatmul.mubr.f32.gmra.mxu0 %v1008
      %v1137 = vpop.f32.mrf.mxu0
      %v1138 = vadd.f32 0.0, %v1137
      %v1139 = vpop.f32.mrf.mxu0
      %1140 = vmatprep.mubr.f32.mxu0 0.0
      %1141 = vmatmul.mubr.f32.gmra.mxu0 %v1011
      %v1142 = vpop.f32.mrf.mxu0
      %v1143 = vadd.f32 0.0, %v1142
      %v1144 = vpop.f32.mrf.mxu0
      %1145 = vmatprep.mubr.f32.mxu0 0.0
      %1146 = vmatmul.mubr.f32.gmra.mxu0 %v1014
      %v1147 = vpop.f32.mrf.mxu0
      %v1148 = vadd.f32 0.0, %v1147
      %v1149 = vpop.f32.mrf.mxu0
      %1150 = vmatprep.mubr.f32.mxu0 0.0
      %1151 = vmatmul.mubr.f32.gmra.mxu0 %v1017
      %v1152 = vpop.f32.mrf.mxu0
      %v1153 = vadd.f32 0.0, %v1152
      %v1154 = vpop.f32.mrf.mxu0
      %1155 = vmatprep.mubr.f32.mxu0 0.0
      %1156 = vmatmul.mubr.f32.gmra.mxu0 %v1020
      %v1157 = vpop.f32.mrf.mxu0
      %v1158 = vadd.f32 0.0, %v1157
      %v1159 = vpop.f32.mrf.mxu0
      %1160 = vmatprep.mubr.f32.mxu0 0.0
      %1161 = vmatmul.mubr.f32.gmra.mxu0 %v1023
      %v1162 = vpop.f32.mrf.mxu0
      %v1163 = vadd.f32 0.0, %v1162
      %v1164 = vpop.f32.mrf.mxu0
      %1165 = vmatprep.mubr.f32.mxu0 0.0
      %1166 = vmatmul.mubr.f32.gmra.mxu0 %v1026
      %v1167 = vpop.f32.mrf.mxu0
      %v1168 = vadd.f32 0.0, %v1167
      %v1169 = vpop.f32.mrf.mxu0
      %1170 = vmatprep.mubr.f32.mxu0 0.0
      %1171 = vmatmul.mubr.f32.gmra.mxu0 %v1029
      %v1172 = vpop.f32.mrf.mxu0
      %v1173 = vadd.f32 0.0, %v1172
      %v1174 = vpop.f32.mrf.mxu0
      %1175 = vmatprep.mubr.f32.mxu0 0.0
      %1176 = vmatmul.mubr.f32.gmra.mxu0 %v1032
      %v1177 = vpop.f32.mrf.mxu0
      %v1178 = vadd.f32 0.0, %v1177
      %v1179 = vpop.f32.mrf.mxu0
      %1180 = vmatprep.mubr.f32.mxu0 0.0
      %1181 = vmatmul.mubr.f32.gmra.mxu0 %v1035
      %v1182 = vpop.f32.mrf.mxu0
      %v1183 = vadd.f32 0.0, %v1182
      %v1184 = vpop.f32.mrf.mxu0
      %1185 = vdwg.mxu0
      %v1186 = vmul.f32 %v1108, 0.2
      %v1187 = vmul.f32 %v1113, 0.2
      %v1188 = vmul.f32 %v1118, 0.2
      %v1189 = vmul.f32 %v1123, 0.2
      %v1190 = vmul.f32 %v1128, 0.2
      %v1191 = vmul.f32 %v1133, 0.2
      %v1192 = vmul.f32 %v1138, 0.2
      %v1193 = vmul.f32 %v1143, 0.2
      %v1194 = vmul.f32 %v1148, 0.2
      %v1195 = vmul.f32 %v1153, 0.2
      %v1196 = vmul.f32 %v1158, 0.2
      %v1197 = vmul.f32 %v1163, 0.2
      %v1198 = vmul.f32 %v1168, 0.2
      %v1199 = vmul.f32 %v1173, 0.2
      %v1200 = vmul.f32 %v1178, 0.2
      %v1201 = vmul.f32 %v1183, 0.2
      %v1202 = vmax.f32 %v1108, %v1186
      %v1203 = vmax.f32 %v1113, %v1187
      %v1204 = vmax.f32 %v1118, %v1188
      %v1205 = vmax.f32 %v1123, %v1189
      %v1206 = vmax.f32 %v1128, %v1190
      %v1207 = vmax.f32 %v1133, %v1191
      %v1208 = vmax.f32 %v1138, %v1192
      %v1209 = vmax.f32 %v1143, %v1193
      %v1210 = vmax.f32 %v1148, %v1194
      %v1211 = vmax.f32 %v1153, %v1195
      %v1212 = vmax.f32 %v1158, %v1196
      %v1213 = vmax.f32 %v1163, %v1197
      %v1214 = vmax.f32 %v1168, %v1198
      %v1215 = vmax.f32 %v1173, %v1199
      %v1216 = vmax.f32 %v1178, %v1200
      %v1217 = vmax.f32 %v1183, %v1201
      %v1218 = vld [vmem:[%s8] sm:$0x3]
      %v1219 = vlaneseq
      %v1220 = vshrl.u32 %v1219, 7
      %v1221 = vsub.s32 0, %v1220
      %v1222 = vrot.slane %v1218, %v1221
      %v1223 = vmul.f32 %v908, %v1222
      %v1224 = vmul.f32 %v911, %v1222
      %v1225 = vmul.f32 %v916, %v1222
      %v1226 = vmul.f32 %v919, %v1222
      %v1227 = vmul.f32 %v924, %v1222
      %v1228 = vmul.f32 %v927, %v1222
      %v1229 = vmul.f32 %v932, %v1222
      %v1230 = vmul.f32 %v935, %v1222
      %v1231 = vmul.f32 %v940, %v1222
      %v1232 = vmul.f32 %v943, %v1222
      %v1233 = vmul.f32 %v948, %v1222
      %v1234 = vmul.f32 %v951, %v1222
      %v1235 = vmul.f32 %v956, %v1222
      %v1236 = vmul.f32 %v959, %v1222
      %v1237 = vmul.f32 %v964, %v1222
      %v1238 = vmul.f32 %v967, %v1222
      %vm1239 = vcmask 64512
      %v1240 = vsel %vm1239, %v1223, 0.0
      %1241 = vadd.xlane.f32.xlu0 %v1240
      %v1242 = vpop.xlane.xlu0 %1241
      %v1243 = vsel %vm1239, %v1224, 0.0
      %1244 = vadd.xlane.f32.xlu0 %v1243
      %v1245 = vpop.xlane.xlu0 %1244
      %v1246 = vsel %vm1239, %v1225, 0.0
      %1247 = vadd.xlane.f32.xlu0 %v1246
      %v1248 = vpop.xlane.xlu0 %1247
      %v1249 = vsel %vm1239, %v1226, 0.0
      %1250 = vadd.xlane.f32.xlu0 %v1249
      %v1251 = vpop.xlane.xlu0 %1250
      %v1252 = vsel %vm1239, %v1227, 0.0
      %1253 = vadd.xlane.f32.xlu0 %v1252
      %v1254 = vpop.xlane.xlu0 %1253
      %v1255 = vsel %vm1239, %v1228, 0.0
      %1256 = vadd.xlane.f32.xlu0 %v1255
      %v1257 = vpop.xlane.xlu0 %1256
      %v1258 = vsel %vm1239, %v1229, 0.0
      %1259 = vadd.xlane.f32.xlu0 %v1258
      %v1260 = vpop.xlane.xlu0 %1259
      %v1261 = vsel %vm1239, %v1230, 0.0
      %1262 = vadd.xlane.f32.xlu0 %v1261
      %v1263 = vpop.xlane.xlu0 %1262
      %v1264 = vsel %vm1239, %v1231, 0.0
      %1265 = vadd.xlane.f32.xlu0 %v1264
      %v1266 = vpop.xlane.xlu0 %1265
      %v1267 = vsel %vm1239, %v1232, 0.0
      %1268 = vadd.xlane.f32.xlu0 %v1267
      %v1269 = vpop.xlane.xlu0 %1268
      %v1270 = vsel %vm1239, %v1233, 0.0
      %1271 = vadd.xlane.f32.xlu0 %v1270
      %v1272 = vpop.xlane.xlu0 %1271
      %v1273 = vsel %vm1239, %v1234, 0.0
      %1274 = vadd.xlane.f32.xlu0 %v1273
      %v1275 = vpop.xlane.xlu0 %1274
      %v1276 = vsel %vm1239, %v1235, 0.0
      %1277 = vadd.xlane.f32.xlu0 %v1276
      %v1278 = vpop.xlane.xlu0 %1277
      %v1279 = vsel %vm1239, %v1236, 0.0
      %1280 = vadd.xlane.f32.xlu0 %v1279
      %v1281 = vpop.xlane.xlu0 %1280
      %v1282 = vsel %vm1239, %v1237, 0.0
      %1283 = vadd.xlane.f32.xlu0 %v1282
      %v1284 = vpop.xlane.xlu0 %1283
      %v1285 = vsel %vm1239, %v1238, 0.0
      %1286 = vadd.xlane.f32.xlu0 %v1285
      %v1287 = vpop.xlane.xlu0 %1286
      %v1289 = vrot.slane %v1218, 1
      %v1290 = vsel %vm1239, %v1289, 0
      %v1293 = vsel %vm1239, %v667, 0
      %v1296 = vsel %vm1239, %v670, 0
      %v1299 = vsel %vm1239, %v675, 0
      %v1302 = vsel %vm1239, %v678, 0
      %v1305 = vsel %vm1239, %v683, 0
      %v1308 = vsel %vm1239, %v686, 0
      %v1311 = vsel %vm1239, %v691, 0
      %v1314 = vsel %vm1239, %v694, 0
      %v1317 = vsel %vm1239, %v699, 0
      %v1320 = vsel %vm1239, %v702, 0
      %v1323 = vsel %vm1239, %v707, 0
      %v1326 = vsel %vm1239, %v710, 0
      %v1329 = vsel %vm1239, %v715, 0
      %v1332 = vsel %vm1239, %v718, 0
      %v1335 = vsel %vm1239, %v723, 0
      %v1338 = vsel %vm1239, %v726, 0
      %v1341 = vsel %vm1239, %v731, 0
      %v1344 = vsel %vm1239, %v734, 0
      %v1347 = vsel %vm1239, %v739, 0
      %v1350 = vsel %vm1239, %v742, 0
      %v1353 = vsel %vm1239, %v747, 0
      %v1356 = vsel %vm1239, %v750, 0
      %v1359 = vsel %vm1239, %v755, 0
      %v1362 = vsel %vm1239, %v758, 0
      %v1365 = vsel %vm1239, %v763, 0
      %v1368 = vsel %vm1239, %v766, 0
      %v1371 = vsel %vm1239, %v771, 0
      %v1374 = vsel %vm1239, %v774, 0
      %v1377 = vsel %vm1239, %v779, 0
      %v1380 = vsel %vm1239, %v782, 0
      %v1383 = vsel %vm1239, %v787, 0
      %v1386 = vsel %vm1239, %v790, 0
      %1388 = vmatprep.subr.mxu0 0.0
      %1389 = vmatpush1.xpose.msra.mxu0 %v1338
      %1390 = vmatprep.subr.mxu0 0.0
      %1391 = vmatpush1.xpose.msra.mxu0 %v1335
      %1392 = vmatprep.subr.mxu0 0.0
      %1393 = vmatpush1.xpose.msra.mxu0 %v1332
      %1394 = vmatprep.subr.mxu0 0.0
      %1395 = vmatpush1.xpose.msra.mxu0 %v1329
      %1396 = vmatprep.subr.mxu0 0.0
      %1397 = vmatpush1.xpose.msra.mxu0 %v1326
      %1398 = vmatprep.subr.mxu0 0.0
      %1399 = vmatpush1.xpose.msra.mxu0 %v1323
      %1400 = vmatprep.subr.mxu0 0.0
      %1401 = vmatpush1.xpose.msra.mxu0 %v1320
      %1402 = vmatprep.subr.mxu0 0.0
      %1403 = vmatpush1.xpose.msra.mxu0 %v1317
      %1404 = vmatprep.subr.mxu0 0.0
      %1405 = vmatpush1.xpose.msra.mxu0 %v1314
      %1406 = vmatprep.subr.mxu0 0.0
      %1407 = vmatpush1.xpose.msra.mxu0 %v1311
      %1408 = vmatprep.subr.mxu0 0.0
      %1409 = vmatpush1.xpose.msra.mxu0 %v1308
      %1410 = vmatprep.subr.mxu0 0.0
      %1411 = vmatpush1.xpose.msra.mxu0 %v1305
      %1412 = vmatprep.subr.mxu0 0.0
      %1413 = vmatpush1.xpose.msra.mxu0 %v1302
      %1414 = vmatprep.subr.mxu0 0.0
      %1415 = vmatpush1.xpose.msra.mxu0 %v1299
      %1416 = vmatprep.subr.mxu0 0.0
      %1417 = vmatpush1.xpose.msra.mxu0 %v1296
      %1418 = vmatprep.subr.mxu0 0.0
      %1419 = vmatpush1.xpose.msra.mxu0 %v1293
      %1420 = vmatprep.subr.mxu0 0.0
      %1421 = vmatpush2.xpose.msra.mxu0 %v1386
      %1422 = vmatprep.subr.mxu0 0.0
      %1423 = vmatpush2.xpose.msra.mxu0 %v1383
      %1424 = vmatprep.subr.mxu0 0.0
      %1425 = vmatpush2.xpose.msra.mxu0 %v1380
      %1426 = vmatprep.subr.mxu0 0.0
      %1427 = vmatpush2.xpose.msra.mxu0 %v1377
      %1428 = vmatprep.subr.mxu0 0.0
      %1429 = vmatpush2.xpose.msra.mxu0 %v1374
      %1430 = vmatprep.subr.mxu0 0.0
      %1431 = vmatpush2.xpose.msra.mxu0 %v1371
      %1432 = vmatprep.subr.mxu0 0.0
      %1433 = vmatpush2.xpose.msra.mxu0 %v1368
      %1434 = vmatprep.subr.mxu0 0.0
      %1435 = vmatpush2.xpose.msra.mxu0 %v1365
      %1436 = vmatprep.subr.mxu0 0.0
      %1437 = vmatpush2.xpose.msra.mxu0 %v1362
      %1438 = vmatprep.subr.mxu0 0.0
      %1439 = vmatpush2.xpose.msra.mxu0 %v1359
      %1440 = vmatprep.subr.mxu0 0.0
      %1441 = vmatpush2.xpose.msra.mxu0 %v1356
      %1442 = vmatprep.subr.mxu0 0.0
      %1443 = vmatpush2.xpose.msra.mxu0 %v1353
      %1444 = vmatprep.subr.mxu0 0.0
      %1445 = vmatpush2.xpose.msra.mxu0 %v1350
      %1446 = vmatprep.subr.mxu0 0.0
      %1447 = vmatpush2.xpose.msra.mxu0 %v1347
      %1448 = vmatprep.subr.mxu0 0.0
      %1449 = vmatpush2.xpose.msra.mxu0 %v1344
      %1450 = vmatprep.subr.mxu0 0.0
      %1451 = vmatpush2.xpose.msra.mxu0 %v1341
      %1452 = vmatprep.mubr.f32.mxu0 0.0
      %1453 = vmatmul.mubr.f32.gmra.mxu0 %v1290
      %v1454 = vpop.f32.mrf.mxu0
      %v1455 = vadd.f32 0.0, %v1454
      %v1456 = vpop.f32.mrf.mxu0
      %v1457 = vadd.f32 0.0, %v1456
      %1458 = vdwg.mxu0
      %v1459 = vld [vmem:[%s420] sm:$0xff]
      %v1460 = vld [vmem:[%s420 + $0x8] sm:$0xff]
      %v1461 = vld [vmem:[%s420 + $0x10] sm:$0xff]
      %v1462 = vld [vmem:[%s420 + $0x18] sm:$0xff]
      %v1463 = vld [vmem:[%s420 + $0x20] sm:$0xff]
      %v1464 = vld [vmem:[%s420 + $0x28] sm:$0xff]
      %v1465 = vld [vmem:[%s420 + $0x30] sm:$0xff]
      %v1466 = vld [vmem:[%s420 + $0x38] sm:$0xff]
      %v1467 = vunpack.c.0.s8 %v1459
      %v1468 = vunpack.c.0.s8 %v1460
      %v1469 = vunpack.c.1.s8 %v1459
      %v1470 = vunpack.c.1.s8 %v1460
      %v1471 = vunpack.c.2.s8 %v1459
      %v1472 = vunpack.c.2.s8 %v1460
      %v1473 = vunpack.c.3.s8 %v1459
      %v1474 = vunpack.c.3.s8 %v1460
      %v1475 = vunpack.c.0.s8 %v1461
      %v1476 = vunpack.c.0.s8 %v1462
      %v1477 = vunpack.c.1.s8 %v1461
      %v1478 = vunpack.c.1.s8 %v1462
      %v1479 = vunpack.c.2.s8 %v1461
      %v1480 = vunpack.c.2.s8 %v1462
      %v1481 = vunpack.c.3.s8 %v1461
      %v1482 = vunpack.c.3.s8 %v1462
      %v1483 = vunpack.c.0.s8 %v1463
      %v1484 = vunpack.c.0.s8 %v1464
      %v1485 = vunpack.c.1.s8 %v1463
      %v1486 = vunpack.c.1.s8 %v1464
      %v1487 = vunpack.c.2.s8 %v1463
      %v1488 = vunpack.c.2.s8 %v1464
      %v1489 = vunpack.c.3.s8 %v1463
      %v1490 = vunpack.c.3.s8 %v1464
      %v1491 = vunpack.c.0.s8 %v1465
      %v1492 = vunpack.c.0.s8 %v1466
      %v1493 = vunpack.c.1.s8 %v1465
      %v1494 = vunpack.c.1.s8 %v1466
      %v1495 = vunpack.c.2.s8 %v1465
      %v1496 = vunpack.c.2.s8 %v1466
      %v1497 = vunpack.c.3.s8 %v1465
      %v1498 = vunpack.c.3.s8 %v1466
      %v1499 = vcvt.s32.f32 %v1467
      %v1500 = vcvt.s32.f32 %v1468
      %v1501 = vcvt.s32.f32 %v1469
      %v1502 = vcvt.s32.f32 %v1470
      %v1503 = vcvt.s32.f32 %v1471
      %v1504 = vcvt.s32.f32 %v1472
      %v1505 = vcvt.s32.f32 %v1473
      %v1506 = vcvt.s32.f32 %v1474
      %v1507 = vcvt.s32.f32 %v1475
      %v1508 = vcvt.s32.f32 %v1476
      %v1509 = vcvt.s32.f32 %v1477
      %v1510 = vcvt.s32.f32 %v1478
      %v1511 = vcvt.s32.f32 %v1479
      %v1512 = vcvt.s32.f32 %v1480
      %v1513 = vcvt.s32.f32 %v1481
      %v1514 = vcvt.s32.f32 %v1482
      %v1515 = vcvt.s32.f32 %v1483
      %v1516 = vcvt.s32.f32 %v1484
      %v1517 = vcvt.s32.f32 %v1485
      %v1518 = vcvt.s32.f32 %v1486
      %v1519 = vcvt.s32.f32 %v1487
      %v1520 = vcvt.s32.f32 %v1488
      %v1521 = vcvt.s32.f32 %v1489
      %v1522 = vcvt.s32.f32 %v1490
      %v1523 = vcvt.s32.f32 %v1491
      %v1524 = vcvt.s32.f32 %v1492
      %v1525 = vcvt.s32.f32 %v1493
      %v1526 = vcvt.s32.f32 %v1494
      %v1527 = vcvt.s32.f32 %v1495
      %v1528 = vcvt.s32.f32 %v1496
      %v1529 = vcvt.s32.f32 %v1497
      %v1530 = vcvt.s32.f32 %v1498
      %v1531 = vlaneseq
      %v1532 = vshrl.u32 %v1531, 7
      %v1533 = vsub.s32 0, %v1532
      %v1534 = vrot.slane %v1455, %v1533
      %v1535 = vlaneseq
      %v1536 = vshrl.u32 %v1535, 7
      %v1537 = vsub.s32 0, %v1536
      %v1538 = vrot.slane %v1457, %v1537
      %v1539 = vadd.f32 %v1242, %v1534
      %v1540 = vadd.f32 %v1242, %v1538
      %v1541 = vadd.f32 %v1245, %v1534
      %v1542 = vadd.f32 %v1245, %v1538
      %v1543 = vadd.f32 %v1248, %v1534
      %v1544 = vadd.f32 %v1248, %v1538
      %v1545 = vadd.f32 %v1251, %v1534
      %v1546 = vadd.f32 %v1251, %v1538
      %v1547 = vadd.f32 %v1254, %v1534
      %v1548 = vadd.f32 %v1254, %v1538
      %v1549 = vadd.f32 %v1257, %v1534
      %v1550 = vadd.f32 %v1257, %v1538
      %v1551 = vadd.f32 %v1260, %v1534
      %v1552 = vadd.f32 %v1260, %v1538
      %v1553 = vadd.f32 %v1263, %v1534
      %v1554 = vadd.f32 %v1263, %v1538
      %v1555 = vadd.f32 %v1266, %v1534
      %v1556 = vadd.f32 %v1266, %v1538
      %v1557 = vadd.f32 %v1269, %v1534
      %v1558 = vadd.f32 %v1269, %v1538
      %v1559 = vadd.f32 %v1272, %v1534
      %v1560 = vadd.f32 %v1272, %v1538
      %v1561 = vadd.f32 %v1275, %v1534
      %v1562 = vadd.f32 %v1275, %v1538
      %v1563 = vadd.f32 %v1278, %v1534
      %v1564 = vadd.f32 %v1278, %v1538
      %v1565 = vadd.f32 %v1281, %v1534
      %v1566 = vadd.f32 %v1281, %v1538
      %v1567 = vadd.f32 %v1284, %v1534
      %v1568 = vadd.f32 %v1284, %v1538
      %v1569 = vadd.f32 %v1287, %v1534
      %v1570 = vadd.f32 %v1287, %v1538
      %v1571 = vmul.f32 %v1539, 0.2
      %v1572 = vmul.f32 %v1540, 0.2
      %v1573 = vmul.f32 %v1541, 0.2
      %v1574 = vmul.f32 %v1542, 0.2
      %v1575 = vmul.f32 %v1543, 0.2
      %v1576 = vmul.f32 %v1544, 0.2
      %v1577 = vmul.f32 %v1545, 0.2
      %v1578 = vmul.f32 %v1546, 0.2
      %v1579 = vmul.f32 %v1547, 0.2
      %v1580 = vmul.f32 %v1548, 0.2
      %v1581 = vmul.f32 %v1549, 0.2
      %v1582 = vmul.f32 %v1550, 0.2
      %v1583 = vmul.f32 %v1551, 0.2
      %v1584 = vmul.f32 %v1552, 0.2
      %v1585 = vmul.f32 %v1553, 0.2
      %v1586 = vmul.f32 %v1554, 0.2
      %v1587 = vmul.f32 %v1555, 0.2
      %v1588 = vmul.f32 %v1556, 0.2
      %v1589 = vmul.f32 %v1557, 0.2
      %v1590 = vmul.f32 %v1558, 0.2
      %v1591 = vmul.f32 %v1559, 0.2
      %v1592 = vmul.f32 %v1560, 0.2
      %v1593 = vmul.f32 %v1561, 0.2
      %v1594 = vmul.f32 %v1562, 0.2
      %v1595 = vmul.f32 %v1563, 0.2
      %v1596 = vmul.f32 %v1564, 0.2
      %v1597 = vmul.f32 %v1565, 0.2
      %v1598 = vmul.f32 %v1566, 0.2
      %v1599 = vmul.f32 %v1567, 0.2
      %v1600 = vmul.f32 %v1568, 0.2
      %v1601 = vmul.f32 %v1569, 0.2
      %v1602 = vmul.f32 %v1570, 0.2
      %v1603 = vmax.f32 %v1539, %v1571
      %v1604 = vmax.f32 %v1540, %v1572
      %v1605 = vmax.f32 %v1541, %v1573
      %v1606 = vmax.f32 %v1542, %v1574
      %v1607 = vmax.f32 %v1543, %v1575
      %v1608 = vmax.f32 %v1544, %v1576
      %v1609 = vmax.f32 %v1545, %v1577
      %v1610 = vmax.f32 %v1546, %v1578
      %v1611 = vmax.f32 %v1547, %v1579
      %v1612 = vmax.f32 %v1548, %v1580
      %v1613 = vmax.f32 %v1549, %v1581
      %v1614 = vmax.f32 %v1550, %v1582
      %v1615 = vmax.f32 %v1551, %v1583
      %v1616 = vmax.f32 %v1552, %v1584
      %v1617 = vmax.f32 %v1553, %v1585
      %v1618 = vmax.f32 %v1554, %v1586
      %v1619 = vmax.f32 %v1555, %v1587
      %v1620 = vmax.f32 %v1556, %v1588
      %v1621 = vmax.f32 %v1557, %v1589
      %v1622 = vmax.f32 %v1558, %v1590
      %v1623 = vmax.f32 %v1559, %v1591
      %v1624 = vmax.f32 %v1560, %v1592
      %v1625 = vmax.f32 %v1561, %v1593
      %v1626 = vmax.f32 %v1562, %v1594
      %v1627 = vmax.f32 %v1563, %v1595
      %v1628 = vmax.f32 %v1564, %v1596
      %v1629 = vmax.f32 %v1565, %v1597
      %v1630 = vmax.f32 %v1566, %v1598
      %v1631 = vmax.f32 %v1567, %v1599
      %v1632 = vmax.f32 %v1568, %v1600
      %v1633 = vmax.f32 %v1569, %v1601
      %v1634 = vmax.f32 %v1570, %v1602
      %v1635 = vmax.f32 %v1603, %v1604
      %1636 = vmax.xlane.f32.xlu0 %v1635
      %v1637 = vpop.xlane.xlu0 %1636
      %v1638 = vmax.f32 %v1605, %v1606
      %1639 = vmax.xlane.f32.xlu0 %v1638
      %v1640 = vpop.xlane.xlu0 %1639
      %v1641 = vmax.f32 %v1607, %v1608
      %1642 = vmax.xlane.f32.xlu0 %v1641
      %v1643 = vpop.xlane.xlu0 %1642
      %v1644 = vmax.f32 %v1609, %v1610
      %1645 = vmax.xlane.f32.xlu0 %v1644
      %v1646 = vpop.xlane.xlu0 %1645
      %v1647 = vmax.f32 %v1611, %v1612
      %1648 = vmax.xlane.f32.xlu0 %v1647
      %v1649 = vpop.xlane.xlu0 %1648
      %v1650 = vmax.f32 %v1613, %v1614
      %1651 = vmax.xlane.f32.xlu0 %v1650
      %v1652 = vpop.xlane.xlu0 %1651
      %v1653 = vmax.f32 %v1615, %v1616
      %1654 = vmax.xlane.f32.xlu0 %v1653
      %v1655 = vpop.xlane.xlu0 %1654
      %v1656 = vmax.f32 %v1617, %v1618
      %1657 = vmax.xlane.f32.xlu0 %v1656
      %v1658 = vpop.xlane.xlu0 %1657
      %v1659 = vmax.f32 %v1619, %v1620
      %1660 = vmax.xlane.f32.xlu0 %v1659
      %v1661 = vpop.xlane.xlu0 %1660
      %v1662 = vmax.f32 %v1621, %v1622
      %1663 = vmax.xlane.f32.xlu0 %v1662
      %v1664 = vpop.xlane.xlu0 %1663
      %v1665 = vmax.f32 %v1623, %v1624
      %1666 = vmax.xlane.f32.xlu0 %v1665
      %v1667 = vpop.xlane.xlu0 %1666
      %v1668 = vmax.f32 %v1625, %v1626
      %1669 = vmax.xlane.f32.xlu0 %v1668
      %v1670 = vpop.xlane.xlu0 %1669
      %v1671 = vmax.f32 %v1627, %v1628
      %1672 = vmax.xlane.f32.xlu0 %v1671
      %v1673 = vpop.xlane.xlu0 %1672
      %v1674 = vmax.f32 %v1629, %v1630
      %1675 = vmax.xlane.f32.xlu0 %v1674
      %v1676 = vpop.xlane.xlu0 %1675
      %v1677 = vmax.f32 %v1631, %v1632
      %1678 = vmax.xlane.f32.xlu0 %v1677
      %v1679 = vpop.xlane.xlu0 %1678
      %v1680 = vmax.f32 %v1633, %v1634
      %1681 = vmax.xlane.f32.xlu0 %v1680
      %v1682 = vpop.xlane.xlu0 %1681
      %v1683 = vsub.f32 %v1603, %v1637
      %v1684 = vsub.f32 %v1604, %v1637
      %v1685 = vsub.f32 %v1605, %v1640
      %v1686 = vsub.f32 %v1606, %v1640
      %v1687 = vsub.f32 %v1607, %v1643
      %v1688 = vsub.f32 %v1608, %v1643
      %v1689 = vsub.f32 %v1609, %v1646
      %v1690 = vsub.f32 %v1610, %v1646
      %v1691 = vsub.f32 %v1611, %v1649
      %v1692 = vsub.f32 %v1612, %v1649
      %v1693 = vsub.f32 %v1613, %v1652
      %v1694 = vsub.f32 %v1614, %v1652
      %v1695 = vsub.f32 %v1615, %v1655
      %v1696 = vsub.f32 %v1616, %v1655
      %v1697 = vsub.f32 %v1617, %v1658
      %v1698 = vsub.f32 %v1618, %v1658
      %v1699 = vsub.f32 %v1619, %v1661
      %v1700 = vsub.f32 %v1620, %v1661
      %v1701 = vsub.f32 %v1621, %v1664
      %v1702 = vsub.f32 %v1622, %v1664
      %v1703 = vsub.f32 %v1623, %v1667
      %v1704 = vsub.f32 %v1624, %v1667
      %v1705 = vsub.f32 %v1625, %v1670
      %v1706 = vsub.f32 %v1626, %v1670
      %v1707 = vsub.f32 %v1627, %v1673
      %v1708 = vsub.f32 %v1628, %v1673
      %v1709 = vsub.f32 %v1629, %v1676
      %v1710 = vsub.f32 %v1630, %v1676
      %v1711 = vsub.f32 %v1631, %v1679
      %v1712 = vsub.f32 %v1632, %v1679
      %v1713 = vsub.f32 %v1633, %v1682
      %v1714 = vsub.f32 %v1634, %v1682
      %v1715 = vmul.f32 %v1683, 1.442695
      %v1716 = vpow.pop %v1715
      %v1717 = vmul.f32 %v1684, 1.442695
      %v1718 = vpow.pop %v1717
      %v1719 = vmul.f32 %v1685, 1.442695
      %v1720 = vpow.pop %v1719
      %v1721 = vmul.f32 %v1686, 1.442695
      %v1722 = vpow.pop %v1721
      %v1723 = vmul.f32 %v1687, 1.442695
      %v1724 = vpow.pop %v1723
      %v1725 = vmul.f32 %v1688, 1.442695
      %v1726 = vpow.pop %v1725
      %v1727 = vmul.f32 %v1689, 1.442695
      %v1728 = vpow.pop %v1727
      %v1729 = vmul.f32 %v1690, 1.442695
      %v1730 = vpow.pop %v1729
      %v1731 = vmul.f32 %v1691, 1.442695
      %v1732 = vpow.pop %v1731
      %v1733 = vmul.f32 %v1692, 1.442695
      %v1734 = vpow.pop %v1733
      %v1735 = vmul.f32 %v1693, 1.442695
      %v1736 = vpow.pop %v1735
      %v1737 = vmul.f32 %v1694, 1.442695
      %v1738 = vpow.pop %v1737
      %v1739 = vmul.f32 %v1695, 1.442695
      %v1740 = vpow.pop %v1739
      %v1741 = vmul.f32 %v1696, 1.442695
      %v1742 = vpow.pop %v1741
      %v1743 = vmul.f32 %v1697, 1.442695
      %v1744 = vpow.pop %v1743
      %v1745 = vmul.f32 %v1698, 1.442695
      %v1746 = vpow.pop %v1745
      %v1747 = vmul.f32 %v1699, 1.442695
      %v1748 = vpow.pop %v1747
      %v1749 = vmul.f32 %v1700, 1.442695
      %v1750 = vpow.pop %v1749
      %v1751 = vmul.f32 %v1701, 1.442695
      %v1752 = vpow.pop %v1751
      %v1753 = vmul.f32 %v1702, 1.442695
      %v1754 = vpow.pop %v1753
      %v1755 = vmul.f32 %v1703, 1.442695
      %v1756 = vpow.pop %v1755
      %v1757 = vmul.f32 %v1704, 1.442695
      %v1758 = vpow.pop %v1757
      %v1759 = vmul.f32 %v1705, 1.442695
      %v1760 = vpow.pop %v1759
      %v1761 = vmul.f32 %v1706, 1.442695
      %v1762 = vpow.pop %v1761
      %v1763 = vmul.f32 %v1707, 1.442695
      %v1764 = vpow.pop %v1763
      %v1765 = vmul.f32 %v1708, 1.442695
      %v1766 = vpow.pop %v1765
      %v1767 = vmul.f32 %v1709, 1.442695
      %v1768 = vpow.pop %v1767
      %v1769 = vmul.f32 %v1710, 1.442695
      %v1770 = vpow.pop %v1769
      %v1771 = vmul.f32 %v1711, 1.442695
      %v1772 = vpow.pop %v1771
      %v1773 = vmul.f32 %v1712, 1.442695
      %v1774 = vpow.pop %v1773
      %v1775 = vmul.f32 %v1713, 1.442695
      %v1776 = vpow.pop %v1775
      %v1777 = vmul.f32 %v1714, 1.442695
      %v1778 = vpow.pop %v1777
      %v1779 = vmul.f32 %v1716, %v1499
      %v1780 = vmul.f32 %v1718, %v1500
      %v1781 = vmul.f32 %v1720, %v1501
      %v1782 = vmul.f32 %v1722, %v1502
      %v1783 = vmul.f32 %v1724, %v1503
      %v1784 = vmul.f32 %v1726, %v1504
      %v1785 = vmul.f32 %v1728, %v1505
      %v1786 = vmul.f32 %v1730, %v1506
      %v1787 = vmul.f32 %v1732, %v1507
      %v1788 = vmul.f32 %v1734, %v1508
      %v1789 = vmul.f32 %v1736, %v1509
      %v1790 = vmul.f32 %v1738, %v1510
      %v1791 = vmul.f32 %v1740, %v1511
      %v1792 = vmul.f32 %v1742, %v1512
      %v1793 = vmul.f32 %v1744, %v1513
      %v1794 = vmul.f32 %v1746, %v1514
      %v1795 = vmul.f32 %v1748, %v1515
      %v1796 = vmul.f32 %v1750, %v1516
      %v1797 = vmul.f32 %v1752, %v1517
      %v1798 = vmul.f32 %v1754, %v1518
      %v1799 = vmul.f32 %v1756, %v1519
      %v1800 = vmul.f32 %v1758, %v1520
      %v1801 = vmul.f32 %v1760, %v1521
      %v1802 = vmul.f32 %v1762, %v1522
      %v1803 = vmul.f32 %v1764, %v1523
      %v1804 = vmul.f32 %v1766, %v1524
      %v1805 = vmul.f32 %v1768, %v1525
      %v1806 = vmul.f32 %v1770, %v1526
      %v1807 = vmul.f32 %v1772, %v1527
      %v1808 = vmul.f32 %v1774, %v1528
      %v1809 = vmul.f32 %v1776, %v1529
      %v1810 = vmul.f32 %v1778, %v1530
      %v1811 = vadd.f32 %v1779, %v1780
      %1812 = vadd.xlane.f32.xlu0 %v1811
      %v1813 = vpop.xlane.xlu0 %1812
      %v1814 = vadd.f32 %v1781, %v1782
      %1815 = vadd.xlane.f32.xlu0 %v1814
      %v1816 = vpop.xlane.xlu0 %1815
      %v1817 = vadd.f32 %v1783, %v1784
      %1818 = vadd.xlane.f32.xlu0 %v1817
      %v1819 = vpop.xlane.xlu0 %1818
      %v1820 = vadd.f32 %v1785, %v1786
      %1821 = vadd.xlane.f32.xlu0 %v1820
      %v1822 = vpop.xlane.xlu0 %1821
      %v1823 = vadd.f32 %v1787, %v1788
      %1824 = vadd.xlane.f32.xlu0 %v1823
      %v1825 = vpop.xlane.xlu0 %1824
      %v1826 = vadd.f32 %v1789, %v1790
      %1827 = vadd.xlane.f32.xlu0 %v1826
      %v1828 = vpop.xlane.xlu0 %1827
      %v1829 = vadd.f32 %v1791, %v1792
      %1830 = vadd.xlane.f32.xlu0 %v1829
      %v1831 = vpop.xlane.xlu0 %1830
      %v1832 = vadd.f32 %v1793, %v1794
      %1833 = vadd.xlane.f32.xlu0 %v1832
      %v1834 = vpop.xlane.xlu0 %1833
      %v1835 = vadd.f32 %v1795, %v1796
      %1836 = vadd.xlane.f32.xlu0 %v1835
      %v1837 = vpop.xlane.xlu0 %1836
      %v1838 = vadd.f32 %v1797, %v1798
      %1839 = vadd.xlane.f32.xlu0 %v1838
      %v1840 = vpop.xlane.xlu0 %1839
      %v1841 = vadd.f32 %v1799, %v1800
      %1842 = vadd.xlane.f32.xlu0 %v1841
      %v1843 = vpop.xlane.xlu0 %1842
      %v1844 = vadd.f32 %v1801, %v1802
      %1845 = vadd.xlane.f32.xlu0 %v1844
      %v1846 = vpop.xlane.xlu0 %1845
      %v1847 = vadd.f32 %v1803, %v1804
      %1848 = vadd.xlane.f32.xlu0 %v1847
      %v1849 = vpop.xlane.xlu0 %1848
      %v1850 = vadd.f32 %v1805, %v1806
      %1851 = vadd.xlane.f32.xlu0 %v1850
      %v1852 = vpop.xlane.xlu0 %1851
      %v1853 = vadd.f32 %v1807, %v1808
      %1854 = vadd.xlane.f32.xlu0 %v1853
      %v1855 = vpop.xlane.xlu0 %1854
      %v1856 = vadd.f32 %v1809, %v1810
      %1857 = vadd.xlane.f32.xlu0 %v1856
      %v1858 = vpop.xlane.xlu0 %1857
      %v1859 = vmax.f32 %v1813, 1e-30
      %v1860 = vmax.f32 %v1816, 1e-30
      %v1861 = vmax.f32 %v1819, 1e-30
      %v1862 = vmax.f32 %v1822, 1e-30
      %v1863 = vmax.f32 %v1825, 1e-30
      %v1864 = vmax.f32 %v1828, 1e-30
      %v1865 = vmax.f32 %v1831, 1e-30
      %v1866 = vmax.f32 %v1834, 1e-30
      %v1867 = vmax.f32 %v1837, 1e-30
      %v1868 = vmax.f32 %v1840, 1e-30
      %v1869 = vmax.f32 %v1843, 1e-30
      %v1870 = vmax.f32 %v1846, 1e-30
      %v1871 = vmax.f32 %v1849, 1e-30
      %v1872 = vmax.f32 %v1852, 1e-30
      %v1873 = vmax.f32 %v1855, 1e-30
      %v1874 = vmax.f32 %v1858, 1e-30
      %v1875 = vrcp.pop %v1859
      %v1876 = vrcp.pop %v1860
      %v1877 = vrcp.pop %v1861
      %v1878 = vrcp.pop %v1862
      %v1879 = vrcp.pop %v1863
      %v1880 = vrcp.pop %v1864
      %v1881 = vrcp.pop %v1865
      %v1882 = vrcp.pop %v1866
      %v1883 = vrcp.pop %v1867
      %v1884 = vrcp.pop %v1868
      %v1885 = vrcp.pop %v1869
      %v1886 = vrcp.pop %v1870
      %v1887 = vrcp.pop %v1871
      %v1888 = vrcp.pop %v1872
      %v1889 = vrcp.pop %v1873
      %v1890 = vrcp.pop %v1874
      %1891 = vmatprep.subr.mxu0 0.0
      %1892 = vmatpush1.msra.mxu0 %v726
      %1893 = vmatprep.subr.mxu0 0.0
      %1894 = vmatpush1.msra.mxu0 %v723
      %1895 = vmatprep.subr.mxu0 0.0
      %1896 = vmatpush1.msra.mxu0 %v718
      %1897 = vmatprep.subr.mxu0 0.0
      %1898 = vmatpush1.msra.mxu0 %v715
      %1899 = vmatprep.subr.mxu0 0.0
      %1900 = vmatpush1.msra.mxu0 %v710
      %1901 = vmatprep.subr.mxu0 0.0
      %1902 = vmatpush1.msra.mxu0 %v707
      %1903 = vmatprep.subr.mxu0 0.0
      %1904 = vmatpush1.msra.mxu0 %v702
      %1905 = vmatprep.subr.mxu0 0.0
      %1906 = vmatpush1.msra.mxu0 %v699
      %1907 = vmatprep.subr.mxu0 0.0
      %1908 = vmatpush1.msra.mxu0 %v694
      %1909 = vmatprep.subr.mxu0 0.0
      %1910 = vmatpush1.msra.mxu0 %v691
      %1911 = vmatprep.subr.mxu0 0.0
      %1912 = vmatpush1.msra.mxu0 %v686
      %1913 = vmatprep.subr.mxu0 0.0
      %1914 = vmatpush1.msra.mxu0 %v683
      %1915 = vmatprep.subr.mxu0 0.0
      %1916 = vmatpush1.msra.mxu0 %v678
      %1917 = vmatprep.subr.mxu0 0.0
      %1918 = vmatpush1.msra.mxu0 %v675
      %1919 = vmatprep.subr.mxu0 0.0
      %1920 = vmatpush1.msra.mxu0 %v670
      %1921 = vmatprep.subr.mxu0 0.0
      %1922 = vmatpush1.msra.mxu0 %v667
      %1923 = vmatprep.subr.mxu0 0.0
      %1924 = vmatpush2.msra.mxu0 %v790
      %1925 = vmatprep.subr.mxu0 0.0
      %1926 = vmatpush2.msra.mxu0 %v787
      %1927 = vmatprep.subr.mxu0 0.0
      %1928 = vmatpush2.msra.mxu0 %v782
      %1929 = vmatprep.subr.mxu0 0.0
      %1930 = vmatpush2.msra.mxu0 %v779
      %1931 = vmatprep.subr.mxu0 0.0
      %1932 = vmatpush2.msra.mxu0 %v774
      %1933 = vmatprep.subr.mxu0 0.0
      %1934 = vmatpush2.msra.mxu0 %v771
      %1935 = vmatprep.subr.mxu0 0.0
      %1936 = vmatpush2.msra.mxu0 %v766
      %1937 = vmatprep.subr.mxu0 0.0
      %1938 = vmatpush2.msra.mxu0 %v763
      %1939 = vmatprep.subr.mxu0 0.0
      %1940 = vmatpush2.msra.mxu0 %v758
      %1941 = vmatprep.subr.mxu0 0.0
      %1942 = vmatpush2.msra.mxu0 %v755
      %1943 = vmatprep.subr.mxu0 0.0
      %1944 = vmatpush2.msra.mxu0 %v750
      %1945 = vmatprep.subr.mxu0 0.0
      %1946 = vmatpush2.msra.mxu0 %v747
      %1947 = vmatprep.subr.mxu0 0.0
      %1948 = vmatpush2.msra.mxu0 %v742
      %1949 = vmatprep.subr.mxu0 0.0
      %1950 = vmatpush2.msra.mxu0 %v739
      %1951 = vmatprep.subr.mxu0 0.0
      %1952 = vmatpush2.msra.mxu0 %v734
      %1953 = vmatprep.subr.mxu0 0.0
      %1954 = vmatpush2.msra.mxu0 %v731
      %1955 = vmatprep.mubr.f32.mxu0 %v1780
      %1956 = vmatmul.mubr.f32.gmra.mxu0 %v1779
      %v1957 = vpop.f32.mrf.mxu0
      %v1958 = vadd.f32 0.0, %v1957
      %v1959 = vpop.f32.mrf.mxu0
      %1960 = vmatprep.mubr.f32.mxu0 %v1782
      %1961 = vmatmul.mubr.f32.gmra.mxu0 %v1781
      %v1962 = vpop.f32.mrf.mxu0
      %v1963 = vadd.f32 0.0, %v1962
      %v1964 = vpop.f32.mrf.mxu0
      %1965 = vmatprep.mubr.f32.mxu0 %v1784
      %1966 = vmatmul.mubr.f32.gmra.mxu0 %v1783
      %v1967 = vpop.f32.mrf.mxu0
      %v1968 = vadd.f32 0.0, %v1967
      %v1969 = vpop.f32.mrf.mxu0
      %1970 = vmatprep.mubr.f32.mxu0 %v1786
      %1971 = vmatmul.mubr.f32.gmra.mxu0 %v1785
      %v1972 = vpop.f32.mrf.mxu0
      %v1973 = vadd.f32 0.0, %v1972
      %v1974 = vpop.f32.mrf.mxu0
      %1975 = vmatprep.mubr.f32.mxu0 %v1788
      %1976 = vmatmul.mubr.f32.gmra.mxu0 %v1787
      %v1977 = vpop.f32.mrf.mxu0
      %v1978 = vadd.f32 0.0, %v1977
      %v1979 = vpop.f32.mrf.mxu0
      %1980 = vmatprep.mubr.f32.mxu0 %v1790
      %1981 = vmatmul.mubr.f32.gmra.mxu0 %v1789
      %v1982 = vpop.f32.mrf.mxu0
      %v1983 = vadd.f32 0.0, %v1982
      %v1984 = vpop.f32.mrf.mxu0
      %1985 = vmatprep.mubr.f32.mxu0 %v1792
      %1986 = vmatmul.mubr.f32.gmra.mxu0 %v1791
      %v1987 = vpop.f32.mrf.mxu0
      %v1988 = vadd.f32 0.0, %v1987
      %v1989 = vpop.f32.mrf.mxu0
      %1990 = vmatprep.mubr.f32.mxu0 %v1794
      %1991 = vmatmul.mubr.f32.gmra.mxu0 %v1793
      %v1992 = vpop.f32.mrf.mxu0
      %v1993 = vadd.f32 0.0, %v1992
      %v1994 = vpop.f32.mrf.mxu0
      %1995 = vmatprep.mubr.f32.mxu0 %v1796
      %1996 = vmatmul.mubr.f32.gmra.mxu0 %v1795
      %v1997 = vpop.f32.mrf.mxu0
      %v1998 = vadd.f32 0.0, %v1997
      %v1999 = vpop.f32.mrf.mxu0
      %2000 = vmatprep.mubr.f32.mxu0 %v1798
      %2001 = vmatmul.mubr.f32.gmra.mxu0 %v1797
      %v2002 = vpop.f32.mrf.mxu0
      %v2003 = vadd.f32 0.0, %v2002
      %v2004 = vpop.f32.mrf.mxu0
      %2005 = vmatprep.mubr.f32.mxu0 %v1800
      %2006 = vmatmul.mubr.f32.gmra.mxu0 %v1799
      %v2007 = vpop.f32.mrf.mxu0
      %v2008 = vadd.f32 0.0, %v2007
      %v2009 = vpop.f32.mrf.mxu0
      %2010 = vmatprep.mubr.f32.mxu0 %v1802
      %2011 = vmatmul.mubr.f32.gmra.mxu0 %v1801
      %v2012 = vpop.f32.mrf.mxu0
      %v2013 = vadd.f32 0.0, %v2012
      %v2014 = vpop.f32.mrf.mxu0
      %2015 = vmatprep.mubr.f32.mxu0 %v1804
      %2016 = vmatmul.mubr.f32.gmra.mxu0 %v1803
      %v2017 = vpop.f32.mrf.mxu0
      %v2018 = vadd.f32 0.0, %v2017
      %v2019 = vpop.f32.mrf.mxu0
      %2020 = vmatprep.mubr.f32.mxu0 %v1806
      %2021 = vmatmul.mubr.f32.gmra.mxu0 %v1805
      %v2022 = vpop.f32.mrf.mxu0
      %v2023 = vadd.f32 0.0, %v2022
      %v2024 = vpop.f32.mrf.mxu0
      %2025 = vmatprep.mubr.f32.mxu0 %v1808
      %2026 = vmatmul.mubr.f32.gmra.mxu0 %v1807
      %v2027 = vpop.f32.mrf.mxu0
      %v2028 = vadd.f32 0.0, %v2027
      %v2029 = vpop.f32.mrf.mxu0
      %2030 = vmatprep.mubr.f32.mxu0 %v1810
      %2031 = vmatmul.mubr.f32.gmra.mxu0 %v1809
      %v2032 = vpop.f32.mrf.mxu0
      %v2033 = vadd.f32 0.0, %v2032
      %v2034 = vpop.f32.mrf.mxu0
      %2035 = vdwg.mxu0
      %v2036 = vmul.f32 %v1958, %v1875
      %v2037 = vmul.f32 %v1963, %v1876
      %v2038 = vmul.f32 %v1968, %v1877
      %v2039 = vmul.f32 %v1973, %v1878
      %v2040 = vmul.f32 %v1978, %v1879
      %v2041 = vmul.f32 %v1983, %v1880
      %v2042 = vmul.f32 %v1988, %v1881
      %v2043 = vmul.f32 %v1993, %v1882
      %v2044 = vmul.f32 %v1998, %v1883
      %v2045 = vmul.f32 %v2003, %v1884
      %v2046 = vmul.f32 %v2008, %v1885
      %v2047 = vmul.f32 %v2013, %v1886
      %v2048 = vmul.f32 %v2018, %v1887
      %v2049 = vmul.f32 %v2023, %v1888
      %v2050 = vmul.f32 %v2028, %v1889
      %v2051 = vmul.f32 %v2033, %v1890
      %v2052 = vmul.f32 %v1202, %v2036
      %v2053 = vmul.f32 %v1203, %v2037
      %v2054 = vmul.f32 %v1204, %v2038
      %v2055 = vmul.f32 %v1205, %v2039
      %v2056 = vmul.f32 %v1206, %v2040
      %v2057 = vmul.f32 %v1207, %v2041
      %v2058 = vmul.f32 %v1208, %v2042
      %v2059 = vmul.f32 %v1209, %v2043
      %v2060 = vmul.f32 %v1210, %v2044
      %v2061 = vmul.f32 %v1211, %v2045
      %v2062 = vmul.f32 %v1212, %v2046
      %v2063 = vmul.f32 %v1213, %v2047
      %v2064 = vmul.f32 %v1214, %v2048
      %v2065 = vmul.f32 %v1215, %v2049
      %v2066 = vmul.f32 %v1216, %v2050
      %v2067 = vmul.f32 %v1217, %v2051
      %2084 = vrot.lane.b32.xlu0 %v1202, 120
      %v2085 = vpop.permute.xlu0 %2084
      %2086 = vrot.lane.b32.xlu0 %v1203, 120
      %v2087 = vpop.permute.xlu0 %2086
      %2088 = vrot.lane.b32.xlu0 %v1204, 120
      %v2089 = vpop.permute.xlu0 %2088
      %2090 = vrot.lane.b32.xlu0 %v1205, 120
      %v2091 = vpop.permute.xlu0 %2090
      %2092 = vrot.lane.b32.xlu0 %v1206, 120
      %v2093 = vpop.permute.xlu0 %2092
      %2094 = vrot.lane.b32.xlu0 %v1207, 120
      %v2095 = vpop.permute.xlu0 %2094
      %2096 = vrot.lane.b32.xlu0 %v1208, 120
      %v2097 = vpop.permute.xlu0 %2096
      %2098 = vrot.lane.b32.xlu0 %v1209, 120
      %v2099 = vpop.permute.xlu0 %2098
      %2100 = vrot.lane.b32.xlu0 %v1210, 120
      %v2101 = vpop.permute.xlu0 %2100
      %2102 = vrot.lane.b32.xlu0 %v1211, 120
      %v2103 = vpop.permute.xlu0 %2102
      %2104 = vrot.lane.b32.xlu0 %v1212, 120
      %v2105 = vpop.permute.xlu0 %2104
      %2106 = vrot.lane.b32.xlu0 %v1213, 120
      %v2107 = vpop.permute.xlu0 %2106
      %2108 = vrot.lane.b32.xlu0 %v1214, 120
      %v2109 = vpop.permute.xlu0 %2108
      %2110 = vrot.lane.b32.xlu0 %v1215, 120
      %v2111 = vpop.permute.xlu0 %2110
      %2112 = vrot.lane.b32.xlu0 %v1216, 120
      %v2113 = vpop.permute.xlu0 %2112
      %2114 = vrot.lane.b32.xlu0 %v1217, 120
      %v2115 = vpop.permute.xlu0 %2114
      %v2132 = vadd.f32 %v2052, %v2085
      %v2133 = vadd.f32 %v2053, %v2087
      %v2134 = vadd.f32 %v2054, %v2089
      %v2135 = vadd.f32 %v2055, %v2091
      %v2136 = vadd.f32 %v2056, %v2093
      %v2137 = vadd.f32 %v2057, %v2095
      %v2138 = vadd.f32 %v2058, %v2097
      %v2139 = vadd.f32 %v2059, %v2099
      %v2140 = vadd.f32 %v2060, %v2101
      %v2141 = vadd.f32 %v2061, %v2103
      %v2142 = vadd.f32 %v2062, %v2105
      %v2143 = vadd.f32 %v2063, %v2107
      %v2144 = vadd.f32 %v2064, %v2109
      %v2145 = vadd.f32 %v2065, %v2111
      %v2146 = vadd.f32 %v2066, %v2113
      %v2147 = vadd.f32 %v2067, %v2115
      %v2148 = vld [vmem:[%s7] sm:$0xff]
      %v2150 = vsel %vm1239, %v2132, 0
      %v2153 = vsel %vm1239, %v2133, 0
      %v2156 = vsel %vm1239, %v2134, 0
      %v2159 = vsel %vm1239, %v2135, 0
      %v2162 = vsel %vm1239, %v2136, 0
      %v2165 = vsel %vm1239, %v2137, 0
      %v2168 = vsel %vm1239, %v2138, 0
      %v2171 = vsel %vm1239, %v2139, 0
      %v2174 = vsel %vm1239, %v2140, 0
      %v2177 = vsel %vm1239, %v2141, 0
      %v2180 = vsel %vm1239, %v2142, 0
      %v2183 = vsel %vm1239, %v2143, 0
      %v2186 = vsel %vm1239, %v2144, 0
      %v2189 = vsel %vm1239, %v2145, 0
      %v2192 = vsel %vm1239, %v2146, 0
      %v2195 = vsel %vm1239, %v2147, 0
      %2197 = vmatprep.subr.mxu0 0.0
      %2198 = vmatpush1.msra.mxu0 0.0
      %2199 = vmatprep.subr.mxu0 0.0
      %2200 = vmatpush1.msra.mxu0 0.0
      %2201 = vmatprep.subr.mxu0 0.0
      %2202 = vmatpush1.msra.mxu0 0.0
      %2203 = vmatprep.subr.mxu0 0.0
      %2204 = vmatpush1.msra.mxu0 0.0
      %2205 = vmatprep.subr.mxu0 0.0
      %2206 = vmatpush1.msra.mxu0 0.0
      %2207 = vmatprep.subr.mxu0 0.0
      %2208 = vmatpush1.msra.mxu0 0.0
      %2209 = vmatprep.subr.mxu0 0.0
      %2210 = vmatpush1.msra.mxu0 0.0
      %2211 = vmatprep.subr.mxu0 0.0
      %2212 = vmatpush1.msra.mxu0 0.0
      %2213 = vmatprep.subr.mxu0 0.0
      %2214 = vmatpush1.msra.mxu0 0.0
      %2215 = vmatprep.subr.mxu0 0.0
      %2216 = vmatpush1.msra.mxu0 0.0
      %2217 = vmatprep.subr.mxu0 0.0
      %2218 = vmatpush1.msra.mxu0 0.0
      %2219 = vmatprep.subr.mxu0 0.0
      %2220 = vmatpush1.msra.mxu0 0.0
      %2221 = vmatprep.subr.mxu0 0.0
      %2222 = vmatpush1.msra.mxu0 0.0
      %2223 = vmatprep.subr.mxu0 0.0
      %2224 = vmatpush1.msra.mxu0 0.0
      %2225 = vmatprep.subr.mxu0 0.0
      %2226 = vmatpush1.msra.mxu0 0.0
      %2227 = vmatprep.subr.mxu0 0.0
      %2228 = vmatpush1.msra.mxu0 %v2148
      %2229 = vmatprep.subr.mxu0 0.0
      %2230 = vmatpush2.msra.mxu0 0.0
      %2231 = vmatprep.subr.mxu0 0.0
      %2232 = vmatpush2.msra.mxu0 0.0
      %2233 = vmatprep.subr.mxu0 0.0
      %2234 = vmatpush2.msra.mxu0 0.0
      %2235 = vmatprep.subr.mxu0 0.0
      %2236 = vmatpush2.msra.mxu0 0.0
      %2237 = vmatprep.subr.mxu0 0.0
      %2238 = vmatpush2.msra.mxu0 0.0
      %2239 = vmatprep.subr.mxu0 0.0
      %2240 = vmatpush2.msra.mxu0 0.0
      %2241 = vmatprep.subr.mxu0 0.0
      %2242 = vmatpush2.msra.mxu0 0.0
      %2243 = vmatprep.subr.mxu0 0.0
      %2244 = vmatpush2.msra.mxu0 0.0
      %2245 = vmatprep.subr.mxu0 0.0
      %2246 = vmatpush2.msra.mxu0 0.0
      %2247 = vmatprep.subr.mxu0 0.0
      %2248 = vmatpush2.msra.mxu0 0.0
      %2249 = vmatprep.subr.mxu0 0.0
      %2250 = vmatpush2.msra.mxu0 0.0
      %2251 = vmatprep.subr.mxu0 0.0
      %2252 = vmatpush2.msra.mxu0 0.0
      %2253 = vmatprep.subr.mxu0 0.0
      %2254 = vmatpush2.msra.mxu0 0.0
      %2255 = vmatprep.subr.mxu0 0.0
      %2256 = vmatpush2.msra.mxu0 0.0
      %2257 = vmatprep.subr.mxu0 0.0
      %2258 = vmatpush2.msra.mxu0 0.0
      %2259 = vmatprep.subr.mxu0 0.0
      %2260 = vmatpush2.msra.mxu0 0.0
      %2261 = vmatprep.mubr.f32.mxu0 0.0
      %2262 = vmatmul.mubr.f32.gmra.mxu0 %v2150
      %v2263 = vpop.f32.mrf.mxu0
      %v2264 = vadd.f32 0.0, %v2263
      %v2265 = vpop.f32.mrf.mxu0
      %2266 = vmatprep.mubr.f32.mxu0 0.0
      %2267 = vmatmul.mubr.f32.gmra.mxu0 %v2153
      %v2268 = vpop.f32.mrf.mxu0
      %v2269 = vadd.f32 0.0, %v2268
      %v2270 = vpop.f32.mrf.mxu0
      %2271 = vmatprep.mubr.f32.mxu0 0.0
      %2272 = vmatmul.mubr.f32.gmra.mxu0 %v2156
      %v2273 = vpop.f32.mrf.mxu0
      %v2274 = vadd.f32 0.0, %v2273
      %v2275 = vpop.f32.mrf.mxu0
      %2276 = vmatprep.mubr.f32.mxu0 0.0
      %2277 = vmatmul.mubr.f32.gmra.mxu0 %v2159
      %v2278 = vpop.f32.mrf.mxu0
      %v2279 = vadd.f32 0.0, %v2278
      %v2280 = vpop.f32.mrf.mxu0
      %2281 = vmatprep.mubr.f32.mxu0 0.0
      %2282 = vmatmul.mubr.f32.gmra.mxu0 %v2162
      %v2283 = vpop.f32.mrf.mxu0
      %v2284 = vadd.f32 0.0, %v2283
      %v2285 = vpop.f32.mrf.mxu0
      %2286 = vmatprep.mubr.f32.mxu0 0.0
      %2287 = vmatmul.mubr.f32.gmra.mxu0 %v2165
      %v2288 = vpop.f32.mrf.mxu0
      %v2289 = vadd.f32 0.0, %v2288
      %v2290 = vpop.f32.mrf.mxu0
      %2291 = vmatprep.mubr.f32.mxu0 0.0
      %2292 = vmatmul.mubr.f32.gmra.mxu0 %v2168
      %v2293 = vpop.f32.mrf.mxu0
      %v2294 = vadd.f32 0.0, %v2293
      %v2295 = vpop.f32.mrf.mxu0
      %2296 = vmatprep.mubr.f32.mxu0 0.0
      %2297 = vmatmul.mubr.f32.gmra.mxu0 %v2171
      %v2298 = vpop.f32.mrf.mxu0
      %v2299 = vadd.f32 0.0, %v2298
      %v2300 = vpop.f32.mrf.mxu0
      %2301 = vmatprep.mubr.f32.mxu0 0.0
      %2302 = vmatmul.mubr.f32.gmra.mxu0 %v2174
      %v2303 = vpop.f32.mrf.mxu0
      %v2304 = vadd.f32 0.0, %v2303
      %v2305 = vpop.f32.mrf.mxu0
      %2306 = vmatprep.mubr.f32.mxu0 0.0
      %2307 = vmatmul.mubr.f32.gmra.mxu0 %v2177
      %v2308 = vpop.f32.mrf.mxu0
      %v2309 = vadd.f32 0.0, %v2308
      %v2310 = vpop.f32.mrf.mxu0
      %2311 = vmatprep.mubr.f32.mxu0 0.0
      %2312 = vmatmul.mubr.f32.gmra.mxu0 %v2180
      %v2313 = vpop.f32.mrf.mxu0
      %v2314 = vadd.f32 0.0, %v2313
      %v2315 = vpop.f32.mrf.mxu0
      %2316 = vmatprep.mubr.f32.mxu0 0.0
      %2317 = vmatmul.mubr.f32.gmra.mxu0 %v2183
      %v2318 = vpop.f32.mrf.mxu0
      %v2319 = vadd.f32 0.0, %v2318
      %v2320 = vpop.f32.mrf.mxu0
      %2321 = vmatprep.mubr.f32.mxu0 0.0
      %2322 = vmatmul.mubr.f32.gmra.mxu0 %v2186
      %v2323 = vpop.f32.mrf.mxu0
      %v2324 = vadd.f32 0.0, %v2323
      %v2325 = vpop.f32.mrf.mxu0
      %2326 = vmatprep.mubr.f32.mxu0 0.0
      %2327 = vmatmul.mubr.f32.gmra.mxu0 %v2189
      %v2328 = vpop.f32.mrf.mxu0
      %v2329 = vadd.f32 0.0, %v2328
      %v2330 = vpop.f32.mrf.mxu0
      %2331 = vmatprep.mubr.f32.mxu0 0.0
      %2332 = vmatmul.mubr.f32.gmra.mxu0 %v2192
      %v2333 = vpop.f32.mrf.mxu0
      %v2334 = vadd.f32 0.0, %v2333
      %v2335 = vpop.f32.mrf.mxu0
      %2336 = vmatprep.mubr.f32.mxu0 0.0
      %2337 = vmatmul.mubr.f32.gmra.mxu0 %v2195
      %v2338 = vpop.f32.mrf.mxu0
      %v2339 = vadd.f32 0.0, %v2338
      %v2340 = vpop.f32.mrf.mxu0
      %2341 = vdwg.mxu0
      %2358 = vrot.lane.b32.xlu0 %v2264, 120
      %v2359 = vpop.permute.xlu0 %2358
      %2360 = vrot.lane.b32.xlu0 %v2269, 120
      %v2361 = vpop.permute.xlu0 %2360
      %2362 = vrot.lane.b32.xlu0 %v2274, 120
      %v2363 = vpop.permute.xlu0 %2362
      %2364 = vrot.lane.b32.xlu0 %v2279, 120
      %v2365 = vpop.permute.xlu0 %2364
      %2366 = vrot.lane.b32.xlu0 %v2284, 120
      %v2367 = vpop.permute.xlu0 %2366
      %2368 = vrot.lane.b32.xlu0 %v2289, 120
      %v2369 = vpop.permute.xlu0 %2368
      %2370 = vrot.lane.b32.xlu0 %v2294, 120
      %v2371 = vpop.permute.xlu0 %2370
      %2372 = vrot.lane.b32.xlu0 %v2299, 120
      %v2373 = vpop.permute.xlu0 %2372
      %2374 = vrot.lane.b32.xlu0 %v2304, 120
      %v2375 = vpop.permute.xlu0 %2374
      %2376 = vrot.lane.b32.xlu0 %v2309, 120
      %v2377 = vpop.permute.xlu0 %2376
      %2378 = vrot.lane.b32.xlu0 %v2314, 120
      %v2379 = vpop.permute.xlu0 %2378
      %2380 = vrot.lane.b32.xlu0 %v2319, 120
      %v2381 = vpop.permute.xlu0 %2380
      %2382 = vrot.lane.b32.xlu0 %v2324, 120
      %v2383 = vpop.permute.xlu0 %2382
      %2384 = vrot.lane.b32.xlu0 %v2329, 120
      %v2385 = vpop.permute.xlu0 %2384
      %2386 = vrot.lane.b32.xlu0 %v2334, 120
      %v2387 = vpop.permute.xlu0 %2386
      %2388 = vrot.lane.b32.xlu0 %v2339, 120
      %v2389 = vpop.permute.xlu0 %2388
      %v2406 = vsub.f32 %v2036, %v2359
      %v2407 = vsub.f32 %v2037, %v2361
      %v2408 = vsub.f32 %v2038, %v2363
      %v2409 = vsub.f32 %v2039, %v2365
      %v2410 = vsub.f32 %v2040, %v2367
      %v2411 = vsub.f32 %v2041, %v2369
      %v2412 = vsub.f32 %v2042, %v2371
      %v2413 = vsub.f32 %v2043, %v2373
      %v2414 = vsub.f32 %v2044, %v2375
      %v2415 = vsub.f32 %v2045, %v2377
      %v2416 = vsub.f32 %v2046, %v2379
      %v2417 = vsub.f32 %v2047, %v2381
      %v2418 = vsub.f32 %v2048, %v2383
      %v2419 = vsub.f32 %v2049, %v2385
      %v2420 = vsub.f32 %v2050, %v2387
      %v2421 = vsub.f32 %v2051, %v2389
      %v2422 = vld [vmem:[%s432] sm:$0xff]
      %v2423 = vld [vmem:[%s432 + $0x8] sm:$0xff]
      %v2424 = vld [vmem:[%s432 + $0x10] sm:$0xff]
      %v2425 = vld [vmem:[%s432 + $0x18] sm:$0xff]
      %v2426 = vld [vmem:[%s432 + $0x20] sm:$0xff]
      %v2427 = vld [vmem:[%s432 + $0x28] sm:$0xff]
      %v2428 = vld [vmem:[%s432 + $0x30] sm:$0xff]
      %v2429 = vld [vmem:[%s432 + $0x38] sm:$0xff]
      %v2430 = vld [vmem:[%s432 + $0x40] sm:$0xff]
      %v2431 = vld [vmem:[%s432 + $0x48] sm:$0xff]
      %v2432 = vld [vmem:[%s432 + $0x50] sm:$0xff]
      %v2433 = vld [vmem:[%s432 + $0x58] sm:$0xff]
      %v2434 = vld [vmem:[%s432 + $0x60] sm:$0xff]
      %v2435 = vld [vmem:[%s432 + $0x68] sm:$0xff]
      %v2436 = vld [vmem:[%s432 + $0x70] sm:$0xff]
      %v2437 = vld [vmem:[%s432 + $0x78] sm:$0xff]
      %v2438 = vadd.f32 %v2264, %v2359
      %v2439 = vadd.f32 %v2269, %v2361
      %v2440 = vadd.f32 %v2274, %v2363
      %v2441 = vadd.f32 %v2279, %v2365
      %v2442 = vadd.f32 %v2284, %v2367
      %v2443 = vadd.f32 %v2289, %v2369
      %v2444 = vadd.f32 %v2294, %v2371
      %v2445 = vadd.f32 %v2299, %v2373
      %v2446 = vadd.f32 %v2304, %v2375
      %v2447 = vadd.f32 %v2309, %v2377
      %v2448 = vadd.f32 %v2314, %v2379
      %v2449 = vadd.f32 %v2319, %v2381
      %v2450 = vadd.f32 %v2324, %v2383
      %v2451 = vadd.f32 %v2329, %v2385
      %v2452 = vadd.f32 %v2334, %v2387
      %v2453 = vadd.f32 %v2339, %v2389
      %2455 = vset.pattern.permute.xlu0 0
      %2456 = vperm.xlu0 %2455, %v2422
      %v2457 = vpop.permute.xlu0 %2456
      %2460 = vset.pattern.permute.xlu0 0
      %2461 = vperm.xlu0 %2460, %v2423
      %v2462 = vpop.permute.xlu0 %2461
      %2465 = vset.pattern.permute.xlu0 0
      %2466 = vperm.xlu0 %2465, %v2424
      %v2467 = vpop.permute.xlu0 %2466
      %2470 = vset.pattern.permute.xlu0 0
      %2471 = vperm.xlu0 %2470, %v2425
      %v2472 = vpop.permute.xlu0 %2471
      %2475 = vset.pattern.permute.xlu0 0
      %2476 = vperm.xlu0 %2475, %v2426
      %v2477 = vpop.permute.xlu0 %2476
      %2480 = vset.pattern.permute.xlu0 0
      %2481 = vperm.xlu0 %2480, %v2427
      %v2482 = vpop.permute.xlu0 %2481
      %2485 = vset.pattern.permute.xlu0 0
      %2486 = vperm.xlu0 %2485, %v2428
      %v2487 = vpop.permute.xlu0 %2486
      %2490 = vset.pattern.permute.xlu0 0
      %2491 = vperm.xlu0 %2490, %v2429
      %v2492 = vpop.permute.xlu0 %2491
      %2495 = vset.pattern.permute.xlu0 0
      %2496 = vperm.xlu0 %2495, %v2430
      %v2497 = vpop.permute.xlu0 %2496
      %2500 = vset.pattern.permute.xlu0 0
      %2501 = vperm.xlu0 %2500, %v2431
      %v2502 = vpop.permute.xlu0 %2501
      %2505 = vset.pattern.permute.xlu0 0
      %2506 = vperm.xlu0 %2505, %v2432
      %v2507 = vpop.permute.xlu0 %2506
      %2510 = vset.pattern.permute.xlu0 0
      %2511 = vperm.xlu0 %2510, %v2433
      %v2512 = vpop.permute.xlu0 %2511
      %2515 = vset.pattern.permute.xlu0 0
      %2516 = vperm.xlu0 %2515, %v2434
      %v2517 = vpop.permute.xlu0 %2516
      %2520 = vset.pattern.permute.xlu0 0
      %2521 = vperm.xlu0 %2520, %v2435
      %v2522 = vpop.permute.xlu0 %2521
      %2525 = vset.pattern.permute.xlu0 0
      %2526 = vperm.xlu0 %2525, %v2436
      %v2527 = vpop.permute.xlu0 %2526
      %2530 = vset.pattern.permute.xlu0 0
      %2531 = vperm.xlu0 %2530, %v2437
      %v2532 = vpop.permute.xlu0 %2531
      %v2534 = vmul.f32 %v2457, %v2438
      %v2535 = vmul.f32 %v2462, %v2439
      %v2536 = vmul.f32 %v2467, %v2440
      %v2537 = vmul.f32 %v2472, %v2441
      %v2538 = vmul.f32 %v2477, %v2442
      %v2539 = vmul.f32 %v2482, %v2443
      %v2540 = vmul.f32 %v2487, %v2444
      %v2541 = vmul.f32 %v2492, %v2445
      %v2542 = vmul.f32 %v2497, %v2446
      %v2543 = vmul.f32 %v2502, %v2447
      %v2544 = vmul.f32 %v2507, %v2448
      %v2545 = vmul.f32 %v2512, %v2449
      %v2546 = vmul.f32 %v2517, %v2450
      %v2547 = vmul.f32 %v2522, %v2451
      %v2548 = vmul.f32 %v2527, %v2452
      %v2549 = vmul.f32 %v2532, %v2453
      %v2550 = vadd.f32 %v2406, %v2534
      %v2551 = vadd.f32 %v2407, %v2535
      %v2552 = vadd.f32 %v2408, %v2536
      %v2553 = vadd.f32 %v2409, %v2537
      %v2554 = vadd.f32 %v2410, %v2538
      %v2555 = vadd.f32 %v2411, %v2539
      %v2556 = vadd.f32 %v2412, %v2540
      %v2557 = vadd.f32 %v2413, %v2541
      %v2558 = vadd.f32 %v2414, %v2542
      %v2559 = vadd.f32 %v2415, %v2543
      %v2560 = vadd.f32 %v2416, %v2544
      %v2561 = vadd.f32 %v2417, %v2545
      %v2562 = vadd.f32 %v2418, %v2546
      %v2563 = vadd.f32 %v2419, %v2547
      %v2564 = vadd.f32 %v2420, %v2548
      %v2565 = vadd.f32 %v2421, %v2549
      %v2566 = vsel %vm1239, %v2550, -inf
      %2567 = vmax.xlane.f32.xlu0 %v2566
      %v2568 = vpop.xlane.xlu0 %2567
      %v2569 = vsel %vm1239, %v2551, -inf
      %2570 = vmax.xlane.f32.xlu0 %v2569
      %v2571 = vpop.xlane.xlu0 %2570
      %v2572 = vsel %vm1239, %v2552, -inf
      %2573 = vmax.xlane.f32.xlu0 %v2572
      %v2574 = vpop.xlane.xlu0 %2573
      %v2575 = vsel %vm1239, %v2553, -inf
      %2576 = vmax.xlane.f32.xlu0 %v2575
      %v2577 = vpop.xlane.xlu0 %2576
      %v2578 = vsel %vm1239, %v2554, -inf
      %2579 = vmax.xlane.f32.xlu0 %v2578
      %v2580 = vpop.xlane.xlu0 %2579
      %v2581 = vsel %vm1239, %v2555, -inf
      %2582 = vmax.xlane.f32.xlu0 %v2581
      %v2583 = vpop.xlane.xlu0 %2582
      %v2584 = vsel %vm1239, %v2556, -inf
      %2585 = vmax.xlane.f32.xlu0 %v2584
      %v2586 = vpop.xlane.xlu0 %2585
      %v2587 = vsel %vm1239, %v2557, -inf
      %2588 = vmax.xlane.f32.xlu0 %v2587
      %v2589 = vpop.xlane.xlu0 %2588
      %v2590 = vsel %vm1239, %v2558, -inf
      %2591 = vmax.xlane.f32.xlu0 %v2590
      %v2592 = vpop.xlane.xlu0 %2591
      %v2593 = vsel %vm1239, %v2559, -inf
      %2594 = vmax.xlane.f32.xlu0 %v2593
      %v2595 = vpop.xlane.xlu0 %2594
      %v2596 = vsel %vm1239, %v2560, -inf
      %2597 = vmax.xlane.f32.xlu0 %v2596
      %v2598 = vpop.xlane.xlu0 %2597
      %v2599 = vsel %vm1239, %v2561, -inf
      %2600 = vmax.xlane.f32.xlu0 %v2599
      %v2601 = vpop.xlane.xlu0 %2600
      %v2602 = vsel %vm1239, %v2562, -inf
      %2603 = vmax.xlane.f32.xlu0 %v2602
      %v2604 = vpop.xlane.xlu0 %2603
      %v2605 = vsel %vm1239, %v2563, -inf
      %2606 = vmax.xlane.f32.xlu0 %v2605
      %v2607 = vpop.xlane.xlu0 %2606
      %v2608 = vsel %vm1239, %v2564, -inf
      %2609 = vmax.xlane.f32.xlu0 %v2608
      %v2610 = vpop.xlane.xlu0 %2609
      %v2611 = vsel %vm1239, %v2565, -inf
      %2612 = vmax.xlane.f32.xlu0 %v2611
      %v2613 = vpop.xlane.xlu0 %2612
      %v2614 = vsub.f32 %v2550, %v2568
      %v2615 = vsub.f32 %v2551, %v2571
      %v2616 = vsub.f32 %v2552, %v2574
      %v2617 = vsub.f32 %v2553, %v2577
      %v2618 = vsub.f32 %v2554, %v2580
      %v2619 = vsub.f32 %v2555, %v2583
      %v2620 = vsub.f32 %v2556, %v2586
      %v2621 = vsub.f32 %v2557, %v2589
      %v2622 = vsub.f32 %v2558, %v2592
      %v2623 = vsub.f32 %v2559, %v2595
      %v2624 = vsub.f32 %v2560, %v2598
      %v2625 = vsub.f32 %v2561, %v2601
      %v2626 = vsub.f32 %v2562, %v2604
      %v2627 = vsub.f32 %v2563, %v2607
      %v2628 = vsub.f32 %v2564, %v2610
      %v2629 = vsub.f32 %v2565, %v2613
      %v2630 = vmul.f32 %v2614, 1.442695
      %v2631 = vpow.pop %v2630
      %v2632 = vmul.f32 %v2615, 1.442695
      %v2633 = vpow.pop %v2632
      %v2634 = vmul.f32 %v2616, 1.442695
      %v2635 = vpow.pop %v2634
      %v2636 = vmul.f32 %v2617, 1.442695
      %v2637 = vpow.pop %v2636
      %v2638 = vmul.f32 %v2618, 1.442695
      %v2639 = vpow.pop %v2638
      %v2640 = vmul.f32 %v2619, 1.442695
      %v2641 = vpow.pop %v2640
      %v2642 = vmul.f32 %v2620, 1.442695
      %v2643 = vpow.pop %v2642
      %v2644 = vmul.f32 %v2621, 1.442695
      %v2645 = vpow.pop %v2644
      %v2646 = vmul.f32 %v2622, 1.442695
      %v2647 = vpow.pop %v2646
      %v2648 = vmul.f32 %v2623, 1.442695
      %v2649 = vpow.pop %v2648
      %v2650 = vmul.f32 %v2624, 1.442695
      %v2651 = vpow.pop %v2650
      %v2652 = vmul.f32 %v2625, 1.442695
      %v2653 = vpow.pop %v2652
      %v2654 = vmul.f32 %v2626, 1.442695
      %v2655 = vpow.pop %v2654
      %v2656 = vmul.f32 %v2627, 1.442695
      %v2657 = vpow.pop %v2656
      %v2658 = vmul.f32 %v2628, 1.442695
      %v2659 = vpow.pop %v2658
      %v2660 = vmul.f32 %v2629, 1.442695
      %v2661 = vpow.pop %v2660
      %v2662 = vsel %vm1239, %v2631, 0.0
      %2663 = vadd.xlane.f32.xlu0 %v2662
      %v2664 = vpop.xlane.xlu0 %2663
      %v2665 = vsel %vm1239, %v2633, 0.0
      %2666 = vadd.xlane.f32.xlu0 %v2665
      %v2667 = vpop.xlane.xlu0 %2666
      %v2668 = vsel %vm1239, %v2635, 0.0
      %2669 = vadd.xlane.f32.xlu0 %v2668
      %v2670 = vpop.xlane.xlu0 %2669
      %v2671 = vsel %vm1239, %v2637, 0.0
      %2672 = vadd.xlane.f32.xlu0 %v2671
      %v2673 = vpop.xlane.xlu0 %2672
      %v2674 = vsel %vm1239, %v2639, 0.0
      %2675 = vadd.xlane.f32.xlu0 %v2674
      %v2676 = vpop.xlane.xlu0 %2675
      %v2677 = vsel %vm1239, %v2641, 0.0
      %2678 = vadd.xlane.f32.xlu0 %v2677
      %v2679 = vpop.xlane.xlu0 %2678
      %v2680 = vsel %vm1239, %v2643, 0.0
      %2681 = vadd.xlane.f32.xlu0 %v2680
      %v2682 = vpop.xlane.xlu0 %2681
      %v2683 = vsel %vm1239, %v2645, 0.0
      %2684 = vadd.xlane.f32.xlu0 %v2683
      %v2685 = vpop.xlane.xlu0 %2684
      %v2686 = vsel %vm1239, %v2647, 0.0
      %2687 = vadd.xlane.f32.xlu0 %v2686
      %v2688 = vpop.xlane.xlu0 %2687
      %v2689 = vsel %vm1239, %v2649, 0.0
      %2690 = vadd.xlane.f32.xlu0 %v2689
      %v2691 = vpop.xlane.xlu0 %2690
      %v2692 = vsel %vm1239, %v2651, 0.0
      %2693 = vadd.xlane.f32.xlu0 %v2692
      %v2694 = vpop.xlane.xlu0 %2693
      %v2695 = vsel %vm1239, %v2653, 0.0
      %2696 = vadd.xlane.f32.xlu0 %v2695
      %v2697 = vpop.xlane.xlu0 %2696
      %v2698 = vsel %vm1239, %v2655, 0.0
      %2699 = vadd.xlane.f32.xlu0 %v2698
      %v2700 = vpop.xlane.xlu0 %2699
      %v2701 = vsel %vm1239, %v2657, 0.0
      %2702 = vadd.xlane.f32.xlu0 %v2701
      %v2703 = vpop.xlane.xlu0 %2702
      %v2704 = vsel %vm1239, %v2659, 0.0
      %2705 = vadd.xlane.f32.xlu0 %v2704
      %v2706 = vpop.xlane.xlu0 %2705
      %v2707 = vsel %vm1239, %v2661, 0.0
      %2708 = vadd.xlane.f32.xlu0 %v2707
      %v2709 = vpop.xlane.xlu0 %2708
      %v2710 = vlog2.pop %v2664
      %v2711 = vmul.f32 %v2710, 0.6931472
      %v2712 = vlog2.pop %v2667
      %v2713 = vmul.f32 %v2712, 0.6931472
      %v2714 = vlog2.pop %v2670
      %v2715 = vmul.f32 %v2714, 0.6931472
      %v2716 = vlog2.pop %v2673
      %v2717 = vmul.f32 %v2716, 0.6931472
      %v2718 = vlog2.pop %v2676
      %v2719 = vmul.f32 %v2718, 0.6931472
      %v2720 = vlog2.pop %v2679
      %v2721 = vmul.f32 %v2720, 0.6931472
      %v2722 = vlog2.pop %v2682
      %v2723 = vmul.f32 %v2722, 0.6931472
      %v2724 = vlog2.pop %v2685
      %v2725 = vmul.f32 %v2724, 0.6931472
      %v2726 = vlog2.pop %v2688
      %v2727 = vmul.f32 %v2726, 0.6931472
      %v2728 = vlog2.pop %v2691
      %v2729 = vmul.f32 %v2728, 0.6931472
      %v2730 = vlog2.pop %v2694
      %v2731 = vmul.f32 %v2730, 0.6931472
      %v2732 = vlog2.pop %v2697
      %v2733 = vmul.f32 %v2732, 0.6931472
      %v2734 = vlog2.pop %v2700
      %v2735 = vmul.f32 %v2734, 0.6931472
      %v2736 = vlog2.pop %v2703
      %v2737 = vmul.f32 %v2736, 0.6931472
      %v2738 = vlog2.pop %v2706
      %v2739 = vmul.f32 %v2738, 0.6931472
      %v2740 = vlog2.pop %v2709
      %v2741 = vmul.f32 %v2740, 0.6931472
      %v2742 = vsub.f32 %v2614, %v2711
      %v2743 = vsub.f32 %v2615, %v2713
      %v2744 = vsub.f32 %v2616, %v2715
      %v2745 = vsub.f32 %v2617, %v2717
      %v2746 = vsub.f32 %v2618, %v2719
      %v2747 = vsub.f32 %v2619, %v2721
      %v2748 = vsub.f32 %v2620, %v2723
      %v2749 = vsub.f32 %v2621, %v2725
      %v2750 = vsub.f32 %v2622, %v2727
      %v2751 = vsub.f32 %v2623, %v2729
      %v2752 = vsub.f32 %v2624, %v2731
      %v2753 = vsub.f32 %v2625, %v2733
      %v2754 = vsub.f32 %v2626, %v2735
      %v2755 = vsub.f32 %v2627, %v2737
      %v2756 = vsub.f32 %v2628, %v2739
      %v2757 = vsub.f32 %v2629, %v2741
      %2758 = vst.msk [vmem:[%s438] sm:$0xff] %vm1239, %v2742
      %2759 = vst.msk [vmem:[%s438 + $0x8] sm:$0xff] %vm1239, %v2743
      %2760 = vst.msk [vmem:[%s438 + $0x10] sm:$0xff] %vm1239, %v2744
      %2761 = vst.msk [vmem:[%s438 + $0x18] sm:$0xff] %vm1239, %v2745
      %2762 = vst.msk [vmem:[%s438 + $0x20] sm:$0xff] %vm1239, %v2746
      %2763 = vst.msk [vmem:[%s438 + $0x28] sm:$0xff] %vm1239, %v2747
      %2764 = vst.msk [vmem:[%s438 + $0x30] sm:$0xff] %vm1239, %v2748
      %2765 = vst.msk [vmem:[%s438 + $0x38] sm:$0xff] %vm1239, %v2749
      %2766 = vst.msk [vmem:[%s438 + $0x40] sm:$0xff] %vm1239, %v2750
      %2767 = vst.msk [vmem:[%s438 + $0x48] sm:$0xff] %vm1239, %v2751
      %2768 = vst.msk [vmem:[%s438 + $0x50] sm:$0xff] %vm1239, %v2752
      %2769 = vst.msk [vmem:[%s438 + $0x58] sm:$0xff] %vm1239, %v2753
      %2770 = vst.msk [vmem:[%s438 + $0x60] sm:$0xff] %vm1239, %v2754
      %2771 = vst.msk [vmem:[%s438 + $0x68] sm:$0xff] %vm1239, %v2755
      %2772 = vst.msk [vmem:[%s438 + $0x70] sm:$0xff] %vm1239, %v2756
      %2773 = vst.msk [vmem:[%s438 + $0x78] sm:$0xff] %vm1239, %v2757
      %v2774 = vmul.f32 %v2264, %v2264
      %v2775 = vmul.f32 %v2269, %v2269
      %v2776 = vmul.f32 %v2274, %v2274
      %v2777 = vmul.f32 %v2279, %v2279
      %v2778 = vmul.f32 %v2284, %v2284
      %v2779 = vmul.f32 %v2289, %v2289
      %v2780 = vmul.f32 %v2294, %v2294
      %v2781 = vmul.f32 %v2299, %v2299
      %v2782 = vmul.f32 %v2304, %v2304
      %v2783 = vmul.f32 %v2309, %v2309
      %v2784 = vmul.f32 %v2314, %v2314
      %v2785 = vmul.f32 %v2319, %v2319
      %v2786 = vmul.f32 %v2324, %v2324
      %v2787 = vmul.f32 %v2329, %v2329
      %v2788 = vmul.f32 %v2334, %v2334
      %v2789 = vmul.f32 %v2339, %v2339
      %2806 = vrot.lane.b32.xlu0 %v2774, 120
      %v2807 = vpop.permute.xlu0 %2806
      %2808 = vrot.lane.b32.xlu0 %v2775, 120
      %v2809 = vpop.permute.xlu0 %2808
      %2810 = vrot.lane.b32.xlu0 %v2776, 120
      %v2811 = vpop.permute.xlu0 %2810
      %2812 = vrot.lane.b32.xlu0 %v2777, 120
      %v2813 = vpop.permute.xlu0 %2812
      %2814 = vrot.lane.b32.xlu0 %v2778, 120
      %v2815 = vpop.permute.xlu0 %2814
      %2816 = vrot.lane.b32.xlu0 %v2779, 120
      %v2817 = vpop.permute.xlu0 %2816
      %2818 = vrot.lane.b32.xlu0 %v2780, 120
      %v2819 = vpop.permute.xlu0 %2818
      %2820 = vrot.lane.b32.xlu0 %v2781, 120
      %v2821 = vpop.permute.xlu0 %2820
      %2822 = vrot.lane.b32.xlu0 %v2782, 120
      %v2823 = vpop.permute.xlu0 %2822
      %2824 = vrot.lane.b32.xlu0 %v2783, 120
      %v2825 = vpop.permute.xlu0 %2824
      %2826 = vrot.lane.b32.xlu0 %v2784, 120
      %v2827 = vpop.permute.xlu0 %2826
      %2828 = vrot.lane.b32.xlu0 %v2785, 120
      %v2829 = vpop.permute.xlu0 %2828
      %2830 = vrot.lane.b32.xlu0 %v2786, 120
      %v2831 = vpop.permute.xlu0 %2830
      %2832 = vrot.lane.b32.xlu0 %v2787, 120
      %v2833 = vpop.permute.xlu0 %2832
      %2834 = vrot.lane.b32.xlu0 %v2788, 120
      %v2835 = vpop.permute.xlu0 %2834
      %2836 = vrot.lane.b32.xlu0 %v2789, 120
      %v2837 = vpop.permute.xlu0 %2836
      %v2854 = vadd.f32 %v2774, %v2807
      %v2855 = vadd.f32 %v2775, %v2809
      %v2856 = vadd.f32 %v2776, %v2811
      %v2857 = vadd.f32 %v2777, %v2813
      %v2858 = vadd.f32 %v2778, %v2815
      %v2859 = vadd.f32 %v2779, %v2817
      %v2860 = vadd.f32 %v2780, %v2819
      %v2861 = vadd.f32 %v2781, %v2821
      %v2862 = vadd.f32 %v2782, %v2823
      %v2863 = vadd.f32 %v2783, %v2825
      %v2864 = vadd.f32 %v2784, %v2827
      %v2865 = vadd.f32 %v2785, %v2829
      %v2866 = vadd.f32 %v2786, %v2831
      %v2867 = vadd.f32 %v2787, %v2833
      %v2868 = vadd.f32 %v2788, %v2835
      %v2869 = vadd.f32 %v2789, %v2837
      %v2870 = vsel %vm1239, %v2854, 0.0
      %2871 = vadd.xlane.f32.xlu0 %v2870
      %v2872 = vpop.xlane.xlu0 %2871
      %v2873 = vsel %vm1239, %v2855, 0.0
      %2874 = vadd.xlane.f32.xlu0 %v2873
      %v2875 = vpop.xlane.xlu0 %2874
      %v2876 = vsel %vm1239, %v2856, 0.0
      %2877 = vadd.xlane.f32.xlu0 %v2876
      %v2878 = vpop.xlane.xlu0 %2877
      %v2879 = vsel %vm1239, %v2857, 0.0
      %2880 = vadd.xlane.f32.xlu0 %v2879
      %v2881 = vpop.xlane.xlu0 %2880
      %v2882 = vsel %vm1239, %v2858, 0.0
      %2883 = vadd.xlane.f32.xlu0 %v2882
      %v2884 = vpop.xlane.xlu0 %2883
      %v2885 = vsel %vm1239, %v2859, 0.0
      %2886 = vadd.xlane.f32.xlu0 %v2885
      %v2887 = vpop.xlane.xlu0 %2886
      %v2888 = vsel %vm1239, %v2860, 0.0
      %2889 = vadd.xlane.f32.xlu0 %v2888
      %v2890 = vpop.xlane.xlu0 %2889
      %v2891 = vsel %vm1239, %v2861, 0.0
      %2892 = vadd.xlane.f32.xlu0 %v2891
      %v2893 = vpop.xlane.xlu0 %2892
      %v2894 = vsel %vm1239, %v2862, 0.0
      %2895 = vadd.xlane.f32.xlu0 %v2894
      %v2896 = vpop.xlane.xlu0 %2895
      %v2897 = vsel %vm1239, %v2863, 0.0
      %2898 = vadd.xlane.f32.xlu0 %v2897
      %v2899 = vpop.xlane.xlu0 %2898
      %v2900 = vsel %vm1239, %v2864, 0.0
      %2901 = vadd.xlane.f32.xlu0 %v2900
      %v2902 = vpop.xlane.xlu0 %2901
      %v2903 = vsel %vm1239, %v2865, 0.0
      %2904 = vadd.xlane.f32.xlu0 %v2903
      %v2905 = vpop.xlane.xlu0 %2904
      %v2906 = vsel %vm1239, %v2866, 0.0
      %2907 = vadd.xlane.f32.xlu0 %v2906
      %v2908 = vpop.xlane.xlu0 %2907
      %v2909 = vsel %vm1239, %v2867, 0.0
      %2910 = vadd.xlane.f32.xlu0 %v2909
      %v2911 = vpop.xlane.xlu0 %2910
      %v2912 = vsel %vm1239, %v2868, 0.0
      %2913 = vadd.xlane.f32.xlu0 %v2912
      %v2914 = vpop.xlane.xlu0 %2913
      %v2915 = vsel %vm1239, %v2869, 0.0
      %2916 = vadd.xlane.f32.xlu0 %v2915
      %v2917 = vpop.xlane.xlu0 %2916
      %v2918 = vmul.f32 %v1202, %v1202
      %v2919 = vmul.f32 %v1203, %v1203
      %v2920 = vmul.f32 %v1204, %v1204
      %v2921 = vmul.f32 %v1205, %v1205
      %v2922 = vmul.f32 %v1206, %v1206
      %v2923 = vmul.f32 %v1207, %v1207
      %v2924 = vmul.f32 %v1208, %v1208
      %v2925 = vmul.f32 %v1209, %v1209
      %v2926 = vmul.f32 %v1210, %v1210
      %v2927 = vmul.f32 %v1211, %v1211
      %v2928 = vmul.f32 %v1212, %v1212
      %v2929 = vmul.f32 %v1213, %v1213
      %v2930 = vmul.f32 %v1214, %v1214
      %v2931 = vmul.f32 %v1215, %v1215
      %v2932 = vmul.f32 %v1216, %v1216
      %v2933 = vmul.f32 %v1217, %v1217
      %2950 = vrot.lane.b32.xlu0 %v2918, 120
      %v2951 = vpop.permute.xlu0 %2950
      %2952 = vrot.lane.b32.xlu0 %v2919, 120
      %v2953 = vpop.permute.xlu0 %2952
      %2954 = vrot.lane.b32.xlu0 %v2920, 120
      %v2955 = vpop.permute.xlu0 %2954
      %2956 = vrot.lane.b32.xlu0 %v2921, 120
      %v2957 = vpop.permute.xlu0 %2956
      %2958 = vrot.lane.b32.xlu0 %v2922, 120
      %v2959 = vpop.permute.xlu0 %2958
      %2960 = vrot.lane.b32.xlu0 %v2923, 120
      %v2961 = vpop.permute.xlu0 %2960
      %2962 = vrot.lane.b32.xlu0 %v2924, 120
      %v2963 = vpop.permute.xlu0 %2962
      %2964 = vrot.lane.b32.xlu0 %v2925, 120
      %v2965 = vpop.permute.xlu0 %2964
      %2966 = vrot.lane.b32.xlu0 %v2926, 120
      %v2967 = vpop.permute.xlu0 %2966
      %2968 = vrot.lane.b32.xlu0 %v2927, 120
      %v2969 = vpop.permute.xlu0 %2968
      %2970 = vrot.lane.b32.xlu0 %v2928, 120
      %v2971 = vpop.permute.xlu0 %2970
      %2972 = vrot.lane.b32.xlu0 %v2929, 120
      %v2973 = vpop.permute.xlu0 %2972
      %2974 = vrot.lane.b32.xlu0 %v2930, 120
      %v2975 = vpop.permute.xlu0 %2974
      %2976 = vrot.lane.b32.xlu0 %v2931, 120
      %v2977 = vpop.permute.xlu0 %2976
      %2978 = vrot.lane.b32.xlu0 %v2932, 120
      %v2979 = vpop.permute.xlu0 %2978
      %2980 = vrot.lane.b32.xlu0 %v2933, 120
      %v2981 = vpop.permute.xlu0 %2980
      %v2998 = vadd.f32 %v2918, %v2951
      %v2999 = vadd.f32 %v2919, %v2953
      %v3000 = vadd.f32 %v2920, %v2955
      %v3001 = vadd.f32 %v2921, %v2957
      %v3002 = vadd.f32 %v2922, %v2959
      %v3003 = vadd.f32 %v2923, %v2961
      %v3004 = vadd.f32 %v2924, %v2963
      %v3005 = vadd.f32 %v2925, %v2965
      %v3006 = vadd.f32 %v2926, %v2967
      %v3007 = vadd.f32 %v2927, %v2969
      %v3008 = vadd.f32 %v2928, %v2971
      %v3009 = vadd.f32 %v2929, %v2973
      %v3010 = vadd.f32 %v2930, %v2975
      %v3011 = vadd.f32 %v2931, %v2977
      %v3012 = vadd.f32 %v2932, %v2979
      %v3013 = vadd.f32 %v2933, %v2981
      %v3014 = vsel %vm1239, %v2998, 0.0
      %3015 = vadd.xlane.f32.xlu0 %v3014
      %v3016 = vpop.xlane.xlu0 %3015
      %v3017 = vsel %vm1239, %v2999, 0.0
      %3018 = vadd.xlane.f32.xlu0 %v3017
      %v3019 = vpop.xlane.xlu0 %3018
      %v3020 = vsel %vm1239, %v3000, 0.0
      %3021 = vadd.xlane.f32.xlu0 %v3020
      %v3022 = vpop.xlane.xlu0 %3021
      %v3023 = vsel %vm1239, %v3001, 0.0
      %3024 = vadd.xlane.f32.xlu0 %v3023
      %v3025 = vpop.xlane.xlu0 %3024
      %v3026 = vsel %vm1239, %v3002, 0.0
      %3027 = vadd.xlane.f32.xlu0 %v3026
      %v3028 = vpop.xlane.xlu0 %3027
      %v3029 = vsel %vm1239, %v3003, 0.0
      %3030 = vadd.xlane.f32.xlu0 %v3029
      %v3031 = vpop.xlane.xlu0 %3030
      %v3032 = vsel %vm1239, %v3004, 0.0
      %3033 = vadd.xlane.f32.xlu0 %v3032
      %v3034 = vpop.xlane.xlu0 %3033
      %v3035 = vsel %vm1239, %v3005, 0.0
      %3036 = vadd.xlane.f32.xlu0 %v3035
      %v3037 = vpop.xlane.xlu0 %3036
      %v3038 = vsel %vm1239, %v3006, 0.0
      %3039 = vadd.xlane.f32.xlu0 %v3038
      %v3040 = vpop.xlane.xlu0 %3039
      %v3041 = vsel %vm1239, %v3007, 0.0
      %3042 = vadd.xlane.f32.xlu0 %v3041
      %v3043 = vpop.xlane.xlu0 %3042
      %v3044 = vsel %vm1239, %v3008, 0.0
      %3045 = vadd.xlane.f32.xlu0 %v3044
      %v3046 = vpop.xlane.xlu0 %3045
      %v3047 = vsel %vm1239, %v3009, 0.0
      %3048 = vadd.xlane.f32.xlu0 %v3047
      %v3049 = vpop.xlane.xlu0 %3048
      %v3050 = vsel %vm1239, %v3010, 0.0
      %3051 = vadd.xlane.f32.xlu0 %v3050
      %v3052 = vpop.xlane.xlu0 %3051
      %v3053 = vsel %vm1239, %v3011, 0.0
      %3054 = vadd.xlane.f32.xlu0 %v3053
      %v3055 = vpop.xlane.xlu0 %3054
      %v3056 = vsel %vm1239, %v3012, 0.0
      %3057 = vadd.xlane.f32.xlu0 %v3056
      %v3058 = vpop.xlane.xlu0 %3057
      %v3059 = vsel %vm1239, %v3013, 0.0
      %3060 = vadd.xlane.f32.xlu0 %v3059
      %v3061 = vpop.xlane.xlu0 %3060
      %vm3062 = vcmask 7168
      %v3063 = vsel %vm3062, %v2872, %v3016
      %v3064 = vsel %vm3062, %v2875, %v3019
      %v3065 = vsel %vm3062, %v2878, %v3022
      %v3066 = vsel %vm3062, %v2881, %v3025
      %v3067 = vsel %vm3062, %v2884, %v3028
      %v3068 = vsel %vm3062, %v2887, %v3031
      %v3069 = vsel %vm3062, %v2890, %v3034
      %v3070 = vsel %vm3062, %v2893, %v3037
      %v3071 = vsel %vm3062, %v2896, %v3040
      %v3072 = vsel %vm3062, %v2899, %v3043
      %v3073 = vsel %vm3062, %v2902, %v3046
      %v3074 = vsel %vm3062, %v2905, %v3049
      %v3075 = vsel %vm3062, %v2908, %v3052
      %v3076 = vsel %vm3062, %v2911, %v3055
      %v3077 = vsel %vm3062, %v2914, %v3058
      %v3078 = vsel %vm3062, %v2917, %v3061
      %vm3079 = vcmask 15360
      %3080 = vst.msk [vmem:[%s444] sm:$0xff] %vm3079, %v3063
      %3081 = vst.msk [vmem:[%s444 + $0x8] sm:$0xff] %vm3079, %v3064
      %3082 = vst.msk [vmem:[%s444 + $0x10] sm:$0xff] %vm3079, %v3065
      %3083 = vst.msk [vmem:[%s444 + $0x18] sm:$0xff] %vm3079, %v3066
      %3084 = vst.msk [vmem:[%s444 + $0x20] sm:$0xff] %vm3079, %v3067
      %3085 = vst.msk [vmem:[%s444 + $0x28] sm:$0xff] %vm3079, %v3068
      %3086 = vst.msk [vmem:[%s444 + $0x30] sm:$0xff] %vm3079, %v3069
      %3087 = vst.msk [vmem:[%s444 + $0x38] sm:$0xff] %vm3079, %v3070
      %3088 = vst.msk [vmem:[%s444 + $0x40] sm:$0xff] %vm3079, %v3071
      %3089 = vst.msk [vmem:[%s444 + $0x48] sm:$0xff] %vm3079, %v3072
      %3090 = vst.msk [vmem:[%s444 + $0x50] sm:$0xff] %vm3079, %v3073
      %3091 = vst.msk [vmem:[%s444 + $0x58] sm:$0xff] %vm3079, %v3074
      %3092 = vst.msk [vmem:[%s444 + $0x60] sm:$0xff] %vm3079, %v3075
      %3093 = vst.msk [vmem:[%s444 + $0x68] sm:$0xff] %vm3079, %v3076
      %3094 = vst.msk [vmem:[%s444 + $0x70] sm:$0xff] %vm3079, %v3077
      %3095 = vst.msk [vmem:[%s444 + $0x78] sm:$0xff] %vm3079, %v3078
      %s3096 = smul.u32 16, %s22
      %p3097 = scmp.lt.s32.totalorder %s3096, 31
      %s3098 = scalar_select %p3097, %s3096, 31
      %s3099 = smul.addr %s3098, 8
      %s3100 = scalar_lea.vmem %s9, %s3099
      %s3101 = smul.u32 16, %s22
      %p3102 = scmp.lt.s32.totalorder %s3101, 31
      %s3103 = scalar_select %p3102, %s3101, 31
      %s3104 = smul.addr %s3103, 8
      %s3105 = scalar_lea.vmem %s10, %s3104
      // Predicated region
      $region57: #{dfair_gat_forward.3} parent=55 // pred_check
        %p3106 = pneg %p249
      $region58: #{dfair_gat_forward.3} parent=55 // pred_check_branch
        %3108 = sbr.rel (%p3106) target = $region60
      $region59: #{dfair_gat_forward.3} parent=55 // pred_region
        %s3109 = smul.u32 16, %s22
      $region60: #{dfair_gat_forward.3} parent=55 // pred_fallthru
        _
      // Predicated region
      $region61: #{dfair_gat_forward.3} parent=55 // pred_check
        %p3110 = pneg %p275
      $region62: #{dfair_gat_forward.3} parent=55 // pred_check_branch
        %3112 = sbr.rel (%p3110) target = $region64
      $region63: #{dfair_gat_forward.3} parent=55 // pred_region
        %s3113 = smul.u32 16, %s22
      $region64: #{dfair_gat_forward.3} parent=55 // pred_fallthru
        _
    $region56: #{dfair_gat_forward.3} parent=5 // pred_fallthru
      _
    %p3114 = scmp.le.s32.totalorder 2, %s17
    // Predicated region
    $region65: #{dfair_gat_forward.3} parent=5 // pred_check
      %p3115 = pneg %p3114
    $region66: #{dfair_gat_forward.3} parent=5 // pred_check_branch
      %3117 = sbr.rel (%p3115) target = $region68
    $region67: #{dfair_gat_forward.3} parent=5 // pred_region
      %s3118 = ssub.s32 %s17, 2
      // Predicated region
      $region69: #{dfair_gat_forward.3} parent=67 // pred_check
        %p3119 = pneg %p255
      $region70: #{dfair_gat_forward.3} parent=67 // pred_check_branch
        %3121 = sbr.rel (%p3119) target = $region72
      $region71: #{dfair_gat_forward.3} parent=67 // pred_region
        %s3122 = smul.u32 16, %s23
        %p3123 = scmp.lt.s32.totalorder %s3122, 31
        %s3124 = scalar_select %p3123, %s3122, 31
        %s3125 = smul.addr %s3124, 8
        %s3126 = scalar_lea.vmem %s9, %s3125
      $region72: #{dfair_gat_forward.3} parent=67 // pred_fallthru
        _
      // Predicated region
      $region73: #{dfair_gat_forward.3} parent=67 // pred_check
        %p3127 = pneg %p281
      $region74: #{dfair_gat_forward.3} parent=67 // pred_check_branch
        %3129 = sbr.rel (%p3127) target = $region76
      $region75: #{dfair_gat_forward.3} parent=67 // pred_region
        %s3130 = smul.u32 16, %s23
        %p3131 = scmp.lt.s32.totalorder %s3130, 31
        %s3132 = scalar_select %p3131, %s3130, 31
        %s3133 = smul.addr %s3132, 8
        %s3134 = scalar_lea.vmem %s10, %s3133
      $region76: #{dfair_gat_forward.3} parent=67 // pred_fallthru
        _
    $region68: #{dfair_gat_forward.3} parent=5 // pred_fallthru
      _
  $region6: #{dfair_gat_forward.3} parent=0 // loop_footer
    %s21 = sadd.s32 1, %s17
  $region7: #{dfair_gat_forward.3} parent=0 // loop_footer_branch
    %16 = sbr.rel target = $region3
  $region8: #{dfair_gat_forward.3} parent=0 // loop_exit
    _

// kernel: dfair_gat_forward.2
$region0: #{dfair_gat_forward.2}
  #allocation0 [shape = 'u32[]', space=smem, size = 0x4, offset = 0x4, fixed_abs, tag = 'smem constant byte address 0x4 - core index']
  #allocation1 [shape = 'u32[144,128]{1,0:T(1,128)}', space=vmem, size = 0x12000, scoped, tag = 'internal scratch']
  %s0 = inlined_call_operand.vmem [shape: bf16[256,32], index: 0, kind: input, shape index: {}, may-alias: {0,1}]
  %s1 = inlined_call_operand.vmem [shape: bf16[256,32], index: 1, kind: input, shape index: {}, may-alias: {0,1}]
  %s2 = inlined_call_operand.vmem [shape: s8[256,256], index: 2, kind: input, shape index: {}]
  %s3 = inlined_call_operand.vmem [shape: f32[256,9], index: 3, kind: input, shape index: {}]
  %s4 = inlined_call_operand.vmem [shape: f32[256,1], index: 4, kind: input, shape index: {}]
  %s5 = inlined_call_operand.vmem [shape: bf16[32,48], index: 5, kind: input, shape index: {}]
  %s6 = inlined_call_operand.vmem [shape: f32[9,96], index: 6, kind: input, shape index: {}]
  %s7 = inlined_call_operand.vmem [shape: f32[48,96], index: 7, kind: input, shape index: {}]
  %s8 = inlined_call_operand.vmem [shape: f32[6,48], index: 8, kind: input, shape index: {}]
  %s9 = inlined_call_operand.vmem [shape: bf16[256,48], index: 9, kind: output, shape index: {0}]
  %s10 = inlined_call_operand.vmem [shape: f32[256,2], index: 10, kind: output, shape index: {1}]
  %11 = xla_tuple %s9, %s10
  %s12 = sld [smem:[#allocation0]]
  $region77: #{dfair_gat_forward.2} parent=0
    _
  %s14 = ssub.s32 1, %s12
  %s15 = scalar_select 0, %s14, %s12
  loop: start=0, step=1, limit=4
  $region2: #{dfair_gat_forward.2} parent=0 // loop_pre_header
    _
  $region3: #{dfair_gat_forward.2} parent=0 // loop_header
    %s17 = sphi 0, %s21
    %p18 = scmp.ge.s32.totalorder %s17, 4
    %s25 = sphi 0, %s25
    %s27 = sphi 0, %s25
    %s28 = sphi 0, %s27
    %s42 = sphi 0, %s28
    %s48 = sphi 0, %s50
    %s51 = sphi 0, %s48
    %s52 = sphi 0, %s51
    %s68 = sphi 0, %s52
    %s74 = sphi 0, %s76
    %s77 = sphi 0, %s74
    %s78 = sphi 0, %s77
    %s94 = sphi 0, %s78
    %s100 = sphi 0, %s102
    %s103 = sphi 0, %s100
    %s104 = sphi 0, %s103
    %s120 = sphi 0, %s104
    %s126 = sphi 0, %s128
    %s129 = sphi 0, %s126
    %s130 = sphi 0, %s129
    %s146 = sphi 0, %s130
    %s150 = sphi 0, %s150
    %s152 = sphi 0, %s150
    %s153 = sphi 0, %s152
    %s167 = sphi 0, %s153
    %s171 = sphi 0, %s171
    %s173 = sphi 0, %s171
    %s174 = sphi 0, %s173
    %s188 = sphi 0, %s174
    %s192 = sphi 0, %s192
    %s194 = sphi 0, %s192
    %s195 = sphi 0, %s194
    %s209 = sphi 0, %s195
    %s213 = sphi 0, %s213
    %s215 = sphi 0, %s213
    %s216 = sphi 0, %s215
    %s230 = sphi 0, %s216
    %s236 = sphi 0, %s238
    %s239 = sphi 0, %s236
    %s240 = sphi 0, %s239
    %s256 = sphi 0, %s240
    %s262 = sphi 0, %s264
    %s265 = sphi 0, %s262
    %s266 = sphi 0, %s265
    %s282 = sphi 0, %s266
  $region4: #{dfair_gat_forward.2} parent=0 // loop_header_branch
    %20 = sbr.rel (%p18) target = $region8
  $region5: #{dfair_gat_forward.2} parent=0 // loop_body
    %s22 = ssub.s32 %s17, 1
    %s23 = ssub.s32 %s17, 2
    %s24 = sadd.s32 %s17, 1
    %s26 = sadd.s32 %s25, 1
    %p29 = scmp.eq.s32.totalorder %s17, 1
    %p30 = scmp.ne.s32.totalorder %s25, %s27
    %p31 = scmp.eq.s32.totalorder %s17, 0
    %p32 = por %p30, %p31
    %p33 = scmp.ne.s32.totalorder %s25, %s27
    %p34 = scmp.eq.s32.totalorder %s22, 1
    %p35 = por %p33, %p34
    %p36 = scmp.ne.s32.totalorder %s27, %s28
    %p37 = scmp.eq.s32.totalorder %s22, 0
    %p38 = por %p36, %p37
    %p39 = scmp.ne.s32.totalorder %s27, %s28
    %p40 = scmp.eq.s32.totalorder %s23, 1
    %p41 = por %p39, %p40
    %p43 = scmp.ne.s32.totalorder %s28, %s42
    %p44 = scmp.eq.s32.totalorder %s23, 0
    %p45 = por %p43, %p44
    %s46 = ssub.s32 %s17, %s24
    %p47 = scmp.eq.s32.totalorder %s46, 0
    %s49 = sadd.s32 %s48, 1
    %s50 = scalar_select %p47, %s48, %s49
    %p53 = pneg %p47
    %p54 = scmp.eq.s32.totalorder %s17, 1
    %p55 = por %p53, %p54
    %p56 = scmp.ne.s32.totalorder %s48, %s51
    %p57 = scmp.eq.s32.totalorder %s17, 0
    %p58 = por %p56, %p57
    %p59 = scmp.ne.s32.totalorder %s48, %s51
    %p60 = scmp.eq.s32.totalorder %s22, 1
    %p61 = por %p59, %p60
    %p62 = scmp.ne.s32.totalorder %s51, %s52
    %p63 = scmp.eq.s32.totalorder %s22, 0
    %p64 = por %p62, %p63
    %p65 = scmp.ne.s32.totalorder %s51, %s52
    %p66 = scmp.eq.s32.totalorder %s23, 1
    %p67 = por %p65, %p66
    %p69 = scmp.ne.s32.totalorder %s52, %s68
    %p70 = scmp.eq.s32.totalorder %s23, 0
    %p71 = por %p69, %p70
    %s72 = ssub.s32 %s17, %s24
    %p73 = scmp.eq.s32.totalorder %s72, 0
    %s75 = sadd.s32 %s74, 1
    %s76 = scalar_select %p73, %s74, %s75
    %p79 = pneg %p73
    %p80 = scmp.eq.s32.totalorder %s17, 1
    %p81 = por %p79, %p80
    %p82 = scmp.ne.s32.totalorder %s74, %s77
    %p83 = scmp.eq.s32.totalorder %s17, 0
    %p84 = por %p82, %p83
    %p85 = scmp.ne.s32.totalorder %s74, %s77
    %p86 = scmp.eq.s32.totalorder %s22, 1
    %p87 = por %p85, %p86
    %p88 = scmp.ne.s32.totalorder %s77, %s78
    %p89 = scmp.eq.s32.totalorder %s22, 0
    %p90 = por %p88, %p89
    %p91 = scmp.ne.s32.totalorder %s77, %s78
    %p92 = scmp.eq.s32.totalorder %s23, 1
    %p93 = por %p91, %p92
    %p95 = scmp.ne.s32.totalorder %s78, %s94
    %p96 = scmp.eq.s32.totalorder %s23, 0
    %p97 = por %p95, %p96
    %s98 = ssub.s32 %s17, %s24
    %p99 = scmp.eq.s32.totalorder %s98, 0
    %s101 = sadd.s32 %s100, 1
    %s102 = scalar_select %p99, %s100, %s101
    %p105 = pneg %p99
    %p106 = scmp.eq.s32.totalorder %s17, 1
    %p107 = por %p105, %p106
    %p108 = scmp.ne.s32.totalorder %s100, %s103
    %p109 = scmp.eq.s32.totalorder %s17, 0
    %p110 = por %p108, %p109
    %p111 = scmp.ne.s32.totalorder %s100, %s103
    %p112 = scmp.eq.s32.totalorder %s22, 1
    %p113 = por %p111, %p112
    %p114 = scmp.ne.s32.totalorder %s103, %s104
    %p115 = scmp.eq.s32.totalorder %s22, 0
    %p116 = por %p114, %p115
    %p117 = scmp.ne.s32.totalorder %s103, %s104
    %p118 = scmp.eq.s32.totalorder %s23, 1
    %p119 = por %p117, %p118
    %p121 = scmp.ne.s32.totalorder %s104, %s120
    %p122 = scmp.eq.s32.totalorder %s23, 0
    %p123 = por %p121, %p122
    %s124 = ssub.s32 %s17, %s24
    %p125 = scmp.eq.s32.totalorder %s124, 0
    %s127 = sadd.s32 %s126, 1
    %s128 = scalar_select %p125, %s126, %s127
    %p131 = pneg %p125
    %p132 = scmp.eq.s32.totalorder %s17, 1
    %p133 = por %p131, %p132
    %p134 = scmp.ne.s32.totalorder %s126, %s129
    %p135 = scmp.eq.s32.totalorder %s17, 0
    %p136 = por %p134, %p135
    %p137 = scmp.ne.s32.totalorder %s126, %s129
    %p138 = scmp.eq.s32.totalorder %s22, 1
    %p139 = por %p137, %p138
    %p140 = scmp.ne.s32.totalorder %s129, %s130
    %p141 = scmp.eq.s32.totalorder %s22, 0
    %p142 = por %p140, %p141
    %p143 = scmp.ne.s32.totalorder %s129, %s130
    %p144 = scmp.eq.s32.totalorder %s23, 1
    %p145 = por %p143, %p144
    %p147 = scmp.ne.s32.totalorder %s130, %s146
    %p148 = scmp.eq.s32.totalorder %s23, 0
    %p149 = por %p147, %p148
    %s151 = sadd.s32 %s150, 1
    %p154 = scmp.eq.s32.totalorder %s17, 1
    %p155 = scmp.ne.s32.totalorder %s150, %s152
    %p156 = scmp.eq.s32.totalorder %s17, 0
    %p157 = por %p155, %p156
    %p158 = scmp.ne.s32.totalorder %s150, %s152
    %p159 = scmp.eq.s32.totalorder %s22, 1
    %p160 = por %p158, %p159
    %p161 = scmp.ne.s32.totalorder %s152, %s153
    %p162 = scmp.eq.s32.totalorder %s22, 0
    %p163 = por %p161, %p162
    %p164 = scmp.ne.s32.totalorder %s152, %s153
    %p165 = scmp.eq.s32.totalorder %s23, 1
    %p166 = por %p164, %p165
    %p168 = scmp.ne.s32.totalorder %s153, %s167
    %p169 = scmp.eq.s32.totalorder %s23, 0
    %p170 = por %p168, %p169
    %s172 = sadd.s32 %s171, 1
    %p175 = scmp.eq.s32.totalorder %s17, 1
    %p176 = scmp.ne.s32.totalorder %s171, %s173
    %p177 = scmp.eq.s32.totalorder %s17, 0
    %p178 = por %p176, %p177
    %p179 = scmp.ne.s32.totalorder %s171, %s173
    %p180 = scmp.eq.s32.totalorder %s22, 1
    %p181 = por %p179, %p180
    %p182 = scmp.ne.s32.totalorder %s173, %s174
    %p183 = scmp.eq.s32.totalorder %s22, 0
    %p184 = por %p182, %p183
    %p185 = scmp.ne.s32.totalorder %s173, %s174
    %p186 = scmp.eq.s32.totalorder %s23, 1
    %p187 = por %p185, %p186
    %p189 = scmp.ne.s32.totalorder %s174, %s188
    %p190 = scmp.eq.s32.totalorder %s23, 0
    %p191 = por %p189, %p190
    %s193 = sadd.s32 %s192, 1
    %p196 = scmp.eq.s32.totalorder %s17, 1
    %p197 = scmp.ne.s32.totalorder %s192, %s194
    %p198 = scmp.eq.s32.totalorder %s17, 0
    %p199 = por %p197, %p198
    %p200 = scmp.ne.s32.totalorder %s192, %s194
    %p201 = scmp.eq.s32.totalorder %s22, 1
    %p202 = por %p200, %p201
    %p203 = scmp.ne.s32.totalorder %s194, %s195
    %p204 = scmp.eq.s32.totalorder %s22, 0
    %p205 = por %p203, %p204
    %p206 = scmp.ne.s32.totalorder %s194, %s195
    %p207 = scmp.eq.s32.totalorder %s23, 1
    %p208 = por %p206, %p207
    %p210 = scmp.ne.s32.totalorder %s195, %s209
    %p211 = scmp.eq.s32.totalorder %s23, 0
    %p212 = por %p210, %p211
    %s214 = sadd.s32 %s213, 1
    %p217 = scmp.eq.s32.totalorder %s17, 1
    %p218 = scmp.ne.s32.totalorder %s213, %s215
    %p219 = scmp.eq.s32.totalorder %s17, 0
    %p220 = por %p218, %p219
    %p221 = scmp.ne.s32.totalorder %s213, %s215
    %p222 = scmp.eq.s32.totalorder %s22, 1
    %p223 = por %p221, %p222
    %p224 = scmp.ne.s32.totalorder %s215, %s216
    %p225 = scmp.eq.s32.totalorder %s22, 0
    %p226 = por %p224, %p225
    %p227 = scmp.ne.s32.totalorder %s215, %s216
    %p228 = scmp.eq.s32.totalorder %s23, 1
    %p229 = por %p227, %p228
    %p231 = scmp.ne.s32.totalorder %s216, %s230
    %p232 = scmp.eq.s32.totalorder %s23, 0
    %p233 = por %p231, %p232
    %s234 = ssub.s32 %s17, %s24
    %p235 = scmp.eq.s32.totalorder %s234, 0
    %s237 = sadd.s32 %s236, 1
    %s238 = scalar_select %p235, %s236, %s237
    %p241 = pneg %p235
    %p242 = scmp.eq.s32.totalorder %s17, 1
    %p243 = por %p241, %p242
    %p244 = scmp.ne.s32.totalorder %s236, %s239
    %p245 = scmp.eq.s32.totalorder %s17, 0
    %p246 = por %p244, %p245
    %p247 = scmp.ne.s32.totalorder %s236, %s239
    %p248 = scmp.eq.s32.totalorder %s22, 1
    %p249 = por %p247, %p248
    %p250 = scmp.ne.s32.totalorder %s239, %s240
    %p251 = scmp.eq.s32.totalorder %s22, 0
    %p252 = por %p250, %p251
    %p253 = scmp.ne.s32.totalorder %s239, %s240
    %p254 = scmp.eq.s32.totalorder %s23, 1
    %p255 = por %p253, %p254
    %p257 = scmp.ne.s32.totalorder %s240, %s256
    %p258 = scmp.eq.s32.totalorder %s23, 0
    %p259 = por %p257, %p258
    %s260 = ssub.s32 %s17, %s24
    %p261 = scmp.eq.s32.totalorder %s260, 0
    %s263 = sadd.s32 %s262, 1
    %s264 = scalar_select %p261, %s262, %s263
    %p267 = pneg %p261
    %p268 = scmp.eq.s32.totalorder %s17, 1
    %p269 = por %p267, %p268
    %p270 = scmp.ne.s32.totalorder %s262, %s265
    %p271 = scmp.eq.s32.totalorder %s17, 0
    %p272 = por %p270, %p271
    %p273 = scmp.ne.s32.totalorder %s262, %s265
    %p274 = scmp.eq.s32.totalorder %s22, 1
    %p275 = por %p273, %p274
    %p276 = scmp.ne.s32.totalorder %s265, %s266
    %p277 = scmp.eq.s32.totalorder %s22, 0
    %p278 = por %p276, %p277
    %p279 = scmp.ne.s32.totalorder %s265, %s266
    %p280 = scmp.eq.s32.totalorder %s23, 1
    %p281 = por %p279, %p280
    %p283 = scmp.ne.s32.totalorder %s266, %s282
    %p284 = scmp.eq.s32.totalorder %s23, 0
    %p285 = por %p283, %p284
    %p286 = scmp.le.s32.totalorder 1, %s17
    %p287 = scmp.lt.s32.totalorder %s17, 3
    %p288 = pnand %p286, %p287
    %p289 = pneg %p288
    // Predicated region
    $region9: #{dfair_gat_forward.2} parent=5 // pred_check
      _
    $region10: #{dfair_gat_forward.2} parent=5 // pred_check_branch
      %291 = sbr.rel (%p288) target = $region12
    $region11: #{dfair_gat_forward.2} parent=5 // pred_region
      %s292 = ssub.s32 %s17, 1
      // Predicated region
      $region13: #{dfair_gat_forward.2} parent=11 // pred_check
        %p293 = pneg %p38
      $region14: #{dfair_gat_forward.2} parent=11 // pred_check_branch
        %295 = sbr.rel (%p293) target = $region16
      $region15: #{dfair_gat_forward.2} parent=11 // pred_region
        _
      $region16: #{dfair_gat_forward.2} parent=11 // pred_fallthru
        _
      // Predicated region
      $region17: #{dfair_gat_forward.2} parent=11 // pred_check
        %p296 = pneg %p163
      $region18: #{dfair_gat_forward.2} parent=11 // pred_check_branch
        %298 = sbr.rel (%p296) target = $region20
      $region19: #{dfair_gat_forward.2} parent=11 // pred_region
        _
      $region20: #{dfair_gat_forward.2} parent=11 // pred_fallthru
        _
      // Predicated region
      $region21: #{dfair_gat_forward.2} parent=11 // pred_check
        %p299 = pneg %p184
      $region22: #{dfair_gat_forward.2} parent=11 // pred_check_branch
        %301 = sbr.rel (%p299) target = $region24
      $region23: #{dfair_gat_forward.2} parent=11 // pred_region
        _
      $region24: #{dfair_gat_forward.2} parent=11 // pred_fallthru
        _
      // Predicated region
      $region25: #{dfair_gat_forward.2} parent=11 // pred_check
        %p302 = pneg %p205
      $region26: #{dfair_gat_forward.2} parent=11 // pred_check_branch
        %304 = sbr.rel (%p302) target = $region28
      $region27: #{dfair_gat_forward.2} parent=11 // pred_region
        _
      $region28: #{dfair_gat_forward.2} parent=11 // pred_fallthru
        _
      // Predicated region
      $region29: #{dfair_gat_forward.2} parent=11 // pred_check
        %p305 = pneg %p226
      $region30: #{dfair_gat_forward.2} parent=11 // pred_check_branch
        %307 = sbr.rel (%p305) target = $region32
      $region31: #{dfair_gat_forward.2} parent=11 // pred_region
        _
      $region32: #{dfair_gat_forward.2} parent=11 // pred_fallthru
        _
    $region12: #{dfair_gat_forward.2} parent=5 // pred_fallthru
      _
    %p308 = scmp.lt.s32.totalorder %s17, 2
    // Predicated region
    $region33: #{dfair_gat_forward.2} parent=5 // pred_check
      %p309 = pneg %p308
    $region34: #{dfair_gat_forward.2} parent=5 // pred_check_branch
      %311 = sbr.rel (%p309) target = $region36
    $region35: #{dfair_gat_forward.2} parent=5 // pred_region
      // Predicated region
      $region37: #{dfair_gat_forward.2} parent=35 // pred_check
        %p312 = pneg %p58
      $region38: #{dfair_gat_forward.2} parent=35 // pred_check_branch
        %314 = sbr.rel (%p312) target = $region40
      $region39: #{dfair_gat_forward.2} parent=35 // pred_region
        %s315 = smul.u32 16, %s17
        %p316 = scmp.lt.s32.totalorder %s315, 31
        %s317 = scalar_select %p316, %s315, 31
        %s318 = smul.addr %s317, 4
        %s319 = scalar_lea.vmem %s1, %s318
        %s320 = smul.u32 16, %s17
      $region40: #{dfair_gat_forward.2} parent=35 // pred_fallthru
        _
      // Predicated region
      $region41: #{dfair_gat_forward.2} parent=35 // pred_check
        %p321 = pneg %p84
      $region42: #{dfair_gat_forward.2} parent=35 // pred_check_branch
        %323 = sbr.rel (%p321) target = $region44
      $region43: #{dfair_gat_forward.2} parent=35 // pred_region
        %s324 = smul.u32 4, %s17
        %p325 = scmp.lt.s32.totalorder %s324, 7
        %s326 = scalar_select %p325, %s324, 7
        %s327 = smul.addr %s326, 2
        %s328 = smul.addr %s327, 8
        %s329 = scalar_lea.vmem %s2, %s328
        %s330 = smul.u32 4, %s17
      $region44: #{dfair_gat_forward.2} parent=35 // pred_fallthru
        _
      // Predicated region
      $region45: #{dfair_gat_forward.2} parent=35 // pred_check
        %p331 = pneg %p110
      $region46: #{dfair_gat_forward.2} parent=35 // pred_check_branch
        %333 = sbr.rel (%p331) target = $region48
      $region47: #{dfair_gat_forward.2} parent=35 // pred_region
        %s334 = smul.u32 16, %s17
        %p335 = scmp.lt.s32.totalorder %s334, 31
        %s336 = scalar_select %p335, %s334, 31
        %s337 = smul.addr %s336, 8
        %s338 = scalar_lea.vmem %s3, %s337
        %s339 = smul.u32 16, %s17
      $region48: #{dfair_gat_forward.2} parent=35 // pred_fallthru
        _
      // Predicated region
      $region49: #{dfair_gat_forward.2} parent=35 // pred_check
        %p340 = pneg %p136
      $region50: #{dfair_gat_forward.2} parent=35 // pred_check_branch
        %342 = sbr.rel (%p340) target = $region52
      $region51: #{dfair_gat_forward.2} parent=35 // pred_region
        %s343 = smul.u32 16, %s17
        %p344 = scmp.lt.s32.totalorder %s343, 31
        %s345 = scalar_select %p344, %s343, 31
        %s346 = smul.addr %s345, 8
        %s347 = scalar_lea.vmem %s4, %s346
        %s348 = smul.u32 16, %s17
      $region52: #{dfair_gat_forward.2} parent=35 // pred_fallthru
        _
    $region36: #{dfair_gat_forward.2} parent=5 // pred_fallthru
      _
    %p349 = scmp.le.s32.totalorder 1, %s17
    %p350 = scmp.lt.s32.totalorder %s17, 3
    %p351 = pnand %p349, %p350
    %p352 = pneg %p351
    // Predicated region
    $region53: #{dfair_gat_forward.2} parent=5 // pred_check
      _
    $region54: #{dfair_gat_forward.2} parent=5 // pred_check_branch
      %354 = sbr.rel (%p351) target = $region56
    $region55: #{dfair_gat_forward.2} parent=5 // pred_region
      %s355 = ssub.s32 %s17, 1
      %p356 = pneg %p38
      %p357 = pneg %p35
      %s358 = smul.u32 16, %s22
      %p359 = scmp.lt.s32.totalorder %s358, 31
      %s360 = scalar_select %p359, %s358, 31
      %s361 = smul.addr %s360, 4
      %s362 = scalar_lea.vmem %s1, %s361
      %p363 = pneg %p64
      %p364 = pneg %p61
      %s365 = smul.u32 4, %s22
      %p366 = scmp.lt.s32.totalorder %s365, 7
      %s367 = scalar_select %p366, %s365, 7
      %s368 = smul.addr %s367, 2
      %s369 = smul.addr %s368, 8
      %s370 = scalar_lea.vmem %s2, %s369
      %p371 = pneg %p90
      %p372 = pneg %p87
      %s373 = smul.u32 16, %s22
      %p374 = scmp.lt.s32.totalorder %s373, 31
      %s375 = scalar_select %p374, %s373, 31
      %s376 = smul.addr %s375, 8
      %s377 = scalar_lea.vmem %s3, %s376
      %p378 = pneg %p116
      %p379 = pneg %p113
      %s380 = smul.u32 16, %s22
      %p381 = scmp.lt.s32.totalorder %s380, 31
      %s382 = scalar_select %p381, %s380, 31
      %s383 = smul.addr %s382, 8
      %s384 = scalar_lea.vmem %s4, %s383
      %p385 = pneg %p142
      %p386 = pneg %p139
      %p387 = pneg %p163
      %p388 = pneg %p160
      %p389 = pneg %p184
      %p390 = pneg %p181
      %p391 = pneg %p205
      %p392 = pneg %p202
      %p393 = pneg %p226
      %p394 = pneg %p223
      %p395 = pneg %p252
      %p396 = pneg %p249
      %s397 = smul.u32 16, %s22
      %p398 = scmp.lt.s32.totalorder %s397, 31
      %s399 = scalar_select %p398, %s397, 31
      %s400 = smul.addr %s399, 4
      %s401 = scalar_lea.vmem %s9, %s400
      %p402 = pneg %p278
      %p403 = pneg %p275
      %s404 = smul.u32 16, %s22
      %p405 = scmp.lt.s32.totalorder %s404, 31
      %s406 = scalar_select %p405, %s404, 31
      %s407 = smul.addr %s406, 8
      %s408 = scalar_lea.vmem %s10, %s407
      %s409 = smul.u32 16, %s22
      %p410 = scmp.lt.s32.totalorder %s409, 31
      %s411 = scalar_select %p410, %s409, 31
      %s412 = smul.addr %s411, 4
      %s413 = scalar_lea.vmem %s1, %s412
      %s414 = smul.u32 16, %s22
      %s415 = smul.u32 4, %s22
      %p416 = scmp.lt.s32.totalorder %s415, 7
      %s417 = scalar_select %p416, %s415, 7
      %s418 = smul.addr %s417, 2
      %s419 = smul.addr %s418, 8
      %s420 = scalar_lea.vmem %s2, %s419
      %s421 = smul.u32 4, %s22
      %s422 = smul.u32 16, %s22
      %p423 = scmp.lt.s32.totalorder %s422, 31
      %s424 = scalar_select %p423, %s422, 31
      %s425 = smul.addr %s424, 8
      %s426 = scalar_lea.vmem %s3, %s425
      %s427 = smul.u32 16, %s22
      %s428 = smul.u32 16, %s22
      %p429 = scmp.lt.s32.totalorder %s428, 31
      %s430 = scalar_select %p429, %s428, 31
      %s431 = smul.addr %s430, 8
      %s432 = scalar_lea.vmem %s4, %s431
      %s433 = smul.u32 16, %s22
      %s434 = smul.u32 16, %s22
      %p435 = scmp.lt.s32.totalorder %s434, 31
      %s436 = scalar_select %p435, %s434, 31
      %s437 = smul.addr %s436, 4
      %s438 = scalar_lea.vmem %s9, %s437
      %s439 = smul.u32 16, %s22
      %s440 = smul.u32 16, %s22
      %p441 = scmp.lt.s32.totalorder %s440, 31
      %s442 = scalar_select %p441, %s440, 31
      %s443 = smul.addr %s442, 8
      %s444 = scalar_lea.vmem %s10, %s443
      %s445 = smul.u32 16, %s22
      %v447 = vld [vmem:[%s0] sm:$0xf]
      %v448 = vld [vmem:[%s0 + $0x4] sm:$0xf]
      %v449 = vld [vmem:[%s0 + $0x8] sm:$0xf]
      %v450 = vld [vmem:[%s0 + $0xc] sm:$0xf]
      %v451 = vld [vmem:[%s0 + $0x10] sm:$0xf]
      %v452 = vld [vmem:[%s0 + $0x14] sm:$0xf]
      %v453 = vld [vmem:[%s0 + $0x18] sm:$0xf]
      %v454 = vld [vmem:[%s0 + $0x1c] sm:$0xf]
      %v455 = vld [vmem:[%s0 + $0x20] sm:$0xf]
      %v456 = vld [vmem:[%s0 + $0x24] sm:$0xf]
      %v457 = vld [vmem:[%s0 + $0x28] sm:$0xf]
      %v458 = vld [vmem:[%s0 + $0x2c] sm:$0xf]
      %v459 = vld [vmem:[%s0 + $0x30] sm:$0xf]
      %v460 = vld [vmem:[%s0 + $0x34] sm:$0xf]
      %v461 = vld [vmem:[%s0 + $0x38] sm:$0xf]
      %v462 = vld [vmem:[%s0 + $0x3c] sm:$0xf]
      %v463 = vld [vmem:[%s0 + $0x40] sm:$0xf]
      %v464 = vld [vmem:[%s0 + $0x44] sm:$0xf]
      %v465 = vld [vmem:[%s0 + $0x48] sm:$0xf]
      %v466 = vld [vmem:[%s0 + $0x4c] sm:$0xf]
      %v467 = vld [vmem:[%s0 + $0x50] sm:$0xf]
      %v468 = vld [vmem:[%s0 + $0x54] sm:$0xf]
      %v469 = vld [vmem:[%s0 + $0x58] sm:$0xf]
      %v470 = vld [vmem:[%s0 + $0x5c] sm:$0xf]
      %v471 = vld [vmem:[%s0 + $0x60] sm:$0xf]
      %v472 = vld [vmem:[%s0 + $0x64] sm:$0xf]
      %v473 = vld [vmem:[%s0 + $0x68] sm:$0xf]
      %v474 = vld [vmem:[%s0 + $0x6c] sm:$0xf]
      %v475 = vld [vmem:[%s0 + $0x70] sm:$0xf]
      %v476 = vld [vmem:[%s0 + $0x74] sm:$0xf]
      %v477 = vld [vmem:[%s0 + $0x78] sm:$0xf]
      %v478 = vld [vmem:[%s0 + $0x7c] sm:$0xf]
      %v479 = vld [vmem:[%s5] sm:$0xf]
      %v480 = vld [vmem:[%s5 + $0x4] sm:$0xf]
      %v481 = vld [vmem:[%s5 + $0x8] sm:$0xf]
      %v482 = vld [vmem:[%s5 + $0xc] sm:$0xf]
      %v515 = vunpack.c.l.b16 %v447
      %v516 = vunpack.c.l.b16 %v448
      %v517 = vunpack.c.l.b16 %v449
      %v518 = vunpack.c.l.b16 %v450
      %v519 = vunpack.c.l.b16 %v451
      %v520 = vunpack.c.l.b16 %v452
      %v521 = vunpack.c.l.b16 %v453
      %v522 = vunpack.c.l.b16 %v454
      %v523 = vunpack.c.l.b16 %v455
      %v524 = vunpack.c.l.b16 %v456
      %v525 = vunpack.c.l.b16 %v457
      %v526 = vunpack.c.l.b16 %v458
      %v527 = vunpack.c.l.b16 %v459
      %v528 = vunpack.c.l.b16 %v460
      %v529 = vunpack.c.l.b16 %v461
      %v530 = vunpack.c.l.b16 %v462
      %v531 = vunpack.c.l.b16 %v463
      %v532 = vunpack.c.l.b16 %v464
      %v533 = vunpack.c.l.b16 %v465
      %v534 = vunpack.c.l.b16 %v466
      %v535 = vunpack.c.l.b16 %v467
      %v536 = vunpack.c.l.b16 %v468
      %v537 = vunpack.c.l.b16 %v469
      %v538 = vunpack.c.l.b16 %v470
      %v539 = vunpack.c.l.b16 %v471
      %v540 = vunpack.c.l.b16 %v472
      %v541 = vunpack.c.l.b16 %v473
      %v542 = vunpack.c.l.b16 %v474
      %v543 = vunpack.c.l.b16 %v475
      %v544 = vunpack.c.l.b16 %v476
      %v545 = vunpack.c.l.b16 %v477
      %v546 = vunpack.c.l.b16 %v478
      %v547 = vpack.c.b16 %v516, %v515
      %v548 = vpack.c.b16 %v518, %v517
      %v549 = vpack.c.b16 %v520, %v519
      %v550 = vpack.c.b16 %v522, %v521
      %v551 = vpack.c.b16 %v524, %v523
      %v552 = vpack.c.b16 %v526, %v525
      %v553 = vpack.c.b16 %v528, %v527
      %v554 = vpack.c.b16 %v530, %v529
      %v555 = vpack.c.b16 %v532, %v531
      %v556 = vpack.c.b16 %v534, %v533
      %v557 = vpack.c.b16 %v536, %v535
      %v558 = vpack.c.b16 %v538, %v537
      %v559 = vpack.c.b16 %v540, %v539
      %v560 = vpack.c.b16 %v542, %v541
      %v561 = vpack.c.b16 %v544, %v543
      %v562 = vpack.c.b16 %v546, %v545
      %v567 = vunpack.c.l.b16 %v479
      %v568 = vunpack.c.l.b16 %v480
      %v569 = vunpack.c.l.b16 %v481
      %v570 = vunpack.c.l.b16 %v482
      %v571 = vpack.c.b16 %v568, %v567
      %v572 = vpack.c.b16 %v570, %v569
      %vm575 = vcmask 261120
      %v577 = vsel %vm575, %v547, 0
      %v580 = vsel %vm575, %v548, 0
      %v583 = vsel %vm575, %v549, 0
      %v586 = vsel %vm575, %v550, 0
      %v589 = vsel %vm575, %v551, 0
      %v592 = vsel %vm575, %v552, 0
      %v595 = vsel %vm575, %v553, 0
      %v598 = vsel %vm575, %v554, 0
      %v601 = vsel %vm575, %v555, 0
      %v604 = vsel %vm575, %v556, 0
      %v607 = vsel %vm575, %v557, 0
      %v610 = vsel %vm575, %v558, 0
      %v613 = vsel %vm575, %v559, 0
      %v616 = vsel %vm575, %v560, 0
      %v619 = vsel %vm575, %v561, 0
      %v622 = vsel %vm575, %v562, 0
      %624 = vmatprep.subr.bf16.mxu0 0
      %625 = vmatpush1.bf16.msra.mxu0 0
      %626 = vmatprep.subr.bf16.mxu0 0
      %627 = vmatpush1.bf16.msra.mxu0 0
      %628 = vmatprep.subr.bf16.mxu0 0
      %629 = vmatpush1.bf16.msra.mxu0 0
      %630 = vmatprep.subr.bf16.mxu0 0
      %631 = vmatpush1.bf16.msra.mxu0 0
      %632 = vmatprep.subr.bf16.mxu0 0
      %633 = vmatpush1.bf16.msra.mxu0 0
      %634 = vmatprep.subr.bf16.mxu0 0
      %635 = vmatpush1.bf16.msra.mxu0 0
      %636 = vmatprep.subr.bf16.mxu0 0
      %637 = vmatpush1.bf16.msra.mxu0 %v572
      %638 = vmatprep.subr.bf16.mxu0 0
      %639 = vmatpush1.bf16.msra.mxu0 %v571
      %640 = vmatprep.subr.bf16.mxu0 0
      %641 = vmatpush2.bf16.msra.mxu0 0
      %642 = vmatprep.subr.bf16.mxu0 0
      %643 = vmatpush2.bf16.msra.mxu0 0
      %644 = vmatprep.subr.bf16.mxu0 0
      %645 = vmatpush2.bf16.msra.mxu0 0
      %646 = vmatprep.subr.bf16.mxu0 0
      %647 = vmatpush2.bf16.msra.mxu0 0
      %648 = vmatprep.subr.bf16.mxu0 0
      %649 = vmatpush2.bf16.msra.mxu0 0
      %650 = vmatprep.subr.bf16.mxu0 0
      %651 = vmatpush2.bf16.msra.mxu0 0
      %652 = vmatprep.subr.bf16.mxu0 0
      %653 = vmatpush2.bf16.msra.mxu0 0
      %654 = vmatprep.subr.bf16.mxu0 0
      %655 = vmatpush2.bf16.msra.mxu0 0
      %656 = vmatprep.mubr.bf16.mxu0 0
      %657 = vmatmul.mubr.bf16.gmra.mxu0 %v577
      %v658 = vpop.f32.mrf.mxu0
      %v659 = vadd.f32 0.0, %v658
      %v660 = vpop.f32.mrf.mxu0
      %v661 = vpop.f32.mrf.mxu0
      %v662 = vadd.f32 0.0, %v661
      %v663 = vpop.f32.mrf.mxu0
      %664 = vmatprep.mubr.bf16.mxu0 0
      %665 = vmatmul.mubr.bf16.gmra.mxu0 %v580
      %v666 = vpop.f32.mrf.mxu0
      %v667 = vadd.f32 0.0, %v666
      %v668 = vpop.f32.mrf.mxu0
      %v669 = vpop.f32.mrf.mxu0
      %v670 = vadd.f32 0.0, %v669
      %v671 = vpop.f32.mrf.mxu0
      %672 = vmatprep.mubr.bf16.mxu0 0
      %673 = vmatmul.mubr.bf16.gmra.mxu0 %v583
      %v674 = vpop.f32.mrf.mxu0
      %v675 = vadd.f32 0.0, %v674
      %v676 = vpop.f32.mrf.mxu0
      %v677 = vpop.f32.mrf.mxu0
      %v678 = vadd.f32 0.0, %v677
      %v679 = vpop.f32.mrf.mxu0
      %680 = vmatprep.mubr.bf16.mxu0 0
      %681 = vmatmul.mubr.bf16.gmra.mxu0 %v586
      %v682 = vpop.f32.mrf.mxu0
      %v683 = vadd.f32 0.0, %v682
      %v684 = vpop.f32.mrf.mxu0
      %v685 = vpop.f32.mrf.mxu0
      %v686 = vadd.f32 0.0, %v685
      %v687 = vpop.f32.mrf.mxu0
      %688 = vmatprep.mubr.bf16.mxu0 0
      %689 = vmatmul.mubr.bf16.gmra.mxu0 %v589
      %v690 = vpop.f32.mrf.mxu0
      %v691 = vadd.f32 0.0, %v690
      %v692 = vpop.f32.mrf.mxu0
      %v693 = vpop.f32.mrf.mxu0
      %v694 = vadd.f32 0.0, %v693
      %v695 = vpop.f32.mrf.mxu0
      %696 = vmatprep.mubr.bf16.mxu0 0
      %697 = vmatmul.mubr.bf16.gmra.mxu0 %v592
      %v698 = vpop.f32.mrf.mxu0
      %v699 = vadd.f32 0.0, %v698
      %v700 = vpop.f32.mrf.mxu0
      %v701 = vpop.f32.mrf.mxu0
      %v702 = vadd.f32 0.0, %v701
      %v703 = vpop.f32.mrf.mxu0
      %704 = vmatprep.mubr.bf16.mxu0 0
      %705 = vmatmul.mubr.bf16.gmra.mxu0 %v595
      %v706 = vpop.f32.mrf.mxu0
      %v707 = vadd.f32 0.0, %v706
      %v708 = vpop.f32.mrf.mxu0
      %v709 = vpop.f32.mrf.mxu0
      %v710 = vadd.f32 0.0, %v709
      %v711 = vpop.f32.mrf.mxu0
      %712 = vmatprep.mubr.bf16.mxu0 0
      %713 = vmatmul.mubr.bf16.gmra.mxu0 %v598
      %v714 = vpop.f32.mrf.mxu0
      %v715 = vadd.f32 0.0, %v714
      %v716 = vpop.f32.mrf.mxu0
      %v717 = vpop.f32.mrf.mxu0
      %v718 = vadd.f32 0.0, %v717
      %v719 = vpop.f32.mrf.mxu0
      %720 = vmatprep.mubr.bf16.mxu0 0
      %721 = vmatmul.mubr.bf16.gmra.mxu0 %v601
      %v722 = vpop.f32.mrf.mxu0
      %v723 = vadd.f32 0.0, %v722
      %v724 = vpop.f32.mrf.mxu0
      %v725 = vpop.f32.mrf.mxu0
      %v726 = vadd.f32 0.0, %v725
      %v727 = vpop.f32.mrf.mxu0
      %728 = vmatprep.mubr.bf16.mxu0 0
      %729 = vmatmul.mubr.bf16.gmra.mxu0 %v604
      %v730 = vpop.f32.mrf.mxu0
      %v731 = vadd.f32 0.0, %v730
      %v732 = vpop.f32.mrf.mxu0
      %v733 = vpop.f32.mrf.mxu0
      %v734 = vadd.f32 0.0, %v733
      %v735 = vpop.f32.mrf.mxu0
      %736 = vmatprep.mubr.bf16.mxu0 0
      %737 = vmatmul.mubr.bf16.gmra.mxu0 %v607
      %v738 = vpop.f32.mrf.mxu0
      %v739 = vadd.f32 0.0, %v738
      %v740 = vpop.f32.mrf.mxu0
      %v741 = vpop.f32.mrf.mxu0
      %v742 = vadd.f32 0.0, %v741
      %v743 = vpop.f32.mrf.mxu0
      %744 = vmatprep.mubr.bf16.mxu0 0
      %745 = vmatmul.mubr.bf16.gmra.mxu0 %v610
      %v746 = vpop.f32.mrf.mxu0
      %v747 = vadd.f32 0.0, %v746
      %v748 = vpop.f32.mrf.mxu0
      %v749 = vpop.f32.mrf.mxu0
      %v750 = vadd.f32 0.0, %v749
      %v751 = vpop.f32.mrf.mxu0
      %752 = vmatprep.mubr.bf16.mxu0 0
      %753 = vmatmul.mubr.bf16.gmra.mxu0 %v613
      %v754 = vpop.f32.mrf.mxu0
      %v755 = vadd.f32 0.0, %v754
      %v756 = vpop.f32.mrf.mxu0
      %v757 = vpop.f32.mrf.mxu0
      %v758 = vadd.f32 0.0, %v757
      %v759 = vpop.f32.mrf.mxu0
      %760 = vmatprep.mubr.bf16.mxu0 0
      %761 = vmatmul.mubr.bf16.gmra.mxu0 %v616
      %v762 = vpop.f32.mrf.mxu0
      %v763 = vadd.f32 0.0, %v762
      %v764 = vpop.f32.mrf.mxu0
      %v765 = vpop.f32.mrf.mxu0
      %v766 = vadd.f32 0.0, %v765
      %v767 = vpop.f32.mrf.mxu0
      %768 = vmatprep.mubr.bf16.mxu0 0
      %769 = vmatmul.mubr.bf16.gmra.mxu0 %v619
      %v770 = vpop.f32.mrf.mxu0
      %v771 = vadd.f32 0.0, %v770
      %v772 = vpop.f32.mrf.mxu0
      %v773 = vpop.f32.mrf.mxu0
      %v774 = vadd.f32 0.0, %v773
      %v775 = vpop.f32.mrf.mxu0
      %776 = vmatprep.mubr.bf16.mxu0 0
      %777 = vmatmul.mubr.bf16.gmra.mxu0 %v622
      %v778 = vpop.f32.mrf.mxu0
      %v779 = vadd.f32 0.0, %v778
      %v780 = vpop.f32.mrf.mxu0
      %v781 = vpop.f32.mrf.mxu0
      %v782 = vadd.f32 0.0, %v781
      %v783 = vpop.f32.mrf.mxu0
      %784 = vdwg.mxu0
      %v785 = vld [vmem:[%s413] sm:$0xf]
      %v786 = vld [vmem:[%s413 + $0x4] sm:$0xf]
      %v787 = vld [vmem:[%s413 + $0x8] sm:$0xf]
      %v788 = vld [vmem:[%s413 + $0xc] sm:$0xf]
      %v789 = vld [vmem:[%s413 + $0x10] sm:$0xf]
      %v790 = vld [vmem:[%s413 + $0x14] sm:$0xf]
      %v791 = vld [vmem:[%s413 + $0x18] sm:$0xf]
      %v792 = vld [vmem:[%s413 + $0x1c] sm:$0xf]
      %v793 = vld [vmem:[%s413 + $0x20] sm:$0xf]
      %v794 = vld [vmem:[%s413 + $0x24] sm:$0xf]
      %v795 = vld [vmem:[%s413 + $0x28] sm:$0xf]
      %v796 = vld [vmem:[%s413 + $0x2c] sm:$0xf]
      %v797 = vld [vmem:[%s413 + $0x30] sm:$0xf]
      %v798 = vld [vmem:[%s413 + $0x34] sm:$0xf]
      %v799 = vld [vmem:[%s413 + $0x38] sm:$0xf]
      %v800 = vld [vmem:[%s413 + $0x3c] sm:$0xf]
      %v817 = vunpack.c.l.b16 %v785
      %v818 = vunpack.c.l.b16 %v786
      %v819 = vunpack.c.l.b16 %v787
      %v820 = vunpack.c.l.b16 %v788
      %v821 = vunpack.c.l.b16 %v789
      %v822 = vunpack.c.l.b16 %v790
      %v823 = vunpack.c.l.b16 %v791
      %v824 = vunpack.c.l.b16 %v792
      %v825 = vunpack.c.l.b16 %v793
      %v826 = vunpack.c.l.b16 %v794
      %v827 = vunpack.c.l.b16 %v795
      %v828 = vunpack.c.l.b16 %v796
      %v829 = vunpack.c.l.b16 %v797
      %v830 = vunpack.c.l.b16 %v798
      %v831 = vunpack.c.l.b16 %v799
      %v832 = vunpack.c.l.b16 %v800
      %v833 = vpack.c.b16 %v818, %v817
      %v834 = vpack.c.b16 %v820, %v819
      %v835 = vpack.c.b16 %v822, %v821
      %v836 = vpack.c.b16 %v824, %v823
      %v837 = vpack.c.b16 %v826, %v825
      %v838 = vpack.c.b16 %v828, %v827
      %v839 = vpack.c.b16 %v830, %v829
      %v840 = vpack.c.b16 %v832, %v831
      %v842 = vsel %vm575, %v833, 0
      %v845 = vsel %vm575, %v834, 0
      %v848 = vsel %vm575, %v835, 0
      %v851 = vsel %vm575, %v836, 0
      %v854 = vsel %vm575, %v837, 0
      %v857 = vsel %vm575, %v838, 0
      %v860 = vsel %vm575, %v839, 0
      %v863 = vsel %vm575, %v840, 0
      %865 = vmatprep.subr.bf16.mxu0 0
      %866 = vmatpush1.bf16.msra.mxu0 0
      %867 = vmatprep.subr.bf16.mxu0 0
      %868 = vmatpush1.bf16.msra.mxu0 0
      %869 = vmatprep.subr.bf16.mxu0 0
      %870 = vmatpush1.bf16.msra.mxu0 0
      %871 = vmatprep.subr.bf16.mxu0 0
      %872 = vmatpush1.bf16.msra.mxu0 0
      %873 = vmatprep.subr.bf16.mxu0 0
      %874 = vmatpush1.bf16.msra.mxu0 0
      %875 = vmatprep.subr.bf16.mxu0 0
      %876 = vmatpush1.bf16.msra.mxu0 0
      %877 = vmatprep.subr.bf16.mxu0 0
      %878 = vmatpush1.bf16.msra.mxu0 %v572
      %879 = vmatprep.subr.bf16.mxu0 0
      %880 = vmatpush1.bf16.msra.mxu0 %v571
      %881 = vmatprep.subr.bf16.mxu0 0
      %882 = vmatpush2.bf16.msra.mxu0 0
      %883 = vmatprep.subr.bf16.mxu0 0
      %884 = vmatpush2.bf16.msra.mxu0 0
      %885 = vmatprep.subr.bf16.mxu0 0
      %886 = vmatpush2.bf16.msra.mxu0 0
      %887 = vmatprep.subr.bf16.mxu0 0
      %888 = vmatpush2.bf16.msra.mxu0 0
      %889 = vmatprep.subr.bf16.mxu0 0
      %890 = vmatpush2.bf16.msra.mxu0 0
      %891 = vmatprep.subr.bf16.mxu0 0
      %892 = vmatpush2.bf16.msra.mxu0 0
      %893 = vmatprep.subr.bf16.mxu0 0
      %894 = vmatpush2.bf16.msra.mxu0 0
      %895 = vmatprep.subr.bf16.mxu0 0
      %896 = vmatpush2.bf16.msra.mxu0 0
      %897 = vmatprep.mubr.bf16.mxu0 0
      %898 = vmatmul.mubr.bf16.gmra.mxu0 %v842
      %v899 = vpop.f32.mrf.mxu0
      %v900 = vadd.f32 0.0, %v899
      %v901 = vpop.f32.mrf.mxu0
      %v902 = vpop.f32.mrf.mxu0
      %v903 = vadd.f32 0.0, %v902
      %v904 = vpop.f32.mrf.mxu0
      %905 = vmatprep.mubr.bf16.mxu0 0
      %906 = vmatmul.mubr.bf16.gmra.mxu0 %v845
      %v907 = vpop.f32.mrf.mxu0
      %v908 = vadd.f32 0.0, %v907
      %v909 = vpop.f32.mrf.mxu0
      %v910 = vpop.f32.mrf.mxu0
      %v911 = vadd.f32 0.0, %v910
      %v912 = vpop.f32.mrf.mxu0
      %913 = vmatprep.mubr.bf16.mxu0 0
      %914 = vmatmul.mubr.bf16.gmra.mxu0 %v848
      %v915 = vpop.f32.mrf.mxu0
      %v916 = vadd.f32 0.0, %v915
      %v917 = vpop.f32.mrf.mxu0
      %v918 = vpop.f32.mrf.mxu0
      %v919 = vadd.f32 0.0, %v918
      %v920 = vpop.f32.mrf.mxu0
      %921 = vmatprep.mubr.bf16.mxu0 0
      %922 = vmatmul.mubr.bf16.gmra.mxu0 %v851
      %v923 = vpop.f32.mrf.mxu0
      %v924 = vadd.f32 0.0, %v923
      %v925 = vpop.f32.mrf.mxu0
      %v926 = vpop.f32.mrf.mxu0
      %v927 = vadd.f32 0.0, %v926
      %v928 = vpop.f32.mrf.mxu0
      %929 = vmatprep.mubr.bf16.mxu0 0
      %930 = vmatmul.mubr.bf16.gmra.mxu0 %v854
      %v931 = vpop.f32.mrf.mxu0
      %v932 = vadd.f32 0.0, %v931
      %v933 = vpop.f32.mrf.mxu0
      %v934 = vpop.f32.mrf.mxu0
      %v935 = vadd.f32 0.0, %v934
      %v936 = vpop.f32.mrf.mxu0
      %937 = vmatprep.mubr.bf16.mxu0 0
      %938 = vmatmul.mubr.bf16.gmra.mxu0 %v857
      %v939 = vpop.f32.mrf.mxu0
      %v940 = vadd.f32 0.0, %v939
      %v941 = vpop.f32.mrf.mxu0
      %v942 = vpop.f32.mrf.mxu0
      %v943 = vadd.f32 0.0, %v942
      %v944 = vpop.f32.mrf.mxu0
      %945 = vmatprep.mubr.bf16.mxu0 0
      %946 = vmatmul.mubr.bf16.gmra.mxu0 %v860
      %v947 = vpop.f32.mrf.mxu0
      %v948 = vadd.f32 0.0, %v947
      %v949 = vpop.f32.mrf.mxu0
      %v950 = vpop.f32.mrf.mxu0
      %v951 = vadd.f32 0.0, %v950
      %v952 = vpop.f32.mrf.mxu0
      %953 = vmatprep.mubr.bf16.mxu0 0
      %954 = vmatmul.mubr.bf16.gmra.mxu0 %v863
      %v955 = vpop.f32.mrf.mxu0
      %v956 = vadd.f32 0.0, %v955
      %v957 = vpop.f32.mrf.mxu0
      %v958 = vpop.f32.mrf.mxu0
      %v959 = vadd.f32 0.0, %v958
      %v960 = vpop.f32.mrf.mxu0
      %961 = vdwg.mxu0
      %v962 = vld [vmem:[%s426] sm:$0xff]
      %v963 = vld [vmem:[%s426 + $0x8] sm:$0xff]
      %v964 = vld [vmem:[%s426 + $0x10] sm:$0xff]
      %v965 = vld [vmem:[%s426 + $0x18] sm:$0xff]
      %v966 = vld [vmem:[%s426 + $0x20] sm:$0xff]
      %v967 = vld [vmem:[%s426 + $0x28] sm:$0xff]
      %v968 = vld [vmem:[%s426 + $0x30] sm:$0xff]
      %v969 = vld [vmem:[%s426 + $0x38] sm:$0xff]
      %v970 = vld [vmem:[%s426 + $0x40] sm:$0xff]
      %v971 = vld [vmem:[%s426 + $0x48] sm:$0xff]
      %v972 = vld [vmem:[%s426 + $0x50] sm:$0xff]
      %v973 = vld [vmem:[%s426 + $0x58] sm:$0xff]
      %v974 = vld [vmem:[%s426 + $0x60] sm:$0xff]
      %v975 = vld [vmem:[%s426 + $0x68] sm:$0xff]
      %v976 = vld [vmem:[%s426 + $0x70] sm:$0xff]
      %v977 = vld [vmem:[%s426 + $0x78] sm:$0xff]
      %v978 = vld [vmem:[%s6] sm:$0xff]
      %v979 = vld [vmem:[%s6 + $0x8] sm:$0x1]
      %vm980 = vcmask 72704
      %v982 = vsel %vm980, %v962, 0
      %v985 = vsel %vm980, %v963, 0
      %v988 = vsel %vm980, %v964, 0
      %v991 = vsel %vm980, %v965, 0
      %v994 = vsel %vm980, %v966, 0
      %v997 = vsel %vm980, %v967, 0
      %v1000 = vsel %vm980, %v968, 0
      %v1003 = vsel %vm980, %v969, 0
      %v1006 = vsel %vm980, %v970, 0
      %v1009 = vsel %vm980, %v971, 0
      %v1012 = vsel %vm980, %v972, 0
      %v1015 = vsel %vm980, %v973, 0
      %v1018 = vsel %vm980, %v974, 0
      %v1021 = vsel %vm980, %v975, 0
      %v1024 = vsel %vm980, %v976, 0
      %v1027 = vsel %vm980, %v977, 0
      %vm1029 = vcmask 1040384
      %v1031 = vsel %vm1029, %v979, 0
      %1033 = vmatprep.subr.mxu0 0.0
      %1034 = vmatpush1.msra.mxu0 0.0
      %1035 = vmatprep.subr.mxu0 0.0
      %1036 = vmatpush1.msra.mxu0 0.0
      %1037 = vmatprep.subr.mxu0 0.0
      %1038 = vmatpush1.msra.mxu0 0.0
      %1039 = vmatprep.subr.mxu0 0.0
      %1040 = vmatpush1.msra.mxu0 0.0
      %1041 = vmatprep.subr.mxu0 0.0
      %1042 = vmatpush1.msra.mxu0 0.0
      %1043 = vmatprep.subr.mxu0 0.0
      %1044 = vmatpush1.msra.mxu0 0.0
      %1045 = vmatprep.subr.mxu0 0.0
      %1046 = vmatpush1.msra.mxu0 0.0
      %1047 = vmatprep.subr.mxu0 0.0
      %1048 = vmatpush1.msra.mxu0 0.0
      %1049 = vmatprep.subr.mxu0 0.0
      %1050 = vmatpush1.msra.mxu0 0.0
      %1051 = vmatprep.subr.mxu0 0.0
      %1052 = vmatpush1.msra.mxu0 0.0
      %1053 = vmatprep.subr.mxu0 0.0
      %1054 = vmatpush1.msra.mxu0 0.0
      %1055 = vmatprep.subr.mxu0 0.0
      %1056 = vmatpush1.msra.mxu0 0.0
      %1057 = vmatprep.subr.mxu0 0.0
      %1058 = vmatpush1.msra.mxu0 0.0
      %1059 = vmatprep.subr.mxu0 0.0
      %1060 = vmatpush1.msra.mxu0 0.0
      %1061 = vmatprep.subr.mxu0 0.0
      %1062 = vmatpush1.msra.mxu0 %v1031
      %1063 = vmatprep.subr.mxu0 0.0
      %1064 = vmatpush1.msra.mxu0 %v978
      %1065 = vmatprep.subr.mxu0 0.0
      %1066 = vmatpush2.msra.mxu0 0.0
      %1067 = vmatprep.subr.mxu0 0.0
      %1068 = vmatpush2.msra.mxu0 0.0
      %1069 = vmatprep.subr.mxu0 0.0
      %1070 = vmatpush2.msra.mxu0 0.0
      %1071 = vmatprep.subr.mxu0 0.0
      %1072 = vmatpush2.msra.mxu0 0.0
      %1073 = vmatprep.subr.mxu0 0.0
      %1074 = vmatpush2.msra.mxu0 0.0
      %1075 = vmatprep.subr.mxu0 0.0
      %1076 = vmatpush2.msra.mxu0 0.0
      %1077 = vmatprep.subr.mxu0 0.0
      %1078 = vmatpush2.msra.mxu0 0.0
      %1079 = vmatprep.subr.mxu0 0.0
      %1080 = vmatpush2.msra.mxu0 0.0
      %1081 = vmatprep.subr.mxu0 0.0
      %1082 = vmatpush2.msra.mxu0 0.0
      %1083 = vmatprep.subr.mxu0 0.0
      %1084 = vmatpush2.msra.mxu0 0.0
      %1085 = vmatprep.subr.mxu0 0.0
      %1086 = vmatpush2.msra.mxu0 0.0
      %1087 = vmatprep.subr.mxu0 0.0
      %1088 = vmatpush2.msra.mxu0 0.0
      %1089 = vmatprep.subr.mxu0 0.0
      %1090 = vmatpush2.msra.mxu0 0.0
      %1091 = vmatprep.subr.mxu0 0.0
      %1092 = vmatpush2.msra.mxu0 0.0
      %1093 = vmatprep.subr.mxu0 0.0
      %1094 = vmatpush2.msra.mxu0 0.0
      %1095 = vmatprep.subr.mxu0 0.0
      %1096 = vmatpush2.msra.mxu0 0.0
      %1097 = vmatprep.mubr.f32.mxu0 0.0
      %1098 = vmatmul.mubr.f32.gmra.mxu0 %v982
      %v1099 = vpop.f32.mrf.mxu0
      %v1100 = vadd.f32 0.0, %v1099
      %v1101 = vpop.f32.mrf.mxu0
      %1102 = vmatprep.mubr.f32.mxu0 0.0
      %1103 = vmatmul.mubr.f32.gmra.mxu0 %v985
      %v1104 = vpop.f32.mrf.mxu0
      %v1105 = vadd.f32 0.0, %v1104
      %v1106 = vpop.f32.mrf.mxu0
      %1107 = vmatprep.mubr.f32.mxu0 0.0
      %1108 = vmatmul.mubr.f32.gmra.mxu0 %v988
      %v1109 = vpop.f32.mrf.mxu0
      %v1110 = vadd.f32 0.0, %v1109
      %v1111 = vpop.f32.mrf.mxu0
      %1112 = vmatprep.mubr.f32.mxu0 0.0
      %1113 = vmatmul.mubr.f32.gmra.mxu0 %v991
      %v1114 = vpop.f32.mrf.mxu0
      %v1115 = vadd.f32 0.0, %v1114
      %v1116 = vpop.f32.mrf.mxu0
      %1117 = vmatprep.mubr.f32.mxu0 0.0
      %1118 = vmatmul.mubr.f32.gmra.mxu0 %v994
      %v1119 = vpop.f32.mrf.mxu0
      %v1120 = vadd.f32 0.0, %v1119
      %v1121 = vpop.f32.mrf.mxu0
      %1122 = vmatprep.mubr.f32.mxu0 0.0
      %1123 = vmatmul.mubr.f32.gmra.mxu0 %v997
      %v1124 = vpop.f32.mrf.mxu0
      %v1125 = vadd.f32 0.0, %v1124
      %v1126 = vpop.f32.mrf.mxu0
      %1127 = vmatprep.mubr.f32.mxu0 0.0
      %1128 = vmatmul.mubr.f32.gmra.mxu0 %v1000
      %v1129 = vpop.f32.mrf.mxu0
      %v1130 = vadd.f32 0.0, %v1129
      %v1131 = vpop.f32.mrf.mxu0
      %1132 = vmatprep.mubr.f32.mxu0 0.0
      %1133 = vmatmul.mubr.f32.gmra.mxu0 %v1003
      %v1134 = vpop.f32.mrf.mxu0
      %v1135 = vadd.f32 0.0, %v1134
      %v1136 = vpop.f32.mrf.mxu0
      %1137 = vmatprep.mubr.f32.mxu0 0.0
      %1138 = vmatmul.mubr.f32.gmra.mxu0 %v1006
      %v1139 = vpop.f32.mrf.mxu0
      %v1140 = vadd.f32 0.0, %v1139
      %v1141 = vpop.f32.mrf.mxu0
      %1142 = vmatprep.mubr.f32.mxu0 0.0
      %1143 = vmatmul.mubr.f32.gmra.mxu0 %v1009
      %v1144 = vpop.f32.mrf.mxu0
      %v1145 = vadd.f32 0.0, %v1144
      %v1146 = vpop.f32.mrf.mxu0
      %1147 = vmatprep.mubr.f32.mxu0 0.0
      %1148 = vmatmul.mubr.f32.gmra.mxu0 %v1012
      %v1149 = vpop.f32.mrf.mxu0
      %v1150 = vadd.f32 0.0, %v1149
      %v1151 = vpop.f32.mrf.mxu0
      %1152 = vmatprep.mubr.f32.mxu0 0.0
      %1153 = vmatmul.mubr.f32.gmra.mxu0 %v1015
      %v1154 = vpop.f32.mrf.mxu0
      %v1155 = vadd.f32 0.0, %v1154
      %v1156 = vpop.f32.mrf.mxu0
      %1157 = vmatprep.mubr.f32.mxu0 0.0
      %1158 = vmatmul.mubr.f32.gmra.mxu0 %v1018
      %v1159 = vpop.f32.mrf.mxu0
      %v1160 = vadd.f32 0.0, %v1159
      %v1161 = vpop.f32.mrf.mxu0
      %1162 = vmatprep.mubr.f32.mxu0 0.0
      %1163 = vmatmul.mubr.f32.gmra.mxu0 %v1021
      %v1164 = vpop.f32.mrf.mxu0
      %v1165 = vadd.f32 0.0, %v1164
      %v1166 = vpop.f32.mrf.mxu0
      %1167 = vmatprep.mubr.f32.mxu0 0.0
      %1168 = vmatmul.mubr.f32.gmra.mxu0 %v1024
      %v1169 = vpop.f32.mrf.mxu0
      %v1170 = vadd.f32 0.0, %v1169
      %v1171 = vpop.f32.mrf.mxu0
      %1172 = vmatprep.mubr.f32.mxu0 0.0
      %1173 = vmatmul.mubr.f32.gmra.mxu0 %v1027
      %v1174 = vpop.f32.mrf.mxu0
      %v1175 = vadd.f32 0.0, %v1174
      %v1176 = vpop.f32.mrf.mxu0
      %1177 = vdwg.mxu0
      %v1178 = vmul.f32 %v1100, 0.2
      %v1179 = vmul.f32 %v1105, 0.2
      %v1180 = vmul.f32 %v1110, 0.2
      %v1181 = vmul.f32 %v1115, 0.2
      %v1182 = vmul.f32 %v1120, 0.2
      %v1183 = vmul.f32 %v1125, 0.2
      %v1184 = vmul.f32 %v1130, 0.2
      %v1185 = vmul.f32 %v1135, 0.2
      %v1186 = vmul.f32 %v1140, 0.2
      %v1187 = vmul.f32 %v1145, 0.2
      %v1188 = vmul.f32 %v1150, 0.2
      %v1189 = vmul.f32 %v1155, 0.2
      %v1190 = vmul.f32 %v1160, 0.2
      %v1191 = vmul.f32 %v1165, 0.2
      %v1192 = vmul.f32 %v1170, 0.2
      %v1193 = vmul.f32 %v1175, 0.2
      %v1194 = vmax.f32 %v1100, %v1178
      %v1195 = vmax.f32 %v1105, %v1179
      %v1196 = vmax.f32 %v1110, %v1180
      %v1197 = vmax.f32 %v1115, %v1181
      %v1198 = vmax.f32 %v1120, %v1182
      %v1199 = vmax.f32 %v1125, %v1183
      %v1200 = vmax.f32 %v1130, %v1184
      %v1201 = vmax.f32 %v1135, %v1185
      %v1202 = vmax.f32 %v1140, %v1186
      %v1203 = vmax.f32 %v1145, %v1187
      %v1204 = vmax.f32 %v1150, %v1188
      %v1205 = vmax.f32 %v1155, %v1189
      %v1206 = vmax.f32 %v1160, %v1190
      %v1207 = vmax.f32 %v1165, %v1191
      %v1208 = vmax.f32 %v1170, %v1192
      %v1209 = vmax.f32 %v1175, %v1193
      %v1210 = vld [vmem:[%s8] sm:$0x3f]
      %vm1211 = vcmask 392192
      %v1213 = vsel %vm1211, %v900, 0
      %v1216 = vsel %vm1211, %v903, 0
      %v1219 = vsel %vm1211, %v908, 0
      %v1222 = vsel %vm1211, %v911, 0
      %v1225 = vsel %vm1211, %v916, 0
      %v1228 = vsel %vm1211, %v919, 0
      %v1231 = vsel %vm1211, %v924, 0
      %v1234 = vsel %vm1211, %v927, 0
      %v1237 = vsel %vm1211, %v932, 0
      %v1240 = vsel %vm1211, %v935, 0
      %v1243 = vsel %vm1211, %v940, 0
      %v1246 = vsel %vm1211, %v943, 0
      %v1249 = vsel %vm1211, %v948, 0
      %v1252 = vsel %vm1211, %v951, 0
      %v1255 = vsel %vm1211, %v956, 0
      %v1258 = vsel %vm1211, %v959, 0
      %v1261 = vsel %vm1211, %v1210, 0
      %1263 = vmatprep.subr.mxu0 0.0
      %1264 = vmatpush1.xpose.msra.mxu0 0.0
      %1265 = vmatprep.subr.mxu0 0.0
      %1266 = vmatpush1.xpose.msra.mxu0 0.0
      %1267 = vmatprep.subr.mxu0 0.0
      %1268 = vmatpush1.xpose.msra.mxu0 0.0
      %1269 = vmatprep.subr.mxu0 0.0
      %1270 = vmatpush1.xpose.msra.mxu0 0.0
      %1271 = vmatprep.subr.mxu0 0.0
      %1272 = vmatpush1.xpose.msra.mxu0 0.0
      %1273 = vmatprep.subr.mxu0 0.0
      %1274 = vmatpush1.xpose.msra.mxu0 0.0
      %1275 = vmatprep.subr.mxu0 0.0
      %1276 = vmatpush1.xpose.msra.mxu0 0.0
      %1277 = vmatprep.subr.mxu0 0.0
      %1278 = vmatpush1.xpose.msra.mxu0 0.0
      %1279 = vmatprep.subr.mxu0 0.0
      %1280 = vmatpush1.xpose.msra.mxu0 0.0
      %1281 = vmatprep.subr.mxu0 0.0
      %1282 = vmatpush1.xpose.msra.mxu0 0.0
      %1283 = vmatprep.subr.mxu0 0.0
      %1284 = vmatpush1.xpose.msra.mxu0 0.0
      %1285 = vmatprep.subr.mxu0 0.0
      %1286 = vmatpush1.xpose.msra.mxu0 0.0
      %1287 = vmatprep.subr.mxu0 0.0
      %1288 = vmatpush1.xpose.msra.mxu0 0.0
      %1289 = vmatprep.subr.mxu0 0.0
      %1290 = vmatpush1.xpose.msra.mxu0 0.0
      %1291 = vmatprep.subr.mxu0 0.0
      %1292 = vmatpush1.xpose.msra.mxu0 0.0
      %1293 = vmatprep.subr.mxu0 0.0
      %1294 = vmatpush1.xpose.msra.mxu0 %v1261
      %1295 = vmatprep.subr.mxu0 0.0
      %1296 = vmatpush2.xpose.msra.mxu0 0.0
      %1297 = vmatprep.subr.mxu0 0.0
      %1298 = vmatpush2.xpose.msra.mxu0 0.0
      %1299 = vmatprep.subr.mxu0 0.0
      %1300 = vmatpush2.xpose.msra.mxu0 0.0
      %1301 = vmatprep.subr.mxu0 0.0
      %1302 = vmatpush2.xpose.msra.mxu0 0.0
      %1303 = vmatprep.subr.mxu0 0.0
      %1304 = vmatpush2.xpose.msra.mxu0 0.0
      %1305 = vmatprep.subr.mxu0 0.0
      %1306 = vmatpush2.xpose.msra.mxu0 0.0
      %1307 = vmatprep.subr.mxu0 0.0
      %1308 = vmatpush2.xpose.msra.mxu0 0.0
      %1309 = vmatprep.subr.mxu0 0.0
      %1310 = vmatpush2.xpose.msra.mxu0 0.0
      %1311 = vmatprep.subr.mxu0 0.0
      %1312 = vmatpush2.xpose.msra.mxu0 0.0
      %1313 = vmatprep.subr.mxu0 0.0
      %1314 = vmatpush2.xpose.msra.mxu0 0.0
      %1315 = vmatprep.subr.mxu0 0.0
      %1316 = vmatpush2.xpose.msra.mxu0 0.0
      %1317 = vmatprep.subr.mxu0 0.0
      %1318 = vmatpush2.xpose.msra.mxu0 0.0
      %1319 = vmatprep.subr.mxu0 0.0
      %1320 = vmatpush2.xpose.msra.mxu0 0.0
      %1321 = vmatprep.subr.mxu0 0.0
      %1322 = vmatpush2.xpose.msra.mxu0 0.0
      %1323 = vmatprep.subr.mxu0 0.0
      %1324 = vmatpush2.xpose.msra.mxu0 0.0
      %1325 = vmatprep.subr.mxu0 0.0
      %1326 = vmatpush2.xpose.msra.mxu0 0.0
      %1327 = vmatprep.mubr.f32.mxu0 0.0
      %1328 = vmatmul.mubr.f32.gmra.mxu0 %v1213
      %v1329 = vpop.f32.mrf.mxu0
      %v1330 = vadd.f32 0.0, %v1329
      %v1331 = vpop.f32.mrf.mxu0
      %1332 = vmatprep.mubr.f32.mxu0 0.0
      %1333 = vmatmul.mubr.f32.gmra.mxu0 %v1216
      %v1334 = vpop.f32.mrf.mxu0
      %v1335 = vadd.f32 0.0, %v1334
      %v1336 = vpop.f32.mrf.mxu0
      %1337 = vmatprep.mubr.f32.mxu0 0.0
      %1338 = vmatmul.mubr.f32.gmra.mxu0 %v1219
      %v1339 = vpop.f32.mrf.mxu0
      %v1340 = vadd.f32 0.0, %v1339
      %v1341 = vpop.f32.mrf.mxu0
      %1342 = vmatprep.mubr.f32.mxu0 0.0
      %1343 = vmatmul.mubr.f32.gmra.mxu0 %v1222
      %v1344 = vpop.f32.mrf.mxu0
      %v1345 = vadd.f32 0.0, %v1344
      %v1346 = vpop.f32.mrf.mxu0
      %1347 = vmatprep.mubr.f32.mxu0 0.0
      %1348 = vmatmul.mubr.f32.gmra.mxu0 %v1225
      %v1349 = vpop.f32.mrf.mxu0
      %v1350 = vadd.f32 0.0, %v1349
      %v1351 = vpop.f32.mrf.mxu0
      %1352 = vmatprep.mubr.f32.mxu0 0.0
      %1353 = vmatmul.mubr.f32.gmra.mxu0 %v1228
      %v1354 = vpop.f32.mrf.mxu0
      %v1355 = vadd.f32 0.0, %v1354
      %v1356 = vpop.f32.mrf.mxu0
      %1357 = vmatprep.mubr.f32.mxu0 0.0
      %1358 = vmatmul.mubr.f32.gmra.mxu0 %v1231
      %v1359 = vpop.f32.mrf.mxu0
      %v1360 = vadd.f32 0.0, %v1359
      %v1361 = vpop.f32.mrf.mxu0
      %1362 = vmatprep.mubr.f32.mxu0 0.0
      %1363 = vmatmul.mubr.f32.gmra.mxu0 %v1234
      %v1364 = vpop.f32.mrf.mxu0
      %v1365 = vadd.f32 0.0, %v1364
      %v1366 = vpop.f32.mrf.mxu0
      %1367 = vmatprep.mubr.f32.mxu0 0.0
      %1368 = vmatmul.mubr.f32.gmra.mxu0 %v1237
      %v1369 = vpop.f32.mrf.mxu0
      %v1370 = vadd.f32 0.0, %v1369
      %v1371 = vpop.f32.mrf.mxu0
      %1372 = vmatprep.mubr.f32.mxu0 0.0
      %1373 = vmatmul.mubr.f32.gmra.mxu0 %v1240
      %v1374 = vpop.f32.mrf.mxu0
      %v1375 = vadd.f32 0.0, %v1374
      %v1376 = vpop.f32.mrf.mxu0
      %1377 = vmatprep.mubr.f32.mxu0 0.0
      %1378 = vmatmul.mubr.f32.gmra.mxu0 %v1243
      %v1379 = vpop.f32.mrf.mxu0
      %v1380 = vadd.f32 0.0, %v1379
      %v1381 = vpop.f32.mrf.mxu0
      %1382 = vmatprep.mubr.f32.mxu0 0.0
      %1383 = vmatmul.mubr.f32.gmra.mxu0 %v1246
      %v1384 = vpop.f32.mrf.mxu0
      %v1385 = vadd.f32 0.0, %v1384
      %v1386 = vpop.f32.mrf.mxu0
      %1387 = vmatprep.mubr.f32.mxu0 0.0
      %1388 = vmatmul.mubr.f32.gmra.mxu0 %v1249
      %v1389 = vpop.f32.mrf.mxu0
      %v1390 = vadd.f32 0.0, %v1389
      %v1391 = vpop.f32.mrf.mxu0
      %1392 = vmatprep.mubr.f32.mxu0 0.0
      %1393 = vmatmul.mubr.f32.gmra.mxu0 %v1252
      %v1394 = vpop.f32.mrf.mxu0
      %v1395 = vadd.f32 0.0, %v1394
      %v1396 = vpop.f32.mrf.mxu0
      %1397 = vmatprep.mubr.f32.mxu0 0.0
      %1398 = vmatmul.mubr.f32.gmra.mxu0 %v1255
      %v1399 = vpop.f32.mrf.mxu0
      %v1400 = vadd.f32 0.0, %v1399
      %v1401 = vpop.f32.mrf.mxu0
      %1402 = vmatprep.mubr.f32.mxu0 0.0
      %1403 = vmatmul.mubr.f32.gmra.mxu0 %v1258
      %v1404 = vpop.f32.mrf.mxu0
      %v1405 = vadd.f32 0.0, %v1404
      %v1406 = vpop.f32.mrf.mxu0
      %1407 = vdwg.mxu0
      %v1408 = vrot.slane %v1210, 3
      %v1409 = vsel %vm1211, %v1408, 0
      %v1412 = vsel %vm1211, %v659, 0
      %v1415 = vsel %vm1211, %v662, 0
      %v1418 = vsel %vm1211, %v667, 0
      %v1421 = vsel %vm1211, %v670, 0
      %v1424 = vsel %vm1211, %v675, 0
      %v1427 = vsel %vm1211, %v678, 0
      %v1430 = vsel %vm1211, %v683, 0
      %v1433 = vsel %vm1211, %v686, 0
      %v1436 = vsel %vm1211, %v691, 0
      %v1439 = vsel %vm1211, %v694, 0
      %v1442 = vsel %vm1211, %v699, 0
      %v1445 = vsel %vm1211, %v702, 0
      %v1448 = vsel %vm1211, %v707, 0
      %v1451 = vsel %vm1211, %v710, 0
      %v1454 = vsel %vm1211, %v715, 0
      %v1457 = vsel %vm1211, %v718, 0
      %v1460 = vsel %vm1211, %v723, 0
      %v1463 = vsel %vm1211, %v726, 0
      %v1466 = vsel %vm1211, %v731, 0
      %v1469 = vsel %vm1211, %v734, 0
      %v1472 = vsel %vm1211, %v739, 0
      %v1475 = vsel %vm1211, %v742, 0
      %v1478 = vsel %vm1211, %v747, 0
      %v1481 = vsel %vm1211, %v750, 0
      %v1484 = vsel %vm1211, %v755, 0
      %v1487 = vsel %vm1211, %v758, 0
      %v1490 = vsel %vm1211, %v763, 0
      %v1493 = vsel %vm1211, %v766, 0
      %v1496 = vsel %vm1211, %v771, 0
      %v1499 = vsel %vm1211, %v774, 0
      %v1502 = vsel %vm1211, %v779, 0
      %v1505 = vsel %vm1211, %v782, 0
      %1507 = vmatprep.subr.mxu0 0.0
      %1508 = vmatpush1.xpose.msra.mxu0 %v1457
      %1509 = vmatprep.subr.mxu0 0.0
      %1510 = vmatpush1.xpose.msra.mxu0 %v1454
      %1511 = vmatprep.subr.mxu0 0.0
      %1512 = vmatpush1.xpose.msra.mxu0 %v1451
      %1513 = vmatprep.subr.mxu0 0.0
      %1514 = vmatpush1.xpose.msra.mxu0 %v1448
      %1515 = vmatprep.subr.mxu0 0.0
      %1516 = vmatpush1.xpose.msra.mxu0 %v1445
      %1517 = vmatprep.subr.mxu0 0.0
      %1518 = vmatpush1.xpose.msra.mxu0 %v1442
      %1519 = vmatprep.subr.mxu0 0.0
      %1520 = vmatpush1.xpose.msra.mxu0 %v1439
      %1521 = vmatprep.subr.mxu0 0.0
      %1522 = vmatpush1.xpose.msra.mxu0 %v1436
      %1523 = vmatprep.subr.mxu0 0.0
      %1524 = vmatpush1.xpose.msra.mxu0 %v1433
      %1525 = vmatprep.subr.mxu0 0.0
      %1526 = vmatpush1.xpose.msra.mxu0 %v1430
      %1527 = vmatprep.subr.mxu0 0.0
      %1528 = vmatpush1.xpose.msra.mxu0 %v1427
      %1529 = vmatprep.subr.mxu0 0.0
      %1530 = vmatpush1.xpose.msra.mxu0 %v1424
      %1531 = vmatprep.subr.mxu0 0.0
      %1532 = vmatpush1.xpose.msra.mxu0 %v1421
      %1533 = vmatprep.subr.mxu0 0.0
      %1534 = vmatpush1.xpose.msra.mxu0 %v1418
      %1535 = vmatprep.subr.mxu0 0.0
      %1536 = vmatpush1.xpose.msra.mxu0 %v1415
      %1537 = vmatprep.subr.mxu0 0.0
      %1538 = vmatpush1.xpose.msra.mxu0 %v1412
      %1539 = vmatprep.subr.mxu0 0.0
      %1540 = vmatpush2.xpose.msra.mxu0 %v1505
      %1541 = vmatprep.subr.mxu0 0.0
      %1542 = vmatpush2.xpose.msra.mxu0 %v1502
      %1543 = vmatprep.subr.mxu0 0.0
      %1544 = vmatpush2.xpose.msra.mxu0 %v1499
      %1545 = vmatprep.subr.mxu0 0.0
      %1546 = vmatpush2.xpose.msra.mxu0 %v1496
      %1547 = vmatprep.subr.mxu0 0.0
      %1548 = vmatpush2.xpose.msra.mxu0 %v1493
      %1549 = vmatprep.subr.mxu0 0.0
      %1550 = vmatpush2.xpose.msra.mxu0 %v1490
      %1551 = vmatprep.subr.mxu0 0.0
      %1552 = vmatpush2.xpose.msra.mxu0 %v1487
      %1553 = vmatprep.subr.mxu0 0.0
      %1554 = vmatpush2.xpose.msra.mxu0 %v1484
      %1555 = vmatprep.subr.mxu0 0.0
      %1556 = vmatpush2.xpose.msra.mxu0 %v1481
      %1557 = vmatprep.subr.mxu0 0.0
      %1558 = vmatpush2.xpose.msra.mxu0 %v1478
      %1559 = vmatprep.subr.mxu0 0.0
      %1560 = vmatpush2.xpose.msra.mxu0 %v1475
      %1561 = vmatprep.subr.mxu0 0.0
      %1562 = vmatpush2.xpose.msra.mxu0 %v1472
      %1563 = vmatprep.subr.mxu0 0.0
      %1564 = vmatpush2.xpose.msra.mxu0 %v1469
      %1565 = vmatprep.subr.mxu0 0.0
      %1566 = vmatpush2.xpose.msra.mxu0 %v1466
      %1567 = vmatprep.subr.mxu0 0.0
      %1568 = vmatpush2.xpose.msra.mxu0 %v1463
      %1569 = vmatprep.subr.mxu0 0.0
      %1570 = vmatpush2.xpose.msra.mxu0 %v1460
      %1571 = vmatprep.mubr.f32.mxu0 0.0
      %1572 = vmatmul.mubr.f32.gmra.mxu0 %v1409
      %v1573 = vpop.f32.mrf.mxu0
      %v1574 = vadd.f32 0.0, %v1573
      %v1575 = vpop.f32.mrf.mxu0
      %v1576 = vadd.f32 0.0, %v1575
      %1577 = vdwg.mxu0
      %v1578 = vld [vmem:[%s420] sm:$0xff]
      %v1579 = vld [vmem:[%s420 + $0x8] sm:$0xff]
      %v1580 = vld [vmem:[%s420 + $0x10] sm:$0xff]
      %v1581 = vld [vmem:[%s420 + $0x18] sm:$0xff]
      %v1582 = vld [vmem:[%s420 + $0x20] sm:$0xff]
      %v1583 = vld [vmem:[%s420 + $0x28] sm:$0xff]
      %v1584 = vld [vmem:[%s420 + $0x30] sm:$0xff]
      %v1585 = vld [vmem:[%s420 + $0x38] sm:$0xff]
      %v1586 = vunpack.c.0.s8 %v1578
      %v1587 = vunpack.c.0.s8 %v1579
      %v1588 = vunpack.c.1.s8 %v1578
      %v1589 = vunpack.c.1.s8 %v1579
      %v1590 = vunpack.c.2.s8 %v1578
      %v1591 = vunpack.c.2.s8 %v1579
      %v1592 = vunpack.c.3.s8 %v1578
      %v1593 = vunpack.c.3.s8 %v1579
      %v1594 = vunpack.c.0.s8 %v1580
      %v1595 = vunpack.c.0.s8 %v1581
      %v1596 = vunpack.c.1.s8 %v1580
      %v1597 = vunpack.c.1.s8 %v1581
      %v1598 = vunpack.c.2.s8 %v1580
      %v1599 = vunpack.c.2.s8 %v1581
      %v1600 = vunpack.c.3.s8 %v1580
      %v1601 = vunpack.c.3.s8 %v1581
      %v1602 = vunpack.c.0.s8 %v1582
      %v1603 = vunpack.c.0.s8 %v1583
      %v1604 = vunpack.c.1.s8 %v1582
      %v1605 = vunpack.c.1.s8 %v1583
      %v1606 = vunpack.c.2.s8 %v1582
      %v1607 = vunpack.c.2.s8 %v1583
      %v1608 = vunpack.c.3.s8 %v1582
      %v1609 = vunpack.c.3.s8 %v1583
      %v1610 = vunpack.c.0.s8 %v1584
      %v1611 = vunpack.c.0.s8 %v1585
      %v1612 = vunpack.c.1.s8 %v1584
      %v1613 = vunpack.c.1.s8 %v1585
      %v1614 = vunpack.c.2.s8 %v1584
      %v1615 = vunpack.c.2.s8 %v1585
      %v1616 = vunpack.c.3.s8 %v1584
      %v1617 = vunpack.c.3.s8 %v1585
      %v1618 = vcvt.s32.f32 %v1586
      %v1619 = vcvt.s32.f32 %v1587
      %v1620 = vcvt.s32.f32 %v1588
      %v1621 = vcvt.s32.f32 %v1589
      %v1622 = vcvt.s32.f32 %v1590
      %v1623 = vcvt.s32.f32 %v1591
      %v1624 = vcvt.s32.f32 %v1592
      %v1625 = vcvt.s32.f32 %v1593
      %v1626 = vcvt.s32.f32 %v1594
      %v1627 = vcvt.s32.f32 %v1595
      %v1628 = vcvt.s32.f32 %v1596
      %v1629 = vcvt.s32.f32 %v1597
      %v1630 = vcvt.s32.f32 %v1598
      %v1631 = vcvt.s32.f32 %v1599
      %v1632 = vcvt.s32.f32 %v1600
      %v1633 = vcvt.s32.f32 %v1601
      %v1634 = vcvt.s32.f32 %v1602
      %v1635 = vcvt.s32.f32 %v1603
      %v1636 = vcvt.s32.f32 %v1604
      %v1637 = vcvt.s32.f32 %v1605
      %v1638 = vcvt.s32.f32 %v1606
      %v1639 = vcvt.s32.f32 %v1607
      %v1640 = vcvt.s32.f32 %v1608
      %v1641 = vcvt.s32.f32 %v1609
      %v1642 = vcvt.s32.f32 %v1610
      %v1643 = vcvt.s32.f32 %v1611
      %v1644 = vcvt.s32.f32 %v1612
      %v1645 = vcvt.s32.f32 %v1613
      %v1646 = vcvt.s32.f32 %v1614
      %v1647 = vcvt.s32.f32 %v1615
      %v1648 = vcvt.s32.f32 %v1616
      %v1649 = vcvt.s32.f32 %v1617
      %1651 = vset.pattern.permute.xlu0 0
      %1652 = vperm.xlu0 %1651, %v1330
      %v1653 = vpop.permute.xlu0 %1652
      %1656 = vset.pattern.permute.xlu0 0
      %1657 = vperm.xlu0 %1656, %v1335
      %v1658 = vpop.permute.xlu0 %1657
      %1661 = vset.pattern.permute.xlu0 0
      %1662 = vperm.xlu0 %1661, %v1340
      %v1663 = vpop.permute.xlu0 %1662
      %1666 = vset.pattern.permute.xlu0 0
      %1667 = vperm.xlu0 %1666, %v1345
      %v1668 = vpop.permute.xlu0 %1667
      %1671 = vset.pattern.permute.xlu0 0
      %1672 = vperm.xlu0 %1671, %v1350
      %v1673 = vpop.permute.xlu0 %1672
      %1676 = vset.pattern.permute.xlu0 0
      %1677 = vperm.xlu0 %1676, %v1355
      %v1678 = vpop.permute.xlu0 %1677
      %1681 = vset.pattern.permute.xlu0 0
      %1682 = vperm.xlu0 %1681, %v1360
      %v1683 = vpop.permute.xlu0 %1682
      %1686 = vset.pattern.permute.xlu0 0
      %1687 = vperm.xlu0 %1686, %v1365
      %v1688 = vpop.permute.xlu0 %1687
      %1691 = vset.pattern.permute.xlu0 0
      %1692 = vperm.xlu0 %1691, %v1370
      %v1693 = vpop.permute.xlu0 %1692
      %1696 = vset.pattern.permute.xlu0 0
      %1697 = vperm.xlu0 %1696, %v1375
      %v1698 = vpop.permute.xlu0 %1697
      %1701 = vset.pattern.permute.xlu0 0
      %1702 = vperm.xlu0 %1701, %v1380
      %v1703 = vpop.permute.xlu0 %1702
      %1706 = vset.pattern.permute.xlu0 0
      %1707 = vperm.xlu0 %1706, %v1385
      %v1708 = vpop.permute.xlu0 %1707
      %1711 = vset.pattern.permute.xlu0 0
      %1712 = vperm.xlu0 %1711, %v1390
      %v1713 = vpop.permute.xlu0 %1712
      %1716 = vset.pattern.permute.xlu0 0
      %1717 = vperm.xlu0 %1716, %v1395
      %v1718 = vpop.permute.xlu0 %1717
      %1721 = vset.pattern.permute.xlu0 0
      %1722 = vperm.xlu0 %1721, %v1400
      %v1723 = vpop.permute.xlu0 %1722
      %1726 = vset.pattern.permute.xlu0 0
      %1727 = vperm.xlu0 %1726, %v1405
      %v1728 = vpop.permute.xlu0 %1727
      %v1730 = vlaneseq
      %v1731 = vshrl.u32 %v1730, 7
      %v1732 = vsub.s32 0, %v1731
      %v1733 = vrot.slane %v1574, %v1732
      %v1734 = vlaneseq
      %v1735 = vshrl.u32 %v1734, 7
      %v1736 = vsub.s32 0, %v1735
      %v1737 = vrot.slane %v1576, %v1736
      %v1738 = vadd.f32 %v1653, %v1733
      %v1739 = vadd.f32 %v1653, %v1737
      %v1740 = vadd.f32 %v1658, %v1733
      %v1741 = vadd.f32 %v1658, %v1737
      %v1742 = vadd.f32 %v1663, %v1733
      %v1743 = vadd.f32 %v1663, %v1737
      %v1744 = vadd.f32 %v1668, %v1733
      %v1745 = vadd.f32 %v1668, %v1737
      %v1746 = vadd.f32 %v1673, %v1733
      %v1747 = vadd.f32 %v1673, %v1737
      %v1748 = vadd.f32 %v1678, %v1733
      %v1749 = vadd.f32 %v1678, %v1737
      %v1750 = vadd.f32 %v1683, %v1733
      %v1751 = vadd.f32 %v1683, %v1737
      %v1752 = vadd.f32 %v1688, %v1733
      %v1753 = vadd.f32 %v1688, %v1737
      %v1754 = vadd.f32 %v1693, %v1733
      %v1755 = vadd.f32 %v1693, %v1737
      %v1756 = vadd.f32 %v1698, %v1733
      %v1757 = vadd.f32 %v1698, %v1737
      %v1758 = vadd.f32 %v1703, %v1733
      %v1759 = vadd.f32 %v1703, %v1737
      %v1760 = vadd.f32 %v1708, %v1733
      %v1761 = vadd.f32 %v1708, %v1737
      %v1762 = vadd.f32 %v1713, %v1733
      %v1763 = vadd.f32 %v1713, %v1737
      %v1764 = vadd.f32 %v1718, %v1733
      %v1765 = vadd.f32 %v1718, %v1737
      %v1766 = vadd.f32 %v1723, %v1733
      %v1767 = vadd.f32 %v1723, %v1737
      %v1768 = vadd.f32 %v1728, %v1733
      %v1769 = vadd.f32 %v1728, %v1737
      %v1770 = vmul.f32 %v1738, 0.2
      %v1771 = vmul.f32 %v1739, 0.2
      %v1772 = vmul.f32 %v1740, 0.2
      %v1773 = vmul.f32 %v1741, 0.2
      %v1774 = vmul.f32 %v1742, 0.2
      %v1775 = vmul.f32 %v1743, 0.2
      %v1776 = vmul.f32 %v1744, 0.2
      %v1777 = vmul.f32 %v1745, 0.2
      %v1778 = vmul.f32 %v1746, 0.2
      %v1779 = vmul.f32 %v1747, 0.2
      %v1780 = vmul.f32 %v1748, 0.2
      %v1781 = vmul.f32 %v1749, 0.2
      %v1782 = vmul.f32 %v1750, 0.2
      %v1783 = vmul.f32 %v1751, 0.2
      %v1784 = vmul.f32 %v1752, 0.2
      %v1785 = vmul.f32 %v1753, 0.2
      %v1786 = vmul.f32 %v1754, 0.2
      %v1787 = vmul.f32 %v1755, 0.2
      %v1788 = vmul.f32 %v1756, 0.2
      %v1789 = vmul.f32 %v1757, 0.2
      %v1790 = vmul.f32 %v1758, 0.2
      %v1791 = vmul.f32 %v1759, 0.2
      %v1792 = vmul.f32 %v1760, 0.2
      %v1793 = vmul.f32 %v1761, 0.2
      %v1794 = vmul.f32 %v1762, 0.2
      %v1795 = vmul.f32 %v1763, 0.2
      %v1796 = vmul.f32 %v1764, 0.2
      %v1797 = vmul.f32 %v1765, 0.2
      %v1798 = vmul.f32 %v1766, 0.2
      %v1799 = vmul.f32 %v1767, 0.2
      %v1800 = vmul.f32 %v1768, 0.2
      %v1801 = vmul.f32 %v1769, 0.2
      %v1802 = vmax.f32 %v1738, %v1770
      %v1803 = vmax.f32 %v1739, %v1771
      %v1804 = vmax.f32 %v1740, %v1772
      %v1805 = vmax.f32 %v1741, %v1773
      %v1806 = vmax.f32 %v1742, %v1774
      %v1807 = vmax.f32 %v1743, %v1775
      %v1808 = vmax.f32 %v1744, %v1776
      %v1809 = vmax.f32 %v1745, %v1777
      %v1810 = vmax.f32 %v1746, %v1778
      %v1811 = vmax.f32 %v1747, %v1779
      %v1812 = vmax.f32 %v1748, %v1780
      %v1813 = vmax.f32 %v1749, %v1781
      %v1814 = vmax.f32 %v1750, %v1782
      %v1815 = vmax.f32 %v1751, %v1783
      %v1816 = vmax.f32 %v1752, %v1784
      %v1817 = vmax.f32 %v1753, %v1785
      %v1818 = vmax.f32 %v1754, %v1786
      %v1819 = vmax.f32 %v1755, %v1787
      %v1820 = vmax.f32 %v1756, %v1788
      %v1821 = vmax.f32 %v1757, %v1789
      %v1822 = vmax.f32 %v1758, %v1790
      %v1823 = vmax.f32 %v1759, %v1791
      %v1824 = vmax.f32 %v1760, %v1792
      %v1825 = vmax.f32 %v1761, %v1793
      %v1826 = vmax.f32 %v1762, %v1794
      %v1827 = vmax.f32 %v1763, %v1795
      %v1828 = vmax.f32 %v1764, %v1796
      %v1829 = vmax.f32 %v1765, %v1797
      %v1830 = vmax.f32 %v1766, %v1798
      %v1831 = vmax.f32 %v1767, %v1799
      %v1832 = vmax.f32 %v1768, %v1800
      %v1833 = vmax.f32 %v1769, %v1801
      %v1834 = vmax.f32 %v1802, %v1803
      %1835 = vmax.xlane.f32.xlu0 %v1834
      %v1836 = vpop.xlane.xlu0 %1835
      %v1837 = vmax.f32 %v1804, %v1805
      %1838 = vmax.xlane.f32.xlu0 %v1837
      %v1839 = vpop.xlane.xlu0 %1838
      %v1840 = vmax.f32 %v1806, %v1807
      %1841 = vmax.xlane.f32.xlu0 %v1840
      %v1842 = vpop.xlane.xlu0 %1841
      %v1843 = vmax.f32 %v1808, %v1809
      %1844 = vmax.xlane.f32.xlu0 %v1843
      %v1845 = vpop.xlane.xlu0 %1844
      %v1846 = vmax.f32 %v1810, %v1811
      %1847 = vmax.xlane.f32.xlu0 %v1846
      %v1848 = vpop.xlane.xlu0 %1847
      %v1849 = vmax.f32 %v1812, %v1813
      %1850 = vmax.xlane.f32.xlu0 %v1849
      %v1851 = vpop.xlane.xlu0 %1850
      %v1852 = vmax.f32 %v1814, %v1815
      %1853 = vmax.xlane.f32.xlu0 %v1852
      %v1854 = vpop.xlane.xlu0 %1853
      %v1855 = vmax.f32 %v1816, %v1817
      %1856 = vmax.xlane.f32.xlu0 %v1855
      %v1857 = vpop.xlane.xlu0 %1856
      %v1858 = vmax.f32 %v1818, %v1819
      %1859 = vmax.xlane.f32.xlu0 %v1858
      %v1860 = vpop.xlane.xlu0 %1859
      %v1861 = vmax.f32 %v1820, %v1821
      %1862 = vmax.xlane.f32.xlu0 %v1861
      %v1863 = vpop.xlane.xlu0 %1862
      %v1864 = vmax.f32 %v1822, %v1823
      %1865 = vmax.xlane.f32.xlu0 %v1864
      %v1866 = vpop.xlane.xlu0 %1865
      %v1867 = vmax.f32 %v1824, %v1825
      %1868 = vmax.xlane.f32.xlu0 %v1867
      %v1869 = vpop.xlane.xlu0 %1868
      %v1870 = vmax.f32 %v1826, %v1827
      %1871 = vmax.xlane.f32.xlu0 %v1870
      %v1872 = vpop.xlane.xlu0 %1871
      %v1873 = vmax.f32 %v1828, %v1829
      %1874 = vmax.xlane.f32.xlu0 %v1873
      %v1875 = vpop.xlane.xlu0 %1874
      %v1876 = vmax.f32 %v1830, %v1831
      %1877 = vmax.xlane.f32.xlu0 %v1876
      %v1878 = vpop.xlane.xlu0 %1877
      %v1879 = vmax.f32 %v1832, %v1833
      %1880 = vmax.xlane.f32.xlu0 %v1879
      %v1881 = vpop.xlane.xlu0 %1880
      %v1882 = vsub.f32 %v1802, %v1836
      %v1883 = vsub.f32 %v1803, %v1836
      %v1884 = vsub.f32 %v1804, %v1839
      %v1885 = vsub.f32 %v1805, %v1839
      %v1886 = vsub.f32 %v1806, %v1842
      %v1887 = vsub.f32 %v1807, %v1842
      %v1888 = vsub.f32 %v1808, %v1845
      %v1889 = vsub.f32 %v1809, %v1845
      %v1890 = vsub.f32 %v1810, %v1848
      %v1891 = vsub.f32 %v1811, %v1848
      %v1892 = vsub.f32 %v1812, %v1851
      %v1893 = vsub.f32 %v1813, %v1851
      %v1894 = vsub.f32 %v1814, %v1854
      %v1895 = vsub.f32 %v1815, %v1854
      %v1896 = vsub.f32 %v1816, %v1857
      %v1897 = vsub.f32 %v1817, %v1857
      %v1898 = vsub.f32 %v1818, %v1860
      %v1899 = vsub.f32 %v1819, %v1860
      %v1900 = vsub.f32 %v1820, %v1863
      %v1901 = vsub.f32 %v1821, %v1863
      %v1902 = vsub.f32 %v1822, %v1866
      %v1903 = vsub.f32 %v1823, %v1866
      %v1904 = vsub.f32 %v1824, %v1869
      %v1905 = vsub.f32 %v1825, %v1869
      %v1906 = vsub.f32 %v1826, %v1872
      %v1907 = vsub.f32 %v1827, %v1872
      %v1908 = vsub.f32 %v1828, %v1875
      %v1909 = vsub.f32 %v1829, %v1875
      %v1910 = vsub.f32 %v1830, %v1878
      %v1911 = vsub.f32 %v1831, %v1878
      %v1912 = vsub.f32 %v1832, %v1881
      %v1913 = vsub.f32 %v1833, %v1881
      %v1914 = vmul.f32 %v1882, 1.442695
      %v1915 = vpow.pop %v1914
      %v1916 = vmul.f32 %v1883, 1.442695
      %v1917 = vpow.pop %v1916
      %v1918 = vmul.f32 %v1884, 1.442695
      %v1919 = vpow.pop %v1918
      %v1920 = vmul.f32 %v1885, 1.442695
      %v1921 = vpow.pop %v1920
      %v1922 = vmul.f32 %v1886, 1.442695
      %v1923 = vpow.pop %v1922
      %v1924 = vmul.f32 %v1887, 1.442695
      %v1925 = vpow.pop %v1924
      %v1926 = vmul.f32 %v1888, 1.442695
      %v1927 = vpow.pop %v1926
      %v1928 = vmul.f32 %v1889, 1.442695
      %v1929 = vpow.pop %v1928
      %v1930 = vmul.f32 %v1890, 1.442695
      %v1931 = vpow.pop %v1930
      %v1932 = vmul.f32 %v1891, 1.442695
      %v1933 = vpow.pop %v1932
      %v1934 = vmul.f32 %v1892, 1.442695
      %v1935 = vpow.pop %v1934
      %v1936 = vmul.f32 %v1893, 1.442695
      %v1937 = vpow.pop %v1936
      %v1938 = vmul.f32 %v1894, 1.442695
      %v1939 = vpow.pop %v1938
      %v1940 = vmul.f32 %v1895, 1.442695
      %v1941 = vpow.pop %v1940
      %v1942 = vmul.f32 %v1896, 1.442695
      %v1943 = vpow.pop %v1942
      %v1944 = vmul.f32 %v1897, 1.442695
      %v1945 = vpow.pop %v1944
      %v1946 = vmul.f32 %v1898, 1.442695
      %v1947 = vpow.pop %v1946
      %v1948 = vmul.f32 %v1899, 1.442695
      %v1949 = vpow.pop %v1948
      %v1950 = vmul.f32 %v1900, 1.442695
      %v1951 = vpow.pop %v1950
      %v1952 = vmul.f32 %v1901, 1.442695
      %v1953 = vpow.pop %v1952
      %v1954 = vmul.f32 %v1902, 1.442695
      %v1955 = vpow.pop %v1954
      %v1956 = vmul.f32 %v1903, 1.442695
      %v1957 = vpow.pop %v1956
      %v1958 = vmul.f32 %v1904, 1.442695
      %v1959 = vpow.pop %v1958
      %v1960 = vmul.f32 %v1905, 1.442695
      %v1961 = vpow.pop %v1960
      %v1962 = vmul.f32 %v1906, 1.442695
      %v1963 = vpow.pop %v1962
      %v1964 = vmul.f32 %v1907, 1.442695
      %v1965 = vpow.pop %v1964
      %v1966 = vmul.f32 %v1908, 1.442695
      %v1967 = vpow.pop %v1966
      %v1968 = vmul.f32 %v1909, 1.442695
      %v1969 = vpow.pop %v1968
      %v1970 = vmul.f32 %v1910, 1.442695
      %v1971 = vpow.pop %v1970
      %v1972 = vmul.f32 %v1911, 1.442695
      %v1973 = vpow.pop %v1972
      %v1974 = vmul.f32 %v1912, 1.442695
      %v1975 = vpow.pop %v1974
      %v1976 = vmul.f32 %v1913, 1.442695
      %v1977 = vpow.pop %v1976
      %v1978 = vmul.f32 %v1915, %v1618
      %v1979 = vmul.f32 %v1917, %v1619
      %v1980 = vmul.f32 %v1919, %v1620
      %v1981 = vmul.f32 %v1921, %v1621
      %v1982 = vmul.f32 %v1923, %v1622
      %v1983 = vmul.f32 %v1925, %v1623
      %v1984 = vmul.f32 %v1927, %v1624
      %v1985 = vmul.f32 %v1929, %v1625
      %v1986 = vmul.f32 %v1931, %v1626
      %v1987 = vmul.f32 %v1933, %v1627
      %v1988 = vmul.f32 %v1935, %v1628
      %v1989 = vmul.f32 %v1937, %v1629
      %v1990 = vmul.f32 %v1939, %v1630
      %v1991 = vmul.f32 %v1941, %v1631
      %v1992 = vmul.f32 %v1943, %v1632
      %v1993 = vmul.f32 %v1945, %v1633
      %v1994 = vmul.f32 %v1947, %v1634
      %v1995 = vmul.f32 %v1949, %v1635
      %v1996 = vmul.f32 %v1951, %v1636
      %v1997 = vmul.f32 %v1953, %v1637
      %v1998 = vmul.f32 %v1955, %v1638
      %v1999 = vmul.f32 %v1957, %v1639
      %v2000 = vmul.f32 %v1959, %v1640
      %v2001 = vmul.f32 %v1961, %v1641
      %v2002 = vmul.f32 %v1963, %v1642
      %v2003 = vmul.f32 %v1965, %v1643
      %v2004 = vmul.f32 %v1967, %v1644
      %v2005 = vmul.f32 %v1969, %v1645
      %v2006 = vmul.f32 %v1971, %v1646
      %v2007 = vmul.f32 %v1973, %v1647
      %v2008 = vmul.f32 %v1975, %v1648
      %v2009 = vmul.f32 %v1977, %v1649
      %v2010 = vadd.f32 %v1978, %v1979
      %2011 = vadd.xlane.f32.xlu0 %v2010
      %v2012 = vpop.xlane.xlu0 %2011
      %v2013 = vadd.f32 %v1980, %v1981
      %2014 = vadd.xlane.f32.xlu0 %v2013
      %v2015 = vpop.xlane.xlu0 %2014
      %v2016 = vadd.f32 %v1982, %v1983
      %2017 = vadd.xlane.f32.xlu0 %v2016
      %v2018 = vpop.xlane.xlu0 %2017
      %v2019 = vadd.f32 %v1984, %v1985
      %2020 = vadd.xlane.f32.xlu0 %v2019
      %v2021 = vpop.xlane.xlu0 %2020
      %v2022 = vadd.f32 %v1986, %v1987
      %2023 = vadd.xlane.f32.xlu0 %v2022
      %v2024 = vpop.xlane.xlu0 %2023
      %v2025 = vadd.f32 %v1988, %v1989
      %2026 = vadd.xlane.f32.xlu0 %v2025
      %v2027 = vpop.xlane.xlu0 %2026
      %v2028 = vadd.f32 %v1990, %v1991
      %2029 = vadd.xlane.f32.xlu0 %v2028
      %v2030 = vpop.xlane.xlu0 %2029
      %v2031 = vadd.f32 %v1992, %v1993
      %2032 = vadd.xlane.f32.xlu0 %v2031
      %v2033 = vpop.xlane.xlu0 %2032
      %v2034 = vadd.f32 %v1994, %v1995
      %2035 = vadd.xlane.f32.xlu0 %v2034
      %v2036 = vpop.xlane.xlu0 %2035
      %v2037 = vadd.f32 %v1996, %v1997
      %2038 = vadd.xlane.f32.xlu0 %v2037
      %v2039 = vpop.xlane.xlu0 %2038
      %v2040 = vadd.f32 %v1998, %v1999
      %2041 = vadd.xlane.f32.xlu0 %v2040
      %v2042 = vpop.xlane.xlu0 %2041
      %v2043 = vadd.f32 %v2000, %v2001
      %2044 = vadd.xlane.f32.xlu0 %v2043
      %v2045 = vpop.xlane.xlu0 %2044
      %v2046 = vadd.f32 %v2002, %v2003
      %2047 = vadd.xlane.f32.xlu0 %v2046
      %v2048 = vpop.xlane.xlu0 %2047
      %v2049 = vadd.f32 %v2004, %v2005
      %2050 = vadd.xlane.f32.xlu0 %v2049
      %v2051 = vpop.xlane.xlu0 %2050
      %v2052 = vadd.f32 %v2006, %v2007
      %2053 = vadd.xlane.f32.xlu0 %v2052
      %v2054 = vpop.xlane.xlu0 %2053
      %v2055 = vadd.f32 %v2008, %v2009
      %2056 = vadd.xlane.f32.xlu0 %v2055
      %v2057 = vpop.xlane.xlu0 %2056
      %v2058 = vmax.f32 %v2012, 1e-30
      %v2059 = vmax.f32 %v2015, 1e-30
      %v2060 = vmax.f32 %v2018, 1e-30
      %v2061 = vmax.f32 %v2021, 1e-30
      %v2062 = vmax.f32 %v2024, 1e-30
      %v2063 = vmax.f32 %v2027, 1e-30
      %v2064 = vmax.f32 %v2030, 1e-30
      %v2065 = vmax.f32 %v2033, 1e-30
      %v2066 = vmax.f32 %v2036, 1e-30
      %v2067 = vmax.f32 %v2039, 1e-30
      %v2068 = vmax.f32 %v2042, 1e-30
      %v2069 = vmax.f32 %v2045, 1e-30
      %v2070 = vmax.f32 %v2048, 1e-30
      %v2071 = vmax.f32 %v2051, 1e-30
      %v2072 = vmax.f32 %v2054, 1e-30
      %v2073 = vmax.f32 %v2057, 1e-30
      %v2074 = vrcp.pop %v2058
      %v2075 = vrcp.pop %v2059
      %v2076 = vrcp.pop %v2060
      %v2077 = vrcp.pop %v2061
      %v2078 = vrcp.pop %v2062
      %v2079 = vrcp.pop %v2063
      %v2080 = vrcp.pop %v2064
      %v2081 = vrcp.pop %v2065
      %v2082 = vrcp.pop %v2066
      %v2083 = vrcp.pop %v2067
      %v2084 = vrcp.pop %v2068
      %v2085 = vrcp.pop %v2069
      %v2086 = vrcp.pop %v2070
      %v2087 = vrcp.pop %v2071
      %v2088 = vrcp.pop %v2072
      %v2089 = vrcp.pop %v2073
      %2090 = vmatprep.subr.mxu0 0.0
      %2091 = vmatpush1.msra.mxu0 %v718
      %2092 = vmatprep.subr.mxu0 0.0
      %2093 = vmatpush1.msra.mxu0 %v715
      %2094 = vmatprep.subr.mxu0 0.0
      %2095 = vmatpush1.msra.mxu0 %v710
      %2096 = vmatprep.subr.mxu0 0.0
      %2097 = vmatpush1.msra.mxu0 %v707
      %2098 = vmatprep.subr.mxu0 0.0
      %2099 = vmatpush1.msra.mxu0 %v702
      %2100 = vmatprep.subr.mxu0 0.0
      %2101 = vmatpush1.msra.mxu0 %v699
      %2102 = vmatprep.subr.mxu0 0.0
      %2103 = vmatpush1.msra.mxu0 %v694
      %2104 = vmatprep.subr.mxu0 0.0
      %2105 = vmatpush1.msra.mxu0 %v691
      %2106 = vmatprep.subr.mxu0 0.0
      %2107 = vmatpush1.msra.mxu0 %v686
      %2108 = vmatprep.subr.mxu0 0.0
      %2109 = vmatpush1.msra.mxu0 %v683
      %2110 = vmatprep.subr.mxu0 0.0
      %2111 = vmatpush1.msra.mxu0 %v678
      %2112 = vmatprep.subr.mxu0 0.0
      %2113 = vmatpush1.msra.mxu0 %v675
      %2114 = vmatprep.subr.mxu0 0.0
      %2115 = vmatpush1.msra.mxu0 %v670
      %2116 = vmatprep.subr.mxu0 0.0
      %2117 = vmatpush1.msra.mxu0 %v667
      %2118 = vmatprep.subr.mxu0 0.0
      %2119 = vmatpush1.msra.mxu0 %v662
      %2120 = vmatprep.subr.mxu0 0.0
      %2121 = vmatpush1.msra.mxu0 %v659
      %2122 = vmatprep.subr.mxu0 0.0
      %2123 = vmatpush2.msra.mxu0 %v782
      %2124 = vmatprep.subr.mxu0 0.0
      %2125 = vmatpush2.msra.mxu0 %v779
      %2126 = vmatprep.subr.mxu0 0.0
      %2127 = vmatpush2.msra.mxu0 %v774
      %2128 = vmatprep.subr.mxu0 0.0
      %2129 = vmatpush2.msra.mxu0 %v771
      %2130 = vmatprep.subr.mxu0 0.0
      %2131 = vmatpush2.msra.mxu0 %v766
      %2132 = vmatprep.subr.mxu0 0.0
      %2133 = vmatpush2.msra.mxu0 %v763
      %2134 = vmatprep.subr.mxu0 0.0
      %2135 = vmatpush2.msra.mxu0 %v758
      %2136 = vmatprep.subr.mxu0 0.0
      %2137 = vmatpush2.msra.mxu0 %v755
      %2138 = vmatprep.subr.mxu0 0.0
      %2139 = vmatpush2.msra.mxu0 %v750
      %2140 = vmatprep.subr.mxu0 0.0
      %2141 = vmatpush2.msra.mxu0 %v747
      %2142 = vmatprep.subr.mxu0 0.0
      %2143 = vmatpush2.msra.mxu0 %v742
      %2144 = vmatprep.subr.mxu0 0.0
      %2145 = vmatpush2.msra.mxu0 %v739
      %2146 = vmatprep.subr.mxu0 0.0
      %2147 = vmatpush2.msra.mxu0 %v734
      %2148 = vmatprep.subr.mxu0 0.0
      %2149 = vmatpush2.msra.mxu0 %v731
      %2150 = vmatprep.subr.mxu0 0.0
      %2151 = vmatpush2.msra.mxu0 %v726
      %2152 = vmatprep.subr.mxu0 0.0
      %2153 = vmatpush2.msra.mxu0 %v723
      %2154 = vmatprep.mubr.f32.mxu0 %v1979
      %2155 = vmatmul.mubr.f32.gmra.mxu0 %v1978
      %v2156 = vpop.f32.mrf.mxu0
      %v2157 = vadd.f32 0.0, %v2156
      %v2158 = vpop.f32.mrf.mxu0
      %2159 = vmatprep.mubr.f32.mxu0 %v1981
      %2160 = vmatmul.mubr.f32.gmra.mxu0 %v1980
      %v2161 = vpop.f32.mrf.mxu0
      %v2162 = vadd.f32 0.0, %v2161
      %v2163 = vpop.f32.mrf.mxu0
      %2164 = vmatprep.mubr.f32.mxu0 %v1983
      %2165 = vmatmul.mubr.f32.gmra.mxu0 %v1982
      %v2166 = vpop.f32.mrf.mxu0
      %v2167 = vadd.f32 0.0, %v2166
      %v2168 = vpop.f32.mrf.mxu0
      %2169 = vmatprep.mubr.f32.mxu0 %v1985
      %2170 = vmatmul.mubr.f32.gmra.mxu0 %v1984
      %v2171 = vpop.f32.mrf.mxu0
      %v2172 = vadd.f32 0.0, %v2171
      %v2173 = vpop.f32.mrf.mxu0
      %2174 = vmatprep.mubr.f32.mxu0 %v1987
      %2175 = vmatmul.mubr.f32.gmra.mxu0 %v1986
      %v2176 = vpop.f32.mrf.mxu0
      %v2177 = vadd.f32 0.0, %v2176
      %v2178 = vpop.f32.mrf.mxu0
      %2179 = vmatprep.mubr.f32.mxu0 %v1989
      %2180 = vmatmul.mubr.f32.gmra.mxu0 %v1988
      %v2181 = vpop.f32.mrf.mxu0
      %v2182 = vadd.f32 0.0, %v2181
      %v2183 = vpop.f32.mrf.mxu0
      %2184 = vmatprep.mubr.f32.mxu0 %v1991
      %2185 = vmatmul.mubr.f32.gmra.mxu0 %v1990
      %v2186 = vpop.f32.mrf.mxu0
      %v2187 = vadd.f32 0.0, %v2186
      %v2188 = vpop.f32.mrf.mxu0
      %2189 = vmatprep.mubr.f32.mxu0 %v1993
      %2190 = vmatmul.mubr.f32.gmra.mxu0 %v1992
      %v2191 = vpop.f32.mrf.mxu0
      %v2192 = vadd.f32 0.0, %v2191
      %v2193 = vpop.f32.mrf.mxu0
      %2194 = vmatprep.mubr.f32.mxu0 %v1995
      %2195 = vmatmul.mubr.f32.gmra.mxu0 %v1994
      %v2196 = vpop.f32.mrf.mxu0
      %v2197 = vadd.f32 0.0, %v2196
      %v2198 = vpop.f32.mrf.mxu0
      %2199 = vmatprep.mubr.f32.mxu0 %v1997
      %2200 = vmatmul.mubr.f32.gmra.mxu0 %v1996
      %v2201 = vpop.f32.mrf.mxu0
      %v2202 = vadd.f32 0.0, %v2201
      %v2203 = vpop.f32.mrf.mxu0
      %2204 = vmatprep.mubr.f32.mxu0 %v1999
      %2205 = vmatmul.mubr.f32.gmra.mxu0 %v1998
      %v2206 = vpop.f32.mrf.mxu0
      %v2207 = vadd.f32 0.0, %v2206
      %v2208 = vpop.f32.mrf.mxu0
      %2209 = vmatprep.mubr.f32.mxu0 %v2001
      %2210 = vmatmul.mubr.f32.gmra.mxu0 %v2000
      %v2211 = vpop.f32.mrf.mxu0
      %v2212 = vadd.f32 0.0, %v2211
      %v2213 = vpop.f32.mrf.mxu0
      %2214 = vmatprep.mubr.f32.mxu0 %v2003
      %2215 = vmatmul.mubr.f32.gmra.mxu0 %v2002
      %v2216 = vpop.f32.mrf.mxu0
      %v2217 = vadd.f32 0.0, %v2216
      %v2218 = vpop.f32.mrf.mxu0
      %2219 = vmatprep.mubr.f32.mxu0 %v2005
      %2220 = vmatmul.mubr.f32.gmra.mxu0 %v2004
      %v2221 = vpop.f32.mrf.mxu0
      %v2222 = vadd.f32 0.0, %v2221
      %v2223 = vpop.f32.mrf.mxu0
      %2224 = vmatprep.mubr.f32.mxu0 %v2007
      %2225 = vmatmul.mubr.f32.gmra.mxu0 %v2006
      %v2226 = vpop.f32.mrf.mxu0
      %v2227 = vadd.f32 0.0, %v2226
      %v2228 = vpop.f32.mrf.mxu0
      %2229 = vmatprep.mubr.f32.mxu0 %v2009
      %2230 = vmatmul.mubr.f32.gmra.mxu0 %v2008
      %v2231 = vpop.f32.mrf.mxu0
      %v2232 = vadd.f32 0.0, %v2231
      %v2233 = vpop.f32.mrf.mxu0
      %2234 = vdwg.mxu0
      %v2235 = vmul.f32 %v2157, %v2074
      %v2236 = vmul.f32 %v2162, %v2075
      %v2237 = vmul.f32 %v2167, %v2076
      %v2238 = vmul.f32 %v2172, %v2077
      %v2239 = vmul.f32 %v2177, %v2078
      %v2240 = vmul.f32 %v2182, %v2079
      %v2241 = vmul.f32 %v2187, %v2080
      %v2242 = vmul.f32 %v2192, %v2081
      %v2243 = vmul.f32 %v2197, %v2082
      %v2244 = vmul.f32 %v2202, %v2083
      %v2245 = vmul.f32 %v2207, %v2084
      %v2246 = vmul.f32 %v2212, %v2085
      %v2247 = vmul.f32 %v2217, %v2086
      %v2248 = vmul.f32 %v2222, %v2087
      %v2249 = vmul.f32 %v2227, %v2088
      %v2250 = vmul.f32 %v2232, %v2089
      %2251 = vset.pattern.permute.xlu0 1
      %2252 = vperm.xlu0 %2251, %v1330
      %v2253 = vpop.permute.xlu0 %2252
      %2255 = vset.pattern.permute.xlu0 1
      %2256 = vperm.xlu0 %2255, %v1335
      %v2257 = vpop.permute.xlu0 %2256
      %2259 = vset.pattern.permute.xlu0 1
      %2260 = vperm.xlu0 %2259, %v1340
      %v2261 = vpop.permute.xlu0 %2260
      %2263 = vset.pattern.permute.xlu0 1
      %2264 = vperm.xlu0 %2263, %v1345
      %v2265 = vpop.permute.xlu0 %2264
      %2267 = vset.pattern.permute.xlu0 1
      %2268 = vperm.xlu0 %2267, %v1350
      %v2269 = vpop.permute.xlu0 %2268
      %2271 = vset.pattern.permute.xlu0 1
      %2272 = vperm.xlu0 %2271, %v1355
      %v2273 = vpop.permute.xlu0 %2272
      %2275 = vset.pattern.permute.xlu0 1
      %2276 = vperm.xlu0 %2275, %v1360
      %v2277 = vpop.permute.xlu0 %2276
      %2279 = vset.pattern.permute.xlu0 1
      %2280 = vperm.xlu0 %2279, %v1365
      %v2281 = vpop.permute.xlu0 %2280
      %2283 = vset.pattern.permute.xlu0 1
      %2284 = vperm.xlu0 %2283, %v1370
      %v2285 = vpop.permute.xlu0 %2284
      %2287 = vset.pattern.permute.xlu0 1
      %2288 = vperm.xlu0 %2287, %v1375
      %v2289 = vpop.permute.xlu0 %2288
      %2291 = vset.pattern.permute.xlu0 1
      %2292 = vperm.xlu0 %2291, %v1380
      %v2293 = vpop.permute.xlu0 %2292
      %2295 = vset.pattern.permute.xlu0 1
      %2296 = vperm.xlu0 %2295, %v1385
      %v2297 = vpop.permute.xlu0 %2296
      %2299 = vset.pattern.permute.xlu0 1
      %2300 = vperm.xlu0 %2299, %v1390
      %v2301 = vpop.permute.xlu0 %2300
      %2303 = vset.pattern.permute.xlu0 1
      %2304 = vperm.xlu0 %2303, %v1395
      %v2305 = vpop.permute.xlu0 %2304
      %2307 = vset.pattern.permute.xlu0 1
      %2308 = vperm.xlu0 %2307, %v1400
      %v2309 = vpop.permute.xlu0 %2308
      %2311 = vset.pattern.permute.xlu0 1
      %2312 = vperm.xlu0 %2311, %v1405
      %v2313 = vpop.permute.xlu0 %2312
      %v2315 = vlaneseq
      %v2316 = vshrl.u32 %v2315, 7
      %v2317 = vsub.s32 1, %v2316
      %v2318 = vrot.slane %v1574, %v2317
      %v2319 = vlaneseq
      %v2320 = vshrl.u32 %v2319, 7
      %v2321 = vsub.s32 1, %v2320
      %v2322 = vrot.slane %v1576, %v2321
      %v2323 = vadd.f32 %v2253, %v2318
      %v2324 = vadd.f32 %v2253, %v2322
      %v2325 = vadd.f32 %v2257, %v2318
      %v2326 = vadd.f32 %v2257, %v2322
      %v2327 = vadd.f32 %v2261, %v2318
      %v2328 = vadd.f32 %v2261, %v2322
      %v2329 = vadd.f32 %v2265, %v2318
      %v2330 = vadd.f32 %v2265, %v2322
      %v2331 = vadd.f32 %v2269, %v2318
      %v2332 = vadd.f32 %v2269, %v2322
      %v2333 = vadd.f32 %v2273, %v2318
      %v2334 = vadd.f32 %v2273, %v2322
      %v2335 = vadd.f32 %v2277, %v2318
      %v2336 = vadd.f32 %v2277, %v2322
      %v2337 = vadd.f32 %v2281, %v2318
      %v2338 = vadd.f32 %v2281, %v2322
      %v2339 = vadd.f32 %v2285, %v2318
      %v2340 = vadd.f32 %v2285, %v2322
      %v2341 = vadd.f32 %v2289, %v2318
      %v2342 = vadd.f32 %v2289, %v2322
      %v2343 = vadd.f32 %v2293, %v2318
      %v2344 = vadd.f32 %v2293, %v2322
      %v2345 = vadd.f32 %v2297, %v2318
      %v2346 = vadd.f32 %v2297, %v2322
      %v2347 = vadd.f32 %v2301, %v2318
      %v2348 = vadd.f32 %v2301, %v2322
      %v2349 = vadd.f32 %v2305, %v2318
      %v2350 = vadd.f32 %v2305, %v2322
      %v2351 = vadd.f32 %v2309, %v2318
      %v2352 = vadd.f32 %v2309, %v2322
      %v2353 = vadd.f32 %v2313, %v2318
      %v2354 = vadd.f32 %v2313, %v2322
      %v2355 = vmul.f32 %v2323, 0.2
      %v2356 = vmul.f32 %v2324, 0.2
      %v2357 = vmul.f32 %v2325, 0.2
      %v2358 = vmul.f32 %v2326, 0.2
      %v2359 = vmul.f32 %v2327, 0.2
      %v2360 = vmul.f32 %v2328, 0.2
      %v2361 = vmul.f32 %v2329, 0.2
      %v2362 = vmul.f32 %v2330, 0.2
      %v2363 = vmul.f32 %v2331, 0.2
      %v2364 = vmul.f32 %v2332, 0.2
      %v2365 = vmul.f32 %v2333, 0.2
      %v2366 = vmul.f32 %v2334, 0.2
      %v2367 = vmul.f32 %v2335, 0.2
      %v2368 = vmul.f32 %v2336, 0.2
      %v2369 = vmul.f32 %v2337, 0.2
      %v2370 = vmul.f32 %v2338, 0.2
      %v2371 = vmul.f32 %v2339, 0.2
      %v2372 = vmul.f32 %v2340, 0.2
      %v2373 = vmul.f32 %v2341, 0.2
      %v2374 = vmul.f32 %v2342, 0.2
      %v2375 = vmul.f32 %v2343, 0.2
      %v2376 = vmul.f32 %v2344, 0.2
      %v2377 = vmul.f32 %v2345, 0.2
      %v2378 = vmul.f32 %v2346, 0.2
      %v2379 = vmul.f32 %v2347, 0.2
      %v2380 = vmul.f32 %v2348, 0.2
      %v2381 = vmul.f32 %v2349, 0.2
      %v2382 = vmul.f32 %v2350, 0.2
      %v2383 = vmul.f32 %v2351, 0.2
      %v2384 = vmul.f32 %v2352, 0.2
      %v2385 = vmul.f32 %v2353, 0.2
      %v2386 = vmul.f32 %v2354, 0.2
      %v2387 = vmax.f32 %v2323, %v2355
      %v2388 = vmax.f32 %v2324, %v2356
      %v2389 = vmax.f32 %v2325, %v2357
      %v2390 = vmax.f32 %v2326, %v2358
      %v2391 = vmax.f32 %v2327, %v2359
      %v2392 = vmax.f32 %v2328, %v2360
      %v2393 = vmax.f32 %v2329, %v2361
      %v2394 = vmax.f32 %v2330, %v2362
      %v2395 = vmax.f32 %v2331, %v2363
      %v2396 = vmax.f32 %v2332, %v2364
      %v2397 = vmax.f32 %v2333, %v2365
      %v2398 = vmax.f32 %v2334, %v2366
      %v2399 = vmax.f32 %v2335, %v2367
      %v2400 = vmax.f32 %v2336, %v2368
      %v2401 = vmax.f32 %v2337, %v2369
      %v2402 = vmax.f32 %v2338, %v2370
      %v2403 = vmax.f32 %v2339, %v2371
      %v2404 = vmax.f32 %v2340, %v2372
      %v2405 = vmax.f32 %v2341, %v2373
      %v2406 = vmax.f32 %v2342, %v2374
      %v2407 = vmax.f32 %v2343, %v2375
      %v2408 = vmax.f32 %v2344, %v2376
      %v2409 = vmax.f32 %v2345, %v2377
      %v2410 = vmax.f32 %v2346, %v2378
      %v2411 = vmax.f32 %v2347, %v2379
      %v2412 = vmax.f32 %v2348, %v2380
      %v2413 = vmax.f32 %v2349, %v2381
      %v2414 = vmax.f32 %v2350, %v2382
      %v2415 = vmax.f32 %v2351, %v2383
      %v2416 = vmax.f32 %v2352, %v2384
      %v2417 = vmax.f32 %v2353, %v2385
      %v2418 = vmax.f32 %v2354, %v2386
      %v2419 = vmax.f32 %v2387, %v2388
      %2420 = vmax.xlane.f32.xlu0 %v2419
      %v2421 = vpop.xlane.xlu0 %2420
      %v2422 = vmax.f32 %v2389, %v2390
      %2423 = vmax.xlane.f32.xlu0 %v2422
      %v2424 = vpop.xlane.xlu0 %2423
      %v2425 = vmax.f32 %v2391, %v2392
      %2426 = vmax.xlane.f32.xlu0 %v2425
      %v2427 = vpop.xlane.xlu0 %2426
      %v2428 = vmax.f32 %v2393, %v2394
      %2429 = vmax.xlane.f32.xlu0 %v2428
      %v2430 = vpop.xlane.xlu0 %2429
      %v2431 = vmax.f32 %v2395, %v2396
      %2432 = vmax.xlane.f32.xlu0 %v2431
      %v2433 = vpop.xlane.xlu0 %2432
      %v2434 = vmax.f32 %v2397, %v2398
      %2435 = vmax.xlane.f32.xlu0 %v2434
      %v2436 = vpop.xlane.xlu0 %2435
      %v2437 = vmax.f32 %v2399, %v2400
      %2438 = vmax.xlane.f32.xlu0 %v2437
      %v2439 = vpop.xlane.xlu0 %2438
      %v2440 = vmax.f32 %v2401, %v2402
      %2441 = vmax.xlane.f32.xlu0 %v2440
      %v2442 = vpop.xlane.xlu0 %2441
      %v2443 = vmax.f32 %v2403, %v2404
      %2444 = vmax.xlane.f32.xlu0 %v2443
      %v2445 = vpop.xlane.xlu0 %2444
      %v2446 = vmax.f32 %v2405, %v2406
      %2447 = vmax.xlane.f32.xlu0 %v2446
      %v2448 = vpop.xlane.xlu0 %2447
      %v2449 = vmax.f32 %v2407, %v2408
      %2450 = vmax.xlane.f32.xlu0 %v2449
      %v2451 = vpop.xlane.xlu0 %2450
      %v2452 = vmax.f32 %v2409, %v2410
      %2453 = vmax.xlane.f32.xlu0 %v2452
      %v2454 = vpop.xlane.xlu0 %2453
      %v2455 = vmax.f32 %v2411, %v2412
      %2456 = vmax.xlane.f32.xlu0 %v2455
      %v2457 = vpop.xlane.xlu0 %2456
      %v2458 = vmax.f32 %v2413, %v2414
      %2459 = vmax.xlane.f32.xlu0 %v2458
      %v2460 = vpop.xlane.xlu0 %2459
      %v2461 = vmax.f32 %v2415, %v2416
      %2462 = vmax.xlane.f32.xlu0 %v2461
      %v2463 = vpop.xlane.xlu0 %2462
      %v2464 = vmax.f32 %v2417, %v2418
      %2465 = vmax.xlane.f32.xlu0 %v2464
      %v2466 = vpop.xlane.xlu0 %2465
      %v2467 = vsub.f32 %v2387, %v2421
      %v2468 = vsub.f32 %v2388, %v2421
      %v2469 = vsub.f32 %v2389, %v2424
      %v2470 = vsub.f32 %v2390, %v2424
      %v2471 = vsub.f32 %v2391, %v2427
      %v2472 = vsub.f32 %v2392, %v2427
      %v2473 = vsub.f32 %v2393, %v2430
      %v2474 = vsub.f32 %v2394, %v2430
      %v2475 = vsub.f32 %v2395, %v2433
      %v2476 = vsub.f32 %v2396, %v2433
      %v2477 = vsub.f32 %v2397, %v2436
      %v2478 = vsub.f32 %v2398, %v2436
      %v2479 = vsub.f32 %v2399, %v2439
      %v2480 = vsub.f32 %v2400, %v2439
      %v2481 = vsub.f32 %v2401, %v2442
      %v2482 = vsub.f32 %v2402, %v2442
      %v2483 = vsub.f32 %v2403, %v2445
      %v2484 = vsub.f32 %v2404, %v2445
      %v2485 = vsub.f32 %v2405, %v2448
      %v2486 = vsub.f32 %v2406, %v2448
      %v2487 = vsub.f32 %v2407, %v2451
      %v2488 = vsub.f32 %v2408, %v2451
      %v2489 = vsub.f32 %v2409, %v2454
      %v2490 = vsub.f32 %v2410, %v2454
      %v2491 = vsub.f32 %v2411, %v2457
      %v2492 = vsub.f32 %v2412, %v2457
      %v2493 = vsub.f32 %v2413, %v2460
      %v2494 = vsub.f32 %v2414, %v2460
      %v2495 = vsub.f32 %v2415, %v2463
      %v2496 = vsub.f32 %v2416, %v2463
      %v2497 = vsub.f32 %v2417, %v2466
      %v2498 = vsub.f32 %v2418, %v2466
      %v2499 = vmul.f32 %v2467, 1.442695
      %v2500 = vpow.pop %v2499
      %v2501 = vmul.f32 %v2468, 1.442695
      %v2502 = vpow.pop %v2501
      %v2503 = vmul.f32 %v2469, 1.442695
      %v2504 = vpow.pop %v2503
      %v2505 = vmul.f32 %v2470, 1.442695
      %v2506 = vpow.pop %v2505
      %v2507 = vmul.f32 %v2471, 1.442695
      %v2508 = vpow.pop %v2507
      %v2509 = vmul.f32 %v2472, 1.442695
      %v2510 = vpow.pop %v2509
      %v2511 = vmul.f32 %v2473, 1.442695
      %v2512 = vpow.pop %v2511
      %v2513 = vmul.f32 %v2474, 1.442695
      %v2514 = vpow.pop %v2513
      %v2515 = vmul.f32 %v2475, 1.442695
      %v2516 = vpow.pop %v2515
      %v2517 = vmul.f32 %v2476, 1.442695
      %v2518 = vpow.pop %v2517
      %v2519 = vmul.f32 %v2477, 1.442695
      %v2520 = vpow.pop %v2519
      %v2521 = vmul.f32 %v2478, 1.442695
      %v2522 = vpow.pop %v2521
      %v2523 = vmul.f32 %v2479, 1.442695
      %v2524 = vpow.pop %v2523
      %v2525 = vmul.f32 %v2480, 1.442695
      %v2526 = vpow.pop %v2525
      %v2527 = vmul.f32 %v2481, 1.442695
      %v2528 = vpow.pop %v2527
      %v2529 = vmul.f32 %v2482, 1.442695
      %v2530 = vpow.pop %v2529
      %v2531 = vmul.f32 %v2483, 1.442695
      %v2532 = vpow.pop %v2531
      %v2533 = vmul.f32 %v2484, 1.442695
      %v2534 = vpow.pop %v2533
      %v2535 = vmul.f32 %v2485, 1.442695
      %v2536 = vpow.pop %v2535
      %v2537 = vmul.f32 %v2486, 1.442695
      %v2538 = vpow.pop %v2537
      %v2539 = vmul.f32 %v2487, 1.442695
      %v2540 = vpow.pop %v2539
      %v2541 = vmul.f32 %v2488, 1.442695
      %v2542 = vpow.pop %v2541
      %v2543 = vmul.f32 %v2489, 1.442695
      %v2544 = vpow.pop %v2543
      %v2545 = vmul.f32 %v2490, 1.442695
      %v2546 = vpow.pop %v2545
      %v2547 = vmul.f32 %v2491, 1.442695
      %v2548 = vpow.pop %v2547
      %v2549 = vmul.f32 %v2492, 1.442695
      %v2550 = vpow.pop %v2549
      %v2551 = vmul.f32 %v2493, 1.442695
      %v2552 = vpow.pop %v2551
      %v2553 = vmul.f32 %v2494, 1.442695
      %v2554 = vpow.pop %v2553
      %v2555 = vmul.f32 %v2495, 1.442695
      %v2556 = vpow.pop %v2555
      %v2557 = vmul.f32 %v2496, 1.442695
      %v2558 = vpow.pop %v2557
      %v2559 = vmul.f32 %v2497, 1.442695
      %v2560 = vpow.pop %v2559
      %v2561 = vmul.f32 %v2498, 1.442695
      %v2562 = vpow.pop %v2561
      %v2563 = vmul.f32 %v2500, %v1618
      %v2564 = vmul.f32 %v2502, %v1619
      %v2565 = vmul.f32 %v2504, %v1620
      %v2566 = vmul.f32 %v2506, %v1621
      %v2567 = vmul.f32 %v2508, %v1622
      %v2568 = vmul.f32 %v2510, %v1623
      %v2569 = vmul.f32 %v2512, %v1624
      %v2570 = vmul.f32 %v2514, %v1625
      %v2571 = vmul.f32 %v2516, %v1626
      %v2572 = vmul.f32 %v2518, %v1627
      %v2573 = vmul.f32 %v2520, %v1628
      %v2574 = vmul.f32 %v2522, %v1629
      %v2575 = vmul.f32 %v2524, %v1630
      %v2576 = vmul.f32 %v2526, %v1631
      %v2577 = vmul.f32 %v2528, %v1632
      %v2578 = vmul.f32 %v2530, %v1633
      %v2579 = vmul.f32 %v2532, %v1634
      %v2580 = vmul.f32 %v2534, %v1635
      %v2581 = vmul.f32 %v2536, %v1636
      %v2582 = vmul.f32 %v2538, %v1637
      %v2583 = vmul.f32 %v2540, %v1638
      %v2584 = vmul.f32 %v2542, %v1639
      %v2585 = vmul.f32 %v2544, %v1640
      %v2586 = vmul.f32 %v2546, %v1641
      %v2587 = vmul.f32 %v2548, %v1642
      %v2588 = vmul.f32 %v2550, %v1643
      %v2589 = vmul.f32 %v2552, %v1644
      %v2590 = vmul.f32 %v2554, %v1645
      %v2591 = vmul.f32 %v2556, %v1646
      %v2592 = vmul.f32 %v2558, %v1647
      %v2593 = vmul.f32 %v2560, %v1648
      %v2594 = vmul.f32 %v2562, %v1649
      %v2595 = vadd.f32 %v2563, %v2564
      %2596 = vadd.xlane.f32.xlu0 %v2595
      %v2597 = vpop.xlane.xlu0 %2596
      %v2598 = vadd.f32 %v2565, %v2566
      %2599 = vadd.xlane.f32.xlu0 %v2598
      %v2600 = vpop.xlane.xlu0 %2599
      %v2601 = vadd.f32 %v2567, %v2568
      %2602 = vadd.xlane.f32.xlu0 %v2601
      %v2603 = vpop.xlane.xlu0 %2602
      %v2604 = vadd.f32 %v2569, %v2570
      %2605 = vadd.xlane.f32.xlu0 %v2604
      %v2606 = vpop.xlane.xlu0 %2605
      %v2607 = vadd.f32 %v2571, %v2572
      %2608 = vadd.xlane.f32.xlu0 %v2607
      %v2609 = vpop.xlane.xlu0 %2608
      %v2610 = vadd.f32 %v2573, %v2574
      %2611 = vadd.xlane.f32.xlu0 %v2610
      %v2612 = vpop.xlane.xlu0 %2611
      %v2613 = vadd.f32 %v2575, %v2576
      %2614 = vadd.xlane.f32.xlu0 %v2613
      %v2615 = vpop.xlane.xlu0 %2614
      %v2616 = vadd.f32 %v2577, %v2578
      %2617 = vadd.xlane.f32.xlu0 %v2616
      %v2618 = vpop.xlane.xlu0 %2617
      %v2619 = vadd.f32 %v2579, %v2580
      %2620 = vadd.xlane.f32.xlu0 %v2619
      %v2621 = vpop.xlane.xlu0 %2620
      %v2622 = vadd.f32 %v2581, %v2582
      %2623 = vadd.xlane.f32.xlu0 %v2622
      %v2624 = vpop.xlane.xlu0 %2623
      %v2625 = vadd.f32 %v2583, %v2584
      %2626 = vadd.xlane.f32.xlu0 %v2625
      %v2627 = vpop.xlane.xlu0 %2626
      %v2628 = vadd.f32 %v2585, %v2586
      %2629 = vadd.xlane.f32.xlu0 %v2628
      %v2630 = vpop.xlane.xlu0 %2629
      %v2631 = vadd.f32 %v2587, %v2588
      %2632 = vadd.xlane.f32.xlu0 %v2631
      %v2633 = vpop.xlane.xlu0 %2632
      %v2634 = vadd.f32 %v2589, %v2590
      %2635 = vadd.xlane.f32.xlu0 %v2634
      %v2636 = vpop.xlane.xlu0 %2635
      %v2637 = vadd.f32 %v2591, %v2592
      %2638 = vadd.xlane.f32.xlu0 %v2637
      %v2639 = vpop.xlane.xlu0 %2638
      %v2640 = vadd.f32 %v2593, %v2594
      %2641 = vadd.xlane.f32.xlu0 %v2640
      %v2642 = vpop.xlane.xlu0 %2641
      %v2643 = vmax.f32 %v2597, 1e-30
      %v2644 = vmax.f32 %v2600, 1e-30
      %v2645 = vmax.f32 %v2603, 1e-30
      %v2646 = vmax.f32 %v2606, 1e-30
      %v2647 = vmax.f32 %v2609, 1e-30
      %v2648 = vmax.f32 %v2612, 1e-30
      %v2649 = vmax.f32 %v2615, 1e-30
      %v2650 = vmax.f32 %v2618, 1e-30
      %v2651 = vmax.f32 %v2621, 1e-30
      %v2652 = vmax.f32 %v2624, 1e-30
      %v2653 = vmax.f32 %v2627, 1e-30
      %v2654 = vmax.f32 %v2630, 1e-30
      %v2655 = vmax.f32 %v2633, 1e-30
      %v2656 = vmax.f32 %v2636, 1e-30
      %v2657 = vmax.f32 %v2639, 1e-30
      %v2658 = vmax.f32 %v2642, 1e-30
      %v2659 = vrcp.pop %v2643
      %v2660 = vrcp.pop %v2644
      %v2661 = vrcp.pop %v2645
      %v2662 = vrcp.pop %v2646
      %v2663 = vrcp.pop %v2647
      %v2664 = vrcp.pop %v2648
      %v2665 = vrcp.pop %v2649
      %v2666 = vrcp.pop %v2650
      %v2667 = vrcp.pop %v2651
      %v2668 = vrcp.pop %v2652
      %v2669 = vrcp.pop %v2653
      %v2670 = vrcp.pop %v2654
      %v2671 = vrcp.pop %v2655
      %v2672 = vrcp.pop %v2656
      %v2673 = vrcp.pop %v2657
      %v2674 = vrcp.pop %v2658
      %2675 = vrot.lane.b32.xlu0 %v659, 112
      %v2676 = vpop.permute.xlu0 %2675
      %2677 = vrot.lane.b32.xlu0 %v662, 112
      %v2678 = vpop.permute.xlu0 %2677
      %2679 = vrot.lane.b32.xlu0 %v667, 112
      %v2680 = vpop.permute.xlu0 %2679
      %2681 = vrot.lane.b32.xlu0 %v670, 112
      %v2682 = vpop.permute.xlu0 %2681
      %2683 = vrot.lane.b32.xlu0 %v675, 112
      %v2684 = vpop.permute.xlu0 %2683
      %2685 = vrot.lane.b32.xlu0 %v678, 112
      %v2686 = vpop.permute.xlu0 %2685
      %2687 = vrot.lane.b32.xlu0 %v683, 112
      %v2688 = vpop.permute.xlu0 %2687
      %2689 = vrot.lane.b32.xlu0 %v686, 112
      %v2690 = vpop.permute.xlu0 %2689
      %2691 = vrot.lane.b32.xlu0 %v691, 112
      %v2692 = vpop.permute.xlu0 %2691
      %2693 = vrot.lane.b32.xlu0 %v694, 112
      %v2694 = vpop.permute.xlu0 %2693
      %2695 = vrot.lane.b32.xlu0 %v699, 112
      %v2696 = vpop.permute.xlu0 %2695
      %2697 = vrot.lane.b32.xlu0 %v702, 112
      %v2698 = vpop.permute.xlu0 %2697
      %2699 = vrot.lane.b32.xlu0 %v707, 112
      %v2700 = vpop.permute.xlu0 %2699
      %2701 = vrot.lane.b32.xlu0 %v710, 112
      %v2702 = vpop.permute.xlu0 %2701
      %2703 = vrot.lane.b32.xlu0 %v715, 112
      %v2704 = vpop.permute.xlu0 %2703
      %2705 = vrot.lane.b32.xlu0 %v718, 112
      %v2706 = vpop.permute.xlu0 %2705
      %2707 = vrot.lane.b32.xlu0 %v723, 112
      %v2708 = vpop.permute.xlu0 %2707
      %2709 = vrot.lane.b32.xlu0 %v726, 112
      %v2710 = vpop.permute.xlu0 %2709
      %2711 = vrot.lane.b32.xlu0 %v731, 112
      %v2712 = vpop.permute.xlu0 %2711
      %2713 = vrot.lane.b32.xlu0 %v734, 112
      %v2714 = vpop.permute.xlu0 %2713
      %2715 = vrot.lane.b32.xlu0 %v739, 112
      %v2716 = vpop.permute.xlu0 %2715
      %2717 = vrot.lane.b32.xlu0 %v742, 112
      %v2718 = vpop.permute.xlu0 %2717
      %2719 = vrot.lane.b32.xlu0 %v747, 112
      %v2720 = vpop.permute.xlu0 %2719
      %2721 = vrot.lane.b32.xlu0 %v750, 112
      %v2722 = vpop.permute.xlu0 %2721
      %2723 = vrot.lane.b32.xlu0 %v755, 112
      %v2724 = vpop.permute.xlu0 %2723
      %2725 = vrot.lane.b32.xlu0 %v758, 112
      %v2726 = vpop.permute.xlu0 %2725
      %2727 = vrot.lane.b32.xlu0 %v763, 112
      %v2728 = vpop.permute.xlu0 %2727
      %2729 = vrot.lane.b32.xlu0 %v766, 112
      %v2730 = vpop.permute.xlu0 %2729
      %2731 = vrot.lane.b32.xlu0 %v771, 112
      %v2732 = vpop.permute.xlu0 %2731
      %2733 = vrot.lane.b32.xlu0 %v774, 112
      %v2734 = vpop.permute.xlu0 %2733
      %2735 = vrot.lane.b32.xlu0 %v779, 112
      %v2736 = vpop.permute.xlu0 %2735
      %2737 = vrot.lane.b32.xlu0 %v782, 112
      %v2738 = vpop.permute.xlu0 %2737
      %2771 = vmatprep.subr.mxu0 0.0
      %2772 = vmatpush1.msra.mxu0 %v2706
      %2773 = vmatprep.subr.mxu0 0.0
      %2774 = vmatpush1.msra.mxu0 %v2704
      %2775 = vmatprep.subr.mxu0 0.0
      %2776 = vmatpush1.msra.mxu0 %v2702
      %2777 = vmatprep.subr.mxu0 0.0
      %2778 = vmatpush1.msra.mxu0 %v2700
      %2779 = vmatprep.subr.mxu0 0.0
      %2780 = vmatpush1.msra.mxu0 %v2698
      %2781 = vmatprep.subr.mxu0 0.0
      %2782 = vmatpush1.msra.mxu0 %v2696
      %2783 = vmatprep.subr.mxu0 0.0
      %2784 = vmatpush1.msra.mxu0 %v2694
      %2785 = vmatprep.subr.mxu0 0.0
      %2786 = vmatpush1.msra.mxu0 %v2692
      %2787 = vmatprep.subr.mxu0 0.0
      %2788 = vmatpush1.msra.mxu0 %v2690
      %2789 = vmatprep.subr.mxu0 0.0
      %2790 = vmatpush1.msra.mxu0 %v2688
      %2791 = vmatprep.subr.mxu0 0.0
      %2792 = vmatpush1.msra.mxu0 %v2686
      %2793 = vmatprep.subr.mxu0 0.0
      %2794 = vmatpush1.msra.mxu0 %v2684
      %2795 = vmatprep.subr.mxu0 0.0
      %2796 = vmatpush1.msra.mxu0 %v2682
      %2797 = vmatprep.subr.mxu0 0.0
      %2798 = vmatpush1.msra.mxu0 %v2680
      %2799 = vmatprep.subr.mxu0 0.0
      %2800 = vmatpush1.msra.mxu0 %v2678
      %2801 = vmatprep.subr.mxu0 0.0
      %2802 = vmatpush1.msra.mxu0 %v2676
      %2803 = vmatprep.subr.mxu0 0.0
      %2804 = vmatpush2.msra.mxu0 %v2738
      %2805 = vmatprep.subr.mxu0 0.0
      %2806 = vmatpush2.msra.mxu0 %v2736
      %2807 = vmatprep.subr.mxu0 0.0
      %2808 = vmatpush2.msra.mxu0 %v2734
      %2809 = vmatprep.subr.mxu0 0.0
      %2810 = vmatpush2.msra.mxu0 %v2732
      %2811 = vmatprep.subr.mxu0 0.0
      %2812 = vmatpush2.msra.mxu0 %v2730
      %2813 = vmatprep.subr.mxu0 0.0
      %2814 = vmatpush2.msra.mxu0 %v2728
      %2815 = vmatprep.subr.mxu0 0.0
      %2816 = vmatpush2.msra.mxu0 %v2726
      %2817 = vmatprep.subr.mxu0 0.0
      %2818 = vmatpush2.msra.mxu0 %v2724
      %2819 = vmatprep.subr.mxu0 0.0
      %2820 = vmatpush2.msra.mxu0 %v2722
      %2821 = vmatprep.subr.mxu0 0.0
      %2822 = vmatpush2.msra.mxu0 %v2720
      %2823 = vmatprep.subr.mxu0 0.0
      %2824 = vmatpush2.msra.mxu0 %v2718
      %2825 = vmatprep.subr.mxu0 0.0
      %2826 = vmatpush2.msra.mxu0 %v2716
      %2827 = vmatprep.subr.mxu0 0.0
      %2828 = vmatpush2.msra.mxu0 %v2714
      %2829 = vmatprep.subr.mxu0 0.0
      %2830 = vmatpush2.msra.mxu0 %v2712
      %2831 = vmatprep.subr.mxu0 0.0
      %2832 = vmatpush2.msra.mxu0 %v2710
      %2833 = vmatprep.subr.mxu0 0.0
      %2834 = vmatpush2.msra.mxu0 %v2708
      %2835 = vmatprep.mubr.f32.mxu0 %v2564
      %2836 = vmatmul.mubr.f32.gmra.mxu0 %v2563
      %v2837 = vpop.f32.mrf.mxu0
      %v2838 = vadd.f32 0.0, %v2837
      %v2839 = vpop.f32.mrf.mxu0
      %2840 = vmatprep.mubr.f32.mxu0 %v2566
      %2841 = vmatmul.mubr.f32.gmra.mxu0 %v2565
      %v2842 = vpop.f32.mrf.mxu0
      %v2843 = vadd.f32 0.0, %v2842
      %v2844 = vpop.f32.mrf.mxu0
      %2845 = vmatprep.mubr.f32.mxu0 %v2568
      %2846 = vmatmul.mubr.f32.gmra.mxu0 %v2567
      %v2847 = vpop.f32.mrf.mxu0
      %v2848 = vadd.f32 0.0, %v2847
      %v2849 = vpop.f32.mrf.mxu0
      %2850 = vmatprep.mubr.f32.mxu0 %v2570
      %2851 = vmatmul.mubr.f32.gmra.mxu0 %v2569
      %v2852 = vpop.f32.mrf.mxu0
      %v2853 = vadd.f32 0.0, %v2852
      %v2854 = vpop.f32.mrf.mxu0
      %2855 = vmatprep.mubr.f32.mxu0 %v2572
      %2856 = vmatmul.mubr.f32.gmra.mxu0 %v2571
      %v2857 = vpop.f32.mrf.mxu0
      %v2858 = vadd.f32 0.0, %v2857
      %v2859 = vpop.f32.mrf.mxu0
      %2860 = vmatprep.mubr.f32.mxu0 %v2574
      %2861 = vmatmul.mubr.f32.gmra.mxu0 %v2573
      %v2862 = vpop.f32.mrf.mxu0
      %v2863 = vadd.f32 0.0, %v2862
      %v2864 = vpop.f32.mrf.mxu0
      %2865 = vmatprep.mubr.f32.mxu0 %v2576
      %2866 = vmatmul.mubr.f32.gmra.mxu0 %v2575
      %v2867 = vpop.f32.mrf.mxu0
      %v2868 = vadd.f32 0.0, %v2867
      %v2869 = vpop.f32.mrf.mxu0
      %2870 = vmatprep.mubr.f32.mxu0 %v2578
      %2871 = vmatmul.mubr.f32.gmra.mxu0 %v2577
      %v2872 = vpop.f32.mrf.mxu0
      %v2873 = vadd.f32 0.0, %v2872
      %v2874 = vpop.f32.mrf.mxu0
      %2875 = vmatprep.mubr.f32.mxu0 %v2580
      %2876 = vmatmul.mubr.f32.gmra.mxu0 %v2579
      %v2877 = vpop.f32.mrf.mxu0
      %v2878 = vadd.f32 0.0, %v2877
      %v2879 = vpop.f32.mrf.mxu0
      %2880 = vmatprep.mubr.f32.mxu0 %v2582
      %2881 = vmatmul.mubr.f32.gmra.mxu0 %v2581
      %v2882 = vpop.f32.mrf.mxu0
      %v2883 = vadd.f32 0.0, %v2882
      %v2884 = vpop.f32.mrf.mxu0
      %2885 = vmatprep.mubr.f32.mxu0 %v2584
      %2886 = vmatmul.mubr.f32.gmra.mxu0 %v2583
      %v2887 = vpop.f32.mrf.mxu0
      %v2888 = vadd.f32 0.0, %v2887
      %v2889 = vpop.f32.mrf.mxu0
      %2890 = vmatprep.mubr.f32.mxu0 %v2586
      %2891 = vmatmul.mubr.f32.gmra.mxu0 %v2585
      %v2892 = vpop.f32.mrf.mxu0
      %v2893 = vadd.f32 0.0, %v2892
      %v2894 = vpop.f32.mrf.mxu0
      %2895 = vmatprep.mubr.f32.mxu0 %v2588
      %2896 = vmatmul.mubr.f32.gmra.mxu0 %v2587
      %v2897 = vpop.f32.mrf.mxu0
      %v2898 = vadd.f32 0.0, %v2897
      %v2899 = vpop.f32.mrf.mxu0
      %2900 = vmatprep.mubr.f32.mxu0 %v2590
      %2901 = vmatmul.mubr.f32.gmra.mxu0 %v2589
      %v2902 = vpop.f32.mrf.mxu0
      %v2903 = vadd.f32 0.0, %v2902
      %v2904 = vpop.f32.mrf.mxu0
      %2905 = vmatprep.mubr.f32.mxu0 %v2592
      %2906 = vmatmul.mubr.f32.gmra.mxu0 %v2591
      %v2907 = vpop.f32.mrf.mxu0
      %v2908 = vadd.f32 0.0, %v2907
      %v2909 = vpop.f32.mrf.mxu0
      %2910 = vmatprep.mubr.f32.mxu0 %v2594
      %2911 = vmatmul.mubr.f32.gmra.mxu0 %v2593
      %v2912 = vpop.f32.mrf.mxu0
      %v2913 = vadd.f32 0.0, %v2912
      %v2914 = vpop.f32.mrf.mxu0
      %2915 = vdwg.mxu0
      %v2916 = vmul.f32 %v2838, %v2659
      %v2917 = vmul.f32 %v2843, %v2660
      %v2918 = vmul.f32 %v2848, %v2661
      %v2919 = vmul.f32 %v2853, %v2662
      %v2920 = vmul.f32 %v2858, %v2663
      %v2921 = vmul.f32 %v2863, %v2664
      %v2922 = vmul.f32 %v2868, %v2665
      %v2923 = vmul.f32 %v2873, %v2666
      %v2924 = vmul.f32 %v2878, %v2667
      %v2925 = vmul.f32 %v2883, %v2668
      %v2926 = vmul.f32 %v2888, %v2669
      %v2927 = vmul.f32 %v2893, %v2670
      %v2928 = vmul.f32 %v2898, %v2671
      %v2929 = vmul.f32 %v2903, %v2672
      %v2930 = vmul.f32 %v2908, %v2673
      %v2931 = vmul.f32 %v2913, %v2674
      %2932 = vset.pattern.permute.xlu0 2
      %2933 = vperm.xlu0 %2932, %v1330
      %v2934 = vpop.permute.xlu0 %2933
      %2936 = vset.pattern.permute.xlu0 2
      %2937 = vperm.xlu0 %2936, %v1335
      %v2938 = vpop.permute.xlu0 %2937
      %2940 = vset.pattern.permute.xlu0 2
      %2941 = vperm.xlu0 %2940, %v1340
      %v2942 = vpop.permute.xlu0 %2941
      %2944 = vset.pattern.permute.xlu0 2
      %2945 = vperm.xlu0 %2944, %v1345
      %v2946 = vpop.permute.xlu0 %2945
      %2948 = vset.pattern.permute.xlu0 2
      %2949 = vperm.xlu0 %2948, %v1350
      %v2950 = vpop.permute.xlu0 %2949
      %2952 = vset.pattern.permute.xlu0 2
      %2953 = vperm.xlu0 %2952, %v1355
      %v2954 = vpop.permute.xlu0 %2953
      %2956 = vset.pattern.permute.xlu0 2
      %2957 = vperm.xlu0 %2956, %v1360
      %v2958 = vpop.permute.xlu0 %2957
      %2960 = vset.pattern.permute.xlu0 2
      %2961 = vperm.xlu0 %2960, %v1365
      %v2962 = vpop.permute.xlu0 %2961
      %2964 = vset.pattern.permute.xlu0 2
      %2965 = vperm.xlu0 %2964, %v1370
      %v2966 = vpop.permute.xlu0 %2965
      %2968 = vset.pattern.permute.xlu0 2
      %2969 = vperm.xlu0 %2968, %v1375
      %v2970 = vpop.permute.xlu0 %2969
      %2972 = vset.pattern.permute.xlu0 2
      %2973 = vperm.xlu0 %2972, %v1380
      %v2974 = vpop.permute.xlu0 %2973
      %2976 = vset.pattern.permute.xlu0 2
      %2977 = vperm.xlu0 %2976, %v1385
      %v2978 = vpop.permute.xlu0 %2977
      %2980 = vset.pattern.permute.xlu0 2
      %2981 = vperm.xlu0 %2980, %v1390
      %v2982 = vpop.permute.xlu0 %2981
      %2984 = vset.pattern.permute.xlu0 2
      %2985 = vperm.xlu0 %2984, %v1395
      %v2986 = vpop.permute.xlu0 %2985
      %2988 = vset.pattern.permute.xlu0 2
      %2989 = vperm.xlu0 %2988, %v1400
      %v2990 = vpop.permute.xlu0 %2989
      %2992 = vset.pattern.permute.xlu0 2
      %2993 = vperm.xlu0 %2992, %v1405
      %v2994 = vpop.permute.xlu0 %2993
      %v2996 = vlaneseq
      %v2997 = vshrl.u32 %v2996, 7
      %v2998 = vsub.s32 2, %v2997
      %v2999 = vrot.slane %v1574, %v2998
      %v3000 = vlaneseq
      %v3001 = vshrl.u32 %v3000, 7
      %v3002 = vsub.s32 2, %v3001
      %v3003 = vrot.slane %v1576, %v3002
      %v3004 = vadd.f32 %v2934, %v2999
      %v3005 = vadd.f32 %v2934, %v3003
      %v3006 = vadd.f32 %v2938, %v2999
      %v3007 = vadd.f32 %v2938, %v3003
      %v3008 = vadd.f32 %v2942, %v2999
      %v3009 = vadd.f32 %v2942, %v3003
      %v3010 = vadd.f32 %v2946, %v2999
      %v3011 = vadd.f32 %v2946, %v3003
      %v3012 = vadd.f32 %v2950, %v2999
      %v3013 = vadd.f32 %v2950, %v3003
      %v3014 = vadd.f32 %v2954, %v2999
      %v3015 = vadd.f32 %v2954, %v3003
      %v3016 = vadd.f32 %v2958, %v2999
      %v3017 = vadd.f32 %v2958, %v3003
      %v3018 = vadd.f32 %v2962, %v2999
      %v3019 = vadd.f32 %v2962, %v3003
      %v3020 = vadd.f32 %v2966, %v2999
      %v3021 = vadd.f32 %v2966, %v3003
      %v3022 = vadd.f32 %v2970, %v2999
      %v3023 = vadd.f32 %v2970, %v3003
      %v3024 = vadd.f32 %v2974, %v2999
      %v3025 = vadd.f32 %v2974, %v3003
      %v3026 = vadd.f32 %v2978, %v2999
      %v3027 = vadd.f32 %v2978, %v3003
      %v3028 = vadd.f32 %v2982, %v2999
      %v3029 = vadd.f32 %v2982, %v3003
      %v3030 = vadd.f32 %v2986, %v2999
      %v3031 = vadd.f32 %v2986, %v3003
      %v3032 = vadd.f32 %v2990, %v2999
      %v3033 = vadd.f32 %v2990, %v3003
      %v3034 = vadd.f32 %v2994, %v2999
      %v3035 = vadd.f32 %v2994, %v3003
      %v3036 = vmul.f32 %v3004, 0.2
      %v3037 = vmul.f32 %v3005, 0.2
      %v3038 = vmul.f32 %v3006, 0.2
      %v3039 = vmul.f32 %v3007, 0.2
      %v3040 = vmul.f32 %v3008, 0.2
      %v3041 = vmul.f32 %v3009, 0.2
      %v3042 = vmul.f32 %v3010, 0.2
      %v3043 = vmul.f32 %v3011, 0.2
      %v3044 = vmul.f32 %v3012, 0.2
      %v3045 = vmul.f32 %v3013, 0.2
      %v3046 = vmul.f32 %v3014, 0.2
      %v3047 = vmul.f32 %v3015, 0.2
      %v3048 = vmul.f32 %v3016, 0.2
      %v3049 = vmul.f32 %v3017, 0.2
      %v3050 = vmul.f32 %v3018, 0.2
      %v3051 = vmul.f32 %v3019, 0.2
      %v3052 = vmul.f32 %v3020, 0.2
      %v3053 = vmul.f32 %v3021, 0.2
      %v3054 = vmul.f32 %v3022, 0.2
      %v3055 = vmul.f32 %v3023, 0.2
      %v3056 = vmul.f32 %v3024, 0.2
      %v3057 = vmul.f32 %v3025, 0.2
      %v3058 = vmul.f32 %v3026, 0.2
      %v3059 = vmul.f32 %v3027, 0.2
      %v3060 = vmul.f32 %v3028, 0.2
      %v3061 = vmul.f32 %v3029, 0.2
      %v3062 = vmul.f32 %v3030, 0.2
      %v3063 = vmul.f32 %v3031, 0.2
      %v3064 = vmul.f32 %v3032, 0.2
      %v3065 = vmul.f32 %v3033, 0.2
      %v3066 = vmul.f32 %v3034, 0.2
      %v3067 = vmul.f32 %v3035, 0.2
      %v3068 = vmax.f32 %v3004, %v3036
      %v3069 = vmax.f32 %v3005, %v3037
      %v3070 = vmax.f32 %v3006, %v3038
      %v3071 = vmax.f32 %v3007, %v3039
      %v3072 = vmax.f32 %v3008, %v3040
      %v3073 = vmax.f32 %v3009, %v3041
      %v3074 = vmax.f32 %v3010, %v3042
      %v3075 = vmax.f32 %v3011, %v3043
      %v3076 = vmax.f32 %v3012, %v3044
      %v3077 = vmax.f32 %v3013, %v3045
      %v3078 = vmax.f32 %v3014, %v3046
      %v3079 = vmax.f32 %v3015, %v3047
      %v3080 = vmax.f32 %v3016, %v3048
      %v3081 = vmax.f32 %v3017, %v3049
      %v3082 = vmax.f32 %v3018, %v3050
      %v3083 = vmax.f32 %v3019, %v3051
      %v3084 = vmax.f32 %v3020, %v3052
      %v3085 = vmax.f32 %v3021, %v3053
      %v3086 = vmax.f32 %v3022, %v3054
      %v3087 = vmax.f32 %v3023, %v3055
      %v3088 = vmax.f32 %v3024, %v3056
      %v3089 = vmax.f32 %v3025, %v3057
      %v3090 = vmax.f32 %v3026, %v3058
      %v3091 = vmax.f32 %v3027, %v3059
      %v3092 = vmax.f32 %v3028, %v3060
      %v3093 = vmax.f32 %v3029, %v3061
      %v3094 = vmax.f32 %v3030, %v3062
      %v3095 = vmax.f32 %v3031, %v3063
      %v3096 = vmax.f32 %v3032, %v3064
      %v3097 = vmax.f32 %v3033, %v3065
      %v3098 = vmax.f32 %v3034, %v3066
      %v3099 = vmax.f32 %v3035, %v3067
      %v3100 = vmax.f32 %v3068, %v3069
      %3101 = vmax.xlane.f32.xlu0 %v3100
      %v3102 = vpop.xlane.xlu0 %3101
      %v3103 = vmax.f32 %v3070, %v3071
      %3104 = vmax.xlane.f32.xlu0 %v3103
      %v3105 = vpop.xlane.xlu0 %3104
      %v3106 = vmax.f32 %v3072, %v3073
      %3107 = vmax.xlane.f32.xlu0 %v3106
      %v3108 = vpop.xlane.xlu0 %3107
      %v3109 = vmax.f32 %v3074, %v3075
      %3110 = vmax.xlane.f32.xlu0 %v3109
      %v3111 = vpop.xlane.xlu0 %3110
      %v3112 = vmax.f32 %v3076, %v3077
      %3113 = vmax.xlane.f32.xlu0 %v3112
      %v3114 = vpop.xlane.xlu0 %3113
      %v3115 = vmax.f32 %v3078, %v3079
      %3116 = vmax.xlane.f32.xlu0 %v3115
      %v3117 = vpop.xlane.xlu0 %3116
      %v3118 = vmax.f32 %v3080, %v3081
      %3119 = vmax.xlane.f32.xlu0 %v3118
      %v3120 = vpop.xlane.xlu0 %3119
      %v3121 = vmax.f32 %v3082, %v3083
      %3122 = vmax.xlane.f32.xlu0 %v3121
      %v3123 = vpop.xlane.xlu0 %3122
      %v3124 = vmax.f32 %v3084, %v3085
      %3125 = vmax.xlane.f32.xlu0 %v3124
      %v3126 = vpop.xlane.xlu0 %3125
      %v3127 = vmax.f32 %v3086, %v3087
      %3128 = vmax.xlane.f32.xlu0 %v3127
      %v3129 = vpop.xlane.xlu0 %3128
      %v3130 = vmax.f32 %v3088, %v3089
      %3131 = vmax.xlane.f32.xlu0 %v3130
      %v3132 = vpop.xlane.xlu0 %3131
      %v3133 = vmax.f32 %v3090, %v3091
      %3134 = vmax.xlane.f32.xlu0 %v3133
      %v3135 = vpop.xlane.xlu0 %3134
      %v3136 = vmax.f32 %v3092, %v3093
      %3137 = vmax.xlane.f32.xlu0 %v3136
      %v3138 = vpop.xlane.xlu0 %3137
      %v3139 = vmax.f32 %v3094, %v3095
      %3140 = vmax.xlane.f32.xlu0 %v3139
      %v3141 = vpop.xlane.xlu0 %3140
      %v3142 = vmax.f32 %v3096, %v3097
      %3143 = vmax.xlane.f32.xlu0 %v3142
      %v3144 = vpop.xlane.xlu0 %3143
      %v3145 = vmax.f32 %v3098, %v3099
      %3146 = vmax.xlane.f32.xlu0 %v3145
      %v3147 = vpop.xlane.xlu0 %3146
      %v3148 = vsub.f32 %v3068, %v3102
      %v3149 = vsub.f32 %v3069, %v3102
      %v3150 = vsub.f32 %v3070, %v3105
      %v3151 = vsub.f32 %v3071, %v3105
      %v3152 = vsub.f32 %v3072, %v3108
      %v3153 = vsub.f32 %v3073, %v3108
      %v3154 = vsub.f32 %v3074, %v3111
      %v3155 = vsub.f32 %v3075, %v3111
      %v3156 = vsub.f32 %v3076, %v3114
      %v3157 = vsub.f32 %v3077, %v3114
      %v3158 = vsub.f32 %v3078, %v3117
      %v3159 = vsub.f32 %v3079, %v3117
      %v3160 = vsub.f32 %v3080, %v3120
      %v3161 = vsub.f32 %v3081, %v3120
      %v3162 = vsub.f32 %v3082, %v3123
      %v3163 = vsub.f32 %v3083, %v3123
      %v3164 = vsub.f32 %v3084, %v3126
      %v3165 = vsub.f32 %v3085, %v3126
      %v3166 = vsub.f32 %v3086, %v3129
      %v3167 = vsub.f32 %v3087, %v3129
      %v3168 = vsub.f32 %v3088, %v3132
      %v3169 = vsub.f32 %v3089, %v3132
      %v3170 = vsub.f32 %v3090, %v3135
      %v3171 = vsub.f32 %v3091, %v3135
      %v3172 = vsub.f32 %v3092, %v3138
      %v3173 = vsub.f32 %v3093, %v3138
      %v3174 = vsub.f32 %v3094, %v3141
      %v3175 = vsub.f32 %v3095, %v3141
      %v3176 = vsub.f32 %v3096, %v3144
      %v3177 = vsub.f32 %v3097, %v3144
      %v3178 = vsub.f32 %v3098, %v3147
      %v3179 = vsub.f32 %v3099, %v3147
      %v3180 = vmul.f32 %v3148, 1.442695
      %v3181 = vpow.pop %v3180
      %v3182 = vmul.f32 %v3149, 1.442695
      %v3183 = vpow.pop %v3182
      %v3184 = vmul.f32 %v3150, 1.442695
      %v3185 = vpow.pop %v3184
      %v3186 = vmul.f32 %v3151, 1.442695
      %v3187 = vpow.pop %v3186
      %v3188 = vmul.f32 %v3152, 1.442695
      %v3189 = vpow.pop %v3188
      %v3190 = vmul.f32 %v3153, 1.442695
      %v3191 = vpow.pop %v3190
      %v3192 = vmul.f32 %v3154, 1.442695
      %v3193 = vpow.pop %v3192
      %v3194 = vmul.f32 %v3155, 1.442695
      %v3195 = vpow.pop %v3194
      %v3196 = vmul.f32 %v3156, 1.442695
      %v3197 = vpow.pop %v3196
      %v3198 = vmul.f32 %v3157, 1.442695
      %v3199 = vpow.pop %v3198
      %v3200 = vmul.f32 %v3158, 1.442695
      %v3201 = vpow.pop %v3200
      %v3202 = vmul.f32 %v3159, 1.442695
      %v3203 = vpow.pop %v3202
      %v3204 = vmul.f32 %v3160, 1.442695
      %v3205 = vpow.pop %v3204
      %v3206 = vmul.f32 %v3161, 1.442695
      %v3207 = vpow.pop %v3206
      %v3208 = vmul.f32 %v3162, 1.442695
      %v3209 = vpow.pop %v3208
      %v3210 = vmul.f32 %v3163, 1.442695
      %v3211 = vpow.pop %v3210
      %v3212 = vmul.f32 %v3164, 1.442695
      %v3213 = vpow.pop %v3212
      %v3214 = vmul.f32 %v3165, 1.442695
      %v3215 = vpow.pop %v3214
      %v3216 = vmul.f32 %v3166, 1.442695
      %v3217 = vpow.pop %v3216
      %v3218 = vmul.f32 %v3167, 1.442695
      %v3219 = vpow.pop %v3218
      %v3220 = vmul.f32 %v3168, 1.442695
      %v3221 = vpow.pop %v3220
      %v3222 = vmul.f32 %v3169, 1.442695
      %v3223 = vpow.pop %v3222
      %v3224 = vmul.f32 %v3170, 1.442695
      %v3225 = vpow.pop %v3224
      %v3226 = vmul.f32 %v3171, 1.442695
      %v3227 = vpow.pop %v3226
      %v3228 = vmul.f32 %v3172, 1.442695
      %v3229 = vpow.pop %v3228
      %v3230 = vmul.f32 %v3173, 1.442695
      %v3231 = vpow.pop %v3230
      %v3232 = vmul.f32 %v3174, 1.442695
      %v3233 = vpow.pop %v3232
      %v3234 = vmul.f32 %v3175, 1.442695
      %v3235 = vpow.pop %v3234
      %v3236 = vmul.f32 %v3176, 1.442695
      %v3237 = vpow.pop %v3236
      %v3238 = vmul.f32 %v3177, 1.442695
      %v3239 = vpow.pop %v3238
      %v3240 = vmul.f32 %v3178, 1.442695
      %v3241 = vpow.pop %v3240
      %v3242 = vmul.f32 %v3179, 1.442695
      %v3243 = vpow.pop %v3242
      %v3244 = vmul.f32 %v3181, %v1618
      %v3245 = vmul.f32 %v3183, %v1619
      %v3246 = vmul.f32 %v3185, %v1620
      %v3247 = vmul.f32 %v3187, %v1621
      %v3248 = vmul.f32 %v3189, %v1622
      %v3249 = vmul.f32 %v3191, %v1623
      %v3250 = vmul.f32 %v3193, %v1624
      %v3251 = vmul.f32 %v3195, %v1625
      %v3252 = vmul.f32 %v3197, %v1626
      %v3253 = vmul.f32 %v3199, %v1627
      %v3254 = vmul.f32 %v3201, %v1628
      %v3255 = vmul.f32 %v3203, %v1629
      %v3256 = vmul.f32 %v3205, %v1630
      %v3257 = vmul.f32 %v3207, %v1631
      %v3258 = vmul.f32 %v3209, %v1632
      %v3259 = vmul.f32 %v3211, %v1633
      %v3260 = vmul.f32 %v3213, %v1634
      %v3261 = vmul.f32 %v3215, %v1635
      %v3262 = vmul.f32 %v3217, %v1636
      %v3263 = vmul.f32 %v3219, %v1637
      %v3264 = vmul.f32 %v3221, %v1638
      %v3265 = vmul.f32 %v3223, %v1639
      %v3266 = vmul.f32 %v3225, %v1640
      %v3267 = vmul.f32 %v3227, %v1641
      %v3268 = vmul.f32 %v3229, %v1642
      %v3269 = vmul.f32 %v3231, %v1643
      %v3270 = vmul.f32 %v3233, %v1644
      %v3271 = vmul.f32 %v3235, %v1645
      %v3272 = vmul.f32 %v3237, %v1646
      %v3273 = vmul.f32 %v3239, %v1647
      %v3274 = vmul.f32 %v3241, %v1648
      %v3275 = vmul.f32 %v3243, %v1649
      %v3276 = vadd.f32 %v3244, %v3245
      %3277 = vadd.xlane.f32.xlu0 %v3276
      %v3278 = vpop.xlane.xlu0 %3277
      %v3279 = vadd.f32 %v3246, %v3247
      %3280 = vadd.xlane.f32.xlu0 %v3279
      %v3281 = vpop.xlane.xlu0 %3280
      %v3282 = vadd.f32 %v3248, %v3249
      %3283 = vadd.xlane.f32.xlu0 %v3282
      %v3284 = vpop.xlane.xlu0 %3283
      %v3285 = vadd.f32 %v3250, %v3251
      %3286 = vadd.xlane.f32.xlu0 %v3285
      %v3287 = vpop.xlane.xlu0 %3286
      %v3288 = vadd.f32 %v3252, %v3253
      %3289 = vadd.xlane.f32.xlu0 %v3288
      %v3290 = vpop.xlane.xlu0 %3289
      %v3291 = vadd.f32 %v3254, %v3255
      %3292 = vadd.xlane.f32.xlu0 %v3291
      %v3293 = vpop.xlane.xlu0 %3292
      %v3294 = vadd.f32 %v3256, %v3257
      %3295 = vadd.xlane.f32.xlu0 %v3294
      %v3296 = vpop.xlane.xlu0 %3295
      %v3297 = vadd.f32 %v3258, %v3259
      %3298 = vadd.xlane.f32.xlu0 %v3297
      %v3299 = vpop.xlane.xlu0 %3298
      %v3300 = vadd.f32 %v3260, %v3261
      %3301 = vadd.xlane.f32.xlu0 %v3300
      %v3302 = vpop.xlane.xlu0 %3301
      %v3303 = vadd.f32 %v3262, %v3263
      %3304 = vadd.xlane.f32.xlu0 %v3303
      %v3305 = vpop.xlane.xlu0 %3304
      %v3306 = vadd.f32 %v3264, %v3265
      %3307 = vadd.xlane.f32.xlu0 %v3306
      %v3308 = vpop.xlane.xlu0 %3307
      %v3309 = vadd.f32 %v3266, %v3267
      %3310 = vadd.xlane.f32.xlu0 %v3309
      %v3311 = vpop.xlane.xlu0 %3310
      %v3312 = vadd.f32 %v3268, %v3269
      %3313 = vadd.xlane.f32.xlu0 %v3312
      %v3314 = vpop.xlane.xlu0 %3313
      %v3315 = vadd.f32 %v3270, %v3271
      %3316 = vadd.xlane.f32.xlu0 %v3315
      %v3317 = vpop.xlane.xlu0 %3316
      %v3318 = vadd.f32 %v3272, %v3273
      %3319 = vadd.xlane.f32.xlu0 %v3318
      %v3320 = vpop.xlane.xlu0 %3319
      %v3321 = vadd.f32 %v3274, %v3275
      %3322 = vadd.xlane.f32.xlu0 %v3321
      %v3323 = vpop.xlane.xlu0 %3322
      %v3324 = vmax.f32 %v3278, 1e-30
      %v3325 = vmax.f32 %v3281, 1e-30
      %v3326 = vmax.f32 %v3284, 1e-30
      %v3327 = vmax.f32 %v3287, 1e-30
      %v3328 = vmax.f32 %v3290, 1e-30
      %v3329 = vmax.f32 %v3293, 1e-30
      %v3330 = vmax.f32 %v3296, 1e-30
      %v3331 = vmax.f32 %v3299, 1e-30
      %v3332 = vmax.f32 %v3302, 1e-30
      %v3333 = vmax.f32 %v3305, 1e-30
      %v3334 = vmax.f32 %v3308, 1e-30
      %v3335 = vmax.f32 %v3311, 1e-30
      %v3336 = vmax.f32 %v3314, 1e-30
      %v3337 = vmax.f32 %v3317, 1e-30
      %v3338 = vmax.f32 %v3320, 1e-30
      %v3339 = vmax.f32 %v3323, 1e-30
      %v3340 = vrcp.pop %v3324
      %v3341 = vrcp.pop %v3325
      %v3342 = vrcp.pop %v3326
      %v3343 = vrcp.pop %v3327
      %v3344 = vrcp.pop %v3328
      %v3345 = vrcp.pop %v3329
      %v3346 = vrcp.pop %v3330
      %v3347 = vrcp.pop %v3331
      %v3348 = vrcp.pop %v3332
      %v3349 = vrcp.pop %v3333
      %v3350 = vrcp.pop %v3334
      %v3351 = vrcp.pop %v3335
      %v3352 = vrcp.pop %v3336
      %v3353 = vrcp.pop %v3337
      %v3354 = vrcp.pop %v3338
      %v3355 = vrcp.pop %v3339
      %3356 = vrot.lane.b32.xlu0 %v659, 96
      %v3357 = vpop.permute.xlu0 %3356
      %3358 = vrot.lane.b32.xlu0 %v662, 96
      %v3359 = vpop.permute.xlu0 %3358
      %3360 = vrot.lane.b32.xlu0 %v667, 96
      %v3361 = vpop.permute.xlu0 %3360
      %3362 = vrot.lane.b32.xlu0 %v670, 96
      %v3363 = vpop.permute.xlu0 %3362
      %3364 = vrot.lane.b32.xlu0 %v675, 96
      %v3365 = vpop.permute.xlu0 %3364
      %3366 = vrot.lane.b32.xlu0 %v678, 96
      %v3367 = vpop.permute.xlu0 %3366
      %3368 = vrot.lane.b32.xlu0 %v683, 96
      %v3369 = vpop.permute.xlu0 %3368
      %3370 = vrot.lane.b32.xlu0 %v686, 96
      %v3371 = vpop.permute.xlu0 %3370
      %3372 = vrot.lane.b32.xlu0 %v691, 96
      %v3373 = vpop.permute.xlu0 %3372
      %3374 = vrot.lane.b32.xlu0 %v694, 96
      %v3375 = vpop.permute.xlu0 %3374
      %3376 = vrot.lane.b32.xlu0 %v699, 96
      %v3377 = vpop.permute.xlu0 %3376
      %3378 = vrot.lane.b32.xlu0 %v702, 96
      %v3379 = vpop.permute.xlu0 %3378
      %3380 = vrot.lane.b32.xlu0 %v707, 96
      %v3381 = vpop.permute.xlu0 %3380
      %3382 = vrot.lane.b32.xlu0 %v710, 96
      %v3383 = vpop.permute.xlu0 %3382
      %3384 = vrot.lane.b32.xlu0 %v715, 96
      %v3385 = vpop.permute.xlu0 %3384
      %3386 = vrot.lane.b32.xlu0 %v718, 96
      %v3387 = vpop.permute.xlu0 %3386
      %3388 = vrot.lane.b32.xlu0 %v723, 96
      %v3389 = vpop.permute.xlu0 %3388
      %3390 = vrot.lane.b32.xlu0 %v726, 96
      %v3391 = vpop.permute.xlu0 %3390
      %3392 = vrot.lane.b32.xlu0 %v731, 96
      %v3393 = vpop.permute.xlu0 %3392
      %3394 = vrot.lane.b32.xlu0 %v734, 96
      %v3395 = vpop.permute.xlu0 %3394
      %3396 = vrot.lane.b32.xlu0 %v739, 96
      %v3397 = vpop.permute.xlu0 %3396
      %3398 = vrot.lane.b32.xlu0 %v742, 96
      %v3399 = vpop.permute.xlu0 %3398
      %3400 = vrot.lane.b32.xlu0 %v747, 96
      %v3401 = vpop.permute.xlu0 %3400
      %3402 = vrot.lane.b32.xlu0 %v750, 96
      %v3403 = vpop.permute.xlu0 %3402
      %3404 = vrot.lane.b32.xlu0 %v755, 96
      %v3405 = vpop.permute.xlu0 %3404
      %3406 = vrot.lane.b32.xlu0 %v758, 96
      %v3407 = vpop.permute.xlu0 %3406
      %3408 = vrot.lane.b32.xlu0 %v763, 96
      %v3409 = vpop.permute.xlu0 %3408
      %3410 = vrot.lane.b32.xlu0 %v766, 96
      %v3411 = vpop.permute.xlu0 %3410
      %3412 = vrot.lane.b32.xlu0 %v771, 96
      %v3413 = vpop.permute.xlu0 %3412
      %3414 = vrot.lane.b32.xlu0 %v774, 96
      %v3415 = vpop.permute.xlu0 %3414
      %3416 = vrot.lane.b32.xlu0 %v779, 96
      %v3417 = vpop.permute.xlu0 %3416
      %3418 = vrot.lane.b32.xlu0 %v782, 96
      %v3419 = vpop.permute.xlu0 %3418
      %3452 = vmatprep.subr.mxu0 0.0
      %3453 = vmatpush1.msra.mxu0 %v3387
      %3454 = vmatprep.subr.mxu0 0.0
      %3455 = vmatpush1.msra.mxu0 %v3385
      %3456 = vmatprep.subr.mxu0 0.0
      %3457 = vmatpush1.msra.mxu0 %v3383
      %3458 = vmatprep.subr.mxu0 0.0
      %3459 = vmatpush1.msra.mxu0 %v3381
      %3460 = vmatprep.subr.mxu0 0.0
      %3461 = vmatpush1.msra.mxu0 %v3379
      %3462 = vmatprep.subr.mxu0 0.0
      %3463 = vmatpush1.msra.mxu0 %v3377
      %3464 = vmatprep.subr.mxu0 0.0
      %3465 = vmatpush1.msra.mxu0 %v3375
      %3466 = vmatprep.subr.mxu0 0.0
      %3467 = vmatpush1.msra.mxu0 %v3373
      %3468 = vmatprep.subr.mxu0 0.0
      %3469 = vmatpush1.msra.mxu0 %v3371
      %3470 = vmatprep.subr.mxu0 0.0
      %3471 = vmatpush1.msra.mxu0 %v3369
      %3472 = vmatprep.subr.mxu0 0.0
      %3473 = vmatpush1.msra.mxu0 %v3367
      %3474 = vmatprep.subr.mxu0 0.0
      %3475 = vmatpush1.msra.mxu0 %v3365
      %3476 = vmatprep.subr.mxu0 0.0
      %3477 = vmatpush1.msra.mxu0 %v3363
      %3478 = vmatprep.subr.mxu0 0.0
      %3479 = vmatpush1.msra.mxu0 %v3361
      %3480 = vmatprep.subr.mxu0 0.0
      %3481 = vmatpush1.msra.mxu0 %v3359
      %3482 = vmatprep.subr.mxu0 0.0
      %3483 = vmatpush1.msra.mxu0 %v3357
      %3484 = vmatprep.subr.mxu0 0.0
      %3485 = vmatpush2.msra.mxu0 %v3419
      %3486 = vmatprep.subr.mxu0 0.0
      %3487 = vmatpush2.msra.mxu0 %v3417
      %3488 = vmatprep.subr.mxu0 0.0
      %3489 = vmatpush2.msra.mxu0 %v3415
      %3490 = vmatprep.subr.mxu0 0.0
      %3491 = vmatpush2.msra.mxu0 %v3413
      %3492 = vmatprep.subr.mxu0 0.0
      %3493 = vmatpush2.msra.mxu0 %v3411
      %3494 = vmatprep.subr.mxu0 0.0
      %3495 = vmatpush2.msra.mxu0 %v3409
      %3496 = vmatprep.subr.mxu0 0.0
      %3497 = vmatpush2.msra.mxu0 %v3407
      %3498 = vmatprep.subr.mxu0 0.0
      %3499 = vmatpush2.msra.mxu0 %v3405
      %3500 = vmatprep.subr.mxu0 0.0
      %3501 = vmatpush2.msra.mxu0 %v3403
      %3502 = vmatprep.subr.mxu0 0.0
      %3503 = vmatpush2.msra.mxu0 %v3401
      %3504 = vmatprep.subr.mxu0 0.0
      %3505 = vmatpush2.msra.mxu0 %v3399
      %3506 = vmatprep.subr.mxu0 0.0
      %3507 = vmatpush2.msra.mxu0 %v3397
      %3508 = vmatprep.subr.mxu0 0.0
      %3509 = vmatpush2.msra.mxu0 %v3395
      %3510 = vmatprep.subr.mxu0 0.0
      %3511 = vmatpush2.msra.mxu0 %v3393
      %3512 = vmatprep.subr.mxu0 0.0
      %3513 = vmatpush2.msra.mxu0 %v3391
      %3514 = vmatprep.subr.mxu0 0.0
      %3515 = vmatpush2.msra.mxu0 %v3389
      %3516 = vmatprep.mubr.f32.mxu0 %v3245
      %3517 = vmatmul.mubr.f32.gmra.mxu0 %v3244
      %v3518 = vpop.f32.mrf.mxu0
      %v3519 = vadd.f32 0.0, %v3518
      %v3520 = vpop.f32.mrf.mxu0
      %3521 = vmatprep.mubr.f32.mxu0 %v3247
      %3522 = vmatmul.mubr.f32.gmra.mxu0 %v3246
      %v3523 = vpop.f32.mrf.mxu0
      %v3524 = vadd.f32 0.0, %v3523
      %v3525 = vpop.f32.mrf.mxu0
      %3526 = vmatprep.mubr.f32.mxu0 %v3249
      %3527 = vmatmul.mubr.f32.gmra.mxu0 %v3248
      %v3528 = vpop.f32.mrf.mxu0
      %v3529 = vadd.f32 0.0, %v3528
      %v3530 = vpop.f32.mrf.mxu0
      %3531 = vmatprep.mubr.f32.mxu0 %v3251
      %3532 = vmatmul.mubr.f32.gmra.mxu0 %v3250
      %v3533 = vpop.f32.mrf.mxu0
      %v3534 = vadd.f32 0.0, %v3533
      %v3535 = vpop.f32.mrf.mxu0
      %3536 = vmatprep.mubr.f32.mxu0 %v3253
      %3537 = vmatmul.mubr.f32.gmra.mxu0 %v3252
      %v3538 = vpop.f32.mrf.mxu0
      %v3539 = vadd.f32 0.0, %v3538
      %v3540 = vpop.f32.mrf.mxu0
      %3541 = vmatprep.mubr.f32.mxu0 %v3255
      %3542 = vmatmul.mubr.f32.gmra.mxu0 %v3254
      %v3543 = vpop.f32.mrf.mxu0
      %v3544 = vadd.f32 0.0, %v3543
      %v3545 = vpop.f32.mrf.mxu0
      %3546 = vmatprep.mubr.f32.mxu0 %v3257
      %3547 = vmatmul.mubr.f32.gmra.mxu0 %v3256
      %v3548 = vpop.f32.mrf.mxu0
      %v3549 = vadd.f32 0.0, %v3548
      %v3550 = vpop.f32.mrf.mxu0
      %3551 = vmatprep.mubr.f32.mxu0 %v3259
      %3552 = vmatmul.mubr.f32.gmra.mxu0 %v3258
      %v3553 = vpop.f32.mrf.mxu0
      %v3554 = vadd.f32 0.0, %v3553
      %v3555 = vpop.f32.mrf.mxu0
      %3556 = vmatprep.mubr.f32.mxu0 %v3261
      %3557 = vmatmul.mubr.f32.gmra.mxu0 %v3260
      %v3558 = vpop.f32.mrf.mxu0
      %v3559 = vadd.f32 0.0, %v3558
      %v3560 = vpop.f32.mrf.mxu0
      %3561 = vmatprep.mubr.f32.mxu0 %v3263
      %3562 = vmatmul.mubr.f32.gmra.mxu0 %v3262
      %v3563 = vpop.f32.mrf.mxu0
      %v3564 = vadd.f32 0.0, %v3563
      %v3565 = vpop.f32.mrf.mxu0
      %3566 = vmatprep.mubr.f32.mxu0 %v3265
      %3567 = vmatmul.mubr.f32.gmra.mxu0 %v3264
      %v3568 = vpop.f32.mrf.mxu0
      %v3569 = vadd.f32 0.0, %v3568
      %v3570 = vpop.f32.mrf.mxu0
      %3571 = vmatprep.mubr.f32.mxu0 %v3267
      %3572 = vmatmul.mubr.f32.gmra.mxu0 %v3266
      %v3573 = vpop.f32.mrf.mxu0
      %v3574 = vadd.f32 0.0, %v3573
      %v3575 = vpop.f32.mrf.mxu0
      %3576 = vmatprep.mubr.f32.mxu0 %v3269
      %3577 = vmatmul.mubr.f32.gmra.mxu0 %v3268
      %v3578 = vpop.f32.mrf.mxu0
      %v3579 = vadd.f32 0.0, %v3578
      %v3580 = vpop.f32.mrf.mxu0
      %3581 = vmatprep.mubr.f32.mxu0 %v3271
      %3582 = vmatmul.mubr.f32.gmra.mxu0 %v3270
      %v3583 = vpop.f32.mrf.mxu0
      %v3584 = vadd.f32 0.0, %v3583
      %v3585 = vpop.f32.mrf.mxu0
      %3586 = vmatprep.mubr.f32.mxu0 %v3273
      %3587 = vmatmul.mubr.f32.gmra.mxu0 %v3272
      %v3588 = vpop.f32.mrf.mxu0
      %v3589 = vadd.f32 0.0, %v3588
      %v3590 = vpop.f32.mrf.mxu0
      %3591 = vmatprep.mubr.f32.mxu0 %v3275
      %3592 = vmatmul.mubr.f32.gmra.mxu0 %v3274
      %v3593 = vpop.f32.mrf.mxu0
      %v3594 = vadd.f32 0.0, %v3593
      %v3595 = vpop.f32.mrf.mxu0
      %3596 = vdwg.mxu0
      %v3597 = vmul.f32 %v3519, %v3340
      %v3598 = vmul.f32 %v3524, %v3341
      %v3599 = vmul.f32 %v3529, %v3342
      %v3600 = vmul.f32 %v3534, %v3343
      %v3601 = vmul.f32 %v3539, %v3344
      %v3602 = vmul.f32 %v3544, %v3345
      %v3603 = vmul.f32 %v3549, %v3346
      %v3604 = vmul.f32 %v3554, %v3347
      %v3605 = vmul.f32 %v3559, %v3348
      %v3606 = vmul.f32 %v3564, %v3349
      %v3607 = vmul.f32 %v3569, %v3350
      %v3608 = vmul.f32 %v3574, %v3351
      %v3609 = vmul.f32 %v3579, %v3352
      %v3610 = vmul.f32 %v3584, %v3353
      %v3611 = vmul.f32 %v3589, %v3354
      %v3612 = vmul.f32 %v3594, %v3355
      %3629 = vrot.lane.b32.xlu0 %v2916, 16
      %v3630 = vpop.permute.xlu0 %3629
      %3631 = vrot.lane.b32.xlu0 %v2917, 16
      %v3632 = vpop.permute.xlu0 %3631
      %3633 = vrot.lane.b32.xlu0 %v2918, 16
      %v3634 = vpop.permute.xlu0 %3633
      %3635 = vrot.lane.b32.xlu0 %v2919, 16
      %v3636 = vpop.permute.xlu0 %3635
      %3637 = vrot.lane.b32.xlu0 %v2920, 16
      %v3638 = vpop.permute.xlu0 %3637
      %3639 = vrot.lane.b32.xlu0 %v2921, 16
      %v3640 = vpop.permute.xlu0 %3639
      %3641 = vrot.lane.b32.xlu0 %v2922, 16
      %v3642 = vpop.permute.xlu0 %3641
      %3643 = vrot.lane.b32.xlu0 %v2923, 16
      %v3644 = vpop.permute.xlu0 %3643
      %3645 = vrot.lane.b32.xlu0 %v2924, 16
      %v3646 = vpop.permute.xlu0 %3645
      %3647 = vrot.lane.b32.xlu0 %v2925, 16
      %v3648 = vpop.permute.xlu0 %3647
      %3649 = vrot.lane.b32.xlu0 %v2926, 16
      %v3650 = vpop.permute.xlu0 %3649
      %3651 = vrot.lane.b32.xlu0 %v2927, 16
      %v3652 = vpop.permute.xlu0 %3651
      %3653 = vrot.lane.b32.xlu0 %v2928, 16
      %v3654 = vpop.permute.xlu0 %3653
      %3655 = vrot.lane.b32.xlu0 %v2929, 16
      %v3656 = vpop.permute.xlu0 %3655
      %3657 = vrot.lane.b32.xlu0 %v2930, 16
      %v3658 = vpop.permute.xlu0 %3657
      %3659 = vrot.lane.b32.xlu0 %v2931, 16
      %v3660 = vpop.permute.xlu0 %3659
      %3693 = vrot.lane.b32.xlu0 %v3597, 32
      %v3694 = vpop.permute.xlu0 %3693
      %3695 = vrot.lane.b32.xlu0 %v3598, 32
      %v3696 = vpop.permute.xlu0 %3695
      %3697 = vrot.lane.b32.xlu0 %v3599, 32
      %v3698 = vpop.permute.xlu0 %3697
      %3699 = vrot.lane.b32.xlu0 %v3600, 32
      %v3700 = vpop.permute.xlu0 %3699
      %3701 = vrot.lane.b32.xlu0 %v3601, 32
      %v3702 = vpop.permute.xlu0 %3701
      %3703 = vrot.lane.b32.xlu0 %v3602, 32
      %v3704 = vpop.permute.xlu0 %3703
      %3705 = vrot.lane.b32.xlu0 %v3603, 32
      %v3706 = vpop.permute.xlu0 %3705
      %3707 = vrot.lane.b32.xlu0 %v3604, 32
      %v3708 = vpop.permute.xlu0 %3707
      %3709 = vrot.lane.b32.xlu0 %v3605, 32
      %v3710 = vpop.permute.xlu0 %3709
      %3711 = vrot.lane.b32.xlu0 %v3606, 32
      %v3712 = vpop.permute.xlu0 %3711
      %3713 = vrot.lane.b32.xlu0 %v3607, 32
      %v3714 = vpop.permute.xlu0 %3713
      %3715 = vrot.lane.b32.xlu0 %v3608, 32
      %v3716 = vpop.permute.xlu0 %3715
      %3717 = vrot.lane.b32.xlu0 %v3609, 32
      %v3718 = vpop.permute.xlu0 %3717
      %3719 = vrot.lane.b32.xlu0 %v3610, 32
      %v3720 = vpop.permute.xlu0 %3719
      %3721 = vrot.lane.b32.xlu0 %v3611, 32
      %v3722 = vpop.permute.xlu0 %3721
      %3723 = vrot.lane.b32.xlu0 %v3612, 32
      %v3724 = vpop.permute.xlu0 %3723
      %vm3741 = vcmask 130048
      %v3742 = vsel %vm3741, %v2235, %v3630
      %v3743 = vsel %vm3741, %v2236, %v3632
      %v3744 = vsel %vm3741, %v2237, %v3634
      %v3745 = vsel %vm3741, %v2238, %v3636
      %v3746 = vsel %vm3741, %v2239, %v3638
      %v3747 = vsel %vm3741, %v2240, %v3640
      %v3748 = vsel %vm3741, %v2241, %v3642
      %v3749 = vsel %vm3741, %v2242, %v3644
      %v3750 = vsel %vm3741, %v2243, %v3646
      %v3751 = vsel %vm3741, %v2244, %v3648
      %v3752 = vsel %vm3741, %v2245, %v3650
      %v3753 = vsel %vm3741, %v2246, %v3652
      %v3754 = vsel %vm3741, %v2247, %v3654
      %v3755 = vsel %vm3741, %v2248, %v3656
      %v3756 = vsel %vm3741, %v2249, %v3658
      %v3757 = vsel %vm3741, %v2250, %v3660
      %v3758 = vsel %vm575, %v3742, %v3694
      %v3759 = vsel %vm575, %v3743, %v3696
      %v3760 = vsel %vm575, %v3744, %v3698
      %v3761 = vsel %vm575, %v3745, %v3700
      %v3762 = vsel %vm575, %v3746, %v3702
      %v3763 = vsel %vm575, %v3747, %v3704
      %v3764 = vsel %vm575, %v3748, %v3706
      %v3765 = vsel %vm575, %v3749, %v3708
      %v3766 = vsel %vm575, %v3750, %v3710
      %v3767 = vsel %vm575, %v3751, %v3712
      %v3768 = vsel %vm575, %v3752, %v3714
      %v3769 = vsel %vm575, %v3753, %v3716
      %v3770 = vsel %vm575, %v3754, %v3718
      %v3771 = vsel %vm575, %v3755, %v3720
      %v3772 = vsel %vm575, %v3756, %v3722
      %v3773 = vsel %vm575, %v3757, %v3724
      %v3774 = vmul.f32 %v1194, %v3758
      %v3775 = vmul.f32 %v1195, %v3759
      %v3776 = vmul.f32 %v1196, %v3760
      %v3777 = vmul.f32 %v1197, %v3761
      %v3778 = vmul.f32 %v1198, %v3762
      %v3779 = vmul.f32 %v1199, %v3763
      %v3780 = vmul.f32 %v1200, %v3764
      %v3781 = vmul.f32 %v1201, %v3765
      %v3782 = vmul.f32 %v1202, %v3766
      %v3783 = vmul.f32 %v1203, %v3767
      %v3784 = vmul.f32 %v1204, %v3768
      %v3785 = vmul.f32 %v1205, %v3769
      %v3786 = vmul.f32 %v1206, %v3770
      %v3787 = vmul.f32 %v1207, %v3771
      %v3788 = vmul.f32 %v1208, %v3772
      %v3789 = vmul.f32 %v1209, %v3773
      %3806 = vrot.lane.b32.xlu0 %v1194, 80
      %v3807 = vpop.permute.xlu0 %3806
      %3808 = vrot.lane.b32.xlu0 %v1195, 80
      %v3809 = vpop.permute.xlu0 %3808
      %3810 = vrot.lane.b32.xlu0 %v1196, 80
      %v3811 = vpop.permute.xlu0 %3810
      %3812 = vrot.lane.b32.xlu0 %v1197, 80
      %v3813 = vpop.permute.xlu0 %3812
      %3814 = vrot.lane.b32.xlu0 %v1198, 80
      %v3815 = vpop.permute.xlu0 %3814
      %3816 = vrot.lane.b32.xlu0 %v1199, 80
      %v3817 = vpop.permute.xlu0 %3816
      %3818 = vrot.lane.b32.xlu0 %v1200, 80
      %v3819 = vpop.permute.xlu0 %3818
      %3820 = vrot.lane.b32.xlu0 %v1201, 80
      %v3821 = vpop.permute.xlu0 %3820
      %3822 = vrot.lane.b32.xlu0 %v1202, 80
      %v3823 = vpop.permute.xlu0 %3822
      %3824 = vrot.lane.b32.xlu0 %v1203, 80
      %v3825 = vpop.permute.xlu0 %3824
      %3826 = vrot.lane.b32.xlu0 %v1204, 80
      %v3827 = vpop.permute.xlu0 %3826
      %3828 = vrot.lane.b32.xlu0 %v1205, 80
      %v3829 = vpop.permute.xlu0 %3828
      %3830 = vrot.lane.b32.xlu0 %v1206, 80
      %v3831 = vpop.permute.xlu0 %3830
      %3832 = vrot.lane.b32.xlu0 %v1207, 80
      %v3833 = vpop.permute.xlu0 %3832
      %3834 = vrot.lane.b32.xlu0 %v1208, 80
      %v3835 = vpop.permute.xlu0 %3834
      %3836 = vrot.lane.b32.xlu0 %v1209, 80
      %v3837 = vpop.permute.xlu0 %3836
      %v3854 = vadd.f32 %v3774, %v3807
      %v3855 = vadd.f32 %v3775, %v3809
      %v3856 = vadd.f32 %v3776, %v3811
      %v3857 = vadd.f32 %v3777, %v3813
      %v3858 = vadd.f32 %v3778, %v3815
      %v3859 = vadd.f32 %v3779, %v3817
      %v3860 = vadd.f32 %v3780, %v3819
      %v3861 = vadd.f32 %v3781, %v3821
      %v3862 = vadd.f32 %v3782, %v3823
      %v3863 = vadd.f32 %v3783, %v3825
      %v3864 = vadd.f32 %v3784, %v3827
      %v3865 = vadd.f32 %v3785, %v3829
      %v3866 = vadd.f32 %v3786, %v3831
      %v3867 = vadd.f32 %v3787, %v3833
      %v3868 = vadd.f32 %v3788, %v3835
      %v3869 = vadd.f32 %v3789, %v3837
      %v3870 = vld [vmem:[%s7] sm:$0xff]
      %v3871 = vld [vmem:[%s7 + $0x8] sm:$0xff]
      %v3872 = vld [vmem:[%s7 + $0x10] sm:$0xff]
      %v3873 = vld [vmem:[%s7 + $0x18] sm:$0xff]
      %v3874 = vld [vmem:[%s7 + $0x20] sm:$0xff]
      %v3875 = vld [vmem:[%s7 + $0x28] sm:$0xff]
      %v3877 = vsel %vm1211, %v3854, 0
      %v3880 = vsel %vm1211, %v3855, 0
      %v3883 = vsel %vm1211, %v3856, 0
      %v3886 = vsel %vm1211, %v3857, 0
      %v3889 = vsel %vm1211, %v3858, 0
      %v3892 = vsel %vm1211, %v3859, 0
      %v3895 = vsel %vm1211, %v3860, 0
      %v3898 = vsel %vm1211, %v3861, 0
      %v3901 = vsel %vm1211, %v3862, 0
      %v3904 = vsel %vm1211, %v3863, 0
      %v3907 = vsel %vm1211, %v3864, 0
      %v3910 = vsel %vm1211, %v3865, 0
      %v3913 = vsel %vm1211, %v3866, 0
      %v3916 = vsel %vm1211, %v3867, 0
      %v3919 = vsel %vm1211, %v3868, 0
      %v3922 = vsel %vm1211, %v3869, 0
      %3924 = vmatprep.subr.mxu0 0.0
      %3925 = vmatpush1.msra.mxu0 0.0
      %3926 = vmatprep.subr.mxu0 0.0
      %3927 = vmatpush1.msra.mxu0 0.0
      %3928 = vmatprep.subr.mxu0 0.0
      %3929 = vmatpush1.msra.mxu0 0.0
      %3930 = vmatprep.subr.mxu0 0.0
      %3931 = vmatpush1.msra.mxu0 0.0
      %3932 = vmatprep.subr.mxu0 0.0
      %3933 = vmatpush1.msra.mxu0 0.0
      %3934 = vmatprep.subr.mxu0 0.0
      %3935 = vmatpush1.msra.mxu0 0.0
      %3936 = vmatprep.subr.mxu0 0.0
      %3937 = vmatpush1.msra.mxu0 0.0
      %3938 = vmatprep.subr.mxu0 0.0
      %3939 = vmatpush1.msra.mxu0 0.0
      %3940 = vmatprep.subr.mxu0 0.0
      %3941 = vmatpush1.msra.mxu0 0.0
      %3942 = vmatprep.subr.mxu0 0.0
      %3943 = vmatpush1.msra.mxu0 0.0
      %3944 = vmatprep.subr.mxu0 0.0
      %3945 = vmatpush1.msra.mxu0 %v3875
      %3946 = vmatprep.subr.mxu0 0.0
      %3947 = vmatpush1.msra.mxu0 %v3874
      %3948 = vmatprep.subr.mxu0 0.0
      %3949 = vmatpush1.msra.mxu0 %v3873
      %3950 = vmatprep.subr.mxu0 0.0
      %3951 = vmatpush1.msra.mxu0 %v3872
      %3952 = vmatprep.subr.mxu0 0.0
      %3953 = vmatpush1.msra.mxu0 %v3871
      %3954 = vmatprep.subr.mxu0 0.0
      %3955 = vmatpush1.msra.mxu0 %v3870
      %3956 = vmatprep.subr.mxu0 0.0
      %3957 = vmatpush2.msra.mxu0 0.0
      %3958 = vmatprep.subr.mxu0 0.0
      %3959 = vmatpush2.msra.mxu0 0.0
      %3960 = vmatprep.subr.mxu0 0.0
      %3961 = vmatpush2.msra.mxu0 0.0
      %3962 = vmatprep.subr.mxu0 0.0
      %3963 = vmatpush2.msra.mxu0 0.0
      %3964 = vmatprep.subr.mxu0 0.0
      %3965 = vmatpush2.msra.mxu0 0.0
      %3966 = vmatprep.subr.mxu0 0.0
      %3967 = vmatpush2.msra.mxu0 0.0
      %3968 = vmatprep.subr.mxu0 0.0
      %3969 = vmatpush2.msra.mxu0 0.0
      %3970 = vmatprep.subr.mxu0 0.0
      %3971 = vmatpush2.msra.mxu0 0.0
      %3972 = vmatprep.subr.mxu0 0.0
      %3973 = vmatpush2.msra.mxu0 0.0
      %3974 = vmatprep.subr.mxu0 0.0
      %3975 = vmatpush2.msra.mxu0 0.0
      %3976 = vmatprep.subr.mxu0 0.0
      %3977 = vmatpush2.msra.mxu0 0.0
      %3978 = vmatprep.subr.mxu0 0.0
      %3979 = vmatpush2.msra.mxu0 0.0
      %3980 = vmatprep.subr.mxu0 0.0
      %3981 = vmatpush2.msra.mxu0 0.0
      %3982 = vmatprep.subr.mxu0 0.0
      %3983 = vmatpush2.msra.mxu0 0.0
      %3984 = vmatprep.subr.mxu0 0.0
      %3985 = vmatpush2.msra.mxu0 0.0
      %3986 = vmatprep.subr.mxu0 0.0
      %3987 = vmatpush2.msra.mxu0 0.0
      %3988 = vmatprep.mubr.f32.mxu0 0.0
      %3989 = vmatmul.mubr.f32.gmra.mxu0 %v3877
      %v3990 = vpop.f32.mrf.mxu0
      %v3991 = vadd.f32 0.0, %v3990
      %v3992 = vpop.f32.mrf.mxu0
      %3993 = vmatprep.mubr.f32.mxu0 0.0
      %3994 = vmatmul.mubr.f32.gmra.mxu0 %v3880
      %v3995 = vpop.f32.mrf.mxu0
      %v3996 = vadd.f32 0.0, %v3995
      %v3997 = vpop.f32.mrf.mxu0
      %3998 = vmatprep.mubr.f32.mxu0 0.0
      %3999 = vmatmul.mubr.f32.gmra.mxu0 %v3883
      %v4000 = vpop.f32.mrf.mxu0
      %v4001 = vadd.f32 0.0, %v4000
      %v4002 = vpop.f32.mrf.mxu0
      %4003 = vmatprep.mubr.f32.mxu0 0.0
      %4004 = vmatmul.mubr.f32.gmra.mxu0 %v3886
      %v4005 = vpop.f32.mrf.mxu0
      %v4006 = vadd.f32 0.0, %v4005
      %v4007 = vpop.f32.mrf.mxu0
      %4008 = vmatprep.mubr.f32.mxu0 0.0
      %4009 = vmatmul.mubr.f32.gmra.mxu0 %v3889
      %v4010 = vpop.f32.mrf.mxu0
      %v4011 = vadd.f32 0.0, %v4010
      %v4012 = vpop.f32.mrf.mxu0
      %4013 = vmatprep.mubr.f32.mxu0 0.0
      %4014 = vmatmul.mubr.f32.gmra.mxu0 %v3892
      %v4015 = vpop.f32.mrf.mxu0
      %v4016 = vadd.f32 0.0, %v4015
      %v4017 = vpop.f32.mrf.mxu0
      %4018 = vmatprep.mubr.f32.mxu0 0.0
      %4019 = vmatmul.mubr.f32.gmra.mxu0 %v3895
      %v4020 = vpop.f32.mrf.mxu0
      %v4021 = vadd.f32 0.0, %v4020
      %v4022 = vpop.f32.mrf.mxu0
      %4023 = vmatprep.mubr.f32.mxu0 0.0
      %4024 = vmatmul.mubr.f32.gmra.mxu0 %v3898
      %v4025 = vpop.f32.mrf.mxu0
      %v4026 = vadd.f32 0.0, %v4025
      %v4027 = vpop.f32.mrf.mxu0
      %4028 = vmatprep.mubr.f32.mxu0 0.0
      %4029 = vmatmul.mubr.f32.gmra.mxu0 %v3901
      %v4030 = vpop.f32.mrf.mxu0
      %v4031 = vadd.f32 0.0, %v4030
      %v4032 = vpop.f32.mrf.mxu0
      %4033 = vmatprep.mubr.f32.mxu0 0.0
      %4034 = vmatmul.mubr.f32.gmra.mxu0 %v3904
      %v4035 = vpop.f32.mrf.mxu0
      %v4036 = vadd.f32 0.0, %v4035
      %v4037 = vpop.f32.mrf.mxu0
      %4038 = vmatprep.mubr.f32.mxu0 0.0
      %4039 = vmatmul.mubr.f32.gmra.mxu0 %v3907
      %v4040 = vpop.f32.mrf.mxu0
      %v4041 = vadd.f32 0.0, %v4040
      %v4042 = vpop.f32.mrf.mxu0
      %4043 = vmatprep.mubr.f32.mxu0 0.0
      %4044 = vmatmul.mubr.f32.gmra.mxu0 %v3910
      %v4045 = vpop.f32.mrf.mxu0
      %v4046 = vadd.f32 0.0, %v4045
      %v4047 = vpop.f32.mrf.mxu0
      %4048 = vmatprep.mubr.f32.mxu0 0.0
      %4049 = vmatmul.mubr.f32.gmra.mxu0 %v3913
      %v4050 = vpop.f32.mrf.mxu0
      %v4051 = vadd.f32 0.0, %v4050
      %v4052 = vpop.f32.mrf.mxu0
      %4053 = vmatprep.mubr.f32.mxu0 0.0
      %4054 = vmatmul.mubr.f32.gmra.mxu0 %v3916
      %v4055 = vpop.f32.mrf.mxu0
      %v4056 = vadd.f32 0.0, %v4055
      %v4057 = vpop.f32.mrf.mxu0
      %4058 = vmatprep.mubr.f32.mxu0 0.0
      %4059 = vmatmul.mubr.f32.gmra.mxu0 %v3919
      %v4060 = vpop.f32.mrf.mxu0
      %v4061 = vadd.f32 0.0, %v4060
      %v4062 = vpop.f32.mrf.mxu0
      %4063 = vmatprep.mubr.f32.mxu0 0.0
      %4064 = vmatmul.mubr.f32.gmra.mxu0 %v3922
      %v4065 = vpop.f32.mrf.mxu0
      %v4066 = vadd.f32 0.0, %v4065
      %v4067 = vpop.f32.mrf.mxu0
      %4068 = vdwg.mxu0
      %4085 = vrot.lane.b32.xlu0 %v3991, 80
      %v4086 = vpop.permute.xlu0 %4085
      %4087 = vrot.lane.b32.xlu0 %v3996, 80
      %v4088 = vpop.permute.xlu0 %4087
      %4089 = vrot.lane.b32.xlu0 %v4001, 80
      %v4090 = vpop.permute.xlu0 %4089
      %4091 = vrot.lane.b32.xlu0 %v4006, 80
      %v4092 = vpop.permute.xlu0 %4091
      %4093 = vrot.lane.b32.xlu0 %v4011, 80
      %v4094 = vpop.permute.xlu0 %4093
      %4095 = vrot.lane.b32.xlu0 %v4016, 80
      %v4096 = vpop.permute.xlu0 %4095
      %4097 = vrot.lane.b32.xlu0 %v4021, 80
      %v4098 = vpop.permute.xlu0 %4097
      %4099 = vrot.lane.b32.xlu0 %v4026, 80
      %v4100 = vpop.permute.xlu0 %4099
      %4101 = vrot.lane.b32.xlu0 %v4031, 80
      %v4102 = vpop.permute.xlu0 %4101
      %4103 = vrot.lane.b32.xlu0 %v4036, 80
      %v4104 = vpop.permute.xlu0 %4103
      %4105 = vrot.lane.b32.xlu0 %v4041, 80
      %v4106 = vpop.permute.xlu0 %4105
      %4107 = vrot.lane.b32.xlu0 %v4046, 80
      %v4108 = vpop.permute.xlu0 %4107
      %4109 = vrot.lane.b32.xlu0 %v4051, 80
      %v4110 = vpop.permute.xlu0 %4109
      %4111 = vrot.lane.b32.xlu0 %v4056, 80
      %v4112 = vpop.permute.xlu0 %4111
      %4113 = vrot.lane.b32.xlu0 %v4061, 80
      %v4114 = vpop.permute.xlu0 %4113
      %4115 = vrot.lane.b32.xlu0 %v4066, 80
      %v4116 = vpop.permute.xlu0 %4115
      %v4133 = vsub.f32 %v3758, %v4086
      %v4134 = vsub.f32 %v3759, %v4088
      %v4135 = vsub.f32 %v3760, %v4090
      %v4136 = vsub.f32 %v3761, %v4092
      %v4137 = vsub.f32 %v3762, %v4094
      %v4138 = vsub.f32 %v3763, %v4096
      %v4139 = vsub.f32 %v3764, %v4098
      %v4140 = vsub.f32 %v3765, %v4100
      %v4141 = vsub.f32 %v3766, %v4102
      %v4142 = vsub.f32 %v3767, %v4104
      %v4143 = vsub.f32 %v3768, %v4106
      %v4144 = vsub.f32 %v3769, %v4108
      %v4145 = vsub.f32 %v3770, %v4110
      %v4146 = vsub.f32 %v3771, %v4112
      %v4147 = vsub.f32 %v3772, %v4114
      %v4148 = vsub.f32 %v3773, %v4116
      %v4149 = vld [vmem:[%s432] sm:$0xff]
      %v4150 = vld [vmem:[%s432 + $0x8] sm:$0xff]
      %v4151 = vld [vmem:[%s432 + $0x10] sm:$0xff]
      %v4152 = vld [vmem:[%s432 + $0x18] sm:$0xff]
      %v4153 = vld [vmem:[%s432 + $0x20] sm:$0xff]
      %v4154 = vld [vmem:[%s432 + $0x28] sm:$0xff]
      %v4155 = vld [vmem:[%s432 + $0x30] sm:$0xff]
      %v4156 = vld [vmem:[%s432 + $0x38] sm:$0xff]
      %v4157 = vld [vmem:[%s432 + $0x40] sm:$0xff]
      %v4158 = vld [vmem:[%s432 + $0x48] sm:$0xff]
      %v4159 = vld [vmem:[%s432 + $0x50] sm:$0xff]
      %v4160 = vld [vmem:[%s432 + $0x58] sm:$0xff]
      %v4161 = vld [vmem:[%s432 + $0x60] sm:$0xff]
      %v4162 = vld [vmem:[%s432 + $0x68] sm:$0xff]
      %v4163 = vld [vmem:[%s432 + $0x70] sm:$0xff]
      %v4164 = vld [vmem:[%s432 + $0x78] sm:$0xff]
      %v4165 = vadd.f32 %v3991, %v4086
      %v4166 = vadd.f32 %v3996, %v4088
      %v4167 = vadd.f32 %v4001, %v4090
      %v4168 = vadd.f32 %v4006, %v4092
      %v4169 = vadd.f32 %v4011, %v4094
      %v4170 = vadd.f32 %v4016, %v4096
      %v4171 = vadd.f32 %v4021, %v4098
      %v4172 = vadd.f32 %v4026, %v4100
      %v4173 = vadd.f32 %v4031, %v4102
      %v4174 = vadd.f32 %v4036, %v4104
      %v4175 = vadd.f32 %v4041, %v4106
      %v4176 = vadd.f32 %v4046, %v4108
      %v4177 = vadd.f32 %v4051, %v4110
      %v4178 = vadd.f32 %v4056, %v4112
      %v4179 = vadd.f32 %v4061, %v4114
      %v4180 = vadd.f32 %v4066, %v4116
      %4182 = vset.pattern.permute.xlu0 0
      %4183 = vperm.xlu0 %4182, %v4149
      %v4184 = vpop.permute.xlu0 %4183
      %4187 = vset.pattern.permute.xlu0 0
      %4188 = vperm.xlu0 %4187, %v4150
      %v4189 = vpop.permute.xlu0 %4188
      %4192 = vset.pattern.permute.xlu0 0
      %4193 = vperm.xlu0 %4192, %v4151
      %v4194 = vpop.permute.xlu0 %4193
      %4197 = vset.pattern.permute.xlu0 0
      %4198 = vperm.xlu0 %4197, %v4152
      %v4199 = vpop.permute.xlu0 %4198
      %4202 = vset.pattern.permute.xlu0 0
      %4203 = vperm.xlu0 %4202, %v4153
      %v4204 = vpop.permute.xlu0 %4203
      %4207 = vset.pattern.permute.xlu0 0
      %4208 = vperm.xlu0 %4207, %v4154
      %v4209 = vpop.permute.xlu0 %4208
      %4212 = vset.pattern.permute.xlu0 0
      %4213 = vperm.xlu0 %4212, %v4155
      %v4214 = vpop.permute.xlu0 %4213
      %4217 = vset.pattern.permute.xlu0 0
      %4218 = vperm.xlu0 %4217, %v4156
      %v4219 = vpop.permute.xlu0 %4218
      %4222 = vset.pattern.permute.xlu0 0
      %4223 = vperm.xlu0 %4222, %v4157
      %v4224 = vpop.permute.xlu0 %4223
      %4227 = vset.pattern.permute.xlu0 0
      %4228 = vperm.xlu0 %4227, %v4158
      %v4229 = vpop.permute.xlu0 %4228
      %4232 = vset.pattern.permute.xlu0 0
      %4233 = vperm.xlu0 %4232, %v4159
      %v4234 = vpop.permute.xlu0 %4233
      %4237 = vset.pattern.permute.xlu0 0
      %4238 = vperm.xlu0 %4237, %v4160
      %v4239 = vpop.permute.xlu0 %4238
      %4242 = vset.pattern.permute.xlu0 0
      %4243 = vperm.xlu0 %4242, %v4161
      %v4244 = vpop.permute.xlu0 %4243
      %4247 = vset.pattern.permute.xlu0 0
      %4248 = vperm.xlu0 %4247, %v4162
      %v4249 = vpop.permute.xlu0 %4248
      %4252 = vset.pattern.permute.xlu0 0
      %4253 = vperm.xlu0 %4252, %v4163
      %v4254 = vpop.permute.xlu0 %4253
      %4257 = vset.pattern.permute.xlu0 0
      %4258 = vperm.xlu0 %4257, %v4164
      %v4259 = vpop.permute.xlu0 %4258
      %v4261 = vmul.f32 %v4184, %v4165
      %v4262 = vmul.f32 %v4189, %v4166
      %v4263 = vmul.f32 %v4194, %v4167
      %v4264 = vmul.f32 %v4199, %v4168
      %v4265 = vmul.f32 %v4204, %v4169
      %v4266 = vmul.f32 %v4209, %v4170
      %v4267 = vmul.f32 %v4214, %v4171
      %v4268 = vmul.f32 %v4219, %v4172
      %v4269 = vmul.f32 %v4224, %v4173
      %v4270 = vmul.f32 %v4229, %v4174
      %v4271 = vmul.f32 %v4234, %v4175
      %v4272 = vmul.f32 %v4239, %v4176
      %v4273 = vmul.f32 %v4244, %v4177
      %v4274 = vmul.f32 %v4249, %v4178
      %v4275 = vmul.f32 %v4254, %v4179
      %v4276 = vmul.f32 %v4259, %v4180
      %v4277 = vadd.f32 %v4133, %v4261
      %v4278 = vadd.f32 %v4134, %v4262
      %v4279 = vadd.f32 %v4135, %v4263
      %v4280 = vadd.f32 %v4136, %v4264
      %v4281 = vadd.f32 %v4137, %v4265
      %v4282 = vadd.f32 %v4138, %v4266
      %v4283 = vadd.f32 %v4139, %v4267
      %v4284 = vadd.f32 %v4140, %v4268
      %v4285 = vadd.f32 %v4141, %v4269
      %v4286 = vadd.f32 %v4142, %v4270
      %v4287 = vadd.f32 %v4143, %v4271
      %v4288 = vadd.f32 %v4144, %v4272
      %v4289 = vadd.f32 %v4145, %v4273
      %v4290 = vadd.f32 %v4146, %v4274
      %v4291 = vadd.f32 %v4147, %v4275
      %v4292 = vadd.f32 %v4148, %v4276
      %v4293 = vpack.c.bf16 %v4278, %v4277
      %v4294 = vpack.c.bf16 %v4280, %v4279
      %v4295 = vpack.c.bf16 %v4282, %v4281
      %v4296 = vpack.c.bf16 %v4284, %v4283
      %v4297 = vpack.c.bf16 %v4286, %v4285
      %v4298 = vpack.c.bf16 %v4288, %v4287
      %v4299 = vpack.c.bf16 %v4290, %v4289
      %v4300 = vpack.c.bf16 %v4292, %v4291
      %v4309 = vunpack.c.l.b16 %v4293
      %v4310 = vunpack.c.h.b16 %v4293
      %v4311 = vunpack.c.l.b16 %v4294
      %v4312 = vunpack.c.h.b16 %v4294
      %v4313 = vunpack.c.l.b16 %v4295
      %v4314 = vunpack.c.h.b16 %v4295
      %v4315 = vunpack.c.l.b16 %v4296
      %v4316 = vunpack.c.h.b16 %v4296
      %v4317 = vunpack.c.l.b16 %v4297
      %v4318 = vunpack.c.h.b16 %v4297
      %v4319 = vunpack.c.l.b16 %v4298
      %v4320 = vunpack.c.h.b16 %v4298
      %v4321 = vunpack.c.l.b16 %v4299
      %v4322 = vunpack.c.h.b16 %v4299
      %v4323 = vunpack.c.l.b16 %v4300
      %v4324 = vunpack.c.h.b16 %v4300
      %v4325 = vpack.c.b16 %v4309, %v4309
      %v4326 = vpack.c.b16 %v4310, %v4310
      %v4327 = vpack.c.b16 %v4311, %v4311
      %v4328 = vpack.c.b16 %v4312, %v4312
      %v4329 = vpack.c.b16 %v4313, %v4313
      %v4330 = vpack.c.b16 %v4314, %v4314
      %v4331 = vpack.c.b16 %v4315, %v4315
      %v4332 = vpack.c.b16 %v4316, %v4316
      %v4333 = vpack.c.b16 %v4317, %v4317
      %v4334 = vpack.c.b16 %v4318, %v4318
      %v4335 = vpack.c.b16 %v4319, %v4319
      %v4336 = vpack.c.b16 %v4320, %v4320
      %v4337 = vpack.c.b16 %v4321, %v4321
      %v4338 = vpack.c.b16 %v4322, %v4322
      %v4339 = vpack.c.b16 %v4323, %v4323
      %v4340 = vpack.c.b16 %v4324, %v4324
      %vm4357 = vcmask 388096
      %4358 = vst.msk [vmem:[%s438] sm:$0xf] %vm4357, %v4325
      %4359 = vst.msk [vmem:[%s438 + $0x4] sm:$0xf] %vm4357, %v4326
      %4360 = vst.msk [vmem:[%s438 + $0x8] sm:$0xf] %vm4357, %v4327
      %4361 = vst.msk [vmem:[%s438 + $0xc] sm:$0xf] %vm4357, %v4328
      %4362 = vst.msk [vmem:[%s438 + $0x10] sm:$0xf] %vm4357, %v4329
      %4363 = vst.msk [vmem:[%s438 + $0x14] sm:$0xf] %vm4357, %v4330
      %4364 = vst.msk [vmem:[%s438 + $0x18] sm:$0xf] %vm4357, %v4331
      %4365 = vst.msk [vmem:[%s438 + $0x1c] sm:$0xf] %vm4357, %v4332
      %4366 = vst.msk [vmem:[%s438 + $0x20] sm:$0xf] %vm4357, %v4333
      %4367 = vst.msk [vmem:[%s438 + $0x24] sm:$0xf] %vm4357, %v4334
      %4368 = vst.msk [vmem:[%s438 + $0x28] sm:$0xf] %vm4357, %v4335
      %4369 = vst.msk [vmem:[%s438 + $0x2c] sm:$0xf] %vm4357, %v4336
      %4370 = vst.msk [vmem:[%s438 + $0x30] sm:$0xf] %vm4357, %v4337
      %4371 = vst.msk [vmem:[%s438 + $0x34] sm:$0xf] %vm4357, %v4338
      %4372 = vst.msk [vmem:[%s438 + $0x38] sm:$0xf] %vm4357, %v4339
      %4373 = vst.msk [vmem:[%s438 + $0x3c] sm:$0xf] %vm4357, %v4340
      %v4374 = vmul.f32 %v3991, %v3991
      %v4375 = vmul.f32 %v3996, %v3996
      %v4376 = vmul.f32 %v4001, %v4001
      %v4377 = vmul.f32 %v4006, %v4006
      %v4378 = vmul.f32 %v4011, %v4011
      %v4379 = vmul.f32 %v4016, %v4016
      %v4380 = vmul.f32 %v4021, %v4021
      %v4381 = vmul.f32 %v4026, %v4026
      %v4382 = vmul.f32 %v4031, %v4031
      %v4383 = vmul.f32 %v4036, %v4036
      %v4384 = vmul.f32 %v4041, %v4041
      %v4385 = vmul.f32 %v4046, %v4046
      %v4386 = vmul.f32 %v4051, %v4051
      %v4387 = vmul.f32 %v4056, %v4056
      %v4388 = vmul.f32 %v4061, %v4061
      %v4389 = vmul.f32 %v4066, %v4066
      %4406 = vrot.lane.b32.xlu0 %v4374, 80
      %v4407 = vpop.permute.xlu0 %4406
      %4408 = vrot.lane.b32.xlu0 %v4375, 80
      %v4409 = vpop.permute.xlu0 %4408
      %4410 = vrot.lane.b32.xlu0 %v4376, 80
      %v4411 = vpop.permute.xlu0 %4410
      %4412 = vrot.lane.b32.xlu0 %v4377, 80
      %v4413 = vpop.permute.xlu0 %4412
      %4414 = vrot.lane.b32.xlu0 %v4378, 80
      %v4415 = vpop.permute.xlu0 %4414
      %4416 = vrot.lane.b32.xlu0 %v4379, 80
      %v4417 = vpop.permute.xlu0 %4416
      %4418 = vrot.lane.b32.xlu0 %v4380, 80
      %v4419 = vpop.permute.xlu0 %4418
      %4420 = vrot.lane.b32.xlu0 %v4381, 80
      %v4421 = vpop.permute.xlu0 %4420
      %4422 = vrot.lane.b32.xlu0 %v4382, 80
      %v4423 = vpop.permute.xlu0 %4422
      %4424 = vrot.lane.b32.xlu0 %v4383, 80
      %v4425 = vpop.permute.xlu0 %4424
      %4426 = vrot.lane.b32.xlu0 %v4384, 80
      %v4427 = vpop.permute.xlu0 %4426
      %4428 = vrot.lane.b32.xlu0 %v4385, 80
      %v4429 = vpop.permute.xlu0 %4428
      %4430 = vrot.lane.b32.xlu0 %v4386, 80
      %v4431 = vpop.permute.xlu0 %4430
      %4432 = vrot.lane.b32.xlu0 %v4387, 80
      %v4433 = vpop.permute.xlu0 %4432
      %4434 = vrot.lane.b32.xlu0 %v4388, 80
      %v4435 = vpop.permute.xlu0 %4434
      %4436 = vrot.lane.b32.xlu0 %v4389, 80
      %v4437 = vpop.permute.xlu0 %4436
      %v4454 = vadd.f32 %v4374, %v4407
      %v4455 = vadd.f32 %v4375, %v4409
      %v4456 = vadd.f32 %v4376, %v4411
      %v4457 = vadd.f32 %v4377, %v4413
      %v4458 = vadd.f32 %v4378, %v4415
      %v4459 = vadd.f32 %v4379, %v4417
      %v4460 = vadd.f32 %v4380, %v4419
      %v4461 = vadd.f32 %v4381, %v4421
      %v4462 = vadd.f32 %v4382, %v4423
      %v4463 = vadd.f32 %v4383, %v4425
      %v4464 = vadd.f32 %v4384, %v4427
      %v4465 = vadd.f32 %v4385, %v4429
      %v4466 = vadd.f32 %v4386, %v4431
      %v4467 = vadd.f32 %v4387, %v4433
      %v4468 = vadd.f32 %v4388, %v4435
      %v4469 = vadd.f32 %v4389, %v4437
      %v4470 = vsel %vm1211, %v4454, 0.0
      %4471 = vadd.xlane.f32.xlu0 %v4470
      %v4472 = vpop.xlane.xlu0 %4471
      %v4473 = vsel %vm1211, %v4455, 0.0
      %4474 = vadd.xlane.f32.xlu0 %v4473
      %v4475 = vpop.xlane.xlu0 %4474
      %v4476 = vsel %vm1211, %v4456, 0.0
      %4477 = vadd.xlane.f32.xlu0 %v4476
      %v4478 = vpop.xlane.xlu0 %4477
      %v4479 = vsel %vm1211, %v4457, 0.0
      %4480 = vadd.xlane.f32.xlu0 %v4479
      %v4481 = vpop.xlane.xlu0 %4480
      %v4482 = vsel %vm1211, %v4458, 0.0
      %4483 = vadd.xlane.f32.xlu0 %v4482
      %v4484 = vpop.xlane.xlu0 %4483
      %v4485 = vsel %vm1211, %v4459, 0.0
      %4486 = vadd.xlane.f32.xlu0 %v4485
      %v4487 = vpop.xlane.xlu0 %4486
      %v4488 = vsel %vm1211, %v4460, 0.0
      %4489 = vadd.xlane.f32.xlu0 %v4488
      %v4490 = vpop.xlane.xlu0 %4489
      %v4491 = vsel %vm1211, %v4461, 0.0
      %4492 = vadd.xlane.f32.xlu0 %v4491
      %v4493 = vpop.xlane.xlu0 %4492
      %v4494 = vsel %vm1211, %v4462, 0.0
      %4495 = vadd.xlane.f32.xlu0 %v4494
      %v4496 = vpop.xlane.xlu0 %4495
      %v4497 = vsel %vm1211, %v4463, 0.0
      %4498 = vadd.xlane.f32.xlu0 %v4497
      %v4499 = vpop.xlane.xlu0 %4498
      %v4500 = vsel %vm1211, %v4464, 0.0
      %4501 = vadd.xlane.f32.xlu0 %v4500
      %v4502 = vpop.xlane.xlu0 %4501
      %v4503 = vsel %vm1211, %v4465, 0.0
      %4504 = vadd.xlane.f32.xlu0 %v4503
      %v4505 = vpop.xlane.xlu0 %4504
      %v4506 = vsel %vm1211, %v4466, 0.0
      %4507 = vadd.xlane.f32.xlu0 %v4506
      %v4508 = vpop.xlane.xlu0 %4507
      %v4509 = vsel %vm1211, %v4467, 0.0
      %4510 = vadd.xlane.f32.xlu0 %v4509
      %v4511 = vpop.xlane.xlu0 %4510
      %v4512 = vsel %vm1211, %v4468, 0.0
      %4513 = vadd.xlane.f32.xlu0 %v4512
      %v4514 = vpop.xlane.xlu0 %4513
      %v4515 = vsel %vm1211, %v4469, 0.0
      %4516 = vadd.xlane.f32.xlu0 %v4515
      %v4517 = vpop.xlane.xlu0 %4516
      %v4518 = vmul.f32 %v1194, %v1194
      %v4519 = vmul.f32 %v1195, %v1195
      %v4520 = vmul.f32 %v1196, %v1196
      %v4521 = vmul.f32 %v1197, %v1197
      %v4522 = vmul.f32 %v1198, %v1198
      %v4523 = vmul.f32 %v1199, %v1199
      %v4524 = vmul.f32 %v1200, %v1200
      %v4525 = vmul.f32 %v1201, %v1201
      %v4526 = vmul.f32 %v1202, %v1202
      %v4527 = vmul.f32 %v1203, %v1203
      %v4528 = vmul.f32 %v1204, %v1204
      %v4529 = vmul.f32 %v1205, %v1205
      %v4530 = vmul.f32 %v1206, %v1206
      %v4531 = vmul.f32 %v1207, %v1207
      %v4532 = vmul.f32 %v1208, %v1208
      %v4533 = vmul.f32 %v1209, %v1209
      %4550 = vrot.lane.b32.xlu0 %v4518, 80
      %v4551 = vpop.permute.xlu0 %4550
      %4552 = vrot.lane.b32.xlu0 %v4519, 80
      %v4553 = vpop.permute.xlu0 %4552
      %4554 = vrot.lane.b32.xlu0 %v4520, 80
      %v4555 = vpop.permute.xlu0 %4554
      %4556 = vrot.lane.b32.xlu0 %v4521, 80
      %v4557 = vpop.permute.xlu0 %4556
      %4558 = vrot.lane.b32.xlu0 %v4522, 80
      %v4559 = vpop.permute.xlu0 %4558
      %4560 = vrot.lane.b32.xlu0 %v4523, 80
      %v4561 = vpop.permute.xlu0 %4560
      %4562 = vrot.lane.b32.xlu0 %v4524, 80
      %v4563 = vpop.permute.xlu0 %4562
      %4564 = vrot.lane.b32.xlu0 %v4525, 80
      %v4565 = vpop.permute.xlu0 %4564
      %4566 = vrot.lane.b32.xlu0 %v4526, 80
      %v4567 = vpop.permute.xlu0 %4566
      %4568 = vrot.lane.b32.xlu0 %v4527, 80
      %v4569 = vpop.permute.xlu0 %4568
      %4570 = vrot.lane.b32.xlu0 %v4528, 80
      %v4571 = vpop.permute.xlu0 %4570
      %4572 = vrot.lane.b32.xlu0 %v4529, 80
      %v4573 = vpop.permute.xlu0 %4572
      %4574 = vrot.lane.b32.xlu0 %v4530, 80
      %v4575 = vpop.permute.xlu0 %4574
      %4576 = vrot.lane.b32.xlu0 %v4531, 80
      %v4577 = vpop.permute.xlu0 %4576
      %4578 = vrot.lane.b32.xlu0 %v4532, 80
      %v4579 = vpop.permute.xlu0 %4578
      %4580 = vrot.lane.b32.xlu0 %v4533, 80
      %v4581 = vpop.permute.xlu0 %4580
      %v4598 = vadd.f32 %v4518, %v4551
      %v4599 = vadd.f32 %v4519, %v4553
      %v4600 = vadd.f32 %v4520, %v4555
      %v4601 = vadd.f32 %v4521, %v4557
      %v4602 = vadd.f32 %v4522, %v4559
      %v4603 = vadd.f32 %v4523, %v4561
      %v4604 = vadd.f32 %v4524, %v4563
      %v4605 = vadd.f32 %v4525, %v4565
      %v4606 = vadd.f32 %v4526, %v4567
      %v4607 = vadd.f32 %v4527, %v4569
      %v4608 = vadd.f32 %v4528, %v4571
      %v4609 = vadd.f32 %v4529, %v4573
      %v4610 = vadd.f32 %v4530, %v4575
      %v4611 = vadd.f32 %v4531, %v4577
      %v4612 = vadd.f32 %v4532, %v4579
      %v4613 = vadd.f32 %v4533, %v4581
      %v4614 = vsel %vm1211, %v4598, 0.0
      %4615 = vadd.xlane.f32.xlu0 %v4614
      %v4616 = vpop.xlane.xlu0 %4615
      %v4617 = vsel %vm1211, %v4599, 0.0
      %4618 = vadd.xlane.f32.xlu0 %v4617
      %v4619 = vpop.xlane.xlu0 %4618
      %v4620 = vsel %vm1211, %v4600, 0.0
      %4621 = vadd.xlane.f32.xlu0 %v4620
      %v4622 = vpop.xlane.xlu0 %4621
      %v4623 = vsel %vm1211, %v4601, 0.0
      %4624 = vadd.xlane.f32.xlu0 %v4623
      %v4625 = vpop.xlane.xlu0 %4624
      %v4626 = vsel %vm1211, %v4602, 0.0
      %4627 = vadd.xlane.f32.xlu0 %v4626
      %v4628 = vpop.xlane.xlu0 %4627
      %v4629 = vsel %vm1211, %v4603, 0.0
      %4630 = vadd.xlane.f32.xlu0 %v4629
      %v4631 = vpop.xlane.xlu0 %4630
      %v4632 = vsel %vm1211, %v4604, 0.0
      %4633 = vadd.xlane.f32.xlu0 %v4632
      %v4634 = vpop.xlane.xlu0 %4633
      %v4635 = vsel %vm1211, %v4605, 0.0
      %4636 = vadd.xlane.f32.xlu0 %v4635
      %v4637 = vpop.xlane.xlu0 %4636
      %v4638 = vsel %vm1211, %v4606, 0.0
      %4639 = vadd.xlane.f32.xlu0 %v4638
      %v4640 = vpop.xlane.xlu0 %4639
      %v4641 = vsel %vm1211, %v4607, 0.0
      %4642 = vadd.xlane.f32.xlu0 %v4641
      %v4643 = vpop.xlane.xlu0 %4642
      %v4644 = vsel %vm1211, %v4608, 0.0
      %4645 = vadd.xlane.f32.xlu0 %v4644
      %v4646 = vpop.xlane.xlu0 %4645
      %v4647 = vsel %vm1211, %v4609, 0.0
      %4648 = vadd.xlane.f32.xlu0 %v4647
      %v4649 = vpop.xlane.xlu0 %4648
      %v4650 = vsel %vm1211, %v4610, 0.0
      %4651 = vadd.xlane.f32.xlu0 %v4650
      %v4652 = vpop.xlane.xlu0 %4651
      %v4653 = vsel %vm1211, %v4611, 0.0
      %4654 = vadd.xlane.f32.xlu0 %v4653
      %v4655 = vpop.xlane.xlu0 %4654
      %v4656 = vsel %vm1211, %v4612, 0.0
      %4657 = vadd.xlane.f32.xlu0 %v4656
      %v4658 = vpop.xlane.xlu0 %4657
      %v4659 = vsel %vm1211, %v4613, 0.0
      %4660 = vadd.xlane.f32.xlu0 %v4659
      %v4661 = vpop.xlane.xlu0 %4660
      %vm4662 = vcmask 7168
      %v4663 = vsel %vm4662, %v4472, %v4616
      %v4664 = vsel %vm4662, %v4475, %v4619
      %v4665 = vsel %vm4662, %v4478, %v4622
      %v4666 = vsel %vm4662, %v4481, %v4625
      %v4667 = vsel %vm4662, %v4484, %v4628
      %v4668 = vsel %vm4662, %v4487, %v4631
      %v4669 = vsel %vm4662, %v4490, %v4634
      %v4670 = vsel %vm4662, %v4493, %v4637
      %v4671 = vsel %vm4662, %v4496, %v4640
      %v4672 = vsel %vm4662, %v4499, %v4643
      %v4673 = vsel %vm4662, %v4502, %v4646
      %v4674 = vsel %vm4662, %v4505, %v4649
      %v4675 = vsel %vm4662, %v4508, %v4652
      %v4676 = vsel %vm4662, %v4511, %v4655
      %v4677 = vsel %vm4662, %v4514, %v4658
      %v4678 = vsel %vm4662, %v4517, %v4661
      %vm4679 = vcmask 15360
      %4680 = vst.msk [vmem:[%s444] sm:$0xff] %vm4679, %v4663
      %4681 = vst.msk [vmem:[%s444 + $0x8] sm:$0xff] %vm4679, %v4664
      %4682 = vst.msk [vmem:[%s444 + $0x10] sm:$0xff] %vm4679, %v4665
      %4683 = vst.msk [vmem:[%s444 + $0x18] sm:$0xff] %vm4679, %v4666
      %4684 = vst.msk [vmem:[%s444 + $0x20] sm:$0xff] %vm4679, %v4667
      %4685 = vst.msk [vmem:[%s444 + $0x28] sm:$0xff] %vm4679, %v4668
      %4686 = vst.msk [vmem:[%s444 + $0x30] sm:$0xff] %vm4679, %v4669
      %4687 = vst.msk [vmem:[%s444 + $0x38] sm:$0xff] %vm4679, %v4670
      %4688 = vst.msk [vmem:[%s444 + $0x40] sm:$0xff] %vm4679, %v4671
      %4689 = vst.msk [vmem:[%s444 + $0x48] sm:$0xff] %vm4679, %v4672
      %4690 = vst.msk [vmem:[%s444 + $0x50] sm:$0xff] %vm4679, %v4673
      %4691 = vst.msk [vmem:[%s444 + $0x58] sm:$0xff] %vm4679, %v4674
      %4692 = vst.msk [vmem:[%s444 + $0x60] sm:$0xff] %vm4679, %v4675
      %4693 = vst.msk [vmem:[%s444 + $0x68] sm:$0xff] %vm4679, %v4676
      %4694 = vst.msk [vmem:[%s444 + $0x70] sm:$0xff] %vm4679, %v4677
      %4695 = vst.msk [vmem:[%s444 + $0x78] sm:$0xff] %vm4679, %v4678
      %s4696 = smul.u32 16, %s22
      %p4697 = scmp.lt.s32.totalorder %s4696, 31
      %s4698 = scalar_select %p4697, %s4696, 31
      %s4699 = smul.addr %s4698, 4
      %s4700 = scalar_lea.vmem %s9, %s4699
      %s4701 = smul.u32 16, %s22
      %p4702 = scmp.lt.s32.totalorder %s4701, 31
      %s4703 = scalar_select %p4702, %s4701, 31
      %s4704 = smul.addr %s4703, 8
      %s4705 = scalar_lea.vmem %s10, %s4704
      // Predicated region
      $region57: #{dfair_gat_forward.2} parent=55 // pred_check
        %p4706 = pneg %p249
      $region58: #{dfair_gat_forward.2} parent=55 // pred_check_branch
        %4708 = sbr.rel (%p4706) target = $region60
      $region59: #{dfair_gat_forward.2} parent=55 // pred_region
        %s4709 = smul.u32 16, %s22
      $region60: #{dfair_gat_forward.2} parent=55 // pred_fallthru
        _
      // Predicated region
      $region61: #{dfair_gat_forward.2} parent=55 // pred_check
        %p4710 = pneg %p275
      $region62: #{dfair_gat_forward.2} parent=55 // pred_check_branch
        %4712 = sbr.rel (%p4710) target = $region64
      $region63: #{dfair_gat_forward.2} parent=55 // pred_region
        %s4713 = smul.u32 16, %s22
      $region64: #{dfair_gat_forward.2} parent=55 // pred_fallthru
        _
    $region56: #{dfair_gat_forward.2} parent=5 // pred_fallthru
      _
    %p4714 = scmp.le.s32.totalorder 2, %s17
    // Predicated region
    $region65: #{dfair_gat_forward.2} parent=5 // pred_check
      %p4715 = pneg %p4714
    $region66: #{dfair_gat_forward.2} parent=5 // pred_check_branch
      %4717 = sbr.rel (%p4715) target = $region68
    $region67: #{dfair_gat_forward.2} parent=5 // pred_region
      %s4718 = ssub.s32 %s17, 2
      // Predicated region
      $region69: #{dfair_gat_forward.2} parent=67 // pred_check
        %p4719 = pneg %p255
      $region70: #{dfair_gat_forward.2} parent=67 // pred_check_branch
        %4721 = sbr.rel (%p4719) target = $region72
      $region71: #{dfair_gat_forward.2} parent=67 // pred_region
        %s4722 = smul.u32 16, %s23
        %p4723 = scmp.lt.s32.totalorder %s4722, 31
        %s4724 = scalar_select %p4723, %s4722, 31
        %s4725 = smul.addr %s4724, 4
        %s4726 = scalar_lea.vmem %s9, %s4725
      $region72: #{dfair_gat_forward.2} parent=67 // pred_fallthru
        _
      // Predicated region
      $region73: #{dfair_gat_forward.2} parent=67 // pred_check
        %p4727 = pneg %p281
      $region74: #{dfair_gat_forward.2} parent=67 // pred_check_branch
        %4729 = sbr.rel (%p4727) target = $region76
      $region75: #{dfair_gat_forward.2} parent=67 // pred_region
        %s4730 = smul.u32 16, %s23
        %p4731 = scmp.lt.s32.totalorder %s4730, 31
        %s4732 = scalar_select %p4731, %s4730, 31
        %s4733 = smul.addr %s4732, 8
        %s4734 = scalar_lea.vmem %s10, %s4733
      $region76: #{dfair_gat_forward.2} parent=67 // pred_fallthru
        _
    $region68: #{dfair_gat_forward.2} parent=5 // pred_fallthru
      _
  $region6: #{dfair_gat_forward.2} parent=0 // loop_footer
    %s21 = sadd.s32 1, %s17
  $region7: #{dfair_gat_forward.2} parent=0 // loop_footer_branch
    %16 = sbr.rel target = $region3
  $region8: #{dfair_gat_forward.2} parent=0 // loop_exit
    _

</llo_original>
